<compile_context>
chip_gen: v7x
topology: tpu7x:2x2x1
jax: 0.10.0
libtpu: 0.0.40
codegen_flags: <defaults>
</compile_context>

<pallas_src>
import numpy as np
import jax
import jax.numpy as jnp
from jax import lax
from jax.experimental import pallas as pl
from jax.experimental.pallas import tpu as pltpu


# --------------------- bilinear interpolation matrices ----------------------

def interp_matrix(n_in, n_out):
    """(n_out, n_in) matrix implementing 1D bilinear resize, align_corners=True."""
    A = np.zeros((n_out, n_in), np.float32)
    if n_in == 1:
        A[:, 0] = 1.0
        return A
    src = np.arange(n_out, dtype=np.float64) * (n_in - 1) / (n_out - 1)
    lo = np.clip(np.floor(src).astype(np.int64), 0, n_in - 1)
    hi = np.minimum(lo + 1, n_in - 1)
    frac = (src - lo).astype(np.float32)
    A[np.arange(n_out), lo] += 1.0 - frac
    A[np.arange(n_out), hi] += frac
    return A


# ------------------------------ fused forward --------------------------------

def fcn_semantic_head_forward(xs_nchw, params):
    """xs_nchw: list of NCHW feature maps (one per featmap stride)."""
    S = len(xs_nchw)
    N = int(xs_nchw[0].shape[0])
    spatial = [(int(x.shape[2]), int(x.shape[3])) for x in xs_nchw]
    H0, W0 = spatial[0]
    Hp, Wp = 4 * H0, 4 * W0
    upC = int(params['upsamples'][0][0][0].shape[3])
    Cls = int(params['logits_w'].shape[1])
    Ce = int(params['emb_w'].shape[1])

    # Activations enter the kernel as bf16 NCHW (the first thing each conv
    # does is cast to bf16 for the MXU anyway) -> halves input DMA / VMEM.
    xs_b = [jnp.asarray(x, jnp.bfloat16) for x in xs_nchw]

    # ----- assemble kernel operands (all small arrays, passed untiled) -------
    extra, extra_specs = [], []

    def add_input(arr, dtype):
        arr = jnp.asarray(arr, dtype)
        extra.append(arr)
        extra_specs.append(
            pl.BlockSpec(arr.shape, lambda n, _nd=arr.ndim: (0,) * _nd))
        return len(extra) - 1

    scratch, scratch_bytes = [], [0]

    def add_scratch(shape, dtype):
        scratch.append(pltpu.VMEM(shape, dtype))
        scratch_bytes[0] += int(np.prod(shape)) * np.dtype(dtype).itemsize
        return len(scratch) - 1

    flops = [0]
    pad_cache, col_cache, interp_cache = {}, {}, {}

    def reg_conv3x3(w_hwio, b, H, W):
        Ci, Co = int(w_hwio.shape[2]), int(w_hwio.shape[3])
        # (3,3,Ci,Co) -> (Co, 9*Ci), tap-major / channel-minor (matches the
        # im2col row order), plus the bias folded in as an extra K column.
        wmat = jnp.transpose(jnp.asarray(w_hwio, jnp.float32),
                             (3, 0, 1, 2)).reshape(Co, 9 * Ci)
        wmat = jnp.concatenate(
            [wmat, jnp.asarray(b, jnp.float32).reshape(Co, 1)], axis=1)
        wi = add_input(wmat, jnp.bfloat16)
        key = (Ci, H, W)
        if key not in pad_cache:            # reuse scratch by geometry
            pad_cache[key] = add_scratch((Ci, H + 2, W + 2), jnp.bfloat16)
            col_cache[key] = add_scratch((9 * Ci + 1, H, W), jnp.bfloat16)
        flops[0] += 2 * Co * (9 * Ci + 1) * H * W
        return dict(wi=wi, pad=pad_cache[key], col=col_cache[key],
                    Ci=Ci, Co=Co, H=H, W=W)

    def reg_resize(C, Hin, Win, factor):
        Hout, Wout = factor * Hin, factor * Win
        hk, wk = ('h', Hin, Hout), ('w', Win, Wout)
        if hk not in interp_cache:
            interp_cache[hk] = add_input(interp_matrix(Hin, Hout), jnp.bfloat16)
        if wk not in interp_cache:
            interp_cache[wk] = add_input(interp_matrix(Win, Wout).T,
                                         jnp.bfloat16)
        flops[0] += 2 * C * Hin * Win * Wout + 2 * C * Hout * Hin * Wout
        return dict(ahi=interp_cache[hk], awti=interp_cache[wk],
                    C=C, Hin=Hin, Win=Win, Hout=Hout, Wout=Wout)

    plan = []
    for i in range(S):
        Hc, Wc = spatial[i]
        blocks = []
        for (w, b) in params['upsamples'][i]:
            cp = reg_conv3x3(w, b, Hc, Wc)
            rp = None
            if i > 0:                                  # UpsampleBlock: conv + x2
                rp = reg_resize(cp['Co'], Hc, Wc, 2)
                Hc, Wc = 2 * Hc, 2 * Wc
            blocks.append((cp, rp))
        assert (Hc, Wc) == (H0, W0), "scale chain must end at the stride-4 size"
        plan.append(blocks)

    # fused 1x1 heads: single (Cls+Ce, upC) matmul sharing the feature LHS.
    heads_w = jnp.concatenate([jnp.asarray(params['logits_w'], jnp.float32).T,
                               jnp.asarray(params['emb_w'], jnp.float32).T], 0)
    heads_b = jnp.concatenate([jnp.asarray(params['logits_b'], jnp.float32),
                               jnp.asarray(params['emb_b'], jnp.float32)],
                              0).reshape(Cls + Ce, 1, 1)
    hw_i = add_input(heads_w, jnp.bfloat16)
    hb_i = add_input(heads_b, jnp.float32)
    flops[0] += 2 * (Cls + Ce) * upC * H0 * W0
    pred_rp = reg_resize(Cls, H0, W0, 4)

    num_x, num_extra = S, len(extra)

    # ------------------------------ kernel -----------------------------------
    def kernel(*refs):
        x_refs = refs[:num_x]
        p_refs = refs[num_x:num_x + num_extra]
        pred_ref, emb_ref = refs[num_x + num_extra:num_x + num_extra + 2]
        s_refs = refs[num_x + num_extra + 2:]

        # One-time scratch init (zero halo ring + im2col ones row for the
        # folded bias).  Scratch persists across grid steps; the grid axis is
        # "arbitrary" (sequential on one core), so program_id==0 is the first
        # step executed here.
        @pl.when(pl.program_id(0) == 0)
        def _init():
            for (Ci, H, W), si in pad_cache.items():
                s_refs[si][...] = jnp.zeros((Ci, H + 2, W + 2), jnp.bfloat16)
            for (Ci, H, W), si in col_cache.items():
                s_refs[si][9 * Ci:9 * Ci + 1, :, :] = jnp.ones(
                    (1, H, W), jnp.bfloat16)

        def conv3x3(x3, cp, relu):
            # x3: (Ci, H, W).  Zero-halo pad scratch -> im2col scratch
            # (9*Ci+1, H, W) -> ONE fat MXU matmul with the bias folded in.
            Ci, Co, H, W = cp['Ci'], cp['Co'], cp['H'], cp['W']
            pad = s_refs[cp['pad']]
            col = s_refs[cp['col']]
            pad[:, 1:H + 1, 1:W + 1] = x3.astype(jnp.bfloat16)
            for ky in range(3):
                for kx in range(3):
                    t = ky * 3 + kx
                    col[t * Ci:(t + 1) * Ci, :, :] = pad[:, ky:ky + H,
                                                         kx:kx + W]
            y = jnp.einsum('of,fhw->ohw', p_refs[cp['wi']][...], col[...],
                           preferred_element_type=jnp.float32)   # (Co, H, W)
            return jnp.maximum(y, 0.0) if relu else y

        def resize(x3, rp):
            # Separable bilinear (align_corners=True) as two batched MXU
            # einsums in natural layout: no transposes, no per-row stores.
            C, Hin, Win = rp['C'], rp['Hin'], rp['Win']
            Hout, Wout = rp['Hout'], rp['Wout']
            awt = jnp.broadcast_to(p_refs[rp['awti']][...], (C, Win, Wout))
            ah = jnp.broadcast_to(p_refs[rp['ahi']][...], (C, Hout, Hin))
            t = jnp.einsum('chw,cwq->chq', x3.astype(jnp.bfloat16), awt,
                           preferred_element_type=jnp.float32)   # W stage
            return jnp.einsum('cph,chq->cpq', ah, t.astype(jnp.bfloat16),
                              preferred_element_type=jnp.float32)  # H stage

        # per-scale upsample chains; everything stays in VMEM / registers.
        ups = []
        for i in range(num_x):
            f = x_refs[i][...]
            for cp, rp in plan[i]:
                f = conv3x3(f, cp, relu=True)
                if rp is not None:
                    f = resize(f, rp)
            ups.append(f)

        # coarse-to-fine sum, fused (no HBM round trip)
        feat = ups[num_x - 1]
        for i in range(num_x - 2, -1, -1):
            feat = ups[i] + feat                       # (upC, H0, W0)

        # fused tail: logits + embedding heads share one matmul.
        heads = jnp.einsum('of,fhw->ohw', p_refs[hw_i][...],
                           feat.astype(jnp.bfloat16),
                           preferred_element_type=jnp.float32) + p_refs[hb_i][...]
        emb_ref[...] = jnp.maximum(heads[Cls:], 0.0)
        pred_ref[...] = resize(heads[:Cls], pred_rp).astype(jnp.bfloat16)

    # ---------------------------- pallas_call --------------------------------
    in_specs = ([pl.BlockSpec((None,) + tuple(int(d) for d in x.shape[1:]),
                              lambda n: (n, 0, 0, 0)) for x in xs_b]
                + extra_specs)
    out_shape = (jax.ShapeDtypeStruct((N, Cls, Hp, Wp), jnp.bfloat16),
                 jax.ShapeDtypeStruct((N, Ce, H0, W0), jnp.float32))
    out_specs = (pl.BlockSpec((None, Cls, Hp, Wp), lambda n: (n, 0, 0, 0)),
                 pl.BlockSpec((None, Ce, H0, W0), lambda n: (n, 0, 0, 0)))

    # advisory cost + scoped-VMEM budget derived from actual buffer sizes
    in_bytes = sum(int(np.prod(x.shape)) * 2 for x in xs_b)
    w_bytes = sum(int(np.prod(e.shape)) * np.dtype(e.dtype).itemsize
                  for e in extra)
    out_bytes = N * Cls * Hp * Wp * 2 + N * Ce * H0 * W0 * 4
    cost = pl.CostEstimate(flops=int(N * flops[0]), transcendentals=0,
                           bytes_accessed=int(in_bytes + w_bytes + out_bytes))
    block_bytes = (in_bytes // N) + w_bytes + (out_bytes // N)
    vmem_limit = int(min(max(scratch_bytes[0] + 2 * block_bytes + (8 << 20),
                             32 << 20), 64 << 20))

    pred, emb = pl.pallas_call(
        kernel,
        out_shape=out_shape,
        grid=(N,),
        in_specs=in_specs,
        out_specs=out_specs,
        scratch_shapes=scratch,
        compiler_params=pltpu.CompilerParams(
            # "arbitrary": batch axis runs sequentially on one core so the
            # program_id==0 scratch init above is always executed first.
            dimension_semantics=("arbitrary",),
            vmem_limit_bytes=vmem_limit),
        cost_estimate=cost,
    )(*xs_b, *extra)

    # pred: (N, Cls, 4H0, 4W0) bf16 (cheap HBM writeback), emb: f32 NCHW.
    return pred, emb


# --------------------------- pure-JAX reference ------------------------------

def _ref_conv3x3(x, w, b, relu):
    y = lax.conv_general_dilated(
        x, w, (1, 1), ((1, 1), (1, 1)),
        dimension_numbers=('NHWC', 'HWIO', 'NHWC'),
        precision=lax.Precision.HIGHEST) + b
    return jnp.maximum(y, 0.0) if relu else y


def _ref_conv1x1(x, w, b, relu):
    y = jnp.einsum('nhwc,cd->nhwd', x, w,
                   precision=lax.Precision.HIGHEST) + b
    return jnp.maximum(y, 0.0) if relu else y


def _ref_resize(x, ah, aw):
    y = jnp.einsum('ph,nhwc->npwc', ah, x, precision=lax.Precision.HIGHEST)
    return jnp.einsum('qw,npwc->npqc', aw, y, precision=lax.Precision.HIGHEST)


def ref_forward(xs_nchw, params):
    feats = [jnp.transpose(x, (0, 2, 3, 1)).astype(jnp.float32) for x in xs_nchw]
    ups = []
    (w0, b0), = params['upsamples'][0]
    ups.append(_ref_conv3x3(feats[0], w0, b0, True))
    for i in range(1, len(feats)):
        f = feats[i]
        for (w, b) in params['upsamples'][i]:
            f = _ref_conv3x3(f, w, b, True)
            Hin, Win = f.shape[1], f.shape[2]
            f = _ref_resize(f, interp_matrix(Hin, 2 * Hin),
                            interp_matrix(Win, 2 * Win))
        ups.append(f)
    for i in range(len(ups) - 1, 0, -1):
        ups[i - 1] = ups[i - 1] + ups[i]
    feat = ups[0]
    logits = _ref_conv1x1(feat, params['logits_w'], params['logits_b'], False)
    H, W = logits.shape[1], logits.shape[2]
    pred = _ref_resize(logits, interp_matrix(H, 4 * H), interp_matrix(W, 4 * W))
    emb = _ref_conv1x1(feat, params['emb_w'], params['emb_b'], True)
    return (jnp.transpose(pred, (0, 3, 1, 2)),
            jnp.transpose(emb, (0, 3, 1, 2)))


# --------------------------------- main --------------------------------------

if __name__ == "__main__":
    # Small, deterministic configuration consistent with the module.
    featmap_strides = [4, 8]
    in_channels = 8
    upsample_out_channels = 16
    embedding_out_channels = 16
    num_classes = 4
    N, H0, W0 = 2, 16, 16            # stride-4 map is 16x16, stride-8 map is 8x8

    key = jax.random.PRNGKey(0)
    keys = iter(jax.random.split(key, 32))

    def init(shape, scale=0.1):
        return (scale * jax.random.normal(next(keys), shape)).astype(jnp.float32)

    # upsamples[0]: one ConvModule 3x3 in->upsample_out
    params = {'upsamples': [[(init((3, 3, in_channels, upsample_out_channels)),
                              init((upsample_out_channels,)))]]}
    # upsamples[i>0]: num_blocks = log2(stride//4) UpsampleBlocks; first
    # (num_blocks-1) keep in_channels, the last maps to upsample_out_channels.
    for i in range(1, len(featmap_strides)):
        num_blocks = int(np.log2(featmap_strides[i] // 4))
        blocks = []
        for _ in range(num_blocks - 1):
            blocks.append((init((3, 3, in_channels, in_channels)),
                           init((in_channels,))))
        blocks.append((init((3, 3, in_channels, upsample_out_channels)),
                       init((upsample_out_channels,))))
        params['upsamples'].append(blocks)
    params['logits_w'] = init((upsample_out_channels, num_classes))
    params['logits_b'] = init((num_classes,))
    params['emb_w'] = init((upsample_out_channels, embedding_out_channels))
    params['emb_b'] = init((embedding_out_channels,))

    # Inputs (NCHW, like the PyTorch module receives from the FPN).
    x0 = jax.random.normal(next(keys), (N, in_channels, H0, W0), jnp.float32)
    x1 = jax.random.normal(next(keys), (N, in_channels, H0 // 2, W0 // 2),
                           jnp.float32)
    xs = [x0, x1]

    pred, emb = fcn_semantic_head_forward(xs, params)
    pred, emb = jax.block_until_ready((pred, emb))

    assert pred.shape == (N, num_classes, 4 * H0, 4 * W0), pred.shape
    assert emb.shape == (N, embedding_out_channels, H0, W0), emb.shape

    # Check against a pure-JAX f32 reference.  The kernel feeds the MXU bf16
    # operands and writes pred as bf16 (per the perf review), so the tolerance
    # is loosened accordingly.
    pred_ref, emb_ref = ref_forward(xs, params)
    np.testing.assert_allclose(np.asarray(pred.astype(jnp.float32)),
                               np.asarray(pred_ref), rtol=3e-2, atol=3e-2)
    np.testing.assert_allclose(np.asarray(emb), np.asarray(emb_ref),
                               rtol=3e-2, atol=3e-2)

    print("KERNEL_OK")
</pallas_src>

<mosaic_0001>
module attributes {stable_mosaic.version = 11 : i64} {
  func.func @kernel(%arg0: i32, %arg1: memref<1x8x16x16xbf16, #tpu.memory_space<vmem>>, %arg2: memref<1x8x8x8xbf16, #tpu.memory_space<vmem>>, %arg3: memref<16x73xbf16, #tpu.memory_space<vmem>>, %arg4: memref<16x73xbf16, #tpu.memory_space<vmem>>, %arg5: memref<16x8xbf16, #tpu.memory_space<vmem>>, %arg6: memref<8x16xbf16, #tpu.memory_space<vmem>>, %arg7: memref<20x16xbf16, #tpu.memory_space<vmem>>, %arg8: memref<20x1x1xf32, #tpu.memory_space<vmem>>, %arg9: memref<64x16xbf16, #tpu.memory_space<vmem>>, %arg10: memref<16x64xbf16, #tpu.memory_space<vmem>>, %arg11: memref<1x4x64x64xbf16, #tpu.memory_space<vmem>>, %arg12: memref<1x16x16x16xf32, #tpu.memory_space<vmem>>, %arg13: memref<8x18x18xbf16, #tpu.memory_space<vmem>>, %arg14: memref<73x16x16xbf16, #tpu.memory_space<vmem>>, %arg15: memref<8x10x10xbf16, #tpu.memory_space<vmem>>, %arg16: memref<73x8x8xbf16, #tpu.memory_space<vmem>>) attributes {dimension_semantics = [#tpu.dimension_semantics<arbitrary>], iteration_bounds = array<i64: 2>, scalar_prefetch = 0 : i64, scratch_operands = 4 : i64, tpu.core_type = #tpu.core_type<tc>, window_params = [{transform_indices = @transform_0, window_bounds = array<i64: 1, 8, 16, 16>}, {transform_indices = @transform_1, window_bounds = array<i64: 1, 8, 8, 8>}, {pipeline_mode = #tpu.pipeline_mode<synchronous>, transform_indices = @transform_2, window_bounds = array<i64: 16, 73>}, {pipeline_mode = #tpu.pipeline_mode<synchronous>, transform_indices = @transform_3, window_bounds = array<i64: 16, 73>}, {pipeline_mode = #tpu.pipeline_mode<synchronous>, transform_indices = @transform_4, window_bounds = array<i64: 16, 8>}, {pipeline_mode = #tpu.pipeline_mode<synchronous>, transform_indices = @transform_5, window_bounds = array<i64: 8, 16>}, {pipeline_mode = #tpu.pipeline_mode<synchronous>, transform_indices = @transform_6, window_bounds = array<i64: 20, 16>}, {pipeline_mode = #tpu.pipeline_mode<synchronous>, transform_indices = @transform_7, window_bounds = array<i64: 20, 1, 1>}, {pipeline_mode = #tpu.pipeline_mode<synchronous>, transform_indices = @transform_8, window_bounds = array<i64: 64, 16>}, {pipeline_mode = #tpu.pipeline_mode<synchronous>, transform_indices = @transform_9, window_bounds = array<i64: 16, 64>}, {transform_indices = @transform_10, window_bounds = array<i64: 1, 4, 64, 64>}, {transform_indices = @transform_11, window_bounds = array<i64: 1, 16, 16, 16>}]} {
    %c0_i32 = arith.constant 0 : i32
    %0 = arith.cmpi eq, %arg0, %c0_i32 : i32
    %1 = arith.extui %0 : i1 to i32
    %c0_i32_0 = arith.constant 0 : i32
    %2 = arith.cmpi ne, %1, %c0_i32_0 : i32
    scf.if %2 {
      %cst_152 = arith.constant 0.000000e+00 : bf16
      %93 = vector.broadcast %cst_152 : bf16 to vector<8x18x18xbf16>
      %c0_153 = arith.constant 0 : index
      %c0_154 = arith.constant 0 : index
      %c0_155 = arith.constant 0 : index
      %94 = vector.load %arg13[%c0_153, %c0_154, %c0_155] : memref<8x18x18xbf16, #tpu.memory_space<vmem>>, vector<8x18x18xbf16>
      tpu.vector_store %arg13[%c0_153, %c0_154, %c0_155], %93 {strides = array<i32>} : memref<8x18x18xbf16, #tpu.memory_space<vmem>>, vector<8x18x18xbf16>,
      %cst_156 = arith.constant 0.000000e+00 : bf16
      %95 = vector.broadcast %cst_156 : bf16 to vector<8x10x10xbf16>
      %c0_157 = arith.constant 0 : index
      %c0_158 = arith.constant 0 : index
      %c0_159 = arith.constant 0 : index
      %96 = vector.load %arg15[%c0_157, %c0_158, %c0_159] : memref<8x10x10xbf16, #tpu.memory_space<vmem>>, vector<8x10x10xbf16>
      tpu.vector_store %arg15[%c0_157, %c0_158, %c0_159], %95 {strides = array<i32>} : memref<8x10x10xbf16, #tpu.memory_space<vmem>>, vector<8x10x10xbf16>,
      %cst_160 = arith.constant 1.000000e+00 : bf16
      %97 = vector.broadcast %cst_160 : bf16 to vector<1x16x16xbf16>
      %c72 = arith.constant 72 : index
      %c0_161 = arith.constant 0 : index
      %c0_162 = arith.constant 0 : index
      %98 = vector.load %arg14[%c72, %c0_161, %c0_162] : memref<73x16x16xbf16, #tpu.memory_space<vmem>>, vector<1x16x16xbf16>
      tpu.vector_store %arg14[%c72, %c0_161, %c0_162], %97 {strides = array<i32>} : memref<73x16x16xbf16, #tpu.memory_space<vmem>>, vector<1x16x16xbf16>,
      %cst_163 = arith.constant 1.000000e+00 : bf16
      %99 = vector.broadcast %cst_163 : bf16 to vector<1x8x8xbf16>
      %c72_164 = arith.constant 72 : index
      %c0_165 = arith.constant 0 : index
      %c0_166 = arith.constant 0 : index
      %100 = vector.load %arg16[%c72_164, %c0_165, %c0_166] : memref<73x8x8xbf16, #tpu.memory_space<vmem>>, vector<1x8x8xbf16>
      tpu.vector_store %arg16[%c72_164, %c0_165, %c0_166], %99 {strides = array<i32>} : memref<73x8x8xbf16, #tpu.memory_space<vmem>>, vector<1x8x8xbf16>,
    } else {
    }
    %c0 = arith.constant 0 : index
    %c0_1 = arith.constant 0 : index
    %c0_2 = arith.constant 0 : index
    %c0_3 = arith.constant 0 : index
    %3 = vector.load %arg1[%c0, %c0_1, %c0_2, %c0_3] : memref<1x8x16x16xbf16, #tpu.memory_space<vmem>>, vector<1x8x16x16xbf16>
    %4 = vector.shape_cast %3 : vector<1x8x16x16xbf16> to vector<8x16x16xbf16>
    %c0_4 = arith.constant 0 : index
    %c1 = arith.constant 1 : index
    %c1_5 = arith.constant 1 : index
    %5 = vector.load %arg13[%c0_4, %c1, %c1_5] : memref<8x18x18xbf16, #tpu.memory_space<vmem>>, vector<8x16x16xbf16>
    tpu.vector_store %arg13[%c0_4, %c1, %c1_5], %4 {strides = array<i32>} : memref<8x18x18xbf16, #tpu.memory_space<vmem>>, vector<8x16x16xbf16>,
    %c0_6 = arith.constant 0 : index
    %c0_7 = arith.constant 0 : index
    %c0_8 = arith.constant 0 : index
    %6 = vector.load %arg13[%c0_6, %c0_7, %c0_8] : memref<8x18x18xbf16, #tpu.memory_space<vmem>>, vector<8x16x16xbf16>
    %c0_9 = arith.constant 0 : index
    %c0_10 = arith.constant 0 : index
    %c0_11 = arith.constant 0 : index
    %7 = vector.load %arg14[%c0_9, %c0_10, %c0_11] : memref<73x16x16xbf16, #tpu.memory_space<vmem>>, vector<8x16x16xbf16>
    tpu.vector_store %arg14[%c0_9, %c0_10, %c0_11], %6 {strides = array<i32>} : memref<73x16x16xbf16, #tpu.memory_space<vmem>>, vector<8x16x16xbf16>,
    %c0_12 = arith.constant 0 : index
    %c0_13 = arith.constant 0 : index
    %c1_14 = arith.constant 1 : index
    %8 = vector.load %arg13[%c0_12, %c0_13, %c1_14] : memref<8x18x18xbf16, #tpu.memory_space<vmem>>, vector<8x16x16xbf16>
    %c8 = arith.constant 8 : index
    %c0_15 = arith.constant 0 : index
    %c0_16 = arith.constant 0 : index
    %9 = vector.load %arg14[%c8, %c0_15, %c0_16] : memref<73x16x16xbf16, #tpu.memory_space<vmem>>, vector<8x16x16xbf16>
    tpu.vector_store %arg14[%c8, %c0_15, %c0_16], %8 {strides = array<i32>} : memref<73x16x16xbf16, #tpu.memory_space<vmem>>, vector<8x16x16xbf16>,
    %c0_17 = arith.constant 0 : index
    %c0_18 = arith.constant 0 : index
    %c2 = arith.constant 2 : index
    %10 = vector.load %arg13[%c0_17, %c0_18, %c2] : memref<8x18x18xbf16, #tpu.memory_space<vmem>>, vector<8x16x16xbf16>
    %c16 = arith.constant 16 : index
    %c0_19 = arith.constant 0 : index
    %c0_20 = arith.constant 0 : index
    %11 = vector.load %arg14[%c16, %c0_19, %c0_20] : memref<73x16x16xbf16, #tpu.memory_space<vmem>>, vector<8x16x16xbf16>
    tpu.vector_store %arg14[%c16, %c0_19, %c0_20], %10 {strides = array<i32>} : memref<73x16x16xbf16, #tpu.memory_space<vmem>>, vector<8x16x16xbf16>,
    %c0_21 = arith.constant 0 : index
    %c1_22 = arith.constant 1 : index
    %c0_23 = arith.constant 0 : index
    %12 = vector.load %arg13[%c0_21, %c1_22, %c0_23] : memref<8x18x18xbf16, #tpu.memory_space<vmem>>, vector<8x16x16xbf16>
    %c24 = arith.constant 24 : index
    %c0_24 = arith.constant 0 : index
    %c0_25 = arith.constant 0 : index
    %13 = vector.load %arg14[%c24, %c0_24, %c0_25] : memref<73x16x16xbf16, #tpu.memory_space<vmem>>, vector<8x16x16xbf16>
    tpu.vector_store %arg14[%c24, %c0_24, %c0_25], %12 {strides = array<i32>} : memref<73x16x16xbf16, #tpu.memory_space<vmem>>, vector<8x16x16xbf16>,
    %c0_26 = arith.constant 0 : index
    %c1_27 = arith.constant 1 : index
    %c1_28 = arith.constant 1 : index
    %14 = vector.load %arg13[%c0_26, %c1_27, %c1_28] : memref<8x18x18xbf16, #tpu.memory_space<vmem>>, vector<8x16x16xbf16>
    %c32 = arith.constant 32 : index
    %c0_29 = arith.constant 0 : index
    %c0_30 = arith.constant 0 : index
    %15 = vector.load %arg14[%c32, %c0_29, %c0_30] : memref<73x16x16xbf16, #tpu.memory_space<vmem>>, vector<8x16x16xbf16>
    tpu.vector_store %arg14[%c32, %c0_29, %c0_30], %14 {strides = array<i32>} : memref<73x16x16xbf16, #tpu.memory_space<vmem>>, vector<8x16x16xbf16>,
    %c0_31 = arith.constant 0 : index
    %c1_32 = arith.constant 1 : index
    %c2_33 = arith.constant 2 : index
    %16 = vector.load %arg13[%c0_31, %c1_32, %c2_33] : memref<8x18x18xbf16, #tpu.memory_space<vmem>>, vector<8x16x16xbf16>
    %c40 = arith.constant 40 : index
    %c0_34 = arith.constant 0 : index
    %c0_35 = arith.constant 0 : index
    %17 = vector.load %arg14[%c40, %c0_34, %c0_35] : memref<73x16x16xbf16, #tpu.memory_space<vmem>>, vector<8x16x16xbf16>
    tpu.vector_store %arg14[%c40, %c0_34, %c0_35], %16 {strides = array<i32>} : memref<73x16x16xbf16, #tpu.memory_space<vmem>>, vector<8x16x16xbf16>,
    %c0_36 = arith.constant 0 : index
    %c2_37 = arith.constant 2 : index
    %c0_38 = arith.constant 0 : index
    %18 = vector.load %arg13[%c0_36, %c2_37, %c0_38] : memref<8x18x18xbf16, #tpu.memory_space<vmem>>, vector<8x16x16xbf16>
    %c48 = arith.constant 48 : index
    %c0_39 = arith.constant 0 : index
    %c0_40 = arith.constant 0 : index
    %19 = vector.load %arg14[%c48, %c0_39, %c0_40] : memref<73x16x16xbf16, #tpu.memory_space<vmem>>, vector<8x16x16xbf16>
    tpu.vector_store %arg14[%c48, %c0_39, %c0_40], %18 {strides = array<i32>} : memref<73x16x16xbf16, #tpu.memory_space<vmem>>, vector<8x16x16xbf16>,
    %c0_41 = arith.constant 0 : index
    %c2_42 = arith.constant 2 : index
    %c1_43 = arith.constant 1 : index
    %20 = vector.load %arg13[%c0_41, %c2_42, %c1_43] : memref<8x18x18xbf16, #tpu.memory_space<vmem>>, vector<8x16x16xbf16>
    %c56 = arith.constant 56 : index
    %c0_44 = arith.constant 0 : index
    %c0_45 = arith.constant 0 : index
    %21 = vector.load %arg14[%c56, %c0_44, %c0_45] : memref<73x16x16xbf16, #tpu.memory_space<vmem>>, vector<8x16x16xbf16>
    tpu.vector_store %arg14[%c56, %c0_44, %c0_45], %20 {strides = array<i32>} : memref<73x16x16xbf16, #tpu.memory_space<vmem>>, vector<8x16x16xbf16>,
    %c0_46 = arith.constant 0 : index
    %c2_47 = arith.constant 2 : index
    %c2_48 = arith.constant 2 : index
    %22 = vector.load %arg13[%c0_46, %c2_47, %c2_48] : memref<8x18x18xbf16, #tpu.memory_space<vmem>>, vector<8x16x16xbf16>
    %c64 = arith.constant 64 : index
    %c0_49 = arith.constant 0 : index
    %c0_50 = arith.constant 0 : index
    %23 = vector.load %arg14[%c64, %c0_49, %c0_50] : memref<73x16x16xbf16, #tpu.memory_space<vmem>>, vector<8x16x16xbf16>
    tpu.vector_store %arg14[%c64, %c0_49, %c0_50], %22 {strides = array<i32>} : memref<73x16x16xbf16, #tpu.memory_space<vmem>>, vector<8x16x16xbf16>,
    %c0_51 = arith.constant 0 : index
    %c0_52 = arith.constant 0 : index
    %24 = vector.load %arg3[%c0_51, %c0_52] : memref<16x73xbf16, #tpu.memory_space<vmem>>, vector<16x73xbf16>
    %c0_53 = arith.constant 0 : index
    %c0_54 = arith.constant 0 : index
    %c0_55 = arith.constant 0 : index
    %25 = vector.load %arg14[%c0_53, %c0_54, %c0_55] : memref<73x16x16xbf16, #tpu.memory_space<vmem>>, vector<73x16x16xbf16>
    "tpu.trace_start"() <{level = 10 : i32, message = "of,fhw->ohw"}> : () -> ()
    %cst = arith.constant dense<0.000000e+00> : vector<16x16x16xf32>
    %26 = tpu.matmul %24, %25, %cst {dimension_numbers = #tpu.dot_dimension_numbers<[1], [0], [0], [1, 2], [0, 0, 1, 1, 1, 2], [], []>} : vector<16x73xbf16>, vector<73x16x16xbf16>, vector<16x16x16xf32> -> vector<16x16x16xf32>
    "tpu.trace_stop"() : () -> ()
    %cst_56 = arith.constant 0.000000e+00 : f32
    %27 = vector.broadcast %cst_56 : f32 to vector<16x16x16xf32>
    %28 = arith.maximumf %26, %27 : vector<16x16x16xf32>
    %c0_57 = arith.constant 0 : index
    %c0_58 = arith.constant 0 : index
    %c0_59 = arith.constant 0 : index
    %c0_60 = arith.constant 0 : index
    %29 = vector.load %arg2[%c0_57, %c0_58, %c0_59, %c0_60] : memref<1x8x8x8xbf16, #tpu.memory_space<vmem>>, vector<1x8x8x8xbf16>
    %30 = vector.shape_cast %29 : vector<1x8x8x8xbf16> to vector<8x8x8xbf16>
    %c0_61 = arith.constant 0 : index
    %c1_62 = arith.constant 1 : index
    %c1_63 = arith.constant 1 : index
    %31 = vector.load %arg15[%c0_61, %c1_62, %c1_63] : memref<8x10x10xbf16, #tpu.memory_space<vmem>>, vector<8x8x8xbf16>
    tpu.vector_store %arg15[%c0_61, %c1_62, %c1_63], %30 {strides = array<i32>} : memref<8x10x10xbf16, #tpu.memory_space<vmem>>, vector<8x8x8xbf16>,
    %c0_64 = arith.constant 0 : index
    %c0_65 = arith.constant 0 : index
    %c0_66 = arith.constant 0 : index
    %32 = vector.load %arg15[%c0_64, %c0_65, %c0_66] : memref<8x10x10xbf16, #tpu.memory_space<vmem>>, vector<8x8x8xbf16>
    %c0_67 = arith.constant 0 : index
    %c0_68 = arith.constant 0 : index
    %c0_69 = arith.constant 0 : index
    %33 = vector.load %arg16[%c0_67, %c0_68, %c0_69] : memref<73x8x8xbf16, #tpu.memory_space<vmem>>, vector<8x8x8xbf16>
    tpu.vector_store %arg16[%c0_67, %c0_68, %c0_69], %32 {strides = array<i32>} : memref<73x8x8xbf16, #tpu.memory_space<vmem>>, vector<8x8x8xbf16>,
    %c0_70 = arith.constant 0 : index
    %c0_71 = arith.constant 0 : index
    %c1_72 = arith.constant 1 : index
    %34 = vector.load %arg15[%c0_70, %c0_71, %c1_72] : memref<8x10x10xbf16, #tpu.memory_space<vmem>>, vector<8x8x8xbf16>
    %c8_73 = arith.constant 8 : index
    %c0_74 = arith.constant 0 : index
    %c0_75 = arith.constant 0 : index
    %35 = vector.load %arg16[%c8_73, %c0_74, %c0_75] : memref<73x8x8xbf16, #tpu.memory_space<vmem>>, vector<8x8x8xbf16>
    tpu.vector_store %arg16[%c8_73, %c0_74, %c0_75], %34 {strides = array<i32>} : memref<73x8x8xbf16, #tpu.memory_space<vmem>>, vector<8x8x8xbf16>,
    %c0_76 = arith.constant 0 : index
    %c0_77 = arith.constant 0 : index
    %c2_78 = arith.constant 2 : index
    %36 = vector.load %arg15[%c0_76, %c0_77, %c2_78] : memref<8x10x10xbf16, #tpu.memory_space<vmem>>, vector<8x8x8xbf16>
    %c16_79 = arith.constant 16 : index
    %c0_80 = arith.constant 0 : index
    %c0_81 = arith.constant 0 : index
    %37 = vector.load %arg16[%c16_79, %c0_80, %c0_81] : memref<73x8x8xbf16, #tpu.memory_space<vmem>>, vector<8x8x8xbf16>
    tpu.vector_store %arg16[%c16_79, %c0_80, %c0_81], %36 {strides = array<i32>} : memref<73x8x8xbf16, #tpu.memory_space<vmem>>, vector<8x8x8xbf16>,
    %c0_82 = arith.constant 0 : index
    %c1_83 = arith.constant 1 : index
    %c0_84 = arith.constant 0 : index
    %38 = vector.load %arg15[%c0_82, %c1_83, %c0_84] : memref<8x10x10xbf16, #tpu.memory_space<vmem>>, vector<8x8x8xbf16>
    %c24_85 = arith.constant 24 : index
    %c0_86 = arith.constant 0 : index
    %c0_87 = arith.constant 0 : index
    %39 = vector.load %arg16[%c24_85, %c0_86, %c0_87] : memref<73x8x8xbf16, #tpu.memory_space<vmem>>, vector<8x8x8xbf16>
    tpu.vector_store %arg16[%c24_85, %c0_86, %c0_87], %38 {strides = array<i32>} : memref<73x8x8xbf16, #tpu.memory_space<vmem>>, vector<8x8x8xbf16>,
    %c0_88 = arith.constant 0 : index
    %c1_89 = arith.constant 1 : index
    %c1_90 = arith.constant 1 : index
    %40 = vector.load %arg15[%c0_88, %c1_89, %c1_90] : memref<8x10x10xbf16, #tpu.memory_space<vmem>>, vector<8x8x8xbf16>
    %c32_91 = arith.constant 32 : index
    %c0_92 = arith.constant 0 : index
    %c0_93 = arith.constant 0 : index
    %41 = vector.load %arg16[%c32_91, %c0_92, %c0_93] : memref<73x8x8xbf16, #tpu.memory_space<vmem>>, vector<8x8x8xbf16>
    tpu.vector_store %arg16[%c32_91, %c0_92, %c0_93], %40 {strides = array<i32>} : memref<73x8x8xbf16, #tpu.memory_space<vmem>>, vector<8x8x8xbf16>,
    %c0_94 = arith.constant 0 : index
    %c1_95 = arith.constant 1 : index
    %c2_96 = arith.constant 2 : index
    %42 = vector.load %arg15[%c0_94, %c1_95, %c2_96] : memref<8x10x10xbf16, #tpu.memory_space<vmem>>, vector<8x8x8xbf16>
    %c40_97 = arith.constant 40 : index
    %c0_98 = arith.constant 0 : index
    %c0_99 = arith.constant 0 : index
    %43 = vector.load %arg16[%c40_97, %c0_98, %c0_99] : memref<73x8x8xbf16, #tpu.memory_space<vmem>>, vector<8x8x8xbf16>
    tpu.vector_store %arg16[%c40_97, %c0_98, %c0_99], %42 {strides = array<i32>} : memref<73x8x8xbf16, #tpu.memory_space<vmem>>, vector<8x8x8xbf16>,
    %c0_100 = arith.constant 0 : index
    %c2_101 = arith.constant 2 : index
    %c0_102 = arith.constant 0 : index
    %44 = vector.load %arg15[%c0_100, %c2_101, %c0_102] : memref<8x10x10xbf16, #tpu.memory_space<vmem>>, vector<8x8x8xbf16>
    %c48_103 = arith.constant 48 : index
    %c0_104 = arith.constant 0 : index
    %c0_105 = arith.constant 0 : index
    %45 = vector.load %arg16[%c48_103, %c0_104, %c0_105] : memref<73x8x8xbf16, #tpu.memory_space<vmem>>, vector<8x8x8xbf16>
    tpu.vector_store %arg16[%c48_103, %c0_104, %c0_105], %44 {strides = array<i32>} : memref<73x8x8xbf16, #tpu.memory_space<vmem>>, vector<8x8x8xbf16>,
    %c0_106 = arith.constant 0 : index
    %c2_107 = arith.constant 2 : index
    %c1_108 = arith.constant 1 : index
    %46 = vector.load %arg15[%c0_106, %c2_107, %c1_108] : memref<8x10x10xbf16, #tpu.memory_space<vmem>>, vector<8x8x8xbf16>
    %c56_109 = arith.constant 56 : index
    %c0_110 = arith.constant 0 : index
    %c0_111 = arith.constant 0 : index
    %47 = vector.load %arg16[%c56_109, %c0_110, %c0_111] : memref<73x8x8xbf16, #tpu.memory_space<vmem>>, vector<8x8x8xbf16>
    tpu.vector_store %arg16[%c56_109, %c0_110, %c0_111], %46 {strides = array<i32>} : memref<73x8x8xbf16, #tpu.memory_space<vmem>>, vector<8x8x8xbf16>,
    %c0_112 = arith.constant 0 : index
    %c2_113 = arith.constant 2 : index
    %c2_114 = arith.constant 2 : index
    %48 = vector.load %arg15[%c0_112, %c2_113, %c2_114] : memref<8x10x10xbf16, #tpu.memory_space<vmem>>, vector<8x8x8xbf16>
    %c64_115 = arith.constant 64 : index
    %c0_116 = arith.constant 0 : index
    %c0_117 = arith.constant 0 : index
    %49 = vector.load %arg16[%c64_115, %c0_116, %c0_117] : memref<73x8x8xbf16, #tpu.memory_space<vmem>>, vector<8x8x8xbf16>
    tpu.vector_store %arg16[%c64_115, %c0_116, %c0_117], %48 {strides = array<i32>} : memref<73x8x8xbf16, #tpu.memory_space<vmem>>, vector<8x8x8xbf16>,
    %c0_118 = arith.constant 0 : index
    %c0_119 = arith.constant 0 : index
    %50 = vector.load %arg4[%c0_118, %c0_119] : memref<16x73xbf16, #tpu.memory_space<vmem>>, vector<16x73xbf16>
    %c0_120 = arith.constant 0 : index
    %c0_121 = arith.constant 0 : index
    %c0_122 = arith.constant 0 : index
    %51 = vector.load %arg16[%c0_120, %c0_121, %c0_122] : memref<73x8x8xbf16, #tpu.memory_space<vmem>>, vector<73x8x8xbf16>
    "tpu.trace_start"() <{level = 10 : i32, message = "of,fhw->ohw"}> : () -> ()
    %cst_123 = arith.constant dense<0.000000e+00> : vector<16x8x8xf32>
    %52 = tpu.matmul %50, %51, %cst_123 {dimension_numbers = #tpu.dot_dimension_numbers<[1], [0], [0], [1, 2], [0, 0, 1, 1, 1, 2], [], []>} : vector<16x73xbf16>, vector<73x8x8xbf16>, vector<16x8x8xf32> -> vector<16x8x8xf32>
    "tpu.trace_stop"() : () -> ()
    %cst_124 = arith.constant 0.000000e+00 : f32
    %53 = vector.broadcast %cst_124 : f32 to vector<16x8x8xf32>
    %54 = arith.maximumf %52, %53 : vector<16x8x8xf32>
    %c0_125 = arith.constant 0 : index
    %c0_126 = arith.constant 0 : index
    %55 = vector.load %arg6[%c0_125, %c0_126] : memref<8x16xbf16, #tpu.memory_space<vmem>>, vector<8x16xbf16>
    %56 = vector.shape_cast %55 : vector<8x16xbf16> to vector<1x8x16xbf16>
    %57 = vector.broadcast %56 : vector<1x8x16xbf16> to vector<16x8x16xbf16>
    %c0_127 = arith.constant 0 : index
    %c0_128 = arith.constant 0 : index
    %58 = vector.load %arg5[%c0_127, %c0_128] : memref<16x8xbf16, #tpu.memory_space<vmem>>, vector<16x8xbf16>
    %59 = vector.shape_cast %58 : vector<16x8xbf16> to vector<1x16x8xbf16>
    %60 = vector.broadcast %59 : vector<1x16x8xbf16> to vector<16x16x8xbf16>
    %61 = arith.truncf %54 : vector<16x8x8xf32> to vector<16x8x8xbf16>
    "tpu.trace_start"() <{level = 10 : i32, message = "chw,cwq->chq"}> : () -> ()
    %cst_129 = arith.constant dense<0.000000e+00> : vector<16x8x16xf32>
    %62 = tpu.matmul %61, %57, %cst_129 {dimension_numbers = #tpu.dot_dimension_numbers<[2], [1], [1], [2], [0, 0, 0, 1, 1, 2], [0], [0]>} : vector<16x8x8xbf16>, vector<16x8x16xbf16>, vector<16x8x16xf32> -> vector<16x8x16xf32>
    "tpu.trace_stop"() : () -> ()
    %63 = arith.truncf %62 : vector<16x8x16xf32> to vector<16x8x16xbf16>
    "tpu.trace_start"() <{level = 10 : i32, message = "cph,chq->cpq"}> : () -> ()
    %cst_130 = arith.constant dense<0.000000e+00> : vector<16x16x16xf32>
    %64 = tpu.matmul %60, %63, %cst_130 {dimension_numbers = #tpu.dot_dimension_numbers<[2], [1], [1], [2], [0, 0, 0, 1, 1, 2], [0], [0]>} : vector<16x16x8xbf16>, vector<16x8x16xbf16>, vector<16x16x16xf32> -> vector<16x16x16xf32>
    "tpu.trace_stop"() : () -> ()
    %65 = arith.addf %28, %64 : vector<16x16x16xf32>
    %c0_131 = arith.constant 0 : index
    %c0_132 = arith.constant 0 : index
    %66 = vector.load %arg7[%c0_131, %c0_132] : memref<20x16xbf16, #tpu.memory_space<vmem>>, vector<20x16xbf16>
    %67 = arith.truncf %65 : vector<16x16x16xf32> to vector<16x16x16xbf16>
    "tpu.trace_start"() <{level = 10 : i32, message = "of,fhw->ohw"}> : () -> ()
    %cst_133 = arith.constant dense<0.000000e+00> : vector<20x16x16xf32>
    %68 = tpu.matmul %66, %67, %cst_133 {dimension_numbers = #tpu.dot_dimension_numbers<[1], [0], [0], [1, 2], [0, 0, 1, 1, 1, 2], [], []>} : vector<20x16xbf16>, vector<16x16x16xbf16>, vector<20x16x16xf32> -> vector<20x16x16xf32>
    "tpu.trace_stop"() : () -> ()
    %c0_134 = arith.constant 0 : index
    %c0_135 = arith.constant 0 : index
    %c0_136 = arith.constant 0 : index
    %69 = vector.load %arg8[%c0_134, %c0_135, %c0_136] : memref<20x1x1xf32, #tpu.memory_space<vmem>>, vector<20x1x1xf32>
    %70 = vector.broadcast %69 : vector<20x1x1xf32> to vector<20x16x16xf32>
    %71 = arith.addf %68, %70 : vector<20x16x16xf32>
    %72 = vector.extract_strided_slice %71 {offsets = [4, 0, 0], sizes = [16, 16, 16], strides = [1, 1, 1]} : vector<20x16x16xf32> to vector<16x16x16xf32>
    %cst_137 = arith.constant 0.000000e+00 : f32
    %73 = vector.broadcast %cst_137 : f32 to vector<16x16x16xf32>
    %74 = arith.maximumf %72, %73 : vector<16x16x16xf32>
    %c0_138 = arith.constant 0 : index
    %c0_139 = arith.constant 0 : index
    %c0_140 = arith.constant 0 : index
    %c0_141 = arith.constant 0 : index
    %75 = vector.load %arg12[%c0_138, %c0_139, %c0_140, %c0_141] : memref<1x16x16x16xf32, #tpu.memory_space<vmem>>, vector<1x16x16x16xf32>
    %76 = vector.shape_cast %75 : vector<1x16x16x16xf32> to vector<16x16x16xf32>
    %77 = vector.shape_cast %74 : vector<16x16x16xf32> to vector<1x16x16x16xf32>
    tpu.vector_store %arg12[%c0_138, %c0_139, %c0_140, %c0_141], %77 {strides = array<i32>} : memref<1x16x16x16xf32, #tpu.memory_space<vmem>>, vector<1x16x16x16xf32>,
    %78 = vector.extract_strided_slice %71 {offsets = [0, 0, 0], sizes = [4, 16, 16], strides = [1, 1, 1]} : vector<20x16x16xf32> to vector<4x16x16xf32>
    %c0_142 = arith.constant 0 : index
    %c0_143 = arith.constant 0 : index
    %79 = vector.load %arg10[%c0_142, %c0_143] : memref<16x64xbf16, #tpu.memory_space<vmem>>, vector<16x64xbf16>
    %80 = vector.shape_cast %79 : vector<16x64xbf16> to vector<1x16x64xbf16>
    %81 = vector.broadcast %80 : vector<1x16x64xbf16> to vector<4x16x64xbf16>
    %c0_144 = arith.constant 0 : index
    %c0_145 = arith.constant 0 : index
    %82 = vector.load %arg9[%c0_144, %c0_145] : memref<64x16xbf16, #tpu.memory_space<vmem>>, vector<64x16xbf16>
    %83 = vector.shape_cast %82 : vector<64x16xbf16> to vector<1x64x16xbf16>
    %84 = vector.broadcast %83 : vector<1x64x16xbf16> to vector<4x64x16xbf16>
    %85 = arith.truncf %78 : vector<4x16x16xf32> to vector<4x16x16xbf16>
    "tpu.trace_start"() <{level = 10 : i32, message = "chw,cwq->chq"}> : () -> ()
    %cst_146 = arith.constant dense<0.000000e+00> : vector<4x16x64xf32>
    %86 = tpu.matmul %85, %81, %cst_146 {dimension_numbers = #tpu.dot_dimension_numbers<[2], [1], [1], [2], [0, 0, 0, 1, 1, 2], [0], [0]>} : vector<4x16x16xbf16>, vector<4x16x64xbf16>, vector<4x16x64xf32> -> vector<4x16x64xf32>
    "tpu.trace_stop"() : () -> ()
    %87 = arith.truncf %86 : vector<4x16x64xf32> to vector<4x16x64xbf16>
    "tpu.trace_start"() <{level = 10 : i32, message = "cph,chq->cpq"}> : () -> ()
    %cst_147 = arith.constant dense<0.000000e+00> : vector<4x64x64xf32>
    %88 = tpu.matmul %84, %87, %cst_147 {dimension_numbers = #tpu.dot_dimension_numbers<[2], [1], [1], [2], [0, 0, 0, 1, 1, 2], [0], [0]>} : vector<4x64x16xbf16>, vector<4x16x64xbf16>, vector<4x64x64xf32> -> vector<4x64x64xf32>
    "tpu.trace_stop"() : () -> ()
    %89 = arith.truncf %88 : vector<4x64x64xf32> to vector<4x64x64xbf16>
    %c0_148 = arith.constant 0 : index
    %c0_149 = arith.constant 0 : index
    %c0_150 = arith.constant 0 : index
    %c0_151 = arith.constant 0 : index
    %90 = vector.load %arg11[%c0_148, %c0_149, %c0_150, %c0_151] : memref<1x4x64x64xbf16, #tpu.memory_space<vmem>>, vector<1x4x64x64xbf16>
    %91 = vector.shape_cast %90 : vector<1x4x64x64xbf16> to vector<4x64x64xbf16>
    %92 = vector.shape_cast %89 : vector<4x64x64xbf16> to vector<1x4x64x64xbf16>
    tpu.vector_store %arg11[%c0_148, %c0_149, %c0_150, %c0_151], %92 {strides = array<i32>} : memref<1x4x64x64xbf16, #tpu.memory_space<vmem>>, vector<1x4x64x64xbf16>,
    return
  }
  func.func @transform_0(%arg0: i32) -> (i32, i32, i32, i32) {
    %c0_i32 = arith.constant 0 : i32
    %c0_i32_0 = arith.constant 0 : i32
    %c0_i32_1 = arith.constant 0 : i32
    %c0_i32_2 = arith.constant 0 : i32
    return %arg0, %c0_i32, %c0_i32_0, %c0_i32_1 : i32, i32, i32, i32
  }
  func.func @transform_1(%arg0: i32) -> (i32, i32, i32, i32) {
    %c0_i32 = arith.constant 0 : i32
    %c0_i32_0 = arith.constant 0 : i32
    %c0_i32_1 = arith.constant 0 : i32
    %c0_i32_2 = arith.constant 0 : i32
    return %arg0, %c0_i32, %c0_i32_0, %c0_i32_1 : i32, i32, i32, i32
  }
  func.func @transform_2(%arg0: i32) -> (i32, i32) {
    %c0_i32 = arith.constant 0 : i32
    %c0_i32_0 = arith.constant 0 : i32
    %c0_i32_1 = arith.constant 0 : i32
    return %c0_i32, %c0_i32_0 : i32, i32
  }
  func.func @transform_3(%arg0: i32) -> (i32, i32) {
    %c0_i32 = arith.constant 0 : i32
    %c0_i32_0 = arith.constant 0 : i32
    %c0_i32_1 = arith.constant 0 : i32
    return %c0_i32, %c0_i32_0 : i32, i32
  }
  func.func @transform_4(%arg0: i32) -> (i32, i32) {
    %c0_i32 = arith.constant 0 : i32
    %c0_i32_0 = arith.constant 0 : i32
    %c0_i32_1 = arith.constant 0 : i32
    return %c0_i32, %c0_i32_0 : i32, i32
  }
  func.func @transform_5(%arg0: i32) -> (i32, i32) {
    %c0_i32 = arith.constant 0 : i32
    %c0_i32_0 = arith.constant 0 : i32
    %c0_i32_1 = arith.constant 0 : i32
    return %c0_i32, %c0_i32_0 : i32, i32
  }
  func.func @transform_6(%arg0: i32) -> (i32, i32) {
    %c0_i32 = arith.constant 0 : i32
    %c0_i32_0 = arith.constant 0 : i32
    %c0_i32_1 = arith.constant 0 : i32
    return %c0_i32, %c0_i32_0 : i32, i32
  }
  func.func @transform_7(%arg0: i32) -> (i32, i32, i32) {
    %c0_i32 = arith.constant 0 : i32
    %c0_i32_0 = arith.constant 0 : i32
    %c0_i32_1 = arith.constant 0 : i32
    %c0_i32_2 = arith.constant 0 : i32
    return %c0_i32, %c0_i32_0, %c0_i32_1 : i32, i32, i32
  }
  func.func @transform_8(%arg0: i32) -> (i32, i32) {
    %c0_i32 = arith.constant 0 : i32
    %c0_i32_0 = arith.constant 0 : i32
    %c0_i32_1 = arith.constant 0 : i32
    return %c0_i32, %c0_i32_0 : i32, i32
  }
  func.func @transform_9(%arg0: i32) -> (i32, i32) {
    %c0_i32 = arith.constant 0 : i32
    %c0_i32_0 = arith.constant 0 : i32
    %c0_i32_1 = arith.constant 0 : i32
    return %c0_i32, %c0_i32_0 : i32, i32
  }
  func.func @transform_10(%arg0: i32) -> (i32, i32, i32, i32) {
    %c0_i32 = arith.constant 0 : i32
    %c0_i32_0 = arith.constant 0 : i32
    %c0_i32_1 = arith.constant 0 : i32
    %c0_i32_2 = arith.constant 0 : i32
    return %arg0, %c0_i32, %c0_i32_0, %c0_i32_1 : i32, i32, i32, i32
  }
  func.func @transform_11(%arg0: i32) -> (i32, i32, i32, i32) {
    %c0_i32 = arith.constant 0 : i32
    %c0_i32_0 = arith.constant 0 : i32
    %c0_i32_1 = arith.constant 0 : i32
    %c0_i32_2 = arith.constant 0 : i32
    return %arg0, %c0_i32, %c0_i32_0, %c0_i32_1 : i32, i32, i32, i32
  }
}

</mosaic_0001>

<llo_original>
// kernel: tpu_custom_call.1
$region0: #{tpu_custom_call.1}
  #allocation0 [shape = 'u32[]', space=smem, size = 0x4, offset = 0x4, fixed_abs, tag = 'smem constant byte address 0x4 - core index']
  #allocation1 [shape = 'u32[144,128]{1,0:T(1,128)}', space=vmem, size = 0x12000, scoped, tag = 'internal scratch']
  #allocation2 [shape = 'bf16[8,18,18]{2,1,0:T(8,128)(2,1)}', space=vmem, size = 0xc000, scoped, tag = 'scratch operand']
  #allocation3 [shape = 'bf16[73,16,16]{2,1,0:T(16,128)(2,1)}', space=vmem, size = 0x49000, scoped, tag = 'scratch operand']
  #allocation4 [shape = 'bf16[8,10,10]{2,1,0:T(8,128)(2,1)}', space=vmem, size = 0x8000, scoped, tag = 'scratch operand']
  #allocation5 [shape = 'bf16[73,8,8]{2,1,0:T(8,128)(2,1)}', space=vmem, size = 0x24800, scoped, tag = 'scratch operand']
  %s0 = inlined_call_operand.hbm [shape: bf16[2,8,16,16], index: 0, kind: input, shape index: {}]
  %s1 = inlined_call_operand.vmem [shape: bf16[2,8,8,8], index: 1, kind: input, shape index: {}]
  %s2 = inlined_call_operand.vmem [shape: bf16[16,73], index: 2, kind: input, shape index: {}]
  %s3 = inlined_call_operand.vmem [shape: bf16[16,73], index: 3, kind: input, shape index: {}]
  %s4 = inlined_call_operand.vmem [shape: bf16[16,8], index: 4, kind: input, shape index: {}]
  %s5 = inlined_call_operand.vmem [shape: bf16[8,16], index: 5, kind: input, shape index: {}]
  %s6 = inlined_call_operand.vmem [shape: bf16[20,16], index: 6, kind: input, shape index: {}]
  %s7 = inlined_call_operand.vmem [shape: f32[20,1,1], index: 7, kind: input, shape index: {}]
  %s8 = inlined_call_operand.vmem [shape: bf16[64,16], index: 8, kind: input, shape index: {}]
  %s9 = inlined_call_operand.vmem [shape: bf16[16,64], index: 9, kind: input, shape index: {}]
  %s10 = inlined_call_operand.hbm [shape: bf16[2,4,64,64], index: 10, kind: output, shape index: {0}]
  %s11 = inlined_call_operand.hbm [shape: f32[2,16,16,16], index: 11, kind: output, shape index: {1}]
  %12 = xla_tuple %s10, %s11
  %s13 = sld [smem:[#allocation0]]
  $region89: #{tpu_custom_call.1} parent=0
    _
  %s15 = ssub.s32 1, %s13
  %s16 = scalar_select 0, %s15, %s13
  $region1: #{tpu_custom_call.1} parent=0
    #allocation6 [shape = 'u8[65536]{0}', space=vmem, size = 0x10000, scoped, tag = 'input window, operand 0']
    #allocation7 [shape = 's32[2]{0}', space=sflag, size = 0x8, scoped, tag = 'scoped memory for tpu_custom_call.1']
    #allocation8 [shape = 's32[2]{0}', space=sflag, size = 0x8, scoped, tag = 'scoped memory for tpu_custom_call.1']
    #allocation9 [shape = 'u8[131072]{0}', space=vmem, size = 0x20000, scoped, tag = 'output window, operand 0']
    #allocation10 [shape = 'u8[262144]{0}', space=vmem, size = 0x40000, scoped, tag = 'output window, operand 1']
    #allocation11 [shape = 's32[2]{0}', space=sflag, size = 0x8, scoped, tag = 'scoped memory for tpu_custom_call.1']
    %17 = vsyncpa [#allocation7], 0
    %s18 = scalar_lea.sflag [#allocation7], 1
    %19 = vsyncpa %s18, 0
    %20 = vsyncpa [#allocation8], 0
    %s21 = scalar_lea.sflag [#allocation8], 1
    %22 = vsyncpa %s21, 0
    %23 = vsyncpa [#allocation11], 0
    %s24 = scalar_lea.sflag [#allocation11], 1
    %25 = vsyncpa %s24, 0
    loop: start=0, step=1, limit=4
    $region2: #{tpu_custom_call.1} parent=1 // loop_pre_header
      _
    $region3: #{tpu_custom_call.1} parent=1 // loop_header
      %s27 = sphi 0, %s31
      %p28 = scmp.ge.s32.totalorder %s27, 4
      %s37 = sphi 0, %s39
      %s40 = sphi 0, %s37
      %s41 = sphi 0, %s40
      %s57 = sphi 0, %s41
      %s63 = sphi 0, %s65
      %s66 = sphi 0, %s63
      %s67 = sphi 0, %s66
      %s83 = sphi 0, %s67
      %s87 = sphi 0, %s87
      %s89 = sphi 0, %s87
      %s90 = sphi 0, %s89
      %s104 = sphi 0, %s90
      %s108 = sphi 0, %s108
      %s110 = sphi 0, %s108
      %s111 = sphi 0, %s110
      %s125 = sphi 0, %s111
      %s129 = sphi 0, %s129
      %s131 = sphi 0, %s129
      %s132 = sphi 0, %s131
      %s146 = sphi 0, %s132
      %s150 = sphi 0, %s150
      %s152 = sphi 0, %s150
      %s153 = sphi 0, %s152
      %s167 = sphi 0, %s153
      %s171 = sphi 0, %s171
      %s173 = sphi 0, %s171
      %s174 = sphi 0, %s173
      %s188 = sphi 0, %s174
      %s192 = sphi 0, %s192
      %s194 = sphi 0, %s192
      %s195 = sphi 0, %s194
      %s209 = sphi 0, %s195
      %s213 = sphi 0, %s213
      %s215 = sphi 0, %s213
      %s216 = sphi 0, %s215
      %s230 = sphi 0, %s216
      %s234 = sphi 0, %s234
      %s236 = sphi 0, %s234
      %s237 = sphi 0, %s236
      %s251 = sphi 0, %s237
      %s257 = sphi 0, %s259
      %s260 = sphi 0, %s257
      %s261 = sphi 0, %s260
      %s277 = sphi 0, %s261
      %s283 = sphi 0, %s285
      %s286 = sphi 0, %s283
      %s287 = sphi 0, %s286
      %s303 = sphi 0, %s287
    $region4: #{tpu_custom_call.1} parent=1 // loop_header_branch
      %30 = sbr.rel (%p28) target = $region8
    $region5: #{tpu_custom_call.1} parent=1 // loop_body
      %s32 = ssub.s32 %s27, 1
      %s33 = ssub.s32 %s27, 2
      %s34 = sadd.s32 %s27, 1
      %s35 = ssub.s32 %s27, %s34
      %p36 = scmp.eq.s32.totalorder %s35, 0
      %s38 = sadd.s32 %s37, 1
      %s39 = scalar_select %p36, %s37, %s38
      %p42 = pneg %p36
      %p43 = scmp.eq.s32.totalorder %s27, 1
      %p44 = por %p42, %p43
      %p45 = scmp.ne.s32.totalorder %s37, %s40
      %p46 = scmp.eq.s32.totalorder %s27, 0
      %p47 = por %p45, %p46
      %p48 = scmp.ne.s32.totalorder %s37, %s40
      %p49 = scmp.eq.s32.totalorder %s32, 1
      %p50 = por %p48, %p49
      %p51 = scmp.ne.s32.totalorder %s40, %s41
      %p52 = scmp.eq.s32.totalorder %s32, 0
      %p53 = por %p51, %p52
      %p54 = scmp.ne.s32.totalorder %s40, %s41
      %p55 = scmp.eq.s32.totalorder %s33, 1
      %p56 = por %p54, %p55
      %p58 = scmp.ne.s32.totalorder %s41, %s57
      %p59 = scmp.eq.s32.totalorder %s33, 0
      %p60 = por %p58, %p59
      %s61 = ssub.s32 %s27, %s34
      %p62 = scmp.eq.s32.totalorder %s61, 0
      %s64 = sadd.s32 %s63, 1
      %s65 = scalar_select %p62, %s63, %s64
      %p68 = pneg %p62
      %p69 = scmp.eq.s32.totalorder %s27, 1
      %p70 = por %p68, %p69
      %p71 = scmp.ne.s32.totalorder %s63, %s66
      %p72 = scmp.eq.s32.totalorder %s27, 0
      %p73 = por %p71, %p72
      %p74 = scmp.ne.s32.totalorder %s63, %s66
      %p75 = scmp.eq.s32.totalorder %s32, 1
      %p76 = por %p74, %p75
      %p77 = scmp.ne.s32.totalorder %s66, %s67
      %p78 = scmp.eq.s32.totalorder %s32, 0
      %p79 = por %p77, %p78
      %p80 = scmp.ne.s32.totalorder %s66, %s67
      %p81 = scmp.eq.s32.totalorder %s33, 1
      %p82 = por %p80, %p81
      %p84 = scmp.ne.s32.totalorder %s67, %s83
      %p85 = scmp.eq.s32.totalorder %s33, 0
      %p86 = por %p84, %p85
      %s88 = sadd.s32 %s87, 1
      %p91 = scmp.eq.s32.totalorder %s27, 1
      %p92 = scmp.ne.s32.totalorder %s87, %s89
      %p93 = scmp.eq.s32.totalorder %s27, 0
      %p94 = por %p92, %p93
      %p95 = scmp.ne.s32.totalorder %s87, %s89
      %p96 = scmp.eq.s32.totalorder %s32, 1
      %p97 = por %p95, %p96
      %p98 = scmp.ne.s32.totalorder %s89, %s90
      %p99 = scmp.eq.s32.totalorder %s32, 0
      %p100 = por %p98, %p99
      %p101 = scmp.ne.s32.totalorder %s89, %s90
      %p102 = scmp.eq.s32.totalorder %s33, 1
      %p103 = por %p101, %p102
      %p105 = scmp.ne.s32.totalorder %s90, %s104
      %p106 = scmp.eq.s32.totalorder %s33, 0
      %p107 = por %p105, %p106
      %s109 = sadd.s32 %s108, 1
      %p112 = scmp.eq.s32.totalorder %s27, 1
      %p113 = scmp.ne.s32.totalorder %s108, %s110
      %p114 = scmp.eq.s32.totalorder %s27, 0
      %p115 = por %p113, %p114
      %p116 = scmp.ne.s32.totalorder %s108, %s110
      %p117 = scmp.eq.s32.totalorder %s32, 1
      %p118 = por %p116, %p117
      %p119 = scmp.ne.s32.totalorder %s110, %s111
      %p120 = scmp.eq.s32.totalorder %s32, 0
      %p121 = por %p119, %p120
      %p122 = scmp.ne.s32.totalorder %s110, %s111
      %p123 = scmp.eq.s32.totalorder %s33, 1
      %p124 = por %p122, %p123
      %p126 = scmp.ne.s32.totalorder %s111, %s125
      %p127 = scmp.eq.s32.totalorder %s33, 0
      %p128 = por %p126, %p127
      %s130 = sadd.s32 %s129, 1
      %p133 = scmp.eq.s32.totalorder %s27, 1
      %p134 = scmp.ne.s32.totalorder %s129, %s131
      %p135 = scmp.eq.s32.totalorder %s27, 0
      %p136 = por %p134, %p135
      %p137 = scmp.ne.s32.totalorder %s129, %s131
      %p138 = scmp.eq.s32.totalorder %s32, 1
      %p139 = por %p137, %p138
      %p140 = scmp.ne.s32.totalorder %s131, %s132
      %p141 = scmp.eq.s32.totalorder %s32, 0
      %p142 = por %p140, %p141
      %p143 = scmp.ne.s32.totalorder %s131, %s132
      %p144 = scmp.eq.s32.totalorder %s33, 1
      %p145 = por %p143, %p144
      %p147 = scmp.ne.s32.totalorder %s132, %s146
      %p148 = scmp.eq.s32.totalorder %s33, 0
      %p149 = por %p147, %p148
      %s151 = sadd.s32 %s150, 1
      %p154 = scmp.eq.s32.totalorder %s27, 1
      %p155 = scmp.ne.s32.totalorder %s150, %s152
      %p156 = scmp.eq.s32.totalorder %s27, 0
      %p157 = por %p155, %p156
      %p158 = scmp.ne.s32.totalorder %s150, %s152
      %p159 = scmp.eq.s32.totalorder %s32, 1
      %p160 = por %p158, %p159
      %p161 = scmp.ne.s32.totalorder %s152, %s153
      %p162 = scmp.eq.s32.totalorder %s32, 0
      %p163 = por %p161, %p162
      %p164 = scmp.ne.s32.totalorder %s152, %s153
      %p165 = scmp.eq.s32.totalorder %s33, 1
      %p166 = por %p164, %p165
      %p168 = scmp.ne.s32.totalorder %s153, %s167
      %p169 = scmp.eq.s32.totalorder %s33, 0
      %p170 = por %p168, %p169
      %s172 = sadd.s32 %s171, 1
      %p175 = scmp.eq.s32.totalorder %s27, 1
      %p176 = scmp.ne.s32.totalorder %s171, %s173
      %p177 = scmp.eq.s32.totalorder %s27, 0
      %p178 = por %p176, %p177
      %p179 = scmp.ne.s32.totalorder %s171, %s173
      %p180 = scmp.eq.s32.totalorder %s32, 1
      %p181 = por %p179, %p180
      %p182 = scmp.ne.s32.totalorder %s173, %s174
      %p183 = scmp.eq.s32.totalorder %s32, 0
      %p184 = por %p182, %p183
      %p185 = scmp.ne.s32.totalorder %s173, %s174
      %p186 = scmp.eq.s32.totalorder %s33, 1
      %p187 = por %p185, %p186
      %p189 = scmp.ne.s32.totalorder %s174, %s188
      %p190 = scmp.eq.s32.totalorder %s33, 0
      %p191 = por %p189, %p190
      %s193 = sadd.s32 %s192, 1
      %p196 = scmp.eq.s32.totalorder %s27, 1
      %p197 = scmp.ne.s32.totalorder %s192, %s194
      %p198 = scmp.eq.s32.totalorder %s27, 0
      %p199 = por %p197, %p198
      %p200 = scmp.ne.s32.totalorder %s192, %s194
      %p201 = scmp.eq.s32.totalorder %s32, 1
      %p202 = por %p200, %p201
      %p203 = scmp.ne.s32.totalorder %s194, %s195
      %p204 = scmp.eq.s32.totalorder %s32, 0
      %p205 = por %p203, %p204
      %p206 = scmp.ne.s32.totalorder %s194, %s195
      %p207 = scmp.eq.s32.totalorder %s33, 1
      %p208 = por %p206, %p207
      %p210 = scmp.ne.s32.totalorder %s195, %s209
      %p211 = scmp.eq.s32.totalorder %s33, 0
      %p212 = por %p210, %p211
      %s214 = sadd.s32 %s213, 1
      %p217 = scmp.eq.s32.totalorder %s27, 1
      %p218 = scmp.ne.s32.totalorder %s213, %s215
      %p219 = scmp.eq.s32.totalorder %s27, 0
      %p220 = por %p218, %p219
      %p221 = scmp.ne.s32.totalorder %s213, %s215
      %p222 = scmp.eq.s32.totalorder %s32, 1
      %p223 = por %p221, %p222
      %p224 = scmp.ne.s32.totalorder %s215, %s216
      %p225 = scmp.eq.s32.totalorder %s32, 0
      %p226 = por %p224, %p225
      %p227 = scmp.ne.s32.totalorder %s215, %s216
      %p228 = scmp.eq.s32.totalorder %s33, 1
      %p229 = por %p227, %p228
      %p231 = scmp.ne.s32.totalorder %s216, %s230
      %p232 = scmp.eq.s32.totalorder %s33, 0
      %p233 = por %p231, %p232
      %s235 = sadd.s32 %s234, 1
      %p238 = scmp.eq.s32.totalorder %s27, 1
      %p239 = scmp.ne.s32.totalorder %s234, %s236
      %p240 = scmp.eq.s32.totalorder %s27, 0
      %p241 = por %p239, %p240
      %p242 = scmp.ne.s32.totalorder %s234, %s236
      %p243 = scmp.eq.s32.totalorder %s32, 1
      %p244 = por %p242, %p243
      %p245 = scmp.ne.s32.totalorder %s236, %s237
      %p246 = scmp.eq.s32.totalorder %s32, 0
      %p247 = por %p245, %p246
      %p248 = scmp.ne.s32.totalorder %s236, %s237
      %p249 = scmp.eq.s32.totalorder %s33, 1
      %p250 = por %p248, %p249
      %p252 = scmp.ne.s32.totalorder %s237, %s251
      %p253 = scmp.eq.s32.totalorder %s33, 0
      %p254 = por %p252, %p253
      %s255 = ssub.s32 %s27, %s34
      %p256 = scmp.eq.s32.totalorder %s255, 0
      %s258 = sadd.s32 %s257, 1
      %s259 = scalar_select %p256, %s257, %s258
      %p262 = pneg %p256
      %p263 = scmp.eq.s32.totalorder %s27, 1
      %p264 = por %p262, %p263
      %p265 = scmp.ne.s32.totalorder %s257, %s260
      %p266 = scmp.eq.s32.totalorder %s27, 0
      %p267 = por %p265, %p266
      %p268 = scmp.ne.s32.totalorder %s257, %s260
      %p269 = scmp.eq.s32.totalorder %s32, 1
      %p270 = por %p268, %p269
      %p271 = scmp.ne.s32.totalorder %s260, %s261
      %p272 = scmp.eq.s32.totalorder %s32, 0
      %p273 = por %p271, %p272
      %p274 = scmp.ne.s32.totalorder %s260, %s261
      %p275 = scmp.eq.s32.totalorder %s33, 1
      %p276 = por %p274, %p275
      %p278 = scmp.ne.s32.totalorder %s261, %s277
      %p279 = scmp.eq.s32.totalorder %s33, 0
      %p280 = por %p278, %p279
      %s281 = ssub.s32 %s27, %s34
      %p282 = scmp.eq.s32.totalorder %s281, 0
      %s284 = sadd.s32 %s283, 1
      %s285 = scalar_select %p282, %s283, %s284
      %p288 = pneg %p282
      %p289 = scmp.eq.s32.totalorder %s27, 1
      %p290 = por %p288, %p289
      %p291 = scmp.ne.s32.totalorder %s283, %s286
      %p292 = scmp.eq.s32.totalorder %s27, 0
      %p293 = por %p291, %p292
      %p294 = scmp.ne.s32.totalorder %s283, %s286
      %p295 = scmp.eq.s32.totalorder %s32, 1
      %p296 = por %p294, %p295
      %p297 = scmp.ne.s32.totalorder %s286, %s287
      %p298 = scmp.eq.s32.totalorder %s32, 0
      %p299 = por %p297, %p298
      %p300 = scmp.ne.s32.totalorder %s286, %s287
      %p301 = scmp.eq.s32.totalorder %s33, 1
      %p302 = por %p300, %p301
      %p304 = scmp.ne.s32.totalorder %s287, %s303
      %p305 = scmp.eq.s32.totalorder %s33, 0
      %p306 = por %p304, %p305
      %p307 = scmp.le.s32.totalorder 1, %s27
      %p308 = scmp.lt.s32.totalorder %s27, 3
      %p309 = pnand %p307, %p308
      %p310 = pneg %p309
      // Predicated region
      $region9: #{tpu_custom_call.1} parent=5 // pred_check
        _
      $region10: #{tpu_custom_call.1} parent=5 // pred_check_branch
        %312 = sbr.rel (%p309) target = $region12
      $region11: #{tpu_custom_call.1} parent=5 // pred_region
        %s313 = ssub.s32 %s27, 1
        // Predicated region
        $region13: #{tpu_custom_call.1} parent=11 // pred_check
          %p314 = pneg %p100
        $region14: #{tpu_custom_call.1} parent=11 // pred_check_branch
          %316 = sbr.rel (%p314) target = $region16
        $region15: #{tpu_custom_call.1} parent=11 // pred_region
          _
        $region16: #{tpu_custom_call.1} parent=11 // pred_fallthru
          _
        // Predicated region
        $region17: #{tpu_custom_call.1} parent=11 // pred_check
          %p317 = pneg %p121
        $region18: #{tpu_custom_call.1} parent=11 // pred_check_branch
          %319 = sbr.rel (%p317) target = $region20
        $region19: #{tpu_custom_call.1} parent=11 // pred_region
          _
        $region20: #{tpu_custom_call.1} parent=11 // pred_fallthru
          _
        // Predicated region
        $region21: #{tpu_custom_call.1} parent=11 // pred_check
          %p320 = pneg %p142
        $region22: #{tpu_custom_call.1} parent=11 // pred_check_branch
          %322 = sbr.rel (%p320) target = $region24
        $region23: #{tpu_custom_call.1} parent=11 // pred_region
          _
        $region24: #{tpu_custom_call.1} parent=11 // pred_fallthru
          _
        // Predicated region
        $region25: #{tpu_custom_call.1} parent=11 // pred_check
          %p323 = pneg %p163
        $region26: #{tpu_custom_call.1} parent=11 // pred_check_branch
          %325 = sbr.rel (%p323) target = $region28
        $region27: #{tpu_custom_call.1} parent=11 // pred_region
          _
        $region28: #{tpu_custom_call.1} parent=11 // pred_fallthru
          _
        // Predicated region
        $region29: #{tpu_custom_call.1} parent=11 // pred_check
          %p326 = pneg %p184
        $region30: #{tpu_custom_call.1} parent=11 // pred_check_branch
          %328 = sbr.rel (%p326) target = $region32
        $region31: #{tpu_custom_call.1} parent=11 // pred_region
          _
        $region32: #{tpu_custom_call.1} parent=11 // pred_fallthru
          _
        // Predicated region
        $region33: #{tpu_custom_call.1} parent=11 // pred_check
          %p329 = pneg %p205
        $region34: #{tpu_custom_call.1} parent=11 // pred_check_branch
          %331 = sbr.rel (%p329) target = $region36
        $region35: #{tpu_custom_call.1} parent=11 // pred_region
          _
        $region36: #{tpu_custom_call.1} parent=11 // pred_fallthru
          _
        // Predicated region
        $region37: #{tpu_custom_call.1} parent=11 // pred_check
          %p332 = pneg %p226
        $region38: #{tpu_custom_call.1} parent=11 // pred_check_branch
          %334 = sbr.rel (%p332) target = $region40
        $region39: #{tpu_custom_call.1} parent=11 // pred_region
          _
        $region40: #{tpu_custom_call.1} parent=11 // pred_fallthru
          _
        // Predicated region
        $region41: #{tpu_custom_call.1} parent=11 // pred_check
          %p335 = pneg %p247
        $region42: #{tpu_custom_call.1} parent=11 // pred_check_branch
          %337 = sbr.rel (%p335) target = $region44
        $region43: #{tpu_custom_call.1} parent=11 // pred_region
          _
        $region44: #{tpu_custom_call.1} parent=11 // pred_fallthru
          _
      $region12: #{tpu_custom_call.1} parent=5 // pred_fallthru
        _
      %p338 = scmp.lt.s32.totalorder %s27, 2
      // Predicated region
      $region45: #{tpu_custom_call.1} parent=5 // pred_check
        %p339 = pneg %p338
      $region46: #{tpu_custom_call.1} parent=5 // pred_check_branch
        %341 = sbr.rel (%p339) target = $region48
      $region47: #{tpu_custom_call.1} parent=5 // pred_region
        // Predicated region
        $region49: #{tpu_custom_call.1} parent=47 // pred_check
          %p342 = pneg %p47
        $region50: #{tpu_custom_call.1} parent=47 // pred_check_branch
          %344 = sbr.rel (%p342) target = $region52
        $region51: #{tpu_custom_call.1} parent=47 // pred_region
          %s345 = sand.u32 %s37, 1
          %s346 = scalar_lea.sflag [#allocation7], %s345
          %s347 = sand.u32 %s37, 1
          %s348 = smul.addr %s347, 64
          %s349 = scalar_lea.vmem [#allocation6], %s348
          %s351 = ssub.s32 1024, 1024
          %352 = vsyncadd %s346, %s351
          %s353 = smul.addr %s27, 16
          %s354 = smul.addr %s353, 64
          %s355 = scalar_lea.hbm %s0, %s354
          %s356 = sshll.u32 %s349, 4
          %s357 = int_to_ptr.vmem [resolvable:$true] %s356
          %362 = dma.hbm_to_vmem [thread:$0]  %s355, 1024, %s357, %s346, 64, 64, 4
        $region52: #{tpu_custom_call.1} parent=47 // pred_fallthru
          _
        // Predicated region
        $region53: #{tpu_custom_call.1} parent=47 // pred_check
          %p363 = pneg %p73
        $region54: #{tpu_custom_call.1} parent=47 // pred_check_branch
          %365 = sbr.rel (%p363) target = $region56
        $region55: #{tpu_custom_call.1} parent=47 // pred_region
          %p366 = scmp.lt.s32.totalorder %s27, 1
          %s367 = scalar_select %p366, %s27, 1
          %s368 = smul.addr %s367, 8
          %s369 = smul.addr %s368, 4
          %s370 = scalar_lea.vmem %s1, %s369
        $region56: #{tpu_custom_call.1} parent=47 // pred_fallthru
          _
      $region48: #{tpu_custom_call.1} parent=5 // pred_fallthru
        _
      %p371 = scmp.le.s32.totalorder 1, %s27
      %p372 = scmp.lt.s32.totalorder %s27, 3
      %p373 = pnand %p371, %p372
      %p374 = pneg %p373
      // Predicated region
      $region57: #{tpu_custom_call.1} parent=5 // pred_check
        _
      $region58: #{tpu_custom_call.1} parent=5 // pred_check_branch
        %376 = sbr.rel (%p373) target = $region60
      $region59: #{tpu_custom_call.1} parent=5 // pred_region
        %s377 = ssub.s32 %s27, 1
        %s378 = sand.u32 %s40, 1
        %s379 = scalar_lea.sflag [#allocation7], %s378
        %s380 = sand.u32 %s40, 1
        %s381 = smul.addr %s380, 64
        %s382 = scalar_lea.vmem [#allocation6], %s381
        // Predicated region
        $region61: #{tpu_custom_call.1} parent=59 // pred_check
          %p383 = pneg %p53
        $region62: #{tpu_custom_call.1} parent=59 // pred_check_branch
          %385 = sbr.rel (%p383) target = $region64
        $region63: #{tpu_custom_call.1} parent=59 // pred_region
          %386 = dma.done %s379, 1024
        $region64: #{tpu_custom_call.1} parent=59 // pred_fallthru
          _
        %s387 = sand.u32 %s40, 1
        %s388 = scalar_lea.sflag [#allocation7], %s387
        %s389 = sand.u32 %s40, 1
        %s390 = smul.addr %s389, 64
        %s391 = scalar_lea.vmem [#allocation6], %s390
        %p392 = pneg %p53
        %p393 = pneg %p50
        %p394 = scmp.lt.s32.totalorder %s32, 1
        %s395 = scalar_select %p394, %s32, 1
        %s396 = smul.addr %s395, 8
        %s397 = smul.addr %s396, 4
        %s398 = scalar_lea.vmem %s1, %s397
        %p399 = pneg %p79
        %p400 = pneg %p76
        %p401 = pneg %p100
        %p402 = pneg %p97
        %p403 = pneg %p121
        %p404 = pneg %p118
        %p405 = pneg %p142
        %p406 = pneg %p139
        %p407 = pneg %p163
        %p408 = pneg %p160
        %p409 = pneg %p184
        %p410 = pneg %p181
        %p411 = pneg %p205
        %p412 = pneg %p202
        %p413 = pneg %p226
        %p414 = pneg %p223
        %p415 = pneg %p247
        %p416 = pneg %p244
        %p417 = pneg %p273
        %p418 = pneg %p270
        %s419 = sand.u32 %s260, 1
        %s420 = scalar_lea.sflag [#allocation8], %s419
        %s421 = sand.u32 %s260, 1
        %s422 = smul.addr %s421, 128
        %s423 = scalar_lea.vmem [#allocation9], %s422
        %p424 = pneg %p299
        %p425 = pneg %p296
        %s426 = sand.u32 %s286, 1
        %s427 = scalar_lea.sflag [#allocation11], %s426
        %s428 = sand.u32 %s286, 1
        %s429 = smul.addr %s428, 256
        %s430 = scalar_lea.vmem [#allocation10], %s429
        %p431 = scmp.lt.s32.totalorder %s32, 1
        %s432 = scalar_select %p431, %s32, 1
        %s433 = smul.addr %s432, 8
        %s434 = smul.addr %s433, 4
        %s435 = scalar_lea.vmem %s1, %s434
        %p438 = scmp.eq.s32.totalorder %s32, 0
        // Predicated region
        $region65: #{tpu_custom_call.1} parent=59 // pred_check
          %p439 = pneg %p438
        $region66: #{tpu_custom_call.1} parent=59 // pred_check_branch
          %441 = sbr.rel (%p439) target = $region68
        $region67: #{tpu_custom_call.1} parent=59 // pred_region
          %vm442 = vcmask 142336
          %443 = vst.msk [vmem:[#allocation2] sm:$0xf] %vm442, 0
          %444 = vst.msk [vmem:[#allocation2 + $0x4] sm:$0xf] %vm442, 0
          %vm445 = vcmask 139264
          %446 = vst.msk [vmem:[#allocation2 + $0x8] sm:$0x1] %vm445, 0
          %447 = vst.msk [vmem:[#allocation2 + $0xc] sm:$0xf] %vm442, 0
          %448 = vst.msk [vmem:[#allocation2 + $0x10] sm:$0xf] %vm442, 0
          %449 = vst.msk [vmem:[#allocation2 + $0x14] sm:$0x1] %vm445, 0
          %450 = vst.msk [vmem:[#allocation2 + $0x18] sm:$0xf] %vm442, 0
          %451 = vst.msk [vmem:[#allocation2 + $0x1c] sm:$0xf] %vm442, 0
          %452 = vst.msk [vmem:[#allocation2 + $0x20] sm:$0x1] %vm445, 0
          %453 = vst.msk [vmem:[#allocation2 + $0x24] sm:$0xf] %vm442, 0
          %454 = vst.msk [vmem:[#allocation2 + $0x28] sm:$0xf] %vm442, 0
          %455 = vst.msk [vmem:[#allocation2 + $0x2c] sm:$0x1] %vm445, 0
          %456 = vst.msk [vmem:[#allocation2 + $0x30] sm:$0xf] %vm442, 0
          %457 = vst.msk [vmem:[#allocation2 + $0x34] sm:$0xf] %vm442, 0
          %458 = vst.msk [vmem:[#allocation2 + $0x38] sm:$0x1] %vm445, 0
          %459 = vst.msk [vmem:[#allocation2 + $0x3c] sm:$0xf] %vm442, 0
          %460 = vst.msk [vmem:[#allocation2 + $0x40] sm:$0xf] %vm442, 0
          %461 = vst.msk [vmem:[#allocation2 + $0x44] sm:$0x1] %vm445, 0
          %462 = vst.msk [vmem:[#allocation2 + $0x48] sm:$0xf] %vm442, 0
          %463 = vst.msk [vmem:[#allocation2 + $0x4c] sm:$0xf] %vm442, 0
          %464 = vst.msk [vmem:[#allocation2 + $0x50] sm:$0x1] %vm445, 0
          %465 = vst.msk [vmem:[#allocation2 + $0x54] sm:$0xf] %vm442, 0
          %466 = vst.msk [vmem:[#allocation2 + $0x58] sm:$0xf] %vm442, 0
          %467 = vst.msk [vmem:[#allocation2 + $0x5c] sm:$0x1] %vm445, 0
          %vm468 = vcmask 76800
          %469 = vst.msk [vmem:[#allocation4] sm:$0xf] %vm468, 0
          %vm470 = vcmask 73728
          %471 = vst.msk [vmem:[#allocation4 + $0x4] sm:$0x1] %vm470, 0
          %472 = vst.msk [vmem:[#allocation4 + $0x8] sm:$0xf] %vm468, 0
          %473 = vst.msk [vmem:[#allocation4 + $0xc] sm:$0x1] %vm470, 0
          %474 = vst.msk [vmem:[#allocation4 + $0x10] sm:$0xf] %vm468, 0
          %475 = vst.msk [vmem:[#allocation4 + $0x14] sm:$0x1] %vm470, 0
          %476 = vst.msk [vmem:[#allocation4 + $0x18] sm:$0xf] %vm468, 0
          %477 = vst.msk [vmem:[#allocation4 + $0x1c] sm:$0x1] %vm470, 0
          %478 = vst.msk [vmem:[#allocation4 + $0x20] sm:$0xf] %vm468, 0
          %479 = vst.msk [vmem:[#allocation4 + $0x24] sm:$0x1] %vm470, 0
          %480 = vst.msk [vmem:[#allocation4 + $0x28] sm:$0xf] %vm468, 0
          %481 = vst.msk [vmem:[#allocation4 + $0x2c] sm:$0x1] %vm470, 0
          %482 = vst.msk [vmem:[#allocation4 + $0x30] sm:$0xf] %vm468, 0
          %483 = vst.msk [vmem:[#allocation4 + $0x34] sm:$0x1] %vm470, 0
          %484 = vst.msk [vmem:[#allocation4 + $0x38] sm:$0xf] %vm468, 0
          %485 = vst.msk [vmem:[#allocation4 + $0x3c] sm:$0x1] %vm470, 0
          %s486 = scalar_lea.vmem [#allocation3], 576
          %vm487 = vcmask 130048
          %488 = vst.msk [vmem:[%s486] sm:$0xff] %vm487, 1065369472
          %s489 = scalar_lea.vmem [#allocation5], 288
          %vm490 = vcmask 60416
          %491 = vst.msk [vmem:[%s489] sm:$0xf] %vm490, 1065369472
        $region68: #{tpu_custom_call.1} parent=59 // pred_fallthru
          _
        %v492 = vld [vmem:[%s382] sm:$0xf]
        %v493 = vld [vmem:[%s382 + $0x4] sm:$0xf]
        %v494 = vld [vmem:[%s382 + $0x8] sm:$0xf]
        %v495 = vld [vmem:[%s382 + $0xc] sm:$0xf]
        %v496 = vld [vmem:[%s382 + $0x10] sm:$0xf]
        %v497 = vld [vmem:[%s382 + $0x14] sm:$0xf]
        %v498 = vld [vmem:[%s382 + $0x18] sm:$0xf]
        %v499 = vld [vmem:[%s382 + $0x1c] sm:$0xf]
        %v500 = vld [vmem:[%s382 + $0x20] sm:$0xf]
        %v501 = vld [vmem:[%s382 + $0x24] sm:$0xf]
        %v502 = vld [vmem:[%s382 + $0x28] sm:$0xf]
        %v503 = vld [vmem:[%s382 + $0x2c] sm:$0xf]
        %v504 = vld [vmem:[%s382 + $0x30] sm:$0xf]
        %v505 = vld [vmem:[%s382 + $0x34] sm:$0xf]
        %v506 = vld [vmem:[%s382 + $0x38] sm:$0xf]
        %v507 = vld [vmem:[%s382 + $0x3c] sm:$0xf]
        %vm508 = vsmask.f32 256
        %vm509 = vsmask.f32 4368
        %vm510 = vmor %vm508, %vm509
        %v512 = vshrl.u32 %v492, 16
        %v514 = vrot.slane %v512, 7
        %v515 = vshll.u32 %v492, 16
        %v517 = vor.u32 %v514, %v515
        %v518 = vrot.slane %v514, 4
        %v520 = vshrl.u32 %v493, 16
        %v522 = vrot.slane %v520, 7
        %v523 = vshll.u32 %v493, 16
        %v525 = vor.u32 %v522, %v523
        %v526 = vsel %vm510, %v518, %v525
        %v527 = vrot.slane %v522, 4
        %v529 = vshrl.u32 %v494, 16
        %v531 = vrot.slane %v529, 7
        %v532 = vshll.u32 %v494, 16
        %v534 = vor.u32 %v531, %v532
        %v535 = vrot.slane %v531, 4
        %v537 = vshrl.u32 %v495, 16
        %v539 = vrot.slane %v537, 7
        %v540 = vshll.u32 %v495, 16
        %v542 = vor.u32 %v539, %v540
        %v543 = vsel %vm510, %v535, %v542
        %v544 = vrot.slane %v539, 4
        %v546 = vshrl.u32 %v496, 16
        %v548 = vrot.slane %v546, 7
        %v549 = vshll.u32 %v496, 16
        %v551 = vor.u32 %v548, %v549
        %v552 = vrot.slane %v548, 4
        %v554 = vshrl.u32 %v497, 16
        %v556 = vrot.slane %v554, 7
        %v557 = vshll.u32 %v497, 16
        %v559 = vor.u32 %v556, %v557
        %v560 = vsel %vm510, %v552, %v559
        %v561 = vrot.slane %v556, 4
        %v563 = vshrl.u32 %v498, 16
        %v565 = vrot.slane %v563, 7
        %v566 = vshll.u32 %v498, 16
        %v568 = vor.u32 %v565, %v566
        %v569 = vrot.slane %v565, 4
        %v571 = vshrl.u32 %v499, 16
        %v573 = vrot.slane %v571, 7
        %v574 = vshll.u32 %v499, 16
        %v576 = vor.u32 %v573, %v574
        %v577 = vsel %vm510, %v569, %v576
        %v578 = vrot.slane %v573, 4
        %v580 = vshrl.u32 %v500, 16
        %v582 = vrot.slane %v580, 7
        %v583 = vshll.u32 %v500, 16
        %v585 = vor.u32 %v582, %v583
        %v586 = vrot.slane %v582, 4
        %v588 = vshrl.u32 %v501, 16
        %v590 = vrot.slane %v588, 7
        %v591 = vshll.u32 %v501, 16
        %v593 = vor.u32 %v590, %v591
        %v594 = vsel %vm510, %v586, %v593
        %v595 = vrot.slane %v590, 4
        %v597 = vshrl.u32 %v502, 16
        %v599 = vrot.slane %v597, 7
        %v600 = vshll.u32 %v502, 16
        %v602 = vor.u32 %v599, %v600
        %v603 = vrot.slane %v599, 4
        %v605 = vshrl.u32 %v503, 16
        %v607 = vrot.slane %v605, 7
        %v608 = vshll.u32 %v503, 16
        %v610 = vor.u32 %v607, %v608
        %v611 = vsel %vm510, %v603, %v610
        %v612 = vrot.slane %v607, 4
        %v614 = vshrl.u32 %v504, 16
        %v616 = vrot.slane %v614, 7
        %v617 = vshll.u32 %v504, 16
        %v619 = vor.u32 %v616, %v617
        %v620 = vrot.slane %v616, 4
        %v622 = vshrl.u32 %v505, 16
        %v624 = vrot.slane %v622, 7
        %v625 = vshll.u32 %v505, 16
        %v627 = vor.u32 %v624, %v625
        %v628 = vsel %vm510, %v620, %v627
        %v629 = vrot.slane %v624, 4
        %v631 = vshrl.u32 %v506, 16
        %v633 = vrot.slane %v631, 7
        %v634 = vshll.u32 %v506, 16
        %v636 = vor.u32 %v633, %v634
        %v637 = vrot.slane %v633, 4
        %v639 = vshrl.u32 %v507, 16
        %v641 = vrot.slane %v639, 7
        %v642 = vshll.u32 %v507, 16
        %v644 = vor.u32 %v641, %v642
        %v645 = vsel %vm510, %v637, %v644
        %v646 = vrot.slane %v641, 4
        %647 = vrot.lane.b32.xlu0 %v517, 1
        %v648 = vpop.permute.xlu0 %647
        %649 = vrot.lane.b32.xlu0 %v526, 1
        %v650 = vpop.permute.xlu0 %649
        %651 = vrot.lane.b32.xlu0 %v527, 1
        %v652 = vpop.permute.xlu0 %651
        %653 = vrot.lane.b32.xlu0 %v534, 1
        %v654 = vpop.permute.xlu0 %653
        %655 = vrot.lane.b32.xlu0 %v543, 1
        %v656 = vpop.permute.xlu0 %655
        %657 = vrot.lane.b32.xlu0 %v544, 1
        %v658 = vpop.permute.xlu0 %657
        %659 = vrot.lane.b32.xlu0 %v551, 1
        %v660 = vpop.permute.xlu0 %659
        %661 = vrot.lane.b32.xlu0 %v560, 1
        %v662 = vpop.permute.xlu0 %661
        %663 = vrot.lane.b32.xlu0 %v561, 1
        %v664 = vpop.permute.xlu0 %663
        %665 = vrot.lane.b32.xlu0 %v568, 1
        %v666 = vpop.permute.xlu0 %665
        %667 = vrot.lane.b32.xlu0 %v577, 1
        %v668 = vpop.permute.xlu0 %667
        %669 = vrot.lane.b32.xlu0 %v578, 1
        %v670 = vpop.permute.xlu0 %669
        %671 = vrot.lane.b32.xlu0 %v585, 1
        %v672 = vpop.permute.xlu0 %671
        %673 = vrot.lane.b32.xlu0 %v594, 1
        %v674 = vpop.permute.xlu0 %673
        %675 = vrot.lane.b32.xlu0 %v595, 1
        %v676 = vpop.permute.xlu0 %675
        %677 = vrot.lane.b32.xlu0 %v602, 1
        %v678 = vpop.permute.xlu0 %677
        %679 = vrot.lane.b32.xlu0 %v611, 1
        %v680 = vpop.permute.xlu0 %679
        %681 = vrot.lane.b32.xlu0 %v612, 1
        %v682 = vpop.permute.xlu0 %681
        %683 = vrot.lane.b32.xlu0 %v619, 1
        %v684 = vpop.permute.xlu0 %683
        %685 = vrot.lane.b32.xlu0 %v628, 1
        %v686 = vpop.permute.xlu0 %685
        %687 = vrot.lane.b32.xlu0 %v629, 1
        %v688 = vpop.permute.xlu0 %687
        %689 = vrot.lane.b32.xlu0 %v636, 1
        %v690 = vpop.permute.xlu0 %689
        %691 = vrot.lane.b32.xlu0 %v645, 1
        %v692 = vpop.permute.xlu0 %691
        %693 = vrot.lane.b32.xlu0 %v646, 1
        %v694 = vpop.permute.xlu0 %693
        %vm719 = vcmask 134152
        %vm720 = vsmask.f32 7938
        %vm721 = vmand %vm719, %vm720
        %v722 = vld [vmem:[#allocation2] sm:$0xf]
        %v723 = vsel %vm721, %v648, %v722
        %724 = vst [vmem:[#allocation2] sm:$0xf] %v723
        %vm725 = vcmask 134152
        %726 = vst.msk [vmem:[#allocation2 + $0x4] sm:$0xf] %vm725, %v650
        %vm727 = vcmask 131080
        %vm728 = vmand %vm727, %vm508
        %v729 = vld [vmem:[#allocation2 + $0x8] sm:$0x1]
        %v730 = vsel %vm728, %v652, %v729
        %731 = vst [vmem:[#allocation2 + $0x8] sm:$0x1] %v730
        %v732 = vld [vmem:[#allocation2 + $0xc] sm:$0xf]
        %v733 = vsel %vm721, %v654, %v732
        %734 = vst [vmem:[#allocation2 + $0xc] sm:$0xf] %v733
        %735 = vst.msk [vmem:[#allocation2 + $0x10] sm:$0xf] %vm725, %v656
        %v736 = vld [vmem:[#allocation2 + $0x14] sm:$0x1]
        %v737 = vsel %vm728, %v658, %v736
        %738 = vst [vmem:[#allocation2 + $0x14] sm:$0x1] %v737
        %v739 = vld [vmem:[#allocation2 + $0x18] sm:$0xf]
        %v740 = vsel %vm721, %v660, %v739
        %741 = vst [vmem:[#allocation2 + $0x18] sm:$0xf] %v740
        %742 = vst.msk [vmem:[#allocation2 + $0x1c] sm:$0xf] %vm725, %v662
        %v743 = vld [vmem:[#allocation2 + $0x20] sm:$0x1]
        %v744 = vsel %vm728, %v664, %v743
        %745 = vst [vmem:[#allocation2 + $0x20] sm:$0x1] %v744
        %v746 = vld [vmem:[#allocation2 + $0x24] sm:$0xf]
        %v747 = vsel %vm721, %v666, %v746
        %748 = vst [vmem:[#allocation2 + $0x24] sm:$0xf] %v747
        %749 = vst.msk [vmem:[#allocation2 + $0x28] sm:$0xf] %vm725, %v668
        %v750 = vld [vmem:[#allocation2 + $0x2c] sm:$0x1]
        %v751 = vsel %vm728, %v670, %v750
        %752 = vst [vmem:[#allocation2 + $0x2c] sm:$0x1] %v751
        %v753 = vld [vmem:[#allocation2 + $0x30] sm:$0xf]
        %v754 = vsel %vm721, %v672, %v753
        %755 = vst [vmem:[#allocation2 + $0x30] sm:$0xf] %v754
        %756 = vst.msk [vmem:[#allocation2 + $0x34] sm:$0xf] %vm725, %v674
        %v757 = vld [vmem:[#allocation2 + $0x38] sm:$0x1]
        %v758 = vsel %vm728, %v676, %v757
        %759 = vst [vmem:[#allocation2 + $0x38] sm:$0x1] %v758
        %v760 = vld [vmem:[#allocation2 + $0x3c] sm:$0xf]
        %v761 = vsel %vm721, %v678, %v760
        %762 = vst [vmem:[#allocation2 + $0x3c] sm:$0xf] %v761
        %763 = vst.msk [vmem:[#allocation2 + $0x40] sm:$0xf] %vm725, %v680
        %v764 = vld [vmem:[#allocation2 + $0x44] sm:$0x1]
        %v765 = vsel %vm728, %v682, %v764
        %766 = vst [vmem:[#allocation2 + $0x44] sm:$0x1] %v765
        %v767 = vld [vmem:[#allocation2 + $0x48] sm:$0xf]
        %v768 = vsel %vm721, %v684, %v767
        %769 = vst [vmem:[#allocation2 + $0x48] sm:$0xf] %v768
        %770 = vst.msk [vmem:[#allocation2 + $0x4c] sm:$0xf] %vm725, %v686
        %v771 = vld [vmem:[#allocation2 + $0x50] sm:$0x1]
        %v772 = vsel %vm728, %v688, %v771
        %773 = vst [vmem:[#allocation2 + $0x50] sm:$0x1] %v772
        %v774 = vld [vmem:[#allocation2 + $0x54] sm:$0xf]
        %v775 = vsel %vm721, %v690, %v774
        %776 = vst [vmem:[#allocation2 + $0x54] sm:$0xf] %v775
        %777 = vst.msk [vmem:[#allocation2 + $0x58] sm:$0xf] %vm725, %v692
        %v778 = vld [vmem:[#allocation2 + $0x5c] sm:$0x1]
        %v779 = vsel %vm728, %v694, %v778
        %780 = vst [vmem:[#allocation2 + $0x5c] sm:$0x1] %v779
        %v781 = vld [vmem:[#allocation2] sm:$0xf]
        %v782 = vld [vmem:[#allocation2 + $0x4] sm:$0xf]
        %v783 = vld [vmem:[#allocation2 + $0xc] sm:$0xf]
        %v784 = vld [vmem:[#allocation2 + $0x10] sm:$0xf]
        %v785 = vld [vmem:[#allocation2 + $0x18] sm:$0xf]
        %v786 = vld [vmem:[#allocation2 + $0x1c] sm:$0xf]
        %v787 = vld [vmem:[#allocation2 + $0x24] sm:$0xf]
        %v788 = vld [vmem:[#allocation2 + $0x28] sm:$0xf]
        %v789 = vld [vmem:[#allocation2 + $0x30] sm:$0xf]
        %v790 = vld [vmem:[#allocation2 + $0x34] sm:$0xf]
        %v791 = vld [vmem:[#allocation2 + $0x3c] sm:$0xf]
        %v792 = vld [vmem:[#allocation2 + $0x40] sm:$0xf]
        %v793 = vld [vmem:[#allocation2 + $0x48] sm:$0xf]
        %v794 = vld [vmem:[#allocation2 + $0x4c] sm:$0xf]
        %v795 = vld [vmem:[#allocation2 + $0x54] sm:$0xf]
        %v796 = vld [vmem:[#allocation2 + $0x58] sm:$0xf]
        %v813 = vunpack.c.l.b16 %v781
        %v814 = vunpack.c.l.b16 %v782
        %v815 = vunpack.c.l.b16 %v783
        %v816 = vunpack.c.l.b16 %v784
        %v817 = vunpack.c.l.b16 %v785
        %v818 = vunpack.c.l.b16 %v786
        %v819 = vunpack.c.l.b16 %v787
        %v820 = vunpack.c.l.b16 %v788
        %v821 = vunpack.c.l.b16 %v789
        %v822 = vunpack.c.l.b16 %v790
        %v823 = vunpack.c.l.b16 %v791
        %v824 = vunpack.c.l.b16 %v792
        %v825 = vunpack.c.l.b16 %v793
        %v826 = vunpack.c.l.b16 %v794
        %v827 = vunpack.c.l.b16 %v795
        %v828 = vunpack.c.l.b16 %v796
        %v829 = vpack.c.b16 %v814, %v813
        %v830 = vpack.c.b16 %v816, %v815
        %v831 = vpack.c.b16 %v818, %v817
        %v832 = vpack.c.b16 %v820, %v819
        %v833 = vpack.c.b16 %v822, %v821
        %v834 = vpack.c.b16 %v824, %v823
        %v835 = vpack.c.b16 %v826, %v825
        %v836 = vpack.c.b16 %v828, %v827
        %vm845 = vcmask 130048
        %846 = vst.msk [vmem:[#allocation3] sm:$0xff] %vm845, %v829
        %847 = vst.msk [vmem:[#allocation3 + $0x8] sm:$0xff] %vm845, %v830
        %848 = vst.msk [vmem:[#allocation3 + $0x10] sm:$0xff] %vm845, %v831
        %849 = vst.msk [vmem:[#allocation3 + $0x18] sm:$0xff] %vm845, %v832
        %850 = vst.msk [vmem:[#allocation3 + $0x20] sm:$0xff] %vm845, %v833
        %851 = vst.msk [vmem:[#allocation3 + $0x28] sm:$0xff] %vm845, %v834
        %852 = vst.msk [vmem:[#allocation3 + $0x30] sm:$0xff] %vm845, %v835
        %853 = vst.msk [vmem:[#allocation3 + $0x38] sm:$0xff] %vm845, %v836
        %v854 = vld [vmem:[#allocation2] sm:$0xf]
        %v855 = vld [vmem:[#allocation2 + $0x4] sm:$0xf]
        %v856 = vld [vmem:[#allocation2 + $0xc] sm:$0xf]
        %v857 = vld [vmem:[#allocation2 + $0x10] sm:$0xf]
        %v858 = vld [vmem:[#allocation2 + $0x18] sm:$0xf]
        %v859 = vld [vmem:[#allocation2 + $0x1c] sm:$0xf]
        %v860 = vld [vmem:[#allocation2 + $0x24] sm:$0xf]
        %v861 = vld [vmem:[#allocation2 + $0x28] sm:$0xf]
        %v862 = vld [vmem:[#allocation2 + $0x30] sm:$0xf]
        %v863 = vld [vmem:[#allocation2 + $0x34] sm:$0xf]
        %v864 = vld [vmem:[#allocation2 + $0x3c] sm:$0xf]
        %v865 = vld [vmem:[#allocation2 + $0x40] sm:$0xf]
        %v866 = vld [vmem:[#allocation2 + $0x48] sm:$0xf]
        %v867 = vld [vmem:[#allocation2 + $0x4c] sm:$0xf]
        %v868 = vld [vmem:[#allocation2 + $0x54] sm:$0xf]
        %v869 = vld [vmem:[#allocation2 + $0x58] sm:$0xf]
        %v886 = vunpack.c.l.b16 %v854
        %v887 = vunpack.c.l.b16 %v855
        %v888 = vunpack.c.l.b16 %v856
        %v889 = vunpack.c.l.b16 %v857
        %v890 = vunpack.c.l.b16 %v858
        %v891 = vunpack.c.l.b16 %v859
        %v892 = vunpack.c.l.b16 %v860
        %v893 = vunpack.c.l.b16 %v861
        %v894 = vunpack.c.l.b16 %v862
        %v895 = vunpack.c.l.b16 %v863
        %v896 = vunpack.c.l.b16 %v864
        %v897 = vunpack.c.l.b16 %v865
        %v898 = vunpack.c.l.b16 %v866
        %v899 = vunpack.c.l.b16 %v867
        %v900 = vunpack.c.l.b16 %v868
        %v901 = vunpack.c.l.b16 %v869
        %v902 = vpack.c.b16 %v887, %v886
        %v903 = vpack.c.b16 %v889, %v888
        %v904 = vpack.c.b16 %v891, %v890
        %v905 = vpack.c.b16 %v893, %v892
        %v906 = vpack.c.b16 %v895, %v894
        %v907 = vpack.c.b16 %v897, %v896
        %v908 = vpack.c.b16 %v899, %v898
        %v909 = vpack.c.b16 %v901, %v900
        %910 = vrot.lane.b32.xlu0 %v902, 127
        %v911 = vpop.permute.xlu0 %910
        %912 = vrot.lane.b32.xlu0 %v903, 127
        %v913 = vpop.permute.xlu0 %912
        %914 = vrot.lane.b32.xlu0 %v904, 127
        %v915 = vpop.permute.xlu0 %914
        %916 = vrot.lane.b32.xlu0 %v905, 127
        %v917 = vpop.permute.xlu0 %916
        %918 = vrot.lane.b32.xlu0 %v906, 127
        %v919 = vpop.permute.xlu0 %918
        %920 = vrot.lane.b32.xlu0 %v907, 127
        %v921 = vpop.permute.xlu0 %920
        %922 = vrot.lane.b32.xlu0 %v908, 127
        %v923 = vpop.permute.xlu0 %922
        %924 = vrot.lane.b32.xlu0 %v909, 127
        %v925 = vpop.permute.xlu0 %924
        %s934 = scalar_lea.vmem [#allocation3], 64
        %935 = vst.msk [vmem:[%s934] sm:$0xff] %vm845, %v911
        %936 = vst.msk [vmem:[%s934 + $0x8] sm:$0xff] %vm845, %v913
        %937 = vst.msk [vmem:[%s934 + $0x10] sm:$0xff] %vm845, %v915
        %938 = vst.msk [vmem:[%s934 + $0x18] sm:$0xff] %vm845, %v917
        %939 = vst.msk [vmem:[%s934 + $0x20] sm:$0xff] %vm845, %v919
        %940 = vst.msk [vmem:[%s934 + $0x28] sm:$0xff] %vm845, %v921
        %941 = vst.msk [vmem:[%s934 + $0x30] sm:$0xff] %vm845, %v923
        %942 = vst.msk [vmem:[%s934 + $0x38] sm:$0xff] %vm845, %v925
        %v943 = vld [vmem:[#allocation2] sm:$0xf]
        %v944 = vld [vmem:[#allocation2 + $0x4] sm:$0xf]
        %v945 = vld [vmem:[#allocation2 + $0xc] sm:$0xf]
        %v946 = vld [vmem:[#allocation2 + $0x10] sm:$0xf]
        %v947 = vld [vmem:[#allocation2 + $0x18] sm:$0xf]
        %v948 = vld [vmem:[#allocation2 + $0x1c] sm:$0xf]
        %v949 = vld [vmem:[#allocation2 + $0x24] sm:$0xf]
        %v950 = vld [vmem:[#allocation2 + $0x28] sm:$0xf]
        %v951 = vld [vmem:[#allocation2 + $0x30] sm:$0xf]
        %v952 = vld [vmem:[#allocation2 + $0x34] sm:$0xf]
        %v953 = vld [vmem:[#allocation2 + $0x3c] sm:$0xf]
        %v954 = vld [vmem:[#allocation2 + $0x40] sm:$0xf]
        %v955 = vld [vmem:[#allocation2 + $0x48] sm:$0xf]
        %v956 = vld [vmem:[#allocation2 + $0x4c] sm:$0xf]
        %v957 = vld [vmem:[#allocation2 + $0x54] sm:$0xf]
        %v958 = vld [vmem:[#allocation2 + $0x58] sm:$0xf]
        %v975 = vunpack.c.l.b16 %v943
        %v976 = vunpack.c.l.b16 %v944
        %v977 = vunpack.c.l.b16 %v945
        %v978 = vunpack.c.l.b16 %v946
        %v979 = vunpack.c.l.b16 %v947
        %v980 = vunpack.c.l.b16 %v948
        %v981 = vunpack.c.l.b16 %v949
        %v982 = vunpack.c.l.b16 %v950
        %v983 = vunpack.c.l.b16 %v951
        %v984 = vunpack.c.l.b16 %v952
        %v985 = vunpack.c.l.b16 %v953
        %v986 = vunpack.c.l.b16 %v954
        %v987 = vunpack.c.l.b16 %v955
        %v988 = vunpack.c.l.b16 %v956
        %v989 = vunpack.c.l.b16 %v957
        %v990 = vunpack.c.l.b16 %v958
        %v991 = vpack.c.b16 %v976, %v975
        %v992 = vpack.c.b16 %v978, %v977
        %v993 = vpack.c.b16 %v980, %v979
        %v994 = vpack.c.b16 %v982, %v981
        %v995 = vpack.c.b16 %v984, %v983
        %v996 = vpack.c.b16 %v986, %v985
        %v997 = vpack.c.b16 %v988, %v987
        %v998 = vpack.c.b16 %v990, %v989
        %999 = vrot.lane.b32.xlu0 %v991, 126
        %v1000 = vpop.permute.xlu0 %999
        %1001 = vrot.lane.b32.xlu0 %v992, 126
        %v1002 = vpop.permute.xlu0 %1001
        %1003 = vrot.lane.b32.xlu0 %v993, 126
        %v1004 = vpop.permute.xlu0 %1003
        %1005 = vrot.lane.b32.xlu0 %v994, 126
        %v1006 = vpop.permute.xlu0 %1005
        %1007 = vrot.lane.b32.xlu0 %v995, 126
        %v1008 = vpop.permute.xlu0 %1007
        %1009 = vrot.lane.b32.xlu0 %v996, 126
        %v1010 = vpop.permute.xlu0 %1009
        %1011 = vrot.lane.b32.xlu0 %v997, 126
        %v1012 = vpop.permute.xlu0 %1011
        %1013 = vrot.lane.b32.xlu0 %v998, 126
        %v1014 = vpop.permute.xlu0 %1013
        %s1023 = scalar_lea.vmem [#allocation3], 128
        %1024 = vst.msk [vmem:[%s1023] sm:$0xff] %vm845, %v1000
        %1025 = vst.msk [vmem:[%s1023 + $0x8] sm:$0xff] %vm845, %v1002
        %1026 = vst.msk [vmem:[%s1023 + $0x10] sm:$0xff] %vm845, %v1004
        %1027 = vst.msk [vmem:[%s1023 + $0x18] sm:$0xff] %vm845, %v1006
        %1028 = vst.msk [vmem:[%s1023 + $0x20] sm:$0xff] %vm845, %v1008
        %1029 = vst.msk [vmem:[%s1023 + $0x28] sm:$0xff] %vm845, %v1010
        %1030 = vst.msk [vmem:[%s1023 + $0x30] sm:$0xff] %vm845, %v1012
        %1031 = vst.msk [vmem:[%s1023 + $0x38] sm:$0xff] %vm845, %v1014
        %v1032 = vld [vmem:[#allocation2] sm:$0xf]
        %v1033 = vld [vmem:[#allocation2 + $0x4] sm:$0xf]
        %v1034 = vld [vmem:[#allocation2 + $0x8] sm:$0x1]
        %v1035 = vld [vmem:[#allocation2 + $0xc] sm:$0xf]
        %v1036 = vld [vmem:[#allocation2 + $0x10] sm:$0xf]
        %v1037 = vld [vmem:[#allocation2 + $0x14] sm:$0x1]
        %v1038 = vld [vmem:[#allocation2 + $0x18] sm:$0xf]
        %v1039 = vld [vmem:[#allocation2 + $0x1c] sm:$0xf]
        %v1040 = vld [vmem:[#allocation2 + $0x20] sm:$0x1]
        %v1041 = vld [vmem:[#allocation2 + $0x24] sm:$0xf]
        %v1042 = vld [vmem:[#allocation2 + $0x28] sm:$0xf]
        %v1043 = vld [vmem:[#allocation2 + $0x2c] sm:$0x1]
        %v1044 = vld [vmem:[#allocation2 + $0x30] sm:$0xf]
        %v1045 = vld [vmem:[#allocation2 + $0x34] sm:$0xf]
        %v1046 = vld [vmem:[#allocation2 + $0x38] sm:$0x1]
        %v1047 = vld [vmem:[#allocation2 + $0x3c] sm:$0xf]
        %v1048 = vld [vmem:[#allocation2 + $0x40] sm:$0xf]
        %v1049 = vld [vmem:[#allocation2 + $0x44] sm:$0x1]
        %v1050 = vld [vmem:[#allocation2 + $0x48] sm:$0xf]
        %v1051 = vld [vmem:[#allocation2 + $0x4c] sm:$0xf]
        %v1052 = vld [vmem:[#allocation2 + $0x50] sm:$0x1]
        %v1053 = vld [vmem:[#allocation2 + $0x54] sm:$0xf]
        %v1054 = vld [vmem:[#allocation2 + $0x58] sm:$0xf]
        %v1055 = vld [vmem:[#allocation2 + $0x5c] sm:$0x1]
        %v1080 = vunpack.c.l.b16 %v1032
        %v1081 = vunpack.c.l.b16 %v1033
        %v1082 = vunpack.c.l.b16 %v1034
        %v1083 = vunpack.c.l.b16 %v1035
        %v1084 = vunpack.c.l.b16 %v1036
        %v1085 = vunpack.c.l.b16 %v1037
        %v1086 = vunpack.c.l.b16 %v1038
        %v1087 = vunpack.c.l.b16 %v1039
        %v1088 = vunpack.c.l.b16 %v1040
        %v1089 = vunpack.c.l.b16 %v1041
        %v1090 = vunpack.c.l.b16 %v1042
        %v1091 = vunpack.c.l.b16 %v1043
        %v1092 = vunpack.c.l.b16 %v1044
        %v1093 = vunpack.c.l.b16 %v1045
        %v1094 = vunpack.c.l.b16 %v1046
        %v1095 = vunpack.c.l.b16 %v1047
        %v1096 = vunpack.c.l.b16 %v1048
        %v1097 = vunpack.c.l.b16 %v1049
        %v1098 = vunpack.c.l.b16 %v1050
        %v1099 = vunpack.c.l.b16 %v1051
        %v1100 = vunpack.c.l.b16 %v1052
        %v1101 = vunpack.c.l.b16 %v1053
        %v1102 = vunpack.c.l.b16 %v1054
        %v1103 = vunpack.c.l.b16 %v1055
        %v1104 = vpack.c.b16 %v1081, %v1080
        %v1105 = vpack.c.b16 %v1082, %v1082
        %v1106 = vpack.c.b16 %v1084, %v1083
        %v1107 = vpack.c.b16 %v1085, %v1085
        %v1108 = vpack.c.b16 %v1087, %v1086
        %v1109 = vpack.c.b16 %v1088, %v1088
        %v1110 = vpack.c.b16 %v1090, %v1089
        %v1111 = vpack.c.b16 %v1091, %v1091
        %v1112 = vpack.c.b16 %v1093, %v1092
        %v1113 = vpack.c.b16 %v1094, %v1094
        %v1114 = vpack.c.b16 %v1096, %v1095
        %v1115 = vpack.c.b16 %v1097, %v1097
        %v1116 = vpack.c.b16 %v1099, %v1098
        %v1117 = vpack.c.b16 %v1100, %v1100
        %v1118 = vpack.c.b16 %v1102, %v1101
        %v1119 = vpack.c.b16 %v1103, %v1103
        %vm1120 = vsmask.f32 7424
        %v1122 = vshrl.u32 %v1104, 16
        %v1124 = vshll.u32 %v1104, 16
        %v1126 = vrot.slane %v1124, 1
        %v1127 = vor.u32 %v1122, %v1126
        %v1129 = vshll.u32 %v1105, 16
        %v1131 = vrot.slane %v1129, 1
        %v1132 = vsel %vm1120, %v1127, %v1131
        %v1134 = vshrl.u32 %v1106, 16
        %v1136 = vshll.u32 %v1106, 16
        %v1138 = vrot.slane %v1136, 1
        %v1139 = vor.u32 %v1134, %v1138
        %v1141 = vshll.u32 %v1107, 16
        %v1143 = vrot.slane %v1141, 1
        %v1144 = vsel %vm1120, %v1139, %v1143
        %v1146 = vshrl.u32 %v1108, 16
        %v1148 = vshll.u32 %v1108, 16
        %v1150 = vrot.slane %v1148, 1
        %v1151 = vor.u32 %v1146, %v1150
        %v1153 = vshll.u32 %v1109, 16
        %v1155 = vrot.slane %v1153, 1
        %v1156 = vsel %vm1120, %v1151, %v1155
        %v1158 = vshrl.u32 %v1110, 16
        %v1160 = vshll.u32 %v1110, 16
        %v1162 = vrot.slane %v1160, 1
        %v1163 = vor.u32 %v1158, %v1162
        %v1165 = vshll.u32 %v1111, 16
        %v1167 = vrot.slane %v1165, 1
        %v1168 = vsel %vm1120, %v1163, %v1167
        %v1170 = vshrl.u32 %v1112, 16
        %v1172 = vshll.u32 %v1112, 16
        %v1174 = vrot.slane %v1172, 1
        %v1175 = vor.u32 %v1170, %v1174
        %v1177 = vshll.u32 %v1113, 16
        %v1179 = vrot.slane %v1177, 1
        %v1180 = vsel %vm1120, %v1175, %v1179
        %v1182 = vshrl.u32 %v1114, 16
        %v1184 = vshll.u32 %v1114, 16
        %v1186 = vrot.slane %v1184, 1
        %v1187 = vor.u32 %v1182, %v1186
        %v1189 = vshll.u32 %v1115, 16
        %v1191 = vrot.slane %v1189, 1
        %v1192 = vsel %vm1120, %v1187, %v1191
        %v1194 = vshrl.u32 %v1116, 16
        %v1196 = vshll.u32 %v1116, 16
        %v1198 = vrot.slane %v1196, 1
        %v1199 = vor.u32 %v1194, %v1198
        %v1201 = vshll.u32 %v1117, 16
        %v1203 = vrot.slane %v1201, 1
        %v1204 = vsel %vm1120, %v1199, %v1203
        %v1206 = vshrl.u32 %v1118, 16
        %v1208 = vshll.u32 %v1118, 16
        %v1210 = vrot.slane %v1208, 1
        %v1211 = vor.u32 %v1206, %v1210
        %v1213 = vshll.u32 %v1119, 16
        %v1215 = vrot.slane %v1213, 1
        %v1216 = vsel %vm1120, %v1211, %v1215
        %s1225 = scalar_lea.vmem [#allocation3], 192
        %1226 = vst.msk [vmem:[%s1225] sm:$0xff] %vm845, %v1132
        %1227 = vst.msk [vmem:[%s1225 + $0x8] sm:$0xff] %vm845, %v1144
        %1228 = vst.msk [vmem:[%s1225 + $0x10] sm:$0xff] %vm845, %v1156
        %1229 = vst.msk [vmem:[%s1225 + $0x18] sm:$0xff] %vm845, %v1168
        %1230 = vst.msk [vmem:[%s1225 + $0x20] sm:$0xff] %vm845, %v1180
        %1231 = vst.msk [vmem:[%s1225 + $0x28] sm:$0xff] %vm845, %v1192
        %1232 = vst.msk [vmem:[%s1225 + $0x30] sm:$0xff] %vm845, %v1204
        %1233 = vst.msk [vmem:[%s1225 + $0x38] sm:$0xff] %vm845, %v1216
        %v1234 = vld [vmem:[#allocation2] sm:$0xf]
        %v1235 = vld [vmem:[#allocation2 + $0x4] sm:$0xf]
        %v1236 = vld [vmem:[#allocation2 + $0x8] sm:$0x1]
        %v1237 = vld [vmem:[#allocation2 + $0xc] sm:$0xf]
        %v1238 = vld [vmem:[#allocation2 + $0x10] sm:$0xf]
        %v1239 = vld [vmem:[#allocation2 + $0x14] sm:$0x1]
        %v1240 = vld [vmem:[#allocation2 + $0x18] sm:$0xf]
        %v1241 = vld [vmem:[#allocation2 + $0x1c] sm:$0xf]
        %v1242 = vld [vmem:[#allocation2 + $0x20] sm:$0x1]
        %v1243 = vld [vmem:[#allocation2 + $0x24] sm:$0xf]
        %v1244 = vld [vmem:[#allocation2 + $0x28] sm:$0xf]
        %v1245 = vld [vmem:[#allocation2 + $0x2c] sm:$0x1]
        %v1246 = vld [vmem:[#allocation2 + $0x30] sm:$0xf]
        %v1247 = vld [vmem:[#allocation2 + $0x34] sm:$0xf]
        %v1248 = vld [vmem:[#allocation2 + $0x38] sm:$0x1]
        %v1249 = vld [vmem:[#allocation2 + $0x3c] sm:$0xf]
        %v1250 = vld [vmem:[#allocation2 + $0x40] sm:$0xf]
        %v1251 = vld [vmem:[#allocation2 + $0x44] sm:$0x1]
        %v1252 = vld [vmem:[#allocation2 + $0x48] sm:$0xf]
        %v1253 = vld [vmem:[#allocation2 + $0x4c] sm:$0xf]
        %v1254 = vld [vmem:[#allocation2 + $0x50] sm:$0x1]
        %v1255 = vld [vmem:[#allocation2 + $0x54] sm:$0xf]
        %v1256 = vld [vmem:[#allocation2 + $0x58] sm:$0xf]
        %v1257 = vld [vmem:[#allocation2 + $0x5c] sm:$0x1]
        %v1282 = vunpack.c.l.b16 %v1234
        %v1283 = vunpack.c.l.b16 %v1235
        %v1284 = vunpack.c.l.b16 %v1236
        %v1285 = vunpack.c.l.b16 %v1237
        %v1286 = vunpack.c.l.b16 %v1238
        %v1287 = vunpack.c.l.b16 %v1239
        %v1288 = vunpack.c.l.b16 %v1240
        %v1289 = vunpack.c.l.b16 %v1241
        %v1290 = vunpack.c.l.b16 %v1242
        %v1291 = vunpack.c.l.b16 %v1243
        %v1292 = vunpack.c.l.b16 %v1244
        %v1293 = vunpack.c.l.b16 %v1245
        %v1294 = vunpack.c.l.b16 %v1246
        %v1295 = vunpack.c.l.b16 %v1247
        %v1296 = vunpack.c.l.b16 %v1248
        %v1297 = vunpack.c.l.b16 %v1249
        %v1298 = vunpack.c.l.b16 %v1250
        %v1299 = vunpack.c.l.b16 %v1251
        %v1300 = vunpack.c.l.b16 %v1252
        %v1301 = vunpack.c.l.b16 %v1253
        %v1302 = vunpack.c.l.b16 %v1254
        %v1303 = vunpack.c.l.b16 %v1255
        %v1304 = vunpack.c.l.b16 %v1256
        %v1305 = vunpack.c.l.b16 %v1257
        %v1306 = vpack.c.b16 %v1283, %v1282
        %v1307 = vpack.c.b16 %v1284, %v1284
        %v1308 = vpack.c.b16 %v1286, %v1285
        %v1309 = vpack.c.b16 %v1287, %v1287
        %v1310 = vpack.c.b16 %v1289, %v1288
        %v1311 = vpack.c.b16 %v1290, %v1290
        %v1312 = vpack.c.b16 %v1292, %v1291
        %v1313 = vpack.c.b16 %v1293, %v1293
        %v1314 = vpack.c.b16 %v1295, %v1294
        %v1315 = vpack.c.b16 %v1296, %v1296
        %v1316 = vpack.c.b16 %v1298, %v1297
        %v1317 = vpack.c.b16 %v1299, %v1299
        %v1318 = vpack.c.b16 %v1301, %v1300
        %v1319 = vpack.c.b16 %v1302, %v1302
        %v1320 = vpack.c.b16 %v1304, %v1303
        %v1321 = vpack.c.b16 %v1305, %v1305
        %v1323 = vshrl.u32 %v1306, 16
        %v1325 = vshll.u32 %v1306, 16
        %v1327 = vrot.slane %v1325, 1
        %v1328 = vor.u32 %v1323, %v1327
        %v1330 = vshll.u32 %v1307, 16
        %v1332 = vrot.slane %v1330, 1
        %v1333 = vsel %vm1120, %v1328, %v1332
        %v1335 = vshrl.u32 %v1308, 16
        %v1337 = vshll.u32 %v1308, 16
        %v1339 = vrot.slane %v1337, 1
        %v1340 = vor.u32 %v1335, %v1339
        %v1342 = vshll.u32 %v1309, 16
        %v1344 = vrot.slane %v1342, 1
        %v1345 = vsel %vm1120, %v1340, %v1344
        %v1347 = vshrl.u32 %v1310, 16
        %v1349 = vshll.u32 %v1310, 16
        %v1351 = vrot.slane %v1349, 1
        %v1352 = vor.u32 %v1347, %v1351
        %v1354 = vshll.u32 %v1311, 16
        %v1356 = vrot.slane %v1354, 1
        %v1357 = vsel %vm1120, %v1352, %v1356
        %v1359 = vshrl.u32 %v1312, 16
        %v1361 = vshll.u32 %v1312, 16
        %v1363 = vrot.slane %v1361, 1
        %v1364 = vor.u32 %v1359, %v1363
        %v1366 = vshll.u32 %v1313, 16
        %v1368 = vrot.slane %v1366, 1
        %v1369 = vsel %vm1120, %v1364, %v1368
        %v1371 = vshrl.u32 %v1314, 16
        %v1373 = vshll.u32 %v1314, 16
        %v1375 = vrot.slane %v1373, 1
        %v1376 = vor.u32 %v1371, %v1375
        %v1378 = vshll.u32 %v1315, 16
        %v1380 = vrot.slane %v1378, 1
        %v1381 = vsel %vm1120, %v1376, %v1380
        %v1383 = vshrl.u32 %v1316, 16
        %v1385 = vshll.u32 %v1316, 16
        %v1387 = vrot.slane %v1385, 1
        %v1388 = vor.u32 %v1383, %v1387
        %v1390 = vshll.u32 %v1317, 16
        %v1392 = vrot.slane %v1390, 1
        %v1393 = vsel %vm1120, %v1388, %v1392
        %v1395 = vshrl.u32 %v1318, 16
        %v1397 = vshll.u32 %v1318, 16
        %v1399 = vrot.slane %v1397, 1
        %v1400 = vor.u32 %v1395, %v1399
        %v1402 = vshll.u32 %v1319, 16
        %v1404 = vrot.slane %v1402, 1
        %v1405 = vsel %vm1120, %v1400, %v1404
        %v1407 = vshrl.u32 %v1320, 16
        %v1409 = vshll.u32 %v1320, 16
        %v1411 = vrot.slane %v1409, 1
        %v1412 = vor.u32 %v1407, %v1411
        %v1414 = vshll.u32 %v1321, 16
        %v1416 = vrot.slane %v1414, 1
        %v1417 = vsel %vm1120, %v1412, %v1416
        %1418 = vrot.lane.b32.xlu0 %v1333, 127
        %v1419 = vpop.permute.xlu0 %1418
        %1420 = vrot.lane.b32.xlu0 %v1345, 127
        %v1421 = vpop.permute.xlu0 %1420
        %1422 = vrot.lane.b32.xlu0 %v1357, 127
        %v1423 = vpop.permute.xlu0 %1422
        %1424 = vrot.lane.b32.xlu0 %v1369, 127
        %v1425 = vpop.permute.xlu0 %1424
        %1426 = vrot.lane.b32.xlu0 %v1381, 127
        %v1427 = vpop.permute.xlu0 %1426
        %1428 = vrot.lane.b32.xlu0 %v1393, 127
        %v1429 = vpop.permute.xlu0 %1428
        %1430 = vrot.lane.b32.xlu0 %v1405, 127
        %v1431 = vpop.permute.xlu0 %1430
        %1432 = vrot.lane.b32.xlu0 %v1417, 127
        %v1433 = vpop.permute.xlu0 %1432
        %s1442 = scalar_lea.vmem [#allocation3], 256
        %1443 = vst.msk [vmem:[%s1442] sm:$0xff] %vm845, %v1419
        %1444 = vst.msk [vmem:[%s1442 + $0x8] sm:$0xff] %vm845, %v1421
        %1445 = vst.msk [vmem:[%s1442 + $0x10] sm:$0xff] %vm845, %v1423
        %1446 = vst.msk [vmem:[%s1442 + $0x18] sm:$0xff] %vm845, %v1425
        %1447 = vst.msk [vmem:[%s1442 + $0x20] sm:$0xff] %vm845, %v1427
        %1448 = vst.msk [vmem:[%s1442 + $0x28] sm:$0xff] %vm845, %v1429
        %1449 = vst.msk [vmem:[%s1442 + $0x30] sm:$0xff] %vm845, %v1431
        %1450 = vst.msk [vmem:[%s1442 + $0x38] sm:$0xff] %vm845, %v1433
        %v1451 = vld [vmem:[#allocation2] sm:$0xf]
        %v1452 = vld [vmem:[#allocation2 + $0x4] sm:$0xf]
        %v1453 = vld [vmem:[#allocation2 + $0x8] sm:$0x1]
        %v1454 = vld [vmem:[#allocation2 + $0xc] sm:$0xf]
        %v1455 = vld [vmem:[#allocation2 + $0x10] sm:$0xf]
        %v1456 = vld [vmem:[#allocation2 + $0x14] sm:$0x1]
        %v1457 = vld [vmem:[#allocation2 + $0x18] sm:$0xf]
        %v1458 = vld [vmem:[#allocation2 + $0x1c] sm:$0xf]
        %v1459 = vld [vmem:[#allocation2 + $0x20] sm:$0x1]
        %v1460 = vld [vmem:[#allocation2 + $0x24] sm:$0xf]
        %v1461 = vld [vmem:[#allocation2 + $0x28] sm:$0xf]
        %v1462 = vld [vmem:[#allocation2 + $0x2c] sm:$0x1]
        %v1463 = vld [vmem:[#allocation2 + $0x30] sm:$0xf]
        %v1464 = vld [vmem:[#allocation2 + $0x34] sm:$0xf]
        %v1465 = vld [vmem:[#allocation2 + $0x38] sm:$0x1]
        %v1466 = vld [vmem:[#allocation2 + $0x3c] sm:$0xf]
        %v1467 = vld [vmem:[#allocation2 + $0x40] sm:$0xf]
        %v1468 = vld [vmem:[#allocation2 + $0x44] sm:$0x1]
        %v1469 = vld [vmem:[#allocation2 + $0x48] sm:$0xf]
        %v1470 = vld [vmem:[#allocation2 + $0x4c] sm:$0xf]
        %v1471 = vld [vmem:[#allocation2 + $0x50] sm:$0x1]
        %v1472 = vld [vmem:[#allocation2 + $0x54] sm:$0xf]
        %v1473 = vld [vmem:[#allocation2 + $0x58] sm:$0xf]
        %v1474 = vld [vmem:[#allocation2 + $0x5c] sm:$0x1]
        %v1499 = vunpack.c.l.b16 %v1451
        %v1500 = vunpack.c.l.b16 %v1452
        %v1501 = vunpack.c.l.b16 %v1453
        %v1502 = vunpack.c.l.b16 %v1454
        %v1503 = vunpack.c.l.b16 %v1455
        %v1504 = vunpack.c.l.b16 %v1456
        %v1505 = vunpack.c.l.b16 %v1457
        %v1506 = vunpack.c.l.b16 %v1458
        %v1507 = vunpack.c.l.b16 %v1459
        %v1508 = vunpack.c.l.b16 %v1460
        %v1509 = vunpack.c.l.b16 %v1461
        %v1510 = vunpack.c.l.b16 %v1462
        %v1511 = vunpack.c.l.b16 %v1463
        %v1512 = vunpack.c.l.b16 %v1464
        %v1513 = vunpack.c.l.b16 %v1465
        %v1514 = vunpack.c.l.b16 %v1466
        %v1515 = vunpack.c.l.b16 %v1467
        %v1516 = vunpack.c.l.b16 %v1468
        %v1517 = vunpack.c.l.b16 %v1469
        %v1518 = vunpack.c.l.b16 %v1470
        %v1519 = vunpack.c.l.b16 %v1471
        %v1520 = vunpack.c.l.b16 %v1472
        %v1521 = vunpack.c.l.b16 %v1473
        %v1522 = vunpack.c.l.b16 %v1474
        %v1523 = vpack.c.b16 %v1500, %v1499
        %v1524 = vpack.c.b16 %v1501, %v1501
        %v1525 = vpack.c.b16 %v1503, %v1502
        %v1526 = vpack.c.b16 %v1504, %v1504
        %v1527 = vpack.c.b16 %v1506, %v1505
        %v1528 = vpack.c.b16 %v1507, %v1507
        %v1529 = vpack.c.b16 %v1509, %v1508
        %v1530 = vpack.c.b16 %v1510, %v1510
        %v1531 = vpack.c.b16 %v1512, %v1511
        %v1532 = vpack.c.b16 %v1513, %v1513
        %v1533 = vpack.c.b16 %v1515, %v1514
        %v1534 = vpack.c.b16 %v1516, %v1516
        %v1535 = vpack.c.b16 %v1518, %v1517
        %v1536 = vpack.c.b16 %v1519, %v1519
        %v1537 = vpack.c.b16 %v1521, %v1520
        %v1538 = vpack.c.b16 %v1522, %v1522
        %v1540 = vshrl.u32 %v1523, 16
        %v1542 = vshll.u32 %v1523, 16
        %v1544 = vrot.slane %v1542, 1
        %v1545 = vor.u32 %v1540, %v1544
        %v1547 = vshll.u32 %v1524, 16
        %v1549 = vrot.slane %v1547, 1
        %v1550 = vsel %vm1120, %v1545, %v1549
        %v1552 = vshrl.u32 %v1525, 16
        %v1554 = vshll.u32 %v1525, 16
        %v1556 = vrot.slane %v1554, 1
        %v1557 = vor.u32 %v1552, %v1556
        %v1559 = vshll.u32 %v1526, 16
        %v1561 = vrot.slane %v1559, 1
        %v1562 = vsel %vm1120, %v1557, %v1561
        %v1564 = vshrl.u32 %v1527, 16
        %v1566 = vshll.u32 %v1527, 16
        %v1568 = vrot.slane %v1566, 1
        %v1569 = vor.u32 %v1564, %v1568
        %v1571 = vshll.u32 %v1528, 16
        %v1573 = vrot.slane %v1571, 1
        %v1574 = vsel %vm1120, %v1569, %v1573
        %v1576 = vshrl.u32 %v1529, 16
        %v1578 = vshll.u32 %v1529, 16
        %v1580 = vrot.slane %v1578, 1
        %v1581 = vor.u32 %v1576, %v1580
        %v1583 = vshll.u32 %v1530, 16
        %v1585 = vrot.slane %v1583, 1
        %v1586 = vsel %vm1120, %v1581, %v1585
        %v1588 = vshrl.u32 %v1531, 16
        %v1590 = vshll.u32 %v1531, 16
        %v1592 = vrot.slane %v1590, 1
        %v1593 = vor.u32 %v1588, %v1592
        %v1595 = vshll.u32 %v1532, 16
        %v1597 = vrot.slane %v1595, 1
        %v1598 = vsel %vm1120, %v1593, %v1597
        %v1600 = vshrl.u32 %v1533, 16
        %v1602 = vshll.u32 %v1533, 16
        %v1604 = vrot.slane %v1602, 1
        %v1605 = vor.u32 %v1600, %v1604
        %v1607 = vshll.u32 %v1534, 16
        %v1609 = vrot.slane %v1607, 1
        %v1610 = vsel %vm1120, %v1605, %v1609
        %v1612 = vshrl.u32 %v1535, 16
        %v1614 = vshll.u32 %v1535, 16
        %v1616 = vrot.slane %v1614, 1
        %v1617 = vor.u32 %v1612, %v1616
        %v1619 = vshll.u32 %v1536, 16
        %v1621 = vrot.slane %v1619, 1
        %v1622 = vsel %vm1120, %v1617, %v1621
        %v1624 = vshrl.u32 %v1537, 16
        %v1626 = vshll.u32 %v1537, 16
        %v1628 = vrot.slane %v1626, 1
        %v1629 = vor.u32 %v1624, %v1628
        %v1631 = vshll.u32 %v1538, 16
        %v1633 = vrot.slane %v1631, 1
        %v1634 = vsel %vm1120, %v1629, %v1633
        %1635 = vrot.lane.b32.xlu0 %v1550, 126
        %v1636 = vpop.permute.xlu0 %1635
        %1637 = vrot.lane.b32.xlu0 %v1562, 126
        %v1638 = vpop.permute.xlu0 %1637
        %1639 = vrot.lane.b32.xlu0 %v1574, 126
        %v1640 = vpop.permute.xlu0 %1639
        %1641 = vrot.lane.b32.xlu0 %v1586, 126
        %v1642 = vpop.permute.xlu0 %1641
        %1643 = vrot.lane.b32.xlu0 %v1598, 126
        %v1644 = vpop.permute.xlu0 %1643
        %1645 = vrot.lane.b32.xlu0 %v1610, 126
        %v1646 = vpop.permute.xlu0 %1645
        %1647 = vrot.lane.b32.xlu0 %v1622, 126
        %v1648 = vpop.permute.xlu0 %1647
        %1649 = vrot.lane.b32.xlu0 %v1634, 126
        %v1650 = vpop.permute.xlu0 %1649
        %s1659 = scalar_lea.vmem [#allocation3], 320
        %1660 = vst.msk [vmem:[%s1659] sm:$0xff] %vm845, %v1636
        %1661 = vst.msk [vmem:[%s1659 + $0x8] sm:$0xff] %vm845, %v1638
        %1662 = vst.msk [vmem:[%s1659 + $0x10] sm:$0xff] %vm845, %v1640
        %1663 = vst.msk [vmem:[%s1659 + $0x18] sm:$0xff] %vm845, %v1642
        %1664 = vst.msk [vmem:[%s1659 + $0x20] sm:$0xff] %vm845, %v1644
        %1665 = vst.msk [vmem:[%s1659 + $0x28] sm:$0xff] %vm845, %v1646
        %1666 = vst.msk [vmem:[%s1659 + $0x30] sm:$0xff] %vm845, %v1648
        %1667 = vst.msk [vmem:[%s1659 + $0x38] sm:$0xff] %vm845, %v1650
        %v1668 = vld [vmem:[#allocation2] sm:$0xe]
        %v1669 = vld [vmem:[#allocation2 + $0x4] sm:$0xf]
        %v1670 = vld [vmem:[#allocation2 + $0x8] sm:$0x1]
        %v1671 = vld [vmem:[#allocation2 + $0xc] sm:$0xe]
        %v1672 = vld [vmem:[#allocation2 + $0x10] sm:$0xf]
        %v1673 = vld [vmem:[#allocation2 + $0x14] sm:$0x1]
        %v1674 = vld [vmem:[#allocation2 + $0x18] sm:$0xe]
        %v1675 = vld [vmem:[#allocation2 + $0x1c] sm:$0xf]
        %v1676 = vld [vmem:[#allocation2 + $0x20] sm:$0x1]
        %v1677 = vld [vmem:[#allocation2 + $0x24] sm:$0xe]
        %v1678 = vld [vmem:[#allocation2 + $0x28] sm:$0xf]
        %v1679 = vld [vmem:[#allocation2 + $0x2c] sm:$0x1]
        %v1680 = vld [vmem:[#allocation2 + $0x30] sm:$0xe]
        %v1681 = vld [vmem:[#allocation2 + $0x34] sm:$0xf]
        %v1682 = vld [vmem:[#allocation2 + $0x38] sm:$0x1]
        %v1683 = vld [vmem:[#allocation2 + $0x3c] sm:$0xe]
        %v1684 = vld [vmem:[#allocation2 + $0x40] sm:$0xf]
        %v1685 = vld [vmem:[#allocation2 + $0x44] sm:$0x1]
        %v1686 = vld [vmem:[#allocation2 + $0x48] sm:$0xe]
        %v1687 = vld [vmem:[#allocation2 + $0x4c] sm:$0xf]
        %v1688 = vld [vmem:[#allocation2 + $0x50] sm:$0x1]
        %v1689 = vld [vmem:[#allocation2 + $0x54] sm:$0xe]
        %v1690 = vld [vmem:[#allocation2 + $0x58] sm:$0xf]
        %v1691 = vld [vmem:[#allocation2 + $0x5c] sm:$0x1]
        %v1716 = vunpack.c.l.b16 %v1668
        %v1717 = vunpack.c.l.b16 %v1669
        %v1718 = vunpack.c.l.b16 %v1670
        %v1719 = vunpack.c.l.b16 %v1671
        %v1720 = vunpack.c.l.b16 %v1672
        %v1721 = vunpack.c.l.b16 %v1673
        %v1722 = vunpack.c.l.b16 %v1674
        %v1723 = vunpack.c.l.b16 %v1675
        %v1724 = vunpack.c.l.b16 %v1676
        %v1725 = vunpack.c.l.b16 %v1677
        %v1726 = vunpack.c.l.b16 %v1678
        %v1727 = vunpack.c.l.b16 %v1679
        %v1728 = vunpack.c.l.b16 %v1680
        %v1729 = vunpack.c.l.b16 %v1681
        %v1730 = vunpack.c.l.b16 %v1682
        %v1731 = vunpack.c.l.b16 %v1683
        %v1732 = vunpack.c.l.b16 %v1684
        %v1733 = vunpack.c.l.b16 %v1685
        %v1734 = vunpack.c.l.b16 %v1686
        %v1735 = vunpack.c.l.b16 %v1687
        %v1736 = vunpack.c.l.b16 %v1688
        %v1737 = vunpack.c.l.b16 %v1689
        %v1738 = vunpack.c.l.b16 %v1690
        %v1739 = vunpack.c.l.b16 %v1691
        %v1740 = vpack.c.b16 %v1717, %v1716
        %v1741 = vpack.c.b16 %v1718, %v1718
        %v1742 = vpack.c.b16 %v1720, %v1719
        %v1743 = vpack.c.b16 %v1721, %v1721
        %v1744 = vpack.c.b16 %v1723, %v1722
        %v1745 = vpack.c.b16 %v1724, %v1724
        %v1746 = vpack.c.b16 %v1726, %v1725
        %v1747 = vpack.c.b16 %v1727, %v1727
        %v1748 = vpack.c.b16 %v1729, %v1728
        %v1749 = vpack.c.b16 %v1730, %v1730
        %v1750 = vpack.c.b16 %v1732, %v1731
        %v1751 = vpack.c.b16 %v1733, %v1733
        %v1752 = vpack.c.b16 %v1735, %v1734
        %v1753 = vpack.c.b16 %v1736, %v1736
        %v1754 = vpack.c.b16 %v1738, %v1737
        %v1755 = vpack.c.b16 %v1739, %v1739
        %vm1756 = vcmask 1046528
        %v1757 = vrot.slane %v1740, 1
        %v1758 = vrot.slane %v1741, 1
        %v1759 = vsel %vm1756, %v1757, %v1758
        %v1760 = vrot.slane %v1742, 1
        %v1761 = vrot.slane %v1743, 1
        %v1762 = vsel %vm1756, %v1760, %v1761
        %v1763 = vrot.slane %v1744, 1
        %v1764 = vrot.slane %v1745, 1
        %v1765 = vsel %vm1756, %v1763, %v1764
        %v1766 = vrot.slane %v1746, 1
        %v1767 = vrot.slane %v1747, 1
        %v1768 = vsel %vm1756, %v1766, %v1767
        %v1769 = vrot.slane %v1748, 1
        %v1770 = vrot.slane %v1749, 1
        %v1771 = vsel %vm1756, %v1769, %v1770
        %v1772 = vrot.slane %v1750, 1
        %v1773 = vrot.slane %v1751, 1
        %v1774 = vsel %vm1756, %v1772, %v1773
        %v1775 = vrot.slane %v1752, 1
        %v1776 = vrot.slane %v1753, 1
        %v1777 = vsel %vm1756, %v1775, %v1776
        %v1778 = vrot.slane %v1754, 1
        %v1779 = vrot.slane %v1755, 1
        %v1780 = vsel %vm1756, %v1778, %v1779
        %s1789 = scalar_lea.vmem [#allocation3], 384
        %1790 = vst.msk [vmem:[%s1789] sm:$0xff] %vm845, %v1759
        %1791 = vst.msk [vmem:[%s1789 + $0x8] sm:$0xff] %vm845, %v1762
        %1792 = vst.msk [vmem:[%s1789 + $0x10] sm:$0xff] %vm845, %v1765
        %1793 = vst.msk [vmem:[%s1789 + $0x18] sm:$0xff] %vm845, %v1768
        %1794 = vst.msk [vmem:[%s1789 + $0x20] sm:$0xff] %vm845, %v1771
        %1795 = vst.msk [vmem:[%s1789 + $0x28] sm:$0xff] %vm845, %v1774
        %1796 = vst.msk [vmem:[%s1789 + $0x30] sm:$0xff] %vm845, %v1777
        %1797 = vst.msk [vmem:[%s1789 + $0x38] sm:$0xff] %vm845, %v1780
        %v1798 = vld [vmem:[#allocation2] sm:$0xe]
        %v1799 = vld [vmem:[#allocation2 + $0x4] sm:$0xf]
        %v1800 = vld [vmem:[#allocation2 + $0x8] sm:$0x1]
        %v1801 = vld [vmem:[#allocation2 + $0xc] sm:$0xe]
        %v1802 = vld [vmem:[#allocation2 + $0x10] sm:$0xf]
        %v1803 = vld [vmem:[#allocation2 + $0x14] sm:$0x1]
        %v1804 = vld [vmem:[#allocation2 + $0x18] sm:$0xe]
        %v1805 = vld [vmem:[#allocation2 + $0x1c] sm:$0xf]
        %v1806 = vld [vmem:[#allocation2 + $0x20] sm:$0x1]
        %v1807 = vld [vmem:[#allocation2 + $0x24] sm:$0xe]
        %v1808 = vld [vmem:[#allocation2 + $0x28] sm:$0xf]
        %v1809 = vld [vmem:[#allocation2 + $0x2c] sm:$0x1]
        %v1810 = vld [vmem:[#allocation2 + $0x30] sm:$0xe]
        %v1811 = vld [vmem:[#allocation2 + $0x34] sm:$0xf]
        %v1812 = vld [vmem:[#allocation2 + $0x38] sm:$0x1]
        %v1813 = vld [vmem:[#allocation2 + $0x3c] sm:$0xe]
        %v1814 = vld [vmem:[#allocation2 + $0x40] sm:$0xf]
        %v1815 = vld [vmem:[#allocation2 + $0x44] sm:$0x1]
        %v1816 = vld [vmem:[#allocation2 + $0x48] sm:$0xe]
        %v1817 = vld [vmem:[#allocation2 + $0x4c] sm:$0xf]
        %v1818 = vld [vmem:[#allocation2 + $0x50] sm:$0x1]
        %v1819 = vld [vmem:[#allocation2 + $0x54] sm:$0xe]
        %v1820 = vld [vmem:[#allocation2 + $0x58] sm:$0xf]
        %v1821 = vld [vmem:[#allocation2 + $0x5c] sm:$0x1]
        %v1846 = vunpack.c.l.b16 %v1798
        %v1847 = vunpack.c.l.b16 %v1799
        %v1848 = vunpack.c.l.b16 %v1800
        %v1849 = vunpack.c.l.b16 %v1801
        %v1850 = vunpack.c.l.b16 %v1802
        %v1851 = vunpack.c.l.b16 %v1803
        %v1852 = vunpack.c.l.b16 %v1804
        %v1853 = vunpack.c.l.b16 %v1805
        %v1854 = vunpack.c.l.b16 %v1806
        %v1855 = vunpack.c.l.b16 %v1807
        %v1856 = vunpack.c.l.b16 %v1808
        %v1857 = vunpack.c.l.b16 %v1809
        %v1858 = vunpack.c.l.b16 %v1810
        %v1859 = vunpack.c.l.b16 %v1811
        %v1860 = vunpack.c.l.b16 %v1812
        %v1861 = vunpack.c.l.b16 %v1813
        %v1862 = vunpack.c.l.b16 %v1814
        %v1863 = vunpack.c.l.b16 %v1815
        %v1864 = vunpack.c.l.b16 %v1816
        %v1865 = vunpack.c.l.b16 %v1817
        %v1866 = vunpack.c.l.b16 %v1818
        %v1867 = vunpack.c.l.b16 %v1819
        %v1868 = vunpack.c.l.b16 %v1820
        %v1869 = vunpack.c.l.b16 %v1821
        %v1870 = vpack.c.b16 %v1847, %v1846
        %v1871 = vpack.c.b16 %v1848, %v1848
        %v1872 = vpack.c.b16 %v1850, %v1849
        %v1873 = vpack.c.b16 %v1851, %v1851
        %v1874 = vpack.c.b16 %v1853, %v1852
        %v1875 = vpack.c.b16 %v1854, %v1854
        %v1876 = vpack.c.b16 %v1856, %v1855
        %v1877 = vpack.c.b16 %v1857, %v1857
        %v1878 = vpack.c.b16 %v1859, %v1858
        %v1879 = vpack.c.b16 %v1860, %v1860
        %v1880 = vpack.c.b16 %v1862, %v1861
        %v1881 = vpack.c.b16 %v1863, %v1863
        %v1882 = vpack.c.b16 %v1865, %v1864
        %v1883 = vpack.c.b16 %v1866, %v1866
        %v1884 = vpack.c.b16 %v1868, %v1867
        %v1885 = vpack.c.b16 %v1869, %v1869
        %v1886 = vrot.slane %v1870, 1
        %v1887 = vrot.slane %v1871, 1
        %v1888 = vsel %vm1756, %v1886, %v1887
        %v1889 = vrot.slane %v1872, 1
        %v1890 = vrot.slane %v1873, 1
        %v1891 = vsel %vm1756, %v1889, %v1890
        %v1892 = vrot.slane %v1874, 1
        %v1893 = vrot.slane %v1875, 1
        %v1894 = vsel %vm1756, %v1892, %v1893
        %v1895 = vrot.slane %v1876, 1
        %v1896 = vrot.slane %v1877, 1
        %v1897 = vsel %vm1756, %v1895, %v1896
        %v1898 = vrot.slane %v1878, 1
        %v1899 = vrot.slane %v1879, 1
        %v1900 = vsel %vm1756, %v1898, %v1899
        %v1901 = vrot.slane %v1880, 1
        %v1902 = vrot.slane %v1881, 1
        %v1903 = vsel %vm1756, %v1901, %v1902
        %v1904 = vrot.slane %v1882, 1
        %v1905 = vrot.slane %v1883, 1
        %v1906 = vsel %vm1756, %v1904, %v1905
        %v1907 = vrot.slane %v1884, 1
        %v1908 = vrot.slane %v1885, 1
        %v1909 = vsel %vm1756, %v1907, %v1908
        %1910 = vrot.lane.b32.xlu0 %v1888, 127
        %v1911 = vpop.permute.xlu0 %1910
        %1912 = vrot.lane.b32.xlu0 %v1891, 127
        %v1913 = vpop.permute.xlu0 %1912
        %1914 = vrot.lane.b32.xlu0 %v1894, 127
        %v1915 = vpop.permute.xlu0 %1914
        %1916 = vrot.lane.b32.xlu0 %v1897, 127
        %v1917 = vpop.permute.xlu0 %1916
        %1918 = vrot.lane.b32.xlu0 %v1900, 127
        %v1919 = vpop.permute.xlu0 %1918
        %1920 = vrot.lane.b32.xlu0 %v1903, 127
        %v1921 = vpop.permute.xlu0 %1920
        %1922 = vrot.lane.b32.xlu0 %v1906, 127
        %v1923 = vpop.permute.xlu0 %1922
        %1924 = vrot.lane.b32.xlu0 %v1909, 127
        %v1925 = vpop.permute.xlu0 %1924
        %s1934 = scalar_lea.vmem [#allocation3], 448
        %1935 = vst.msk [vmem:[%s1934] sm:$0xff] %vm845, %v1911
        %1936 = vst.msk [vmem:[%s1934 + $0x8] sm:$0xff] %vm845, %v1913
        %1937 = vst.msk [vmem:[%s1934 + $0x10] sm:$0xff] %vm845, %v1915
        %1938 = vst.msk [vmem:[%s1934 + $0x18] sm:$0xff] %vm845, %v1917
        %1939 = vst.msk [vmem:[%s1934 + $0x20] sm:$0xff] %vm845, %v1919
        %1940 = vst.msk [vmem:[%s1934 + $0x28] sm:$0xff] %vm845, %v1921
        %1941 = vst.msk [vmem:[%s1934 + $0x30] sm:$0xff] %vm845, %v1923
        %1942 = vst.msk [vmem:[%s1934 + $0x38] sm:$0xff] %vm845, %v1925
        %v1943 = vld [vmem:[#allocation2] sm:$0xe]
        %v1944 = vld [vmem:[#allocation2 + $0x4] sm:$0xf]
        %v1945 = vld [vmem:[#allocation2 + $0x8] sm:$0x1]
        %v1946 = vld [vmem:[#allocation2 + $0xc] sm:$0xe]
        %v1947 = vld [vmem:[#allocation2 + $0x10] sm:$0xf]
        %v1948 = vld [vmem:[#allocation2 + $0x14] sm:$0x1]
        %v1949 = vld [vmem:[#allocation2 + $0x18] sm:$0xe]
        %v1950 = vld [vmem:[#allocation2 + $0x1c] sm:$0xf]
        %v1951 = vld [vmem:[#allocation2 + $0x20] sm:$0x1]
        %v1952 = vld [vmem:[#allocation2 + $0x24] sm:$0xe]
        %v1953 = vld [vmem:[#allocation2 + $0x28] sm:$0xf]
        %v1954 = vld [vmem:[#allocation2 + $0x2c] sm:$0x1]
        %v1955 = vld [vmem:[#allocation2 + $0x30] sm:$0xe]
        %v1956 = vld [vmem:[#allocation2 + $0x34] sm:$0xf]
        %v1957 = vld [vmem:[#allocation2 + $0x38] sm:$0x1]
        %v1958 = vld [vmem:[#allocation2 + $0x3c] sm:$0xe]
        %v1959 = vld [vmem:[#allocation2 + $0x40] sm:$0xf]
        %v1960 = vld [vmem:[#allocation2 + $0x44] sm:$0x1]
        %v1961 = vld [vmem:[#allocation2 + $0x48] sm:$0xe]
        %v1962 = vld [vmem:[#allocation2 + $0x4c] sm:$0xf]
        %v1963 = vld [vmem:[#allocation2 + $0x50] sm:$0x1]
        %v1964 = vld [vmem:[#allocation2 + $0x54] sm:$0xe]
        %v1965 = vld [vmem:[#allocation2 + $0x58] sm:$0xf]
        %v1966 = vld [vmem:[#allocation2 + $0x5c] sm:$0x1]
        %v1991 = vunpack.c.l.b16 %v1943
        %v1992 = vunpack.c.l.b16 %v1944
        %v1993 = vunpack.c.l.b16 %v1945
        %v1994 = vunpack.c.l.b16 %v1946
        %v1995 = vunpack.c.l.b16 %v1947
        %v1996 = vunpack.c.l.b16 %v1948
        %v1997 = vunpack.c.l.b16 %v1949
        %v1998 = vunpack.c.l.b16 %v1950
        %v1999 = vunpack.c.l.b16 %v1951
        %v2000 = vunpack.c.l.b16 %v1952
        %v2001 = vunpack.c.l.b16 %v1953
        %v2002 = vunpack.c.l.b16 %v1954
        %v2003 = vunpack.c.l.b16 %v1955
        %v2004 = vunpack.c.l.b16 %v1956
        %v2005 = vunpack.c.l.b16 %v1957
        %v2006 = vunpack.c.l.b16 %v1958
        %v2007 = vunpack.c.l.b16 %v1959
        %v2008 = vunpack.c.l.b16 %v1960
        %v2009 = vunpack.c.l.b16 %v1961
        %v2010 = vunpack.c.l.b16 %v1962
        %v2011 = vunpack.c.l.b16 %v1963
        %v2012 = vunpack.c.l.b16 %v1964
        %v2013 = vunpack.c.l.b16 %v1965
        %v2014 = vunpack.c.l.b16 %v1966
        %v2015 = vpack.c.b16 %v1992, %v1991
        %v2016 = vpack.c.b16 %v1993, %v1993
        %v2017 = vpack.c.b16 %v1995, %v1994
        %v2018 = vpack.c.b16 %v1996, %v1996
        %v2019 = vpack.c.b16 %v1998, %v1997
        %v2020 = vpack.c.b16 %v1999, %v1999
        %v2021 = vpack.c.b16 %v2001, %v2000
        %v2022 = vpack.c.b16 %v2002, %v2002
        %v2023 = vpack.c.b16 %v2004, %v2003
        %v2024 = vpack.c.b16 %v2005, %v2005
        %v2025 = vpack.c.b16 %v2007, %v2006
        %v2026 = vpack.c.b16 %v2008, %v2008
        %v2027 = vpack.c.b16 %v2010, %v2009
        %v2028 = vpack.c.b16 %v2011, %v2011
        %v2029 = vpack.c.b16 %v2013, %v2012
        %v2030 = vpack.c.b16 %v2014, %v2014
        %v2031 = vrot.slane %v2015, 1
        %v2032 = vrot.slane %v2016, 1
        %v2033 = vsel %vm1756, %v2031, %v2032
        %v2034 = vrot.slane %v2017, 1
        %v2035 = vrot.slane %v2018, 1
        %v2036 = vsel %vm1756, %v2034, %v2035
        %v2037 = vrot.slane %v2019, 1
        %v2038 = vrot.slane %v2020, 1
        %v2039 = vsel %vm1756, %v2037, %v2038
        %v2040 = vrot.slane %v2021, 1
        %v2041 = vrot.slane %v2022, 1
        %v2042 = vsel %vm1756, %v2040, %v2041
        %v2043 = vrot.slane %v2023, 1
        %v2044 = vrot.slane %v2024, 1
        %v2045 = vsel %vm1756, %v2043, %v2044
        %v2046 = vrot.slane %v2025, 1
        %v2047 = vrot.slane %v2026, 1
        %v2048 = vsel %vm1756, %v2046, %v2047
        %v2049 = vrot.slane %v2027, 1
        %v2050 = vrot.slane %v2028, 1
        %v2051 = vsel %vm1756, %v2049, %v2050
        %v2052 = vrot.slane %v2029, 1
        %v2053 = vrot.slane %v2030, 1
        %v2054 = vsel %vm1756, %v2052, %v2053
        %2055 = vrot.lane.b32.xlu0 %v2033, 126
        %v2056 = vpop.permute.xlu0 %2055
        %2057 = vrot.lane.b32.xlu0 %v2036, 126
        %v2058 = vpop.permute.xlu0 %2057
        %2059 = vrot.lane.b32.xlu0 %v2039, 126
        %v2060 = vpop.permute.xlu0 %2059
        %2061 = vrot.lane.b32.xlu0 %v2042, 126
        %v2062 = vpop.permute.xlu0 %2061
        %2063 = vrot.lane.b32.xlu0 %v2045, 126
        %v2064 = vpop.permute.xlu0 %2063
        %2065 = vrot.lane.b32.xlu0 %v2048, 126
        %v2066 = vpop.permute.xlu0 %2065
        %2067 = vrot.lane.b32.xlu0 %v2051, 126
        %v2068 = vpop.permute.xlu0 %2067
        %2069 = vrot.lane.b32.xlu0 %v2054, 126
        %v2070 = vpop.permute.xlu0 %2069
        %s2079 = scalar_lea.vmem [#allocation3], 512
        %2080 = vst.msk [vmem:[%s2079] sm:$0xff] %vm845, %v2056
        %2081 = vst.msk [vmem:[%s2079 + $0x8] sm:$0xff] %vm845, %v2058
        %2082 = vst.msk [vmem:[%s2079 + $0x10] sm:$0xff] %vm845, %v2060
        %2083 = vst.msk [vmem:[%s2079 + $0x18] sm:$0xff] %vm845, %v2062
        %2084 = vst.msk [vmem:[%s2079 + $0x20] sm:$0xff] %vm845, %v2064
        %2085 = vst.msk [vmem:[%s2079 + $0x28] sm:$0xff] %vm845, %v2066
        %2086 = vst.msk [vmem:[%s2079 + $0x30] sm:$0xff] %vm845, %v2068
        %2087 = vst.msk [vmem:[%s2079 + $0x38] sm:$0xff] %vm845, %v2070
        %v2088 = vld [vmem:[%s2] sm:$0xf]
        %v2089 = vld [vmem:[%s2 + $0x4] sm:$0xf]
        %v2090 = vld [vmem:[#allocation3] sm:$0xff]
        %v2091 = vld [vmem:[#allocation3 + $0x8] sm:$0xff]
        %v2092 = vld [vmem:[#allocation3 + $0x10] sm:$0xff]
        %v2093 = vld [vmem:[#allocation3 + $0x18] sm:$0xff]
        %v2094 = vld [vmem:[#allocation3 + $0x20] sm:$0xff]
        %v2095 = vld [vmem:[#allocation3 + $0x28] sm:$0xff]
        %v2096 = vld [vmem:[#allocation3 + $0x30] sm:$0xff]
        %v2097 = vld [vmem:[#allocation3 + $0x38] sm:$0xff]
        %v2098 = vld [vmem:[#allocation3 + $0x40] sm:$0xff]
        %v2099 = vld [vmem:[#allocation3 + $0x48] sm:$0xff]
        %v2100 = vld [vmem:[#allocation3 + $0x50] sm:$0xff]
        %v2101 = vld [vmem:[#allocation3 + $0x58] sm:$0xff]
        %v2102 = vld [vmem:[#allocation3 + $0x60] sm:$0xff]
        %v2103 = vld [vmem:[#allocation3 + $0x68] sm:$0xff]
        %v2104 = vld [vmem:[#allocation3 + $0x70] sm:$0xff]
        %v2105 = vld [vmem:[#allocation3 + $0x78] sm:$0xff]
        %v2106 = vld [vmem:[#allocation3 + $0x80] sm:$0xff]
        %v2107 = vld [vmem:[#allocation3 + $0x88] sm:$0xff]
        %v2108 = vld [vmem:[#allocation3 + $0x90] sm:$0xff]
        %v2109 = vld [vmem:[#allocation3 + $0x98] sm:$0xff]
        %v2110 = vld [vmem:[#allocation3 + $0xa0] sm:$0xff]
        %v2111 = vld [vmem:[#allocation3 + $0xa8] sm:$0xff]
        %v2112 = vld [vmem:[#allocation3 + $0xb0] sm:$0xff]
        %v2113 = vld [vmem:[#allocation3 + $0xb8] sm:$0xff]
        %v2114 = vld [vmem:[#allocation3 + $0xc0] sm:$0xff]
        %v2115 = vld [vmem:[#allocation3 + $0xc8] sm:$0xff]
        %v2116 = vld [vmem:[#allocation3 + $0xd0] sm:$0xff]
        %v2117 = vld [vmem:[#allocation3 + $0xd8] sm:$0xff]
        %v2118 = vld [vmem:[#allocation3 + $0xe0] sm:$0xff]
        %v2119 = vld [vmem:[#allocation3 + $0xe8] sm:$0xff]
        %v2120 = vld [vmem:[#allocation3 + $0xf0] sm:$0xff]
        %v2121 = vld [vmem:[#allocation3 + $0xf8] sm:$0xff]
        %v2122 = vld [vmem:[#allocation3 + $0x100] sm:$0xff]
        %v2123 = vld [vmem:[#allocation3 + $0x108] sm:$0xff]
        %v2124 = vld [vmem:[#allocation3 + $0x110] sm:$0xff]
        %v2125 = vld [vmem:[#allocation3 + $0x118] sm:$0xff]
        %v2126 = vld [vmem:[#allocation3 + $0x120] sm:$0xff]
        %v2127 = vld [vmem:[#allocation3 + $0x128] sm:$0xff]
        %v2128 = vld [vmem:[#allocation3 + $0x130] sm:$0xff]
        %v2129 = vld [vmem:[#allocation3 + $0x138] sm:$0xff]
        %v2130 = vld [vmem:[#allocation3 + $0x140] sm:$0xff]
        %v2131 = vld [vmem:[#allocation3 + $0x148] sm:$0xff]
        %v2132 = vld [vmem:[#allocation3 + $0x150] sm:$0xff]
        %v2133 = vld [vmem:[#allocation3 + $0x158] sm:$0xff]
        %v2134 = vld [vmem:[#allocation3 + $0x160] sm:$0xff]
        %v2135 = vld [vmem:[#allocation3 + $0x168] sm:$0xff]
        %v2136 = vld [vmem:[#allocation3 + $0x170] sm:$0xff]
        %v2137 = vld [vmem:[#allocation3 + $0x178] sm:$0xff]
        %v2138 = vld [vmem:[#allocation3 + $0x180] sm:$0xff]
        %v2139 = vld [vmem:[#allocation3 + $0x188] sm:$0xff]
        %v2140 = vld [vmem:[#allocation3 + $0x190] sm:$0xff]
        %v2141 = vld [vmem:[#allocation3 + $0x198] sm:$0xff]
        %v2142 = vld [vmem:[#allocation3 + $0x1a0] sm:$0xff]
        %v2143 = vld [vmem:[#allocation3 + $0x1a8] sm:$0xff]
        %v2144 = vld [vmem:[#allocation3 + $0x1b0] sm:$0xff]
        %v2145 = vld [vmem:[#allocation3 + $0x1b8] sm:$0xff]
        %v2146 = vld [vmem:[#allocation3 + $0x1c0] sm:$0xff]
        %v2147 = vld [vmem:[#allocation3 + $0x1c8] sm:$0xff]
        %v2148 = vld [vmem:[#allocation3 + $0x1d0] sm:$0xff]
        %v2149 = vld [vmem:[#allocation3 + $0x1d8] sm:$0xff]
        %v2150 = vld [vmem:[#allocation3 + $0x1e0] sm:$0xff]
        %v2151 = vld [vmem:[#allocation3 + $0x1e8] sm:$0xff]
        %v2152 = vld [vmem:[#allocation3 + $0x1f0] sm:$0xff]
        %v2153 = vld [vmem:[#allocation3 + $0x1f8] sm:$0xff]
        %v2154 = vld [vmem:[#allocation3 + $0x200] sm:$0xff]
        %v2155 = vld [vmem:[#allocation3 + $0x208] sm:$0xff]
        %v2156 = vld [vmem:[#allocation3 + $0x210] sm:$0xff]
        %v2157 = vld [vmem:[#allocation3 + $0x218] sm:$0xff]
        %v2158 = vld [vmem:[#allocation3 + $0x220] sm:$0xff]
        %v2159 = vld [vmem:[#allocation3 + $0x228] sm:$0xff]
        %v2160 = vld [vmem:[#allocation3 + $0x230] sm:$0xff]
        %v2161 = vld [vmem:[#allocation3 + $0x238] sm:$0xff]
        %v2162 = vld [vmem:[#allocation3 + $0x240] sm:$0xff]
        %v2165 = vpack.i.b16 %v2091, %v2090
        %v2167 = vshrl.u32 %v2090, 16
        %v2168 = vshrl.u32 %v2091, 16
        %v2169 = vpack.i.b16 %v2168, %v2167
        %v2173 = vpack.i.b16 %v2093, %v2092
        %v2175 = vshrl.u32 %v2092, 16
        %v2176 = vshrl.u32 %v2093, 16
        %v2177 = vpack.i.b16 %v2176, %v2175
        %v2181 = vpack.i.b16 %v2095, %v2094
        %v2183 = vshrl.u32 %v2094, 16
        %v2184 = vshrl.u32 %v2095, 16
        %v2185 = vpack.i.b16 %v2184, %v2183
        %v2189 = vpack.i.b16 %v2097, %v2096
        %v2191 = vshrl.u32 %v2096, 16
        %v2192 = vshrl.u32 %v2097, 16
        %v2193 = vpack.i.b16 %v2192, %v2191
        %v2197 = vpack.i.b16 %v2099, %v2098
        %v2199 = vshrl.u32 %v2098, 16
        %v2200 = vshrl.u32 %v2099, 16
        %v2201 = vpack.i.b16 %v2200, %v2199
        %v2205 = vpack.i.b16 %v2101, %v2100
        %v2207 = vshrl.u32 %v2100, 16
        %v2208 = vshrl.u32 %v2101, 16
        %v2209 = vpack.i.b16 %v2208, %v2207
        %v2213 = vpack.i.b16 %v2103, %v2102
        %v2215 = vshrl.u32 %v2102, 16
        %v2216 = vshrl.u32 %v2103, 16
        %v2217 = vpack.i.b16 %v2216, %v2215
        %v2221 = vpack.i.b16 %v2105, %v2104
        %v2223 = vshrl.u32 %v2104, 16
        %v2224 = vshrl.u32 %v2105, 16
        %v2225 = vpack.i.b16 %v2224, %v2223
        %v2229 = vpack.i.b16 %v2107, %v2106
        %v2231 = vshrl.u32 %v2106, 16
        %v2232 = vshrl.u32 %v2107, 16
        %v2233 = vpack.i.b16 %v2232, %v2231
        %v2237 = vpack.i.b16 %v2109, %v2108
        %v2239 = vshrl.u32 %v2108, 16
        %v2240 = vshrl.u32 %v2109, 16
        %v2241 = vpack.i.b16 %v2240, %v2239
        %v2245 = vpack.i.b16 %v2111, %v2110
        %v2247 = vshrl.u32 %v2110, 16
        %v2248 = vshrl.u32 %v2111, 16
        %v2249 = vpack.i.b16 %v2248, %v2247
        %v2253 = vpack.i.b16 %v2113, %v2112
        %v2255 = vshrl.u32 %v2112, 16
        %v2256 = vshrl.u32 %v2113, 16
        %v2257 = vpack.i.b16 %v2256, %v2255
        %v2261 = vpack.i.b16 %v2115, %v2114
        %v2263 = vshrl.u32 %v2114, 16
        %v2264 = vshrl.u32 %v2115, 16
        %v2265 = vpack.i.b16 %v2264, %v2263
        %v2269 = vpack.i.b16 %v2117, %v2116
        %v2271 = vshrl.u32 %v2116, 16
        %v2272 = vshrl.u32 %v2117, 16
        %v2273 = vpack.i.b16 %v2272, %v2271
        %v2277 = vpack.i.b16 %v2119, %v2118
        %v2279 = vshrl.u32 %v2118, 16
        %v2280 = vshrl.u32 %v2119, 16
        %v2281 = vpack.i.b16 %v2280, %v2279
        %v2285 = vpack.i.b16 %v2121, %v2120
        %v2287 = vshrl.u32 %v2120, 16
        %v2288 = vshrl.u32 %v2121, 16
        %v2289 = vpack.i.b16 %v2288, %v2287
        %v2293 = vpack.i.b16 %v2123, %v2122
        %v2295 = vshrl.u32 %v2122, 16
        %v2296 = vshrl.u32 %v2123, 16
        %v2297 = vpack.i.b16 %v2296, %v2295
        %v2301 = vpack.i.b16 %v2125, %v2124
        %v2303 = vshrl.u32 %v2124, 16
        %v2304 = vshrl.u32 %v2125, 16
        %v2305 = vpack.i.b16 %v2304, %v2303
        %v2309 = vpack.i.b16 %v2127, %v2126
        %v2311 = vshrl.u32 %v2126, 16
        %v2312 = vshrl.u32 %v2127, 16
        %v2313 = vpack.i.b16 %v2312, %v2311
        %v2317 = vpack.i.b16 %v2129, %v2128
        %v2319 = vshrl.u32 %v2128, 16
        %v2320 = vshrl.u32 %v2129, 16
        %v2321 = vpack.i.b16 %v2320, %v2319
        %v2325 = vpack.i.b16 %v2131, %v2130
        %v2327 = vshrl.u32 %v2130, 16
        %v2328 = vshrl.u32 %v2131, 16
        %v2329 = vpack.i.b16 %v2328, %v2327
        %v2333 = vpack.i.b16 %v2133, %v2132
        %v2335 = vshrl.u32 %v2132, 16
        %v2336 = vshrl.u32 %v2133, 16
        %v2337 = vpack.i.b16 %v2336, %v2335
        %v2341 = vpack.i.b16 %v2135, %v2134
        %v2343 = vshrl.u32 %v2134, 16
        %v2344 = vshrl.u32 %v2135, 16
        %v2345 = vpack.i.b16 %v2344, %v2343
        %v2349 = vpack.i.b16 %v2137, %v2136
        %v2351 = vshrl.u32 %v2136, 16
        %v2352 = vshrl.u32 %v2137, 16
        %v2353 = vpack.i.b16 %v2352, %v2351
        %v2357 = vpack.i.b16 %v2139, %v2138
        %v2359 = vshrl.u32 %v2138, 16
        %v2360 = vshrl.u32 %v2139, 16
        %v2361 = vpack.i.b16 %v2360, %v2359
        %v2365 = vpack.i.b16 %v2141, %v2140
        %v2367 = vshrl.u32 %v2140, 16
        %v2368 = vshrl.u32 %v2141, 16
        %v2369 = vpack.i.b16 %v2368, %v2367
        %v2373 = vpack.i.b16 %v2143, %v2142
        %v2375 = vshrl.u32 %v2142, 16
        %v2376 = vshrl.u32 %v2143, 16
        %v2377 = vpack.i.b16 %v2376, %v2375
        %v2381 = vpack.i.b16 %v2145, %v2144
        %v2383 = vshrl.u32 %v2144, 16
        %v2384 = vshrl.u32 %v2145, 16
        %v2385 = vpack.i.b16 %v2384, %v2383
        %v2389 = vpack.i.b16 %v2147, %v2146
        %v2391 = vshrl.u32 %v2146, 16
        %v2392 = vshrl.u32 %v2147, 16
        %v2393 = vpack.i.b16 %v2392, %v2391
        %v2397 = vpack.i.b16 %v2149, %v2148
        %v2399 = vshrl.u32 %v2148, 16
        %v2400 = vshrl.u32 %v2149, 16
        %v2401 = vpack.i.b16 %v2400, %v2399
        %v2405 = vpack.i.b16 %v2151, %v2150
        %v2407 = vshrl.u32 %v2150, 16
        %v2408 = vshrl.u32 %v2151, 16
        %v2409 = vpack.i.b16 %v2408, %v2407
        %v2413 = vpack.i.b16 %v2153, %v2152
        %v2415 = vshrl.u32 %v2152, 16
        %v2416 = vshrl.u32 %v2153, 16
        %v2417 = vpack.i.b16 %v2416, %v2415
        %v2421 = vpack.i.b16 %v2155, %v2154
        %v2423 = vshrl.u32 %v2154, 16
        %v2424 = vshrl.u32 %v2155, 16
        %v2425 = vpack.i.b16 %v2424, %v2423
        %v2429 = vpack.i.b16 %v2157, %v2156
        %v2431 = vshrl.u32 %v2156, 16
        %v2432 = vshrl.u32 %v2157, 16
        %v2433 = vpack.i.b16 %v2432, %v2431
        %v2437 = vpack.i.b16 %v2159, %v2158
        %v2439 = vshrl.u32 %v2158, 16
        %v2440 = vshrl.u32 %v2159, 16
        %v2441 = vpack.i.b16 %v2440, %v2439
        %v2445 = vpack.i.b16 %v2161, %v2160
        %v2447 = vshrl.u32 %v2160, 16
        %v2448 = vshrl.u32 %v2161, 16
        %v2449 = vpack.i.b16 %v2448, %v2447
        %v2453 = vpack.i.b16 0, %v2162
        %v2455 = vshrl.u32 %v2162, 16
        %v2456 = vshrl.u32 0, 16
        %v2457 = vpack.i.b16 %v2456, %v2455
        %v2459 = vpack.i.b16 0, 0
        %v2461 = vpack.i.b16 %v2456, %v2456
        %v2463 = vcombine.low %v2165, %v2181
        %v2464 = vcombine.high %v2165, %v2181
        %v2466 = vunpack.c.l.s4 1983009808
        %v2467 = vunpack.c.0.s8 %v2466
        %v2468 = vlaneseq
        %v2469 = vshrl.u32 %v2468, 7
        %v2470 = vsub.s32 %v2467, %v2469
        %v2471 = vrot.slane %v2463, %v2470
        %v2473 = vunpack.c.l.s4 1983009808
        %v2474 = vunpack.c.0.s8 %v2473
        %v2475 = vlaneseq
        %v2476 = vshrl.u32 %v2475, 7
        %v2477 = vsub.s32 %v2474, %v2476
        %v2478 = vrot.slane %v2464, %v2477
        %v2479 = vcombine.low %v2173, %v2189
        %v2480 = vcombine.high %v2173, %v2189
        %v2482 = vunpack.c.l.s4 1983009808
        %v2483 = vunpack.c.0.s8 %v2482
        %v2484 = vlaneseq
        %v2485 = vshrl.u32 %v2484, 7
        %v2486 = vsub.s32 %v2483, %v2485
        %v2487 = vrot.slane %v2479, %v2486
        %v2489 = vunpack.c.l.s4 1983009808
        %v2490 = vunpack.c.0.s8 %v2489
        %v2491 = vlaneseq
        %v2492 = vshrl.u32 %v2491, 7
        %v2493 = vsub.s32 %v2490, %v2492
        %v2494 = vrot.slane %v2480, %v2493
        %v2495 = vcombine.low %v2197, %v2213
        %v2496 = vcombine.high %v2197, %v2213
        %v2498 = vunpack.c.l.s4 1983009808
        %v2499 = vunpack.c.0.s8 %v2498
        %v2500 = vlaneseq
        %v2501 = vshrl.u32 %v2500, 7
        %v2502 = vsub.s32 %v2499, %v2501
        %v2503 = vrot.slane %v2495, %v2502
        %v2505 = vunpack.c.l.s4 1983009808
        %v2506 = vunpack.c.0.s8 %v2505
        %v2507 = vlaneseq
        %v2508 = vshrl.u32 %v2507, 7
        %v2509 = vsub.s32 %v2506, %v2508
        %v2510 = vrot.slane %v2496, %v2509
        %v2511 = vcombine.low %v2205, %v2221
        %v2512 = vcombine.high %v2205, %v2221
        %v2514 = vunpack.c.l.s4 1983009808
        %v2515 = vunpack.c.0.s8 %v2514
        %v2516 = vlaneseq
        %v2517 = vshrl.u32 %v2516, 7
        %v2518 = vsub.s32 %v2515, %v2517
        %v2519 = vrot.slane %v2511, %v2518
        %v2521 = vunpack.c.l.s4 1983009808
        %v2522 = vunpack.c.0.s8 %v2521
        %v2523 = vlaneseq
        %v2524 = vshrl.u32 %v2523, 7
        %v2525 = vsub.s32 %v2522, %v2524
        %v2526 = vrot.slane %v2512, %v2525
        %v2527 = vcombine.low %v2471, %v2487
        %v2528 = vcombine.high %v2471, %v2487
        %v2530 = vunpack.c.l.s4 1934713408
        %v2531 = vunpack.c.0.s8 %v2530
        %v2532 = vlaneseq
        %v2533 = vshrl.u32 %v2532, 7
        %v2534 = vsub.s32 %v2531, %v2533
        %v2535 = vrot.slane %v2527, %v2534
        %v2537 = vunpack.c.l.s4 1934713408
        %v2538 = vunpack.c.0.s8 %v2537
        %v2539 = vlaneseq
        %v2540 = vshrl.u32 %v2539, 7
        %v2541 = vsub.s32 %v2538, %v2540
        %v2542 = vrot.slane %v2528, %v2541
        %v2543 = vcombine.low %v2478, %v2494
        %v2544 = vcombine.high %v2478, %v2494
        %v2546 = vunpack.c.l.s4 1934713408
        %v2547 = vunpack.c.0.s8 %v2546
        %v2548 = vlaneseq
        %v2549 = vshrl.u32 %v2548, 7
        %v2550 = vsub.s32 %v2547, %v2549
        %v2551 = vrot.slane %v2543, %v2550
        %v2553 = vunpack.c.l.s4 1934713408
        %v2554 = vunpack.c.0.s8 %v2553
        %v2555 = vlaneseq
        %v2556 = vshrl.u32 %v2555, 7
        %v2557 = vsub.s32 %v2554, %v2556
        %v2558 = vrot.slane %v2544, %v2557
        %v2559 = vcombine.low %v2503, %v2519
        %v2560 = vcombine.high %v2503, %v2519
        %v2562 = vunpack.c.l.s4 1934713408
        %v2563 = vunpack.c.0.s8 %v2562
        %v2564 = vlaneseq
        %v2565 = vshrl.u32 %v2564, 7
        %v2566 = vsub.s32 %v2563, %v2565
        %v2567 = vrot.slane %v2559, %v2566
        %v2569 = vunpack.c.l.s4 1934713408
        %v2570 = vunpack.c.0.s8 %v2569
        %v2571 = vlaneseq
        %v2572 = vshrl.u32 %v2571, 7
        %v2573 = vsub.s32 %v2570, %v2572
        %v2574 = vrot.slane %v2560, %v2573
        %v2575 = vcombine.low %v2510, %v2526
        %v2576 = vcombine.high %v2510, %v2526
        %v2578 = vunpack.c.l.s4 1934713408
        %v2579 = vunpack.c.0.s8 %v2578
        %v2580 = vlaneseq
        %v2581 = vshrl.u32 %v2580, 7
        %v2582 = vsub.s32 %v2579, %v2581
        %v2583 = vrot.slane %v2575, %v2582
        %v2585 = vunpack.c.l.s4 1934713408
        %v2586 = vunpack.c.0.s8 %v2585
        %v2587 = vlaneseq
        %v2588 = vshrl.u32 %v2587, 7
        %v2589 = vsub.s32 %v2586, %v2588
        %v2590 = vrot.slane %v2576, %v2589
        %v2591 = vcombine.low %v2535, %v2567
        %v2592 = vcombine.high %v2535, %v2567
        %v2593 = vcombine.low %v2542, %v2574
        %v2594 = vcombine.high %v2542, %v2574
        %v2595 = vcombine.low %v2551, %v2583
        %v2596 = vcombine.high %v2551, %v2583
        %v2597 = vcombine.low %v2558, %v2590
        %v2598 = vcombine.high %v2558, %v2590
        %v2599 = vcombine.low %v2169, %v2185
        %v2600 = vcombine.high %v2169, %v2185
        %v2602 = vunpack.c.l.s4 1983009808
        %v2603 = vunpack.c.0.s8 %v2602
        %v2604 = vlaneseq
        %v2605 = vshrl.u32 %v2604, 7
        %v2606 = vsub.s32 %v2603, %v2605
        %v2607 = vrot.slane %v2599, %v2606
        %v2609 = vunpack.c.l.s4 1983009808
        %v2610 = vunpack.c.0.s8 %v2609
        %v2611 = vlaneseq
        %v2612 = vshrl.u32 %v2611, 7
        %v2613 = vsub.s32 %v2610, %v2612
        %v2614 = vrot.slane %v2600, %v2613
        %v2615 = vcombine.low %v2177, %v2193
        %v2616 = vcombine.high %v2177, %v2193
        %v2618 = vunpack.c.l.s4 1983009808
        %v2619 = vunpack.c.0.s8 %v2618
        %v2620 = vlaneseq
        %v2621 = vshrl.u32 %v2620, 7
        %v2622 = vsub.s32 %v2619, %v2621
        %v2623 = vrot.slane %v2615, %v2622
        %v2625 = vunpack.c.l.s4 1983009808
        %v2626 = vunpack.c.0.s8 %v2625
        %v2627 = vlaneseq
        %v2628 = vshrl.u32 %v2627, 7
        %v2629 = vsub.s32 %v2626, %v2628
        %v2630 = vrot.slane %v2616, %v2629
        %v2631 = vcombine.low %v2201, %v2217
        %v2632 = vcombine.high %v2201, %v2217
        %v2634 = vunpack.c.l.s4 1983009808
        %v2635 = vunpack.c.0.s8 %v2634
        %v2636 = vlaneseq
        %v2637 = vshrl.u32 %v2636, 7
        %v2638 = vsub.s32 %v2635, %v2637
        %v2639 = vrot.slane %v2631, %v2638
        %v2641 = vunpack.c.l.s4 1983009808
        %v2642 = vunpack.c.0.s8 %v2641
        %v2643 = vlaneseq
        %v2644 = vshrl.u32 %v2643, 7
        %v2645 = vsub.s32 %v2642, %v2644
        %v2646 = vrot.slane %v2632, %v2645
        %v2647 = vcombine.low %v2209, %v2225
        %v2648 = vcombine.high %v2209, %v2225
        %v2650 = vunpack.c.l.s4 1983009808
        %v2651 = vunpack.c.0.s8 %v2650
        %v2652 = vlaneseq
        %v2653 = vshrl.u32 %v2652, 7
        %v2654 = vsub.s32 %v2651, %v2653
        %v2655 = vrot.slane %v2647, %v2654
        %v2657 = vunpack.c.l.s4 1983009808
        %v2658 = vunpack.c.0.s8 %v2657
        %v2659 = vlaneseq
        %v2660 = vshrl.u32 %v2659, 7
        %v2661 = vsub.s32 %v2658, %v2660
        %v2662 = vrot.slane %v2648, %v2661
        %v2663 = vcombine.low %v2607, %v2623
        %v2664 = vcombine.high %v2607, %v2623
        %v2666 = vunpack.c.l.s4 1934713408
        %v2667 = vunpack.c.0.s8 %v2666
        %v2668 = vlaneseq
        %v2669 = vshrl.u32 %v2668, 7
        %v2670 = vsub.s32 %v2667, %v2669
        %v2671 = vrot.slane %v2663, %v2670
        %v2673 = vunpack.c.l.s4 1934713408
        %v2674 = vunpack.c.0.s8 %v2673
        %v2675 = vlaneseq
        %v2676 = vshrl.u32 %v2675, 7
        %v2677 = vsub.s32 %v2674, %v2676
        %v2678 = vrot.slane %v2664, %v2677
        %v2679 = vcombine.low %v2614, %v2630
        %v2680 = vcombine.high %v2614, %v2630
        %v2682 = vunpack.c.l.s4 1934713408
        %v2683 = vunpack.c.0.s8 %v2682
        %v2684 = vlaneseq
        %v2685 = vshrl.u32 %v2684, 7
        %v2686 = vsub.s32 %v2683, %v2685
        %v2687 = vrot.slane %v2679, %v2686
        %v2689 = vunpack.c.l.s4 1934713408
        %v2690 = vunpack.c.0.s8 %v2689
        %v2691 = vlaneseq
        %v2692 = vshrl.u32 %v2691, 7
        %v2693 = vsub.s32 %v2690, %v2692
        %v2694 = vrot.slane %v2680, %v2693
        %v2695 = vcombine.low %v2639, %v2655
        %v2696 = vcombine.high %v2639, %v2655
        %v2698 = vunpack.c.l.s4 1934713408
        %v2699 = vunpack.c.0.s8 %v2698
        %v2700 = vlaneseq
        %v2701 = vshrl.u32 %v2700, 7
        %v2702 = vsub.s32 %v2699, %v2701
        %v2703 = vrot.slane %v2695, %v2702
        %v2705 = vunpack.c.l.s4 1934713408
        %v2706 = vunpack.c.0.s8 %v2705
        %v2707 = vlaneseq
        %v2708 = vshrl.u32 %v2707, 7
        %v2709 = vsub.s32 %v2706, %v2708
        %v2710 = vrot.slane %v2696, %v2709
        %v2711 = vcombine.low %v2646, %v2662
        %v2712 = vcombine.high %v2646, %v2662
        %v2714 = vunpack.c.l.s4 1934713408
        %v2715 = vunpack.c.0.s8 %v2714
        %v2716 = vlaneseq
        %v2717 = vshrl.u32 %v2716, 7
        %v2718 = vsub.s32 %v2715, %v2717
        %v2719 = vrot.slane %v2711, %v2718
        %v2721 = vunpack.c.l.s4 1934713408
        %v2722 = vunpack.c.0.s8 %v2721
        %v2723 = vlaneseq
        %v2724 = vshrl.u32 %v2723, 7
        %v2725 = vsub.s32 %v2722, %v2724
        %v2726 = vrot.slane %v2712, %v2725
        %v2727 = vcombine.low %v2671, %v2703
        %v2728 = vcombine.high %v2671, %v2703
        %v2729 = vcombine.low %v2678, %v2710
        %v2730 = vcombine.high %v2678, %v2710
        %v2731 = vcombine.low %v2687, %v2719
        %v2732 = vcombine.high %v2687, %v2719
        %v2733 = vcombine.low %v2694, %v2726
        %v2734 = vcombine.high %v2694, %v2726
        %v2735 = vcombine.low %v2229, %v2245
        %v2736 = vcombine.high %v2229, %v2245
        %v2738 = vunpack.c.l.s4 1983009808
        %v2739 = vunpack.c.0.s8 %v2738
        %v2740 = vlaneseq
        %v2741 = vshrl.u32 %v2740, 7
        %v2742 = vsub.s32 %v2739, %v2741
        %v2743 = vrot.slane %v2735, %v2742
        %v2745 = vunpack.c.l.s4 1983009808
        %v2746 = vunpack.c.0.s8 %v2745
        %v2747 = vlaneseq
        %v2748 = vshrl.u32 %v2747, 7
        %v2749 = vsub.s32 %v2746, %v2748
        %v2750 = vrot.slane %v2736, %v2749
        %v2751 = vcombine.low %v2237, %v2253
        %v2752 = vcombine.high %v2237, %v2253
        %v2754 = vunpack.c.l.s4 1983009808
        %v2755 = vunpack.c.0.s8 %v2754
        %v2756 = vlaneseq
        %v2757 = vshrl.u32 %v2756, 7
        %v2758 = vsub.s32 %v2755, %v2757
        %v2759 = vrot.slane %v2751, %v2758
        %v2761 = vunpack.c.l.s4 1983009808
        %v2762 = vunpack.c.0.s8 %v2761
        %v2763 = vlaneseq
        %v2764 = vshrl.u32 %v2763, 7
        %v2765 = vsub.s32 %v2762, %v2764
        %v2766 = vrot.slane %v2752, %v2765
        %v2767 = vcombine.low %v2261, %v2277
        %v2768 = vcombine.high %v2261, %v2277
        %v2770 = vunpack.c.l.s4 1983009808
        %v2771 = vunpack.c.0.s8 %v2770
        %v2772 = vlaneseq
        %v2773 = vshrl.u32 %v2772, 7
        %v2774 = vsub.s32 %v2771, %v2773
        %v2775 = vrot.slane %v2767, %v2774
        %v2777 = vunpack.c.l.s4 1983009808
        %v2778 = vunpack.c.0.s8 %v2777
        %v2779 = vlaneseq
        %v2780 = vshrl.u32 %v2779, 7
        %v2781 = vsub.s32 %v2778, %v2780
        %v2782 = vrot.slane %v2768, %v2781
        %v2783 = vcombine.low %v2269, %v2285
        %v2784 = vcombine.high %v2269, %v2285
        %v2786 = vunpack.c.l.s4 1983009808
        %v2787 = vunpack.c.0.s8 %v2786
        %v2788 = vlaneseq
        %v2789 = vshrl.u32 %v2788, 7
        %v2790 = vsub.s32 %v2787, %v2789
        %v2791 = vrot.slane %v2783, %v2790
        %v2793 = vunpack.c.l.s4 1983009808
        %v2794 = vunpack.c.0.s8 %v2793
        %v2795 = vlaneseq
        %v2796 = vshrl.u32 %v2795, 7
        %v2797 = vsub.s32 %v2794, %v2796
        %v2798 = vrot.slane %v2784, %v2797
        %v2799 = vcombine.low %v2743, %v2759
        %v2800 = vcombine.high %v2743, %v2759
        %v2802 = vunpack.c.l.s4 1934713408
        %v2803 = vunpack.c.0.s8 %v2802
        %v2804 = vlaneseq
        %v2805 = vshrl.u32 %v2804, 7
        %v2806 = vsub.s32 %v2803, %v2805
        %v2807 = vrot.slane %v2799, %v2806
        %v2809 = vunpack.c.l.s4 1934713408
        %v2810 = vunpack.c.0.s8 %v2809
        %v2811 = vlaneseq
        %v2812 = vshrl.u32 %v2811, 7
        %v2813 = vsub.s32 %v2810, %v2812
        %v2814 = vrot.slane %v2800, %v2813
        %v2815 = vcombine.low %v2750, %v2766
        %v2816 = vcombine.high %v2750, %v2766
        %v2818 = vunpack.c.l.s4 1934713408
        %v2819 = vunpack.c.0.s8 %v2818
        %v2820 = vlaneseq
        %v2821 = vshrl.u32 %v2820, 7
        %v2822 = vsub.s32 %v2819, %v2821
        %v2823 = vrot.slane %v2815, %v2822
        %v2825 = vunpack.c.l.s4 1934713408
        %v2826 = vunpack.c.0.s8 %v2825
        %v2827 = vlaneseq
        %v2828 = vshrl.u32 %v2827, 7
        %v2829 = vsub.s32 %v2826, %v2828
        %v2830 = vrot.slane %v2816, %v2829
        %v2831 = vcombine.low %v2775, %v2791
        %v2832 = vcombine.high %v2775, %v2791
        %v2834 = vunpack.c.l.s4 1934713408
        %v2835 = vunpack.c.0.s8 %v2834
        %v2836 = vlaneseq
        %v2837 = vshrl.u32 %v2836, 7
        %v2838 = vsub.s32 %v2835, %v2837
        %v2839 = vrot.slane %v2831, %v2838
        %v2841 = vunpack.c.l.s4 1934713408
        %v2842 = vunpack.c.0.s8 %v2841
        %v2843 = vlaneseq
        %v2844 = vshrl.u32 %v2843, 7
        %v2845 = vsub.s32 %v2842, %v2844
        %v2846 = vrot.slane %v2832, %v2845
        %v2847 = vcombine.low %v2782, %v2798
        %v2848 = vcombine.high %v2782, %v2798
        %v2850 = vunpack.c.l.s4 1934713408
        %v2851 = vunpack.c.0.s8 %v2850
        %v2852 = vlaneseq
        %v2853 = vshrl.u32 %v2852, 7
        %v2854 = vsub.s32 %v2851, %v2853
        %v2855 = vrot.slane %v2847, %v2854
        %v2857 = vunpack.c.l.s4 1934713408
        %v2858 = vunpack.c.0.s8 %v2857
        %v2859 = vlaneseq
        %v2860 = vshrl.u32 %v2859, 7
        %v2861 = vsub.s32 %v2858, %v2860
        %v2862 = vrot.slane %v2848, %v2861
        %v2863 = vcombine.low %v2807, %v2839
        %v2864 = vcombine.high %v2807, %v2839
        %v2865 = vcombine.low %v2814, %v2846
        %v2866 = vcombine.high %v2814, %v2846
        %v2867 = vcombine.low %v2823, %v2855
        %v2868 = vcombine.high %v2823, %v2855
        %v2869 = vcombine.low %v2830, %v2862
        %v2870 = vcombine.high %v2830, %v2862
        %v2871 = vcombine.low %v2233, %v2249
        %v2872 = vcombine.high %v2233, %v2249
        %v2874 = vunpack.c.l.s4 1983009808
        %v2875 = vunpack.c.0.s8 %v2874
        %v2876 = vlaneseq
        %v2877 = vshrl.u32 %v2876, 7
        %v2878 = vsub.s32 %v2875, %v2877
        %v2879 = vrot.slane %v2871, %v2878
        %v2881 = vunpack.c.l.s4 1983009808
        %v2882 = vunpack.c.0.s8 %v2881
        %v2883 = vlaneseq
        %v2884 = vshrl.u32 %v2883, 7
        %v2885 = vsub.s32 %v2882, %v2884
        %v2886 = vrot.slane %v2872, %v2885
        %v2887 = vcombine.low %v2241, %v2257
        %v2888 = vcombine.high %v2241, %v2257
        %v2890 = vunpack.c.l.s4 1983009808
        %v2891 = vunpack.c.0.s8 %v2890
        %v2892 = vlaneseq
        %v2893 = vshrl.u32 %v2892, 7
        %v2894 = vsub.s32 %v2891, %v2893
        %v2895 = vrot.slane %v2887, %v2894
        %v2897 = vunpack.c.l.s4 1983009808
        %v2898 = vunpack.c.0.s8 %v2897
        %v2899 = vlaneseq
        %v2900 = vshrl.u32 %v2899, 7
        %v2901 = vsub.s32 %v2898, %v2900
        %v2902 = vrot.slane %v2888, %v2901
        %v2903 = vcombine.low %v2265, %v2281
        %v2904 = vcombine.high %v2265, %v2281
        %v2906 = vunpack.c.l.s4 1983009808
        %v2907 = vunpack.c.0.s8 %v2906
        %v2908 = vlaneseq
        %v2909 = vshrl.u32 %v2908, 7
        %v2910 = vsub.s32 %v2907, %v2909
        %v2911 = vrot.slane %v2903, %v2910
        %v2913 = vunpack.c.l.s4 1983009808
        %v2914 = vunpack.c.0.s8 %v2913
        %v2915 = vlaneseq
        %v2916 = vshrl.u32 %v2915, 7
        %v2917 = vsub.s32 %v2914, %v2916
        %v2918 = vrot.slane %v2904, %v2917
        %v2919 = vcombine.low %v2273, %v2289
        %v2920 = vcombine.high %v2273, %v2289
        %v2922 = vunpack.c.l.s4 1983009808
        %v2923 = vunpack.c.0.s8 %v2922
        %v2924 = vlaneseq
        %v2925 = vshrl.u32 %v2924, 7
        %v2926 = vsub.s32 %v2923, %v2925
        %v2927 = vrot.slane %v2919, %v2926
        %v2929 = vunpack.c.l.s4 1983009808
        %v2930 = vunpack.c.0.s8 %v2929
        %v2931 = vlaneseq
        %v2932 = vshrl.u32 %v2931, 7
        %v2933 = vsub.s32 %v2930, %v2932
        %v2934 = vrot.slane %v2920, %v2933
        %v2935 = vcombine.low %v2879, %v2895
        %v2936 = vcombine.high %v2879, %v2895
        %v2938 = vunpack.c.l.s4 1934713408
        %v2939 = vunpack.c.0.s8 %v2938
        %v2940 = vlaneseq
        %v2941 = vshrl.u32 %v2940, 7
        %v2942 = vsub.s32 %v2939, %v2941
        %v2943 = vrot.slane %v2935, %v2942
        %v2945 = vunpack.c.l.s4 1934713408
        %v2946 = vunpack.c.0.s8 %v2945
        %v2947 = vlaneseq
        %v2948 = vshrl.u32 %v2947, 7
        %v2949 = vsub.s32 %v2946, %v2948
        %v2950 = vrot.slane %v2936, %v2949
        %v2951 = vcombine.low %v2886, %v2902
        %v2952 = vcombine.high %v2886, %v2902
        %v2954 = vunpack.c.l.s4 1934713408
        %v2955 = vunpack.c.0.s8 %v2954
        %v2956 = vlaneseq
        %v2957 = vshrl.u32 %v2956, 7
        %v2958 = vsub.s32 %v2955, %v2957
        %v2959 = vrot.slane %v2951, %v2958
        %v2961 = vunpack.c.l.s4 1934713408
        %v2962 = vunpack.c.0.s8 %v2961
        %v2963 = vlaneseq
        %v2964 = vshrl.u32 %v2963, 7
        %v2965 = vsub.s32 %v2962, %v2964
        %v2966 = vrot.slane %v2952, %v2965
        %v2967 = vcombine.low %v2911, %v2927
        %v2968 = vcombine.high %v2911, %v2927
        %v2970 = vunpack.c.l.s4 1934713408
        %v2971 = vunpack.c.0.s8 %v2970
        %v2972 = vlaneseq
        %v2973 = vshrl.u32 %v2972, 7
        %v2974 = vsub.s32 %v2971, %v2973
        %v2975 = vrot.slane %v2967, %v2974
        %v2977 = vunpack.c.l.s4 1934713408
        %v2978 = vunpack.c.0.s8 %v2977
        %v2979 = vlaneseq
        %v2980 = vshrl.u32 %v2979, 7
        %v2981 = vsub.s32 %v2978, %v2980
        %v2982 = vrot.slane %v2968, %v2981
        %v2983 = vcombine.low %v2918, %v2934
        %v2984 = vcombine.high %v2918, %v2934
        %v2986 = vunpack.c.l.s4 1934713408
        %v2987 = vunpack.c.0.s8 %v2986
        %v2988 = vlaneseq
        %v2989 = vshrl.u32 %v2988, 7
        %v2990 = vsub.s32 %v2987, %v2989
        %v2991 = vrot.slane %v2983, %v2990
        %v2993 = vunpack.c.l.s4 1934713408
        %v2994 = vunpack.c.0.s8 %v2993
        %v2995 = vlaneseq
        %v2996 = vshrl.u32 %v2995, 7
        %v2997 = vsub.s32 %v2994, %v2996
        %v2998 = vrot.slane %v2984, %v2997
        %v2999 = vcombine.low %v2943, %v2975
        %v3000 = vcombine.high %v2943, %v2975
        %v3001 = vcombine.low %v2950, %v2982
        %v3002 = vcombine.high %v2950, %v2982
        %v3003 = vcombine.low %v2959, %v2991
        %v3004 = vcombine.high %v2959, %v2991
        %v3005 = vcombine.low %v2966, %v2998
        %v3006 = vcombine.high %v2966, %v2998
        %v3007 = vcombine.low %v2293, %v2309
        %v3008 = vcombine.high %v2293, %v2309
        %v3010 = vunpack.c.l.s4 1983009808
        %v3011 = vunpack.c.0.s8 %v3010
        %v3012 = vlaneseq
        %v3013 = vshrl.u32 %v3012, 7
        %v3014 = vsub.s32 %v3011, %v3013
        %v3015 = vrot.slane %v3007, %v3014
        %v3017 = vunpack.c.l.s4 1983009808
        %v3018 = vunpack.c.0.s8 %v3017
        %v3019 = vlaneseq
        %v3020 = vshrl.u32 %v3019, 7
        %v3021 = vsub.s32 %v3018, %v3020
        %v3022 = vrot.slane %v3008, %v3021
        %v3023 = vcombine.low %v2301, %v2317
        %v3024 = vcombine.high %v2301, %v2317
        %v3026 = vunpack.c.l.s4 1983009808
        %v3027 = vunpack.c.0.s8 %v3026
        %v3028 = vlaneseq
        %v3029 = vshrl.u32 %v3028, 7
        %v3030 = vsub.s32 %v3027, %v3029
        %v3031 = vrot.slane %v3023, %v3030
        %v3033 = vunpack.c.l.s4 1983009808
        %v3034 = vunpack.c.0.s8 %v3033
        %v3035 = vlaneseq
        %v3036 = vshrl.u32 %v3035, 7
        %v3037 = vsub.s32 %v3034, %v3036
        %v3038 = vrot.slane %v3024, %v3037
        %v3039 = vcombine.low %v2325, %v2341
        %v3040 = vcombine.high %v2325, %v2341
        %v3042 = vunpack.c.l.s4 1983009808
        %v3043 = vunpack.c.0.s8 %v3042
        %v3044 = vlaneseq
        %v3045 = vshrl.u32 %v3044, 7
        %v3046 = vsub.s32 %v3043, %v3045
        %v3047 = vrot.slane %v3039, %v3046
        %v3049 = vunpack.c.l.s4 1983009808
        %v3050 = vunpack.c.0.s8 %v3049
        %v3051 = vlaneseq
        %v3052 = vshrl.u32 %v3051, 7
        %v3053 = vsub.s32 %v3050, %v3052
        %v3054 = vrot.slane %v3040, %v3053
        %v3055 = vcombine.low %v2333, %v2349
        %v3056 = vcombine.high %v2333, %v2349
        %v3058 = vunpack.c.l.s4 1983009808
        %v3059 = vunpack.c.0.s8 %v3058
        %v3060 = vlaneseq
        %v3061 = vshrl.u32 %v3060, 7
        %v3062 = vsub.s32 %v3059, %v3061
        %v3063 = vrot.slane %v3055, %v3062
        %v3065 = vunpack.c.l.s4 1983009808
        %v3066 = vunpack.c.0.s8 %v3065
        %v3067 = vlaneseq
        %v3068 = vshrl.u32 %v3067, 7
        %v3069 = vsub.s32 %v3066, %v3068
        %v3070 = vrot.slane %v3056, %v3069
        %v3071 = vcombine.low %v3015, %v3031
        %v3072 = vcombine.high %v3015, %v3031
        %v3074 = vunpack.c.l.s4 1934713408
        %v3075 = vunpack.c.0.s8 %v3074
        %v3076 = vlaneseq
        %v3077 = vshrl.u32 %v3076, 7
        %v3078 = vsub.s32 %v3075, %v3077
        %v3079 = vrot.slane %v3071, %v3078
        %v3081 = vunpack.c.l.s4 1934713408
        %v3082 = vunpack.c.0.s8 %v3081
        %v3083 = vlaneseq
        %v3084 = vshrl.u32 %v3083, 7
        %v3085 = vsub.s32 %v3082, %v3084
        %v3086 = vrot.slane %v3072, %v3085
        %v3087 = vcombine.low %v3022, %v3038
        %v3088 = vcombine.high %v3022, %v3038
        %v3090 = vunpack.c.l.s4 1934713408
        %v3091 = vunpack.c.0.s8 %v3090
        %v3092 = vlaneseq
        %v3093 = vshrl.u32 %v3092, 7
        %v3094 = vsub.s32 %v3091, %v3093
        %v3095 = vrot.slane %v3087, %v3094
        %v3097 = vunpack.c.l.s4 1934713408
        %v3098 = vunpack.c.0.s8 %v3097
        %v3099 = vlaneseq
        %v3100 = vshrl.u32 %v3099, 7
        %v3101 = vsub.s32 %v3098, %v3100
        %v3102 = vrot.slane %v3088, %v3101
        %v3103 = vcombine.low %v3047, %v3063
        %v3104 = vcombine.high %v3047, %v3063
        %v3106 = vunpack.c.l.s4 1934713408
        %v3107 = vunpack.c.0.s8 %v3106
        %v3108 = vlaneseq
        %v3109 = vshrl.u32 %v3108, 7
        %v3110 = vsub.s32 %v3107, %v3109
        %v3111 = vrot.slane %v3103, %v3110
        %v3113 = vunpack.c.l.s4 1934713408
        %v3114 = vunpack.c.0.s8 %v3113
        %v3115 = vlaneseq
        %v3116 = vshrl.u32 %v3115, 7
        %v3117 = vsub.s32 %v3114, %v3116
        %v3118 = vrot.slane %v3104, %v3117
        %v3119 = vcombine.low %v3054, %v3070
        %v3120 = vcombine.high %v3054, %v3070
        %v3122 = vunpack.c.l.s4 1934713408
        %v3123 = vunpack.c.0.s8 %v3122
        %v3124 = vlaneseq
        %v3125 = vshrl.u32 %v3124, 7
        %v3126 = vsub.s32 %v3123, %v3125
        %v3127 = vrot.slane %v3119, %v3126
        %v3129 = vunpack.c.l.s4 1934713408
        %v3130 = vunpack.c.0.s8 %v3129
        %v3131 = vlaneseq
        %v3132 = vshrl.u32 %v3131, 7
        %v3133 = vsub.s32 %v3130, %v3132
        %v3134 = vrot.slane %v3120, %v3133
        %v3135 = vcombine.low %v3079, %v3111
        %v3136 = vcombine.high %v3079, %v3111
        %v3137 = vcombine.low %v3086, %v3118
        %v3138 = vcombine.high %v3086, %v3118
        %v3139 = vcombine.low %v3095, %v3127
        %v3140 = vcombine.high %v3095, %v3127
        %v3141 = vcombine.low %v3102, %v3134
        %v3142 = vcombine.high %v3102, %v3134
        %v3143 = vcombine.low %v2297, %v2313
        %v3144 = vcombine.high %v2297, %v2313
        %v3146 = vunpack.c.l.s4 1983009808
        %v3147 = vunpack.c.0.s8 %v3146
        %v3148 = vlaneseq
        %v3149 = vshrl.u32 %v3148, 7
        %v3150 = vsub.s32 %v3147, %v3149
        %v3151 = vrot.slane %v3143, %v3150
        %v3153 = vunpack.c.l.s4 1983009808
        %v3154 = vunpack.c.0.s8 %v3153
        %v3155 = vlaneseq
        %v3156 = vshrl.u32 %v3155, 7
        %v3157 = vsub.s32 %v3154, %v3156
        %v3158 = vrot.slane %v3144, %v3157
        %v3159 = vcombine.low %v2305, %v2321
        %v3160 = vcombine.high %v2305, %v2321
        %v3162 = vunpack.c.l.s4 1983009808
        %v3163 = vunpack.c.0.s8 %v3162
        %v3164 = vlaneseq
        %v3165 = vshrl.u32 %v3164, 7
        %v3166 = vsub.s32 %v3163, %v3165
        %v3167 = vrot.slane %v3159, %v3166
        %v3169 = vunpack.c.l.s4 1983009808
        %v3170 = vunpack.c.0.s8 %v3169
        %v3171 = vlaneseq
        %v3172 = vshrl.u32 %v3171, 7
        %v3173 = vsub.s32 %v3170, %v3172
        %v3174 = vrot.slane %v3160, %v3173
        %v3175 = vcombine.low %v2329, %v2345
        %v3176 = vcombine.high %v2329, %v2345
        %v3178 = vunpack.c.l.s4 1983009808
        %v3179 = vunpack.c.0.s8 %v3178
        %v3180 = vlaneseq
        %v3181 = vshrl.u32 %v3180, 7
        %v3182 = vsub.s32 %v3179, %v3181
        %v3183 = vrot.slane %v3175, %v3182
        %v3185 = vunpack.c.l.s4 1983009808
        %v3186 = vunpack.c.0.s8 %v3185
        %v3187 = vlaneseq
        %v3188 = vshrl.u32 %v3187, 7
        %v3189 = vsub.s32 %v3186, %v3188
        %v3190 = vrot.slane %v3176, %v3189
        %v3191 = vcombine.low %v2337, %v2353
        %v3192 = vcombine.high %v2337, %v2353
        %v3194 = vunpack.c.l.s4 1983009808
        %v3195 = vunpack.c.0.s8 %v3194
        %v3196 = vlaneseq
        %v3197 = vshrl.u32 %v3196, 7
        %v3198 = vsub.s32 %v3195, %v3197
        %v3199 = vrot.slane %v3191, %v3198
        %v3201 = vunpack.c.l.s4 1983009808
        %v3202 = vunpack.c.0.s8 %v3201
        %v3203 = vlaneseq
        %v3204 = vshrl.u32 %v3203, 7
        %v3205 = vsub.s32 %v3202, %v3204
        %v3206 = vrot.slane %v3192, %v3205
        %v3207 = vcombine.low %v3151, %v3167
        %v3208 = vcombine.high %v3151, %v3167
        %v3210 = vunpack.c.l.s4 1934713408
        %v3211 = vunpack.c.0.s8 %v3210
        %v3212 = vlaneseq
        %v3213 = vshrl.u32 %v3212, 7
        %v3214 = vsub.s32 %v3211, %v3213
        %v3215 = vrot.slane %v3207, %v3214
        %v3217 = vunpack.c.l.s4 1934713408
        %v3218 = vunpack.c.0.s8 %v3217
        %v3219 = vlaneseq
        %v3220 = vshrl.u32 %v3219, 7
        %v3221 = vsub.s32 %v3218, %v3220
        %v3222 = vrot.slane %v3208, %v3221
        %v3223 = vcombine.low %v3158, %v3174
        %v3224 = vcombine.high %v3158, %v3174
        %v3226 = vunpack.c.l.s4 1934713408
        %v3227 = vunpack.c.0.s8 %v3226
        %v3228 = vlaneseq
        %v3229 = vshrl.u32 %v3228, 7
        %v3230 = vsub.s32 %v3227, %v3229
        %v3231 = vrot.slane %v3223, %v3230
        %v3233 = vunpack.c.l.s4 1934713408
        %v3234 = vunpack.c.0.s8 %v3233
        %v3235 = vlaneseq
        %v3236 = vshrl.u32 %v3235, 7
        %v3237 = vsub.s32 %v3234, %v3236
        %v3238 = vrot.slane %v3224, %v3237
        %v3239 = vcombine.low %v3183, %v3199
        %v3240 = vcombine.high %v3183, %v3199
        %v3242 = vunpack.c.l.s4 1934713408
        %v3243 = vunpack.c.0.s8 %v3242
        %v3244 = vlaneseq
        %v3245 = vshrl.u32 %v3244, 7
        %v3246 = vsub.s32 %v3243, %v3245
        %v3247 = vrot.slane %v3239, %v3246
        %v3249 = vunpack.c.l.s4 1934713408
        %v3250 = vunpack.c.0.s8 %v3249
        %v3251 = vlaneseq
        %v3252 = vshrl.u32 %v3251, 7
        %v3253 = vsub.s32 %v3250, %v3252
        %v3254 = vrot.slane %v3240, %v3253
        %v3255 = vcombine.low %v3190, %v3206
        %v3256 = vcombine.high %v3190, %v3206
        %v3258 = vunpack.c.l.s4 1934713408
        %v3259 = vunpack.c.0.s8 %v3258
        %v3260 = vlaneseq
        %v3261 = vshrl.u32 %v3260, 7
        %v3262 = vsub.s32 %v3259, %v3261
        %v3263 = vrot.slane %v3255, %v3262
        %v3265 = vunpack.c.l.s4 1934713408
        %v3266 = vunpack.c.0.s8 %v3265
        %v3267 = vlaneseq
        %v3268 = vshrl.u32 %v3267, 7
        %v3269 = vsub.s32 %v3266, %v3268
        %v3270 = vrot.slane %v3256, %v3269
        %v3271 = vcombine.low %v3215, %v3247
        %v3272 = vcombine.high %v3215, %v3247
        %v3273 = vcombine.low %v3222, %v3254
        %v3274 = vcombine.high %v3222, %v3254
        %v3275 = vcombine.low %v3231, %v3263
        %v3276 = vcombine.high %v3231, %v3263
        %v3277 = vcombine.low %v3238, %v3270
        %v3278 = vcombine.high %v3238, %v3270
        %v3279 = vcombine.low %v2357, %v2373
        %v3280 = vcombine.high %v2357, %v2373
        %v3282 = vunpack.c.l.s4 1983009808
        %v3283 = vunpack.c.0.s8 %v3282
        %v3284 = vlaneseq
        %v3285 = vshrl.u32 %v3284, 7
        %v3286 = vsub.s32 %v3283, %v3285
        %v3287 = vrot.slane %v3279, %v3286
        %v3289 = vunpack.c.l.s4 1983009808
        %v3290 = vunpack.c.0.s8 %v3289
        %v3291 = vlaneseq
        %v3292 = vshrl.u32 %v3291, 7
        %v3293 = vsub.s32 %v3290, %v3292
        %v3294 = vrot.slane %v3280, %v3293
        %v3295 = vcombine.low %v2365, %v2381
        %v3296 = vcombine.high %v2365, %v2381
        %v3298 = vunpack.c.l.s4 1983009808
        %v3299 = vunpack.c.0.s8 %v3298
        %v3300 = vlaneseq
        %v3301 = vshrl.u32 %v3300, 7
        %v3302 = vsub.s32 %v3299, %v3301
        %v3303 = vrot.slane %v3295, %v3302
        %v3305 = vunpack.c.l.s4 1983009808
        %v3306 = vunpack.c.0.s8 %v3305
        %v3307 = vlaneseq
        %v3308 = vshrl.u32 %v3307, 7
        %v3309 = vsub.s32 %v3306, %v3308
        %v3310 = vrot.slane %v3296, %v3309
        %v3311 = vcombine.low %v2389, %v2405
        %v3312 = vcombine.high %v2389, %v2405
        %v3314 = vunpack.c.l.s4 1983009808
        %v3315 = vunpack.c.0.s8 %v3314
        %v3316 = vlaneseq
        %v3317 = vshrl.u32 %v3316, 7
        %v3318 = vsub.s32 %v3315, %v3317
        %v3319 = vrot.slane %v3311, %v3318
        %v3321 = vunpack.c.l.s4 1983009808
        %v3322 = vunpack.c.0.s8 %v3321
        %v3323 = vlaneseq
        %v3324 = vshrl.u32 %v3323, 7
        %v3325 = vsub.s32 %v3322, %v3324
        %v3326 = vrot.slane %v3312, %v3325
        %v3327 = vcombine.low %v2397, %v2413
        %v3328 = vcombine.high %v2397, %v2413
        %v3330 = vunpack.c.l.s4 1983009808
        %v3331 = vunpack.c.0.s8 %v3330
        %v3332 = vlaneseq
        %v3333 = vshrl.u32 %v3332, 7
        %v3334 = vsub.s32 %v3331, %v3333
        %v3335 = vrot.slane %v3327, %v3334
        %v3337 = vunpack.c.l.s4 1983009808
        %v3338 = vunpack.c.0.s8 %v3337
        %v3339 = vlaneseq
        %v3340 = vshrl.u32 %v3339, 7
        %v3341 = vsub.s32 %v3338, %v3340
        %v3342 = vrot.slane %v3328, %v3341
        %v3343 = vcombine.low %v3287, %v3303
        %v3344 = vcombine.high %v3287, %v3303
        %v3346 = vunpack.c.l.s4 1934713408
        %v3347 = vunpack.c.0.s8 %v3346
        %v3348 = vlaneseq
        %v3349 = vshrl.u32 %v3348, 7
        %v3350 = vsub.s32 %v3347, %v3349
        %v3351 = vrot.slane %v3343, %v3350
        %v3353 = vunpack.c.l.s4 1934713408
        %v3354 = vunpack.c.0.s8 %v3353
        %v3355 = vlaneseq
        %v3356 = vshrl.u32 %v3355, 7
        %v3357 = vsub.s32 %v3354, %v3356
        %v3358 = vrot.slane %v3344, %v3357
        %v3359 = vcombine.low %v3294, %v3310
        %v3360 = vcombine.high %v3294, %v3310
        %v3362 = vunpack.c.l.s4 1934713408
        %v3363 = vunpack.c.0.s8 %v3362
        %v3364 = vlaneseq
        %v3365 = vshrl.u32 %v3364, 7
        %v3366 = vsub.s32 %v3363, %v3365
        %v3367 = vrot.slane %v3359, %v3366
        %v3369 = vunpack.c.l.s4 1934713408
        %v3370 = vunpack.c.0.s8 %v3369
        %v3371 = vlaneseq
        %v3372 = vshrl.u32 %v3371, 7
        %v3373 = vsub.s32 %v3370, %v3372
        %v3374 = vrot.slane %v3360, %v3373
        %v3375 = vcombine.low %v3319, %v3335
        %v3376 = vcombine.high %v3319, %v3335
        %v3378 = vunpack.c.l.s4 1934713408
        %v3379 = vunpack.c.0.s8 %v3378
        %v3380 = vlaneseq
        %v3381 = vshrl.u32 %v3380, 7
        %v3382 = vsub.s32 %v3379, %v3381
        %v3383 = vrot.slane %v3375, %v3382
        %v3385 = vunpack.c.l.s4 1934713408
        %v3386 = vunpack.c.0.s8 %v3385
        %v3387 = vlaneseq
        %v3388 = vshrl.u32 %v3387, 7
        %v3389 = vsub.s32 %v3386, %v3388
        %v3390 = vrot.slane %v3376, %v3389
        %v3391 = vcombine.low %v3326, %v3342
        %v3392 = vcombine.high %v3326, %v3342
        %v3394 = vunpack.c.l.s4 1934713408
        %v3395 = vunpack.c.0.s8 %v3394
        %v3396 = vlaneseq
        %v3397 = vshrl.u32 %v3396, 7
        %v3398 = vsub.s32 %v3395, %v3397
        %v3399 = vrot.slane %v3391, %v3398
        %v3401 = vunpack.c.l.s4 1934713408
        %v3402 = vunpack.c.0.s8 %v3401
        %v3403 = vlaneseq
        %v3404 = vshrl.u32 %v3403, 7
        %v3405 = vsub.s32 %v3402, %v3404
        %v3406 = vrot.slane %v3392, %v3405
        %v3407 = vcombine.low %v3351, %v3383
        %v3408 = vcombine.high %v3351, %v3383
        %v3409 = vcombine.low %v3358, %v3390
        %v3410 = vcombine.high %v3358, %v3390
        %v3411 = vcombine.low %v3367, %v3399
        %v3412 = vcombine.high %v3367, %v3399
        %v3413 = vcombine.low %v3374, %v3406
        %v3414 = vcombine.high %v3374, %v3406
        %v3415 = vcombine.low %v2361, %v2377
        %v3416 = vcombine.high %v2361, %v2377
        %v3418 = vunpack.c.l.s4 1983009808
        %v3419 = vunpack.c.0.s8 %v3418
        %v3420 = vlaneseq
        %v3421 = vshrl.u32 %v3420, 7
        %v3422 = vsub.s32 %v3419, %v3421
        %v3423 = vrot.slane %v3415, %v3422
        %v3425 = vunpack.c.l.s4 1983009808
        %v3426 = vunpack.c.0.s8 %v3425
        %v3427 = vlaneseq
        %v3428 = vshrl.u32 %v3427, 7
        %v3429 = vsub.s32 %v3426, %v3428
        %v3430 = vrot.slane %v3416, %v3429
        %v3431 = vcombine.low %v2369, %v2385
        %v3432 = vcombine.high %v2369, %v2385
        %v3434 = vunpack.c.l.s4 1983009808
        %v3435 = vunpack.c.0.s8 %v3434
        %v3436 = vlaneseq
        %v3437 = vshrl.u32 %v3436, 7
        %v3438 = vsub.s32 %v3435, %v3437
        %v3439 = vrot.slane %v3431, %v3438
        %v3441 = vunpack.c.l.s4 1983009808
        %v3442 = vunpack.c.0.s8 %v3441
        %v3443 = vlaneseq
        %v3444 = vshrl.u32 %v3443, 7
        %v3445 = vsub.s32 %v3442, %v3444
        %v3446 = vrot.slane %v3432, %v3445
        %v3447 = vcombine.low %v2393, %v2409
        %v3448 = vcombine.high %v2393, %v2409
        %v3450 = vunpack.c.l.s4 1983009808
        %v3451 = vunpack.c.0.s8 %v3450
        %v3452 = vlaneseq
        %v3453 = vshrl.u32 %v3452, 7
        %v3454 = vsub.s32 %v3451, %v3453
        %v3455 = vrot.slane %v3447, %v3454
        %v3457 = vunpack.c.l.s4 1983009808
        %v3458 = vunpack.c.0.s8 %v3457
        %v3459 = vlaneseq
        %v3460 = vshrl.u32 %v3459, 7
        %v3461 = vsub.s32 %v3458, %v3460
        %v3462 = vrot.slane %v3448, %v3461
        %v3463 = vcombine.low %v2401, %v2417
        %v3464 = vcombine.high %v2401, %v2417
        %v3466 = vunpack.c.l.s4 1983009808
        %v3467 = vunpack.c.0.s8 %v3466
        %v3468 = vlaneseq
        %v3469 = vshrl.u32 %v3468, 7
        %v3470 = vsub.s32 %v3467, %v3469
        %v3471 = vrot.slane %v3463, %v3470
        %v3473 = vunpack.c.l.s4 1983009808
        %v3474 = vunpack.c.0.s8 %v3473
        %v3475 = vlaneseq
        %v3476 = vshrl.u32 %v3475, 7
        %v3477 = vsub.s32 %v3474, %v3476
        %v3478 = vrot.slane %v3464, %v3477
        %v3479 = vcombine.low %v3423, %v3439
        %v3480 = vcombine.high %v3423, %v3439
        %v3482 = vunpack.c.l.s4 1934713408
        %v3483 = vunpack.c.0.s8 %v3482
        %v3484 = vlaneseq
        %v3485 = vshrl.u32 %v3484, 7
        %v3486 = vsub.s32 %v3483, %v3485
        %v3487 = vrot.slane %v3479, %v3486
        %v3489 = vunpack.c.l.s4 1934713408
        %v3490 = vunpack.c.0.s8 %v3489
        %v3491 = vlaneseq
        %v3492 = vshrl.u32 %v3491, 7
        %v3493 = vsub.s32 %v3490, %v3492
        %v3494 = vrot.slane %v3480, %v3493
        %v3495 = vcombine.low %v3430, %v3446
        %v3496 = vcombine.high %v3430, %v3446
        %v3498 = vunpack.c.l.s4 1934713408
        %v3499 = vunpack.c.0.s8 %v3498
        %v3500 = vlaneseq
        %v3501 = vshrl.u32 %v3500, 7
        %v3502 = vsub.s32 %v3499, %v3501
        %v3503 = vrot.slane %v3495, %v3502
        %v3505 = vunpack.c.l.s4 1934713408
        %v3506 = vunpack.c.0.s8 %v3505
        %v3507 = vlaneseq
        %v3508 = vshrl.u32 %v3507, 7
        %v3509 = vsub.s32 %v3506, %v3508
        %v3510 = vrot.slane %v3496, %v3509
        %v3511 = vcombine.low %v3455, %v3471
        %v3512 = vcombine.high %v3455, %v3471
        %v3514 = vunpack.c.l.s4 1934713408
        %v3515 = vunpack.c.0.s8 %v3514
        %v3516 = vlaneseq
        %v3517 = vshrl.u32 %v3516, 7
        %v3518 = vsub.s32 %v3515, %v3517
        %v3519 = vrot.slane %v3511, %v3518
        %v3521 = vunpack.c.l.s4 1934713408
        %v3522 = vunpack.c.0.s8 %v3521
        %v3523 = vlaneseq
        %v3524 = vshrl.u32 %v3523, 7
        %v3525 = vsub.s32 %v3522, %v3524
        %v3526 = vrot.slane %v3512, %v3525
        %v3527 = vcombine.low %v3462, %v3478
        %v3528 = vcombine.high %v3462, %v3478
        %v3530 = vunpack.c.l.s4 1934713408
        %v3531 = vunpack.c.0.s8 %v3530
        %v3532 = vlaneseq
        %v3533 = vshrl.u32 %v3532, 7
        %v3534 = vsub.s32 %v3531, %v3533
        %v3535 = vrot.slane %v3527, %v3534
        %v3537 = vunpack.c.l.s4 1934713408
        %v3538 = vunpack.c.0.s8 %v3537
        %v3539 = vlaneseq
        %v3540 = vshrl.u32 %v3539, 7
        %v3541 = vsub.s32 %v3538, %v3540
        %v3542 = vrot.slane %v3528, %v3541
        %v3543 = vcombine.low %v3487, %v3519
        %v3544 = vcombine.high %v3487, %v3519
        %v3545 = vcombine.low %v3494, %v3526
        %v3546 = vcombine.high %v3494, %v3526
        %v3547 = vcombine.low %v3503, %v3535
        %v3548 = vcombine.high %v3503, %v3535
        %v3549 = vcombine.low %v3510, %v3542
        %v3550 = vcombine.high %v3510, %v3542
        %v3551 = vcombine.low %v2421, %v2437
        %v3552 = vcombine.high %v2421, %v2437
        %v3554 = vunpack.c.l.s4 1983009808
        %v3555 = vunpack.c.0.s8 %v3554
        %v3556 = vlaneseq
        %v3557 = vshrl.u32 %v3556, 7
        %v3558 = vsub.s32 %v3555, %v3557
        %v3559 = vrot.slane %v3551, %v3558
        %v3561 = vunpack.c.l.s4 1983009808
        %v3562 = vunpack.c.0.s8 %v3561
        %v3563 = vlaneseq
        %v3564 = vshrl.u32 %v3563, 7
        %v3565 = vsub.s32 %v3562, %v3564
        %v3566 = vrot.slane %v3552, %v3565
        %v3567 = vcombine.low %v2429, %v2445
        %v3568 = vcombine.high %v2429, %v2445
        %v3570 = vunpack.c.l.s4 1983009808
        %v3571 = vunpack.c.0.s8 %v3570
        %v3572 = vlaneseq
        %v3573 = vshrl.u32 %v3572, 7
        %v3574 = vsub.s32 %v3571, %v3573
        %v3575 = vrot.slane %v3567, %v3574
        %v3577 = vunpack.c.l.s4 1983009808
        %v3578 = vunpack.c.0.s8 %v3577
        %v3579 = vlaneseq
        %v3580 = vshrl.u32 %v3579, 7
        %v3581 = vsub.s32 %v3578, %v3580
        %v3582 = vrot.slane %v3568, %v3581
        %v3583 = vcombine.high %v2453, %v2459
        %v3585 = vunpack.c.l.s4 1983009808
        %v3586 = vunpack.c.0.s8 %v3585
        %v3587 = vlaneseq
        %v3588 = vshrl.u32 %v3587, 7
        %v3589 = vsub.s32 %v3586, %v3588
        %v3590 = vrot.slane %v2453, %v3589
        %v3592 = vunpack.c.l.s4 1983009808
        %v3593 = vunpack.c.0.s8 %v3592
        %v3594 = vlaneseq
        %v3595 = vshrl.u32 %v3594, 7
        %v3596 = vsub.s32 %v3593, %v3595
        %v3597 = vrot.slane %v3583, %v3596
        %v3598 = vcombine.low %v3559, %v3575
        %v3599 = vcombine.high %v3559, %v3575
        %v3601 = vunpack.c.l.s4 1934713408
        %v3602 = vunpack.c.0.s8 %v3601
        %v3603 = vlaneseq
        %v3604 = vshrl.u32 %v3603, 7
        %v3605 = vsub.s32 %v3602, %v3604
        %v3606 = vrot.slane %v3598, %v3605
        %v3608 = vunpack.c.l.s4 1934713408
        %v3609 = vunpack.c.0.s8 %v3608
        %v3610 = vlaneseq
        %v3611 = vshrl.u32 %v3610, 7
        %v3612 = vsub.s32 %v3609, %v3611
        %v3613 = vrot.slane %v3599, %v3612
        %v3614 = vcombine.low %v3566, %v3582
        %v3615 = vcombine.high %v3566, %v3582
        %v3617 = vunpack.c.l.s4 1934713408
        %v3618 = vunpack.c.0.s8 %v3617
        %v3619 = vlaneseq
        %v3620 = vshrl.u32 %v3619, 7
        %v3621 = vsub.s32 %v3618, %v3620
        %v3622 = vrot.slane %v3614, %v3621
        %v3624 = vunpack.c.l.s4 1934713408
        %v3625 = vunpack.c.0.s8 %v3624
        %v3626 = vlaneseq
        %v3627 = vshrl.u32 %v3626, 7
        %v3628 = vsub.s32 %v3625, %v3627
        %v3629 = vrot.slane %v3615, %v3628
        %v3630 = vcombine.high %v3590, 0
        %v3632 = vunpack.c.l.s4 1934713408
        %v3633 = vunpack.c.0.s8 %v3632
        %v3634 = vlaneseq
        %v3635 = vshrl.u32 %v3634, 7
        %v3636 = vsub.s32 %v3633, %v3635
        %v3637 = vrot.slane %v3590, %v3636
        %v3639 = vunpack.c.l.s4 1934713408
        %v3640 = vunpack.c.0.s8 %v3639
        %v3641 = vlaneseq
        %v3642 = vshrl.u32 %v3641, 7
        %v3643 = vsub.s32 %v3640, %v3642
        %v3644 = vrot.slane %v3630, %v3643
        %v3645 = vcombine.high %v3597, 0
        %v3647 = vunpack.c.l.s4 1934713408
        %v3648 = vunpack.c.0.s8 %v3647
        %v3649 = vlaneseq
        %v3650 = vshrl.u32 %v3649, 7
        %v3651 = vsub.s32 %v3648, %v3650
        %v3652 = vrot.slane %v3597, %v3651
        %v3654 = vunpack.c.l.s4 1934713408
        %v3655 = vunpack.c.0.s8 %v3654
        %v3656 = vlaneseq
        %v3657 = vshrl.u32 %v3656, 7
        %v3658 = vsub.s32 %v3655, %v3657
        %v3659 = vrot.slane %v3645, %v3658
        %v3660 = vcombine.low %v3606, %v3637
        %v3661 = vcombine.high %v3606, %v3637
        %v3662 = vcombine.low %v3613, %v3644
        %v3663 = vcombine.high %v3613, %v3644
        %v3664 = vcombine.low %v3622, %v3652
        %v3665 = vcombine.high %v3622, %v3652
        %v3666 = vcombine.low %v3629, %v3659
        %v3667 = vcombine.high %v3629, %v3659
        %v3668 = vcombine.low %v2425, %v2441
        %v3669 = vcombine.high %v2425, %v2441
        %v3671 = vunpack.c.l.s4 1983009808
        %v3672 = vunpack.c.0.s8 %v3671
        %v3673 = vlaneseq
        %v3674 = vshrl.u32 %v3673, 7
        %v3675 = vsub.s32 %v3672, %v3674
        %v3676 = vrot.slane %v3668, %v3675
        %v3678 = vunpack.c.l.s4 1983009808
        %v3679 = vunpack.c.0.s8 %v3678
        %v3680 = vlaneseq
        %v3681 = vshrl.u32 %v3680, 7
        %v3682 = vsub.s32 %v3679, %v3681
        %v3683 = vrot.slane %v3669, %v3682
        %v3684 = vcombine.low %v2433, %v2449
        %v3685 = vcombine.high %v2433, %v2449
        %v3687 = vunpack.c.l.s4 1983009808
        %v3688 = vunpack.c.0.s8 %v3687
        %v3689 = vlaneseq
        %v3690 = vshrl.u32 %v3689, 7
        %v3691 = vsub.s32 %v3688, %v3690
        %v3692 = vrot.slane %v3684, %v3691
        %v3694 = vunpack.c.l.s4 1983009808
        %v3695 = vunpack.c.0.s8 %v3694
        %v3696 = vlaneseq
        %v3697 = vshrl.u32 %v3696, 7
        %v3698 = vsub.s32 %v3695, %v3697
        %v3699 = vrot.slane %v3685, %v3698
        %v3700 = vcombine.high %v2457, %v2461
        %v3702 = vunpack.c.l.s4 1983009808
        %v3703 = vunpack.c.0.s8 %v3702
        %v3704 = vlaneseq
        %v3705 = vshrl.u32 %v3704, 7
        %v3706 = vsub.s32 %v3703, %v3705
        %v3707 = vrot.slane %v2457, %v3706
        %v3709 = vunpack.c.l.s4 1983009808
        %v3710 = vunpack.c.0.s8 %v3709
        %v3711 = vlaneseq
        %v3712 = vshrl.u32 %v3711, 7
        %v3713 = vsub.s32 %v3710, %v3712
        %v3714 = vrot.slane %v3700, %v3713
        %v3715 = vcombine.low %v3676, %v3692
        %v3716 = vcombine.high %v3676, %v3692
        %v3718 = vunpack.c.l.s4 1934713408
        %v3719 = vunpack.c.0.s8 %v3718
        %v3720 = vlaneseq
        %v3721 = vshrl.u32 %v3720, 7
        %v3722 = vsub.s32 %v3719, %v3721
        %v3723 = vrot.slane %v3715, %v3722
        %v3725 = vunpack.c.l.s4 1934713408
        %v3726 = vunpack.c.0.s8 %v3725
        %v3727 = vlaneseq
        %v3728 = vshrl.u32 %v3727, 7
        %v3729 = vsub.s32 %v3726, %v3728
        %v3730 = vrot.slane %v3716, %v3729
        %v3731 = vcombine.low %v3683, %v3699
        %v3732 = vcombine.high %v3683, %v3699
        %v3734 = vunpack.c.l.s4 1934713408
        %v3735 = vunpack.c.0.s8 %v3734
        %v3736 = vlaneseq
        %v3737 = vshrl.u32 %v3736, 7
        %v3738 = vsub.s32 %v3735, %v3737
        %v3739 = vrot.slane %v3731, %v3738
        %v3741 = vunpack.c.l.s4 1934713408
        %v3742 = vunpack.c.0.s8 %v3741
        %v3743 = vlaneseq
        %v3744 = vshrl.u32 %v3743, 7
        %v3745 = vsub.s32 %v3742, %v3744
        %v3746 = vrot.slane %v3732, %v3745
        %v3747 = vcombine.high %v3707, 0
        %v3749 = vunpack.c.l.s4 1934713408
        %v3750 = vunpack.c.0.s8 %v3749
        %v3751 = vlaneseq
        %v3752 = vshrl.u32 %v3751, 7
        %v3753 = vsub.s32 %v3750, %v3752
        %v3754 = vrot.slane %v3707, %v3753
        %v3756 = vunpack.c.l.s4 1934713408
        %v3757 = vunpack.c.0.s8 %v3756
        %v3758 = vlaneseq
        %v3759 = vshrl.u32 %v3758, 7
        %v3760 = vsub.s32 %v3757, %v3759
        %v3761 = vrot.slane %v3747, %v3760
        %v3762 = vcombine.high %v3714, 0
        %v3764 = vunpack.c.l.s4 1934713408
        %v3765 = vunpack.c.0.s8 %v3764
        %v3766 = vlaneseq
        %v3767 = vshrl.u32 %v3766, 7
        %v3768 = vsub.s32 %v3765, %v3767
        %v3769 = vrot.slane %v3714, %v3768
        %v3771 = vunpack.c.l.s4 1934713408
        %v3772 = vunpack.c.0.s8 %v3771
        %v3773 = vlaneseq
        %v3774 = vshrl.u32 %v3773, 7
        %v3775 = vsub.s32 %v3772, %v3774
        %v3776 = vrot.slane %v3762, %v3775
        %v3777 = vcombine.low %v3723, %v3754
        %v3778 = vcombine.high %v3723, %v3754
        %v3779 = vcombine.low %v3730, %v3761
        %v3780 = vcombine.high %v3730, %v3761
        %v3781 = vcombine.low %v3739, %v3769
        %v3782 = vcombine.high %v3739, %v3769
        %v3783 = vcombine.low %v3746, %v3776
        %v3784 = vcombine.high %v3746, %v3776
        %3790 = vrot.lane.b32.xlu0 %v2727, 16
        %v3791 = vpop.permute.xlu0 %3790
        %3792 = vrot.lane.b32.xlu0 %v2999, 16
        %v3793 = vpop.permute.xlu0 %3792
        %3794 = vrot.lane.b32.xlu0 %v3271, 16
        %v3795 = vpop.permute.xlu0 %3794
        %3796 = vrot.lane.b32.xlu0 %v3543, 16
        %v3797 = vpop.permute.xlu0 %3796
        %3798 = vrot.lane.b32.xlu0 %v3777, 16
        %v3799 = vpop.permute.xlu0 %3798
        %3805 = vrot.lane.b32.xlu0 %v2592, 32
        %v3806 = vpop.permute.xlu0 %3805
        %3807 = vrot.lane.b32.xlu0 %v2864, 32
        %v3808 = vpop.permute.xlu0 %3807
        %3809 = vrot.lane.b32.xlu0 %v3136, 32
        %v3810 = vpop.permute.xlu0 %3809
        %3811 = vrot.lane.b32.xlu0 %v3408, 32
        %v3812 = vpop.permute.xlu0 %3811
        %3813 = vrot.lane.b32.xlu0 %v3661, 32
        %v3814 = vpop.permute.xlu0 %3813
        %3820 = vrot.lane.b32.xlu0 %v2728, 48
        %v3821 = vpop.permute.xlu0 %3820
        %3822 = vrot.lane.b32.xlu0 %v3000, 48
        %v3823 = vpop.permute.xlu0 %3822
        %3824 = vrot.lane.b32.xlu0 %v3272, 48
        %v3825 = vpop.permute.xlu0 %3824
        %3826 = vrot.lane.b32.xlu0 %v3544, 48
        %v3827 = vpop.permute.xlu0 %3826
        %3828 = vrot.lane.b32.xlu0 %v3778, 48
        %v3829 = vpop.permute.xlu0 %3828
        %3835 = vrot.lane.b32.xlu0 %v2593, 64
        %v3836 = vpop.permute.xlu0 %3835
        %3837 = vrot.lane.b32.xlu0 %v2865, 64
        %v3838 = vpop.permute.xlu0 %3837
        %3839 = vrot.lane.b32.xlu0 %v3137, 64
        %v3840 = vpop.permute.xlu0 %3839
        %3841 = vrot.lane.b32.xlu0 %v3409, 64
        %v3842 = vpop.permute.xlu0 %3841
        %3843 = vrot.lane.b32.xlu0 %v3662, 64
        %v3844 = vpop.permute.xlu0 %3843
        %3850 = vrot.lane.b32.xlu0 %v2729, 80
        %v3851 = vpop.permute.xlu0 %3850
        %3852 = vrot.lane.b32.xlu0 %v3001, 80
        %v3853 = vpop.permute.xlu0 %3852
        %3854 = vrot.lane.b32.xlu0 %v3273, 80
        %v3855 = vpop.permute.xlu0 %3854
        %3856 = vrot.lane.b32.xlu0 %v3545, 80
        %v3857 = vpop.permute.xlu0 %3856
        %3858 = vrot.lane.b32.xlu0 %v3779, 80
        %v3859 = vpop.permute.xlu0 %3858
        %3865 = vrot.lane.b32.xlu0 %v2594, 96
        %v3866 = vpop.permute.xlu0 %3865
        %3867 = vrot.lane.b32.xlu0 %v2866, 96
        %v3868 = vpop.permute.xlu0 %3867
        %3869 = vrot.lane.b32.xlu0 %v3138, 96
        %v3870 = vpop.permute.xlu0 %3869
        %3871 = vrot.lane.b32.xlu0 %v3410, 96
        %v3872 = vpop.permute.xlu0 %3871
        %3873 = vrot.lane.b32.xlu0 %v3663, 96
        %v3874 = vpop.permute.xlu0 %3873
        %3880 = vrot.lane.b32.xlu0 %v2730, 112
        %v3881 = vpop.permute.xlu0 %3880
        %3882 = vrot.lane.b32.xlu0 %v3002, 112
        %v3883 = vpop.permute.xlu0 %3882
        %3884 = vrot.lane.b32.xlu0 %v3274, 112
        %v3885 = vpop.permute.xlu0 %3884
        %3886 = vrot.lane.b32.xlu0 %v3546, 112
        %v3887 = vpop.permute.xlu0 %3886
        %3888 = vrot.lane.b32.xlu0 %v3780, 112
        %v3889 = vpop.permute.xlu0 %3888
        %3895 = vrot.lane.b32.xlu0 %v2731, 16
        %v3896 = vpop.permute.xlu0 %3895
        %3897 = vrot.lane.b32.xlu0 %v3003, 16
        %v3898 = vpop.permute.xlu0 %3897
        %3899 = vrot.lane.b32.xlu0 %v3275, 16
        %v3900 = vpop.permute.xlu0 %3899
        %3901 = vrot.lane.b32.xlu0 %v3547, 16
        %v3902 = vpop.permute.xlu0 %3901
        %3903 = vrot.lane.b32.xlu0 %v3781, 16
        %v3904 = vpop.permute.xlu0 %3903
        %3910 = vrot.lane.b32.xlu0 %v2596, 32
        %v3911 = vpop.permute.xlu0 %3910
        %3912 = vrot.lane.b32.xlu0 %v2868, 32
        %v3913 = vpop.permute.xlu0 %3912
        %3914 = vrot.lane.b32.xlu0 %v3140, 32
        %v3915 = vpop.permute.xlu0 %3914
        %3916 = vrot.lane.b32.xlu0 %v3412, 32
        %v3917 = vpop.permute.xlu0 %3916
        %3918 = vrot.lane.b32.xlu0 %v3665, 32
        %v3919 = vpop.permute.xlu0 %3918
        %3925 = vrot.lane.b32.xlu0 %v2732, 48
        %v3926 = vpop.permute.xlu0 %3925
        %3927 = vrot.lane.b32.xlu0 %v3004, 48
        %v3928 = vpop.permute.xlu0 %3927
        %3929 = vrot.lane.b32.xlu0 %v3276, 48
        %v3930 = vpop.permute.xlu0 %3929
        %3931 = vrot.lane.b32.xlu0 %v3548, 48
        %v3932 = vpop.permute.xlu0 %3931
        %3933 = vrot.lane.b32.xlu0 %v3782, 48
        %v3934 = vpop.permute.xlu0 %3933
        %3940 = vrot.lane.b32.xlu0 %v2597, 64
        %v3941 = vpop.permute.xlu0 %3940
        %3942 = vrot.lane.b32.xlu0 %v2869, 64
        %v3943 = vpop.permute.xlu0 %3942
        %3944 = vrot.lane.b32.xlu0 %v3141, 64
        %v3945 = vpop.permute.xlu0 %3944
        %3946 = vrot.lane.b32.xlu0 %v3413, 64
        %v3947 = vpop.permute.xlu0 %3946
        %3948 = vrot.lane.b32.xlu0 %v3666, 64
        %v3949 = vpop.permute.xlu0 %3948
        %3955 = vrot.lane.b32.xlu0 %v2733, 80
        %v3956 = vpop.permute.xlu0 %3955
        %3957 = vrot.lane.b32.xlu0 %v3005, 80
        %v3958 = vpop.permute.xlu0 %3957
        %3959 = vrot.lane.b32.xlu0 %v3277, 80
        %v3960 = vpop.permute.xlu0 %3959
        %3961 = vrot.lane.b32.xlu0 %v3549, 80
        %v3962 = vpop.permute.xlu0 %3961
        %3963 = vrot.lane.b32.xlu0 %v3783, 80
        %v3964 = vpop.permute.xlu0 %3963
        %3970 = vrot.lane.b32.xlu0 %v2598, 96
        %v3971 = vpop.permute.xlu0 %3970
        %3972 = vrot.lane.b32.xlu0 %v2870, 96
        %v3973 = vpop.permute.xlu0 %3972
        %3974 = vrot.lane.b32.xlu0 %v3142, 96
        %v3975 = vpop.permute.xlu0 %3974
        %3976 = vrot.lane.b32.xlu0 %v3414, 96
        %v3977 = vpop.permute.xlu0 %3976
        %3978 = vrot.lane.b32.xlu0 %v3667, 96
        %v3979 = vpop.permute.xlu0 %3978
        %3985 = vrot.lane.b32.xlu0 %v2734, 112
        %v3986 = vpop.permute.xlu0 %3985
        %3987 = vrot.lane.b32.xlu0 %v3006, 112
        %v3988 = vpop.permute.xlu0 %3987
        %3989 = vrot.lane.b32.xlu0 %v3278, 112
        %v3990 = vpop.permute.xlu0 %3989
        %3991 = vrot.lane.b32.xlu0 %v3550, 112
        %v3992 = vpop.permute.xlu0 %3991
        %3993 = vrot.lane.b32.xlu0 %v3784, 112
        %v3994 = vpop.permute.xlu0 %3993
        %v3997 = vsel %vm845, %v2591, %v3791
        %v4000 = vsel %vm845, %v2863, %v3793
        %v4003 = vsel %vm845, %v3135, %v3795
        %v4006 = vsel %vm845, %v3407, %v3797
        %v4009 = vsel %vm845, %v3660, %v3799
        %vm4010 = vcmask 261120
        %v4012 = vsel %vm4010, %v3997, %v3806
        %v4014 = vsel %vm4010, %v4000, %v3808
        %v4016 = vsel %vm4010, %v4003, %v3810
        %v4018 = vsel %vm4010, %v4006, %v3812
        %v4020 = vsel %vm4010, %v4009, %v3814
        %vm4021 = vcmask 392192
        %v4023 = vsel %vm4021, %v4012, %v3821
        %v4025 = vsel %vm4021, %v4014, %v3823
        %v4027 = vsel %vm4021, %v4016, %v3825
        %v4029 = vsel %vm4021, %v4018, %v3827
        %v4031 = vsel %vm4021, %v4020, %v3829
        %vm4032 = vcmask 523264
        %v4034 = vsel %vm4032, %v4023, %v3836
        %v4036 = vsel %vm4032, %v4025, %v3838
        %v4038 = vsel %vm4032, %v4027, %v3840
        %v4040 = vsel %vm4032, %v4029, %v3842
        %v4042 = vsel %vm4032, %v4031, %v3844
        %vm4043 = vcmask 654336
        %v4045 = vsel %vm4043, %v4034, %v3851
        %v4047 = vsel %vm4043, %v4036, %v3853
        %v4049 = vsel %vm4043, %v4038, %v3855
        %v4051 = vsel %vm4043, %v4040, %v3857
        %v4053 = vsel %vm4043, %v4042, %v3859
        %vm4054 = vcmask 785408
        %v4056 = vsel %vm4054, %v4045, %v3866
        %v4058 = vsel %vm4054, %v4047, %v3868
        %v4060 = vsel %vm4054, %v4049, %v3870
        %v4062 = vsel %vm4054, %v4051, %v3872
        %v4064 = vsel %vm4054, %v4053, %v3874
        %vm4065 = vcmask 916480
        %v4067 = vsel %vm4065, %v4056, %v3881
        %v4070 = vsel %vm4065, %v4058, %v3883
        %v4073 = vsel %vm4065, %v4060, %v3885
        %v4076 = vsel %vm4065, %v4062, %v3887
        %v4079 = vsel %vm4065, %v4064, %v3889
        %v4082 = vsel %vm845, %v2595, %v3896
        %v4085 = vsel %vm845, %v2867, %v3898
        %v4088 = vsel %vm845, %v3139, %v3900
        %v4091 = vsel %vm845, %v3411, %v3902
        %v4094 = vsel %vm845, %v3664, %v3904
        %v4096 = vsel %vm4010, %v4082, %v3911
        %v4098 = vsel %vm4010, %v4085, %v3913
        %v4100 = vsel %vm4010, %v4088, %v3915
        %v4102 = vsel %vm4010, %v4091, %v3917
        %v4104 = vsel %vm4010, %v4094, %v3919
        %v4106 = vsel %vm4021, %v4096, %v3926
        %v4108 = vsel %vm4021, %v4098, %v3928
        %v4110 = vsel %vm4021, %v4100, %v3930
        %v4112 = vsel %vm4021, %v4102, %v3932
        %v4114 = vsel %vm4021, %v4104, %v3934
        %v4116 = vsel %vm4032, %v4106, %v3941
        %v4118 = vsel %vm4032, %v4108, %v3943
        %v4120 = vsel %vm4032, %v4110, %v3945
        %v4122 = vsel %vm4032, %v4112, %v3947
        %v4124 = vsel %vm4032, %v4114, %v3949
        %v4126 = vsel %vm4043, %v4116, %v3956
        %v4128 = vsel %vm4043, %v4118, %v3958
        %v4130 = vsel %vm4043, %v4120, %v3960
        %v4132 = vsel %vm4043, %v4122, %v3962
        %v4134 = vsel %vm4043, %v4124, %v3964
        %v4136 = vsel %vm4054, %v4126, %v3971
        %v4138 = vsel %vm4054, %v4128, %v3973
        %v4140 = vsel %vm4054, %v4130, %v3975
        %v4142 = vsel %vm4054, %v4132, %v3977
        %v4144 = vsel %vm4054, %v4134, %v3979
        %v4146 = vsel %vm4065, %v4136, %v3986
        %v4149 = vsel %vm4065, %v4138, %v3988
        %v4152 = vsel %vm4065, %v4140, %v3990
        %v4155 = vsel %vm4065, %v4142, %v3992
        %v4158 = vsel %vm4065, %v4144, %v3994
        %v4159 = vcombine.low 0.0, 0.0
        %v4160 = vcombine.high 0.0, 0.0
        %v4162 = vunpack.c.l.s4 1983009808
        %v4163 = vunpack.c.0.s8 %v4162
        %v4164 = vlaneseq
        %v4165 = vshrl.u32 %v4164, 7
        %v4166 = vsub.s32 %v4163, %v4165
        %v4167 = vrot.slane %v4159, %v4166
        %v4169 = vunpack.c.l.s4 1983009808
        %v4170 = vunpack.c.0.s8 %v4169
        %v4171 = vlaneseq
        %v4172 = vshrl.u32 %v4171, 7
        %v4173 = vsub.s32 %v4170, %v4172
        %v4174 = vrot.slane %v4160, %v4173
        %v4175 = vcombine.low %v4167, %v4167
        %v4176 = vcombine.high %v4167, %v4167
        %v4178 = vunpack.c.l.s4 1934713408
        %v4179 = vunpack.c.0.s8 %v4178
        %v4180 = vlaneseq
        %v4181 = vshrl.u32 %v4180, 7
        %v4182 = vsub.s32 %v4179, %v4181
        %v4183 = vrot.slane %v4175, %v4182
        %v4185 = vunpack.c.l.s4 1934713408
        %v4186 = vunpack.c.0.s8 %v4185
        %v4187 = vlaneseq
        %v4188 = vshrl.u32 %v4187, 7
        %v4189 = vsub.s32 %v4186, %v4188
        %v4190 = vrot.slane %v4176, %v4189
        %v4191 = vcombine.low %v4174, %v4174
        %v4192 = vcombine.high %v4174, %v4174
        %v4194 = vunpack.c.l.s4 1934713408
        %v4195 = vunpack.c.0.s8 %v4194
        %v4196 = vlaneseq
        %v4197 = vshrl.u32 %v4196, 7
        %v4198 = vsub.s32 %v4195, %v4197
        %v4199 = vrot.slane %v4191, %v4198
        %v4201 = vunpack.c.l.s4 1934713408
        %v4202 = vunpack.c.0.s8 %v4201
        %v4203 = vlaneseq
        %v4204 = vshrl.u32 %v4203, 7
        %v4205 = vsub.s32 %v4202, %v4204
        %v4206 = vrot.slane %v4192, %v4205
        %v4207 = vcombine.low %v4183, %v4183
        %v4208 = vcombine.high %v4183, %v4183
        %v4209 = vcombine.low %v4190, %v4190
        %v4210 = vcombine.high %v4190, %v4190
        %v4211 = vcombine.low %v4199, %v4199
        %v4212 = vcombine.high %v4199, %v4199
        %v4213 = vcombine.low %v4206, %v4206
        %v4214 = vcombine.high %v4206, %v4206
        %4216 = vrot.lane.b32.xlu0 %v4208, 16
        %v4217 = vpop.permute.xlu0 %4216
        %4220 = vrot.lane.b32.xlu0 %v4209, 32
        %v4221 = vpop.permute.xlu0 %4220
        %4224 = vrot.lane.b32.xlu0 %v4210, 48
        %v4225 = vpop.permute.xlu0 %4224
        %4228 = vrot.lane.b32.xlu0 %v4211, 64
        %v4229 = vpop.permute.xlu0 %4228
        %4232 = vrot.lane.b32.xlu0 %v4212, 80
        %v4233 = vpop.permute.xlu0 %4232
        %4236 = vrot.lane.b32.xlu0 %v4213, 96
        %v4237 = vpop.permute.xlu0 %4236
        %4240 = vrot.lane.b32.xlu0 %v4214, 112
        %v4241 = vpop.permute.xlu0 %4240
        %v4243 = vsel %vm845, %v4207, %v4217
        %v4244 = vsel %vm4010, %v4243, %v4221
        %v4245 = vsel %vm4021, %v4244, %v4225
        %v4246 = vsel %vm4032, %v4245, %v4229
        %v4247 = vsel %vm4043, %v4246, %v4233
        %v4248 = vsel %vm4054, %v4247, %v4237
        %v4249 = vsel %vm4065, %v4248, %v4241
        %v4252 = vunpack.c.l.b16 %v2088
        %v4253 = vunpack.c.l.b16 %v2089
        %v4254 = vpack.c.b16 %v4253, %v4252
        %vm4255 = vcmask 596992
        %v4257 = vsel %vm4255, %v4254, 0
        %vm4259 = vcmask 1043456
        %vm4260 = vcmask 1044480
        %v4261 = vsel %vm4259, 4294967295, 65535
        %v4262 = vsel %vm4260, %v4261, 0
        %v4263 = vand.u32 %v4079, %v4262
        %v4265 = vand.u32 %v4158, %v4262
        %4267 = vmatprep.subr.bf16.mxu0 %v4146
        %4268 = vmatpush1.bf16.msra.mxu0 %v4067
        %4269 = vmatprep.subr.bf16.mxu0 %v4149
        %4270 = vmatpush1.bf16.msra.mxu0 %v4070
        %4271 = vmatprep.subr.bf16.mxu0 %v4152
        %4272 = vmatpush1.bf16.msra.mxu0 %v4073
        %4273 = vmatprep.subr.bf16.mxu0 %v4155
        %4274 = vmatpush1.bf16.msra.mxu0 %v4076
        %4275 = vmatprep.subr.bf16.mxu0 %v4265
        %4276 = vmatpush1.bf16.msra.mxu0 %v4263
        %4277 = vmatprep.subr.bf16.mxu0 0
        %4278 = vmatpush1.bf16.msra.mxu0 0
        %4279 = vmatprep.subr.bf16.mxu0 0
        %4280 = vmatpush1.bf16.msra.mxu0 0
        %4281 = vmatprep.subr.bf16.mxu0 0
        %4282 = vmatpush1.bf16.msra.mxu0 0
        %4283 = vmatprep.subr.bf16.mxu0 0
        %4284 = vmatpush1.bf16.msra.mxu0 0
        %4285 = vmatprep.subr.bf16.mxu0 0
        %4286 = vmatpush1.bf16.msra.mxu0 0
        %4287 = vmatprep.subr.bf16.mxu0 0
        %4288 = vmatpush1.bf16.msra.mxu0 0
        %4289 = vmatprep.subr.bf16.mxu0 0
        %4290 = vmatpush1.bf16.msra.mxu0 0
        %4291 = vmatprep.subr.bf16.mxu0 0
        %4292 = vmatpush1.bf16.msra.mxu0 0
        %4293 = vmatprep.subr.bf16.mxu0 0
        %4294 = vmatpush1.bf16.msra.mxu0 0
        %4295 = vmatprep.subr.bf16.mxu0 0
        %4296 = vmatpush1.bf16.msra.mxu0 0
        %4297 = vmatprep.subr.bf16.mxu0 0
        %4298 = vmatpush1.bf16.msra.mxu0 0
        %4299 = vmatprep.mubr.bf16.mxu0 0
        %4300 = vmatmul.mubr.bf16.gmra.mrb[0].mxu0 %v4257
        %v4301 = vpop.f32.mrb[0].mxu0
        %v4302 = vadd.f32 %v4249, %v4301
        %v4303 = vpop.f32.mrb[0].mxu0
        %v4304 = vadd.f32 %v4249, %v4303
        %v4305 = vpop.f32.mrb[0].mxu0
        %v4306 = vadd.f32 %v4249, %v4305
        %v4307 = vpop.f32.mrb[0].mxu0
        %v4308 = vadd.f32 %v4249, %v4307
        %4309 = vdwg.mxu0
        %4312 = vrot.lane.b32.xlu0 %v4302, 112
        %v4313 = vpop.permute.xlu0 %4312
        %4314 = vrot.lane.b32.xlu0 %v4306, 112
        %v4315 = vpop.permute.xlu0 %4314
        %4318 = vrot.lane.b32.xlu0 %v4302, 96
        %v4319 = vpop.permute.xlu0 %4318
        %4320 = vrot.lane.b32.xlu0 %v4306, 96
        %v4321 = vpop.permute.xlu0 %4320
        %4324 = vrot.lane.b32.xlu0 %v4302, 80
        %v4325 = vpop.permute.xlu0 %4324
        %4326 = vrot.lane.b32.xlu0 %v4306, 80
        %v4327 = vpop.permute.xlu0 %4326
        %4330 = vrot.lane.b32.xlu0 %v4302, 64
        %v4331 = vpop.permute.xlu0 %4330
        %4332 = vrot.lane.b32.xlu0 %v4306, 64
        %v4333 = vpop.permute.xlu0 %4332
        %4336 = vrot.lane.b32.xlu0 %v4302, 48
        %v4337 = vpop.permute.xlu0 %4336
        %4338 = vrot.lane.b32.xlu0 %v4306, 48
        %v4339 = vpop.permute.xlu0 %4338
        %4342 = vrot.lane.b32.xlu0 %v4302, 32
        %v4343 = vpop.permute.xlu0 %4342
        %4344 = vrot.lane.b32.xlu0 %v4306, 32
        %v4345 = vpop.permute.xlu0 %4344
        %4348 = vrot.lane.b32.xlu0 %v4302, 16
        %v4349 = vpop.permute.xlu0 %4348
        %4350 = vrot.lane.b32.xlu0 %v4306, 16
        %v4351 = vpop.permute.xlu0 %4350
        %4356 = vrot.lane.b32.xlu0 %v4304, 112
        %v4357 = vpop.permute.xlu0 %4356
        %4358 = vrot.lane.b32.xlu0 %v4308, 112
        %v4359 = vpop.permute.xlu0 %4358
        %4362 = vrot.lane.b32.xlu0 %v4304, 96
        %v4363 = vpop.permute.xlu0 %4362
        %4364 = vrot.lane.b32.xlu0 %v4308, 96
        %v4365 = vpop.permute.xlu0 %4364
        %4368 = vrot.lane.b32.xlu0 %v4304, 80
        %v4369 = vpop.permute.xlu0 %4368
        %4370 = vrot.lane.b32.xlu0 %v4308, 80
        %v4371 = vpop.permute.xlu0 %4370
        %4374 = vrot.lane.b32.xlu0 %v4304, 64
        %v4375 = vpop.permute.xlu0 %4374
        %4376 = vrot.lane.b32.xlu0 %v4308, 64
        %v4377 = vpop.permute.xlu0 %4376
        %4380 = vrot.lane.b32.xlu0 %v4304, 48
        %v4381 = vpop.permute.xlu0 %4380
        %4382 = vrot.lane.b32.xlu0 %v4308, 48
        %v4383 = vpop.permute.xlu0 %4382
        %4386 = vrot.lane.b32.xlu0 %v4304, 32
        %v4387 = vpop.permute.xlu0 %4386
        %4388 = vrot.lane.b32.xlu0 %v4308, 32
        %v4389 = vpop.permute.xlu0 %4388
        %4392 = vrot.lane.b32.xlu0 %v4304, 16
        %v4393 = vpop.permute.xlu0 %4392
        %4394 = vrot.lane.b32.xlu0 %v4308, 16
        %v4395 = vpop.permute.xlu0 %4394
        %v4398 = vcombine.low %v4302, %v4319
        %v4399 = vcombine.high %v4302, %v4319
        %v4401 = vunpack.c.l.s4 1983009808
        %v4402 = vunpack.c.0.s8 %v4401
        %v4403 = vlaneseq
        %v4404 = vshrl.u32 %v4403, 7
        %v4405 = vsub.s32 %v4402, %v4404
        %v4406 = vrot.slane %v4398, %v4405
        %v4408 = vunpack.c.l.s4 1983009808
        %v4409 = vunpack.c.0.s8 %v4408
        %v4410 = vlaneseq
        %v4411 = vshrl.u32 %v4410, 7
        %v4412 = vsub.s32 %v4409, %v4411
        %v4413 = vrot.slane %v4399, %v4412
        %v4414 = vcombine.low %v4313, %v4325
        %v4415 = vcombine.high %v4313, %v4325
        %v4417 = vunpack.c.l.s4 1983009808
        %v4418 = vunpack.c.0.s8 %v4417
        %v4419 = vlaneseq
        %v4420 = vshrl.u32 %v4419, 7
        %v4421 = vsub.s32 %v4418, %v4420
        %v4422 = vrot.slane %v4414, %v4421
        %v4424 = vunpack.c.l.s4 1983009808
        %v4425 = vunpack.c.0.s8 %v4424
        %v4426 = vlaneseq
        %v4427 = vshrl.u32 %v4426, 7
        %v4428 = vsub.s32 %v4425, %v4427
        %v4429 = vrot.slane %v4415, %v4428
        %v4430 = vcombine.low %v4331, %v4343
        %v4431 = vcombine.high %v4331, %v4343
        %v4433 = vunpack.c.l.s4 1983009808
        %v4434 = vunpack.c.0.s8 %v4433
        %v4435 = vlaneseq
        %v4436 = vshrl.u32 %v4435, 7
        %v4437 = vsub.s32 %v4434, %v4436
        %v4438 = vrot.slane %v4430, %v4437
        %v4440 = vunpack.c.l.s4 1983009808
        %v4441 = vunpack.c.0.s8 %v4440
        %v4442 = vlaneseq
        %v4443 = vshrl.u32 %v4442, 7
        %v4444 = vsub.s32 %v4441, %v4443
        %v4445 = vrot.slane %v4431, %v4444
        %v4446 = vcombine.low %v4337, %v4349
        %v4447 = vcombine.high %v4337, %v4349
        %v4449 = vunpack.c.l.s4 1983009808
        %v4450 = vunpack.c.0.s8 %v4449
        %v4451 = vlaneseq
        %v4452 = vshrl.u32 %v4451, 7
        %v4453 = vsub.s32 %v4450, %v4452
        %v4454 = vrot.slane %v4446, %v4453
        %v4456 = vunpack.c.l.s4 1983009808
        %v4457 = vunpack.c.0.s8 %v4456
        %v4458 = vlaneseq
        %v4459 = vshrl.u32 %v4458, 7
        %v4460 = vsub.s32 %v4457, %v4459
        %v4461 = vrot.slane %v4447, %v4460
        %v4462 = vcombine.low %v4406, %v4422
        %v4463 = vcombine.high %v4406, %v4422
        %v4465 = vunpack.c.l.s4 1934713408
        %v4466 = vunpack.c.0.s8 %v4465
        %v4467 = vlaneseq
        %v4468 = vshrl.u32 %v4467, 7
        %v4469 = vsub.s32 %v4466, %v4468
        %v4470 = vrot.slane %v4462, %v4469
        %v4472 = vunpack.c.l.s4 1934713408
        %v4473 = vunpack.c.0.s8 %v4472
        %v4474 = vlaneseq
        %v4475 = vshrl.u32 %v4474, 7
        %v4476 = vsub.s32 %v4473, %v4475
        %v4477 = vrot.slane %v4463, %v4476
        %v4478 = vcombine.low %v4413, %v4429
        %v4479 = vcombine.high %v4413, %v4429
        %v4481 = vunpack.c.l.s4 1934713408
        %v4482 = vunpack.c.0.s8 %v4481
        %v4483 = vlaneseq
        %v4484 = vshrl.u32 %v4483, 7
        %v4485 = vsub.s32 %v4482, %v4484
        %v4486 = vrot.slane %v4478, %v4485
        %v4488 = vunpack.c.l.s4 1934713408
        %v4489 = vunpack.c.0.s8 %v4488
        %v4490 = vlaneseq
        %v4491 = vshrl.u32 %v4490, 7
        %v4492 = vsub.s32 %v4489, %v4491
        %v4493 = vrot.slane %v4479, %v4492
        %v4494 = vcombine.low %v4438, %v4454
        %v4495 = vcombine.high %v4438, %v4454
        %v4497 = vunpack.c.l.s4 1934713408
        %v4498 = vunpack.c.0.s8 %v4497
        %v4499 = vlaneseq
        %v4500 = vshrl.u32 %v4499, 7
        %v4501 = vsub.s32 %v4498, %v4500
        %v4502 = vrot.slane %v4494, %v4501
        %v4504 = vunpack.c.l.s4 1934713408
        %v4505 = vunpack.c.0.s8 %v4504
        %v4506 = vlaneseq
        %v4507 = vshrl.u32 %v4506, 7
        %v4508 = vsub.s32 %v4505, %v4507
        %v4509 = vrot.slane %v4495, %v4508
        %v4510 = vcombine.low %v4445, %v4461
        %v4511 = vcombine.high %v4445, %v4461
        %v4513 = vunpack.c.l.s4 1934713408
        %v4514 = vunpack.c.0.s8 %v4513
        %v4515 = vlaneseq
        %v4516 = vshrl.u32 %v4515, 7
        %v4517 = vsub.s32 %v4514, %v4516
        %v4518 = vrot.slane %v4510, %v4517
        %v4520 = vunpack.c.l.s4 1934713408
        %v4521 = vunpack.c.0.s8 %v4520
        %v4522 = vlaneseq
        %v4523 = vshrl.u32 %v4522, 7
        %v4524 = vsub.s32 %v4521, %v4523
        %v4525 = vrot.slane %v4511, %v4524
        %v4526 = vcombine.low %v4470, %v4502
        %v4527 = vcombine.high %v4470, %v4502
        %v4528 = vcombine.low %v4477, %v4509
        %v4529 = vcombine.high %v4477, %v4509
        %v4530 = vcombine.low %v4486, %v4518
        %v4531 = vcombine.high %v4486, %v4518
        %v4532 = vcombine.low %v4493, %v4525
        %v4533 = vcombine.high %v4493, %v4525
        %v4534 = vcombine.low %v4304, %v4363
        %v4535 = vcombine.high %v4304, %v4363
        %v4537 = vunpack.c.l.s4 1983009808
        %v4538 = vunpack.c.0.s8 %v4537
        %v4539 = vlaneseq
        %v4540 = vshrl.u32 %v4539, 7
        %v4541 = vsub.s32 %v4538, %v4540
        %v4542 = vrot.slane %v4534, %v4541
        %v4544 = vunpack.c.l.s4 1983009808
        %v4545 = vunpack.c.0.s8 %v4544
        %v4546 = vlaneseq
        %v4547 = vshrl.u32 %v4546, 7
        %v4548 = vsub.s32 %v4545, %v4547
        %v4549 = vrot.slane %v4535, %v4548
        %v4550 = vcombine.low %v4357, %v4369
        %v4551 = vcombine.high %v4357, %v4369
        %v4553 = vunpack.c.l.s4 1983009808
        %v4554 = vunpack.c.0.s8 %v4553
        %v4555 = vlaneseq
        %v4556 = vshrl.u32 %v4555, 7
        %v4557 = vsub.s32 %v4554, %v4556
        %v4558 = vrot.slane %v4550, %v4557
        %v4560 = vunpack.c.l.s4 1983009808
        %v4561 = vunpack.c.0.s8 %v4560
        %v4562 = vlaneseq
        %v4563 = vshrl.u32 %v4562, 7
        %v4564 = vsub.s32 %v4561, %v4563
        %v4565 = vrot.slane %v4551, %v4564
        %v4566 = vcombine.low %v4375, %v4387
        %v4567 = vcombine.high %v4375, %v4387
        %v4569 = vunpack.c.l.s4 1983009808
        %v4570 = vunpack.c.0.s8 %v4569
        %v4571 = vlaneseq
        %v4572 = vshrl.u32 %v4571, 7
        %v4573 = vsub.s32 %v4570, %v4572
        %v4574 = vrot.slane %v4566, %v4573
        %v4576 = vunpack.c.l.s4 1983009808
        %v4577 = vunpack.c.0.s8 %v4576
        %v4578 = vlaneseq
        %v4579 = vshrl.u32 %v4578, 7
        %v4580 = vsub.s32 %v4577, %v4579
        %v4581 = vrot.slane %v4567, %v4580
        %v4582 = vcombine.low %v4381, %v4393
        %v4583 = vcombine.high %v4381, %v4393
        %v4585 = vunpack.c.l.s4 1983009808
        %v4586 = vunpack.c.0.s8 %v4585
        %v4587 = vlaneseq
        %v4588 = vshrl.u32 %v4587, 7
        %v4589 = vsub.s32 %v4586, %v4588
        %v4590 = vrot.slane %v4582, %v4589
        %v4592 = vunpack.c.l.s4 1983009808
        %v4593 = vunpack.c.0.s8 %v4592
        %v4594 = vlaneseq
        %v4595 = vshrl.u32 %v4594, 7
        %v4596 = vsub.s32 %v4593, %v4595
        %v4597 = vrot.slane %v4583, %v4596
        %v4598 = vcombine.low %v4542, %v4558
        %v4599 = vcombine.high %v4542, %v4558
        %v4601 = vunpack.c.l.s4 1934713408
        %v4602 = vunpack.c.0.s8 %v4601
        %v4603 = vlaneseq
        %v4604 = vshrl.u32 %v4603, 7
        %v4605 = vsub.s32 %v4602, %v4604
        %v4606 = vrot.slane %v4598, %v4605
        %v4608 = vunpack.c.l.s4 1934713408
        %v4609 = vunpack.c.0.s8 %v4608
        %v4610 = vlaneseq
        %v4611 = vshrl.u32 %v4610, 7
        %v4612 = vsub.s32 %v4609, %v4611
        %v4613 = vrot.slane %v4599, %v4612
        %v4614 = vcombine.low %v4549, %v4565
        %v4615 = vcombine.high %v4549, %v4565
        %v4617 = vunpack.c.l.s4 1934713408
        %v4618 = vunpack.c.0.s8 %v4617
        %v4619 = vlaneseq
        %v4620 = vshrl.u32 %v4619, 7
        %v4621 = vsub.s32 %v4618, %v4620
        %v4622 = vrot.slane %v4614, %v4621
        %v4624 = vunpack.c.l.s4 1934713408
        %v4625 = vunpack.c.0.s8 %v4624
        %v4626 = vlaneseq
        %v4627 = vshrl.u32 %v4626, 7
        %v4628 = vsub.s32 %v4625, %v4627
        %v4629 = vrot.slane %v4615, %v4628
        %v4630 = vcombine.low %v4574, %v4590
        %v4631 = vcombine.high %v4574, %v4590
        %v4633 = vunpack.c.l.s4 1934713408
        %v4634 = vunpack.c.0.s8 %v4633
        %v4635 = vlaneseq
        %v4636 = vshrl.u32 %v4635, 7
        %v4637 = vsub.s32 %v4634, %v4636
        %v4638 = vrot.slane %v4630, %v4637
        %v4640 = vunpack.c.l.s4 1934713408
        %v4641 = vunpack.c.0.s8 %v4640
        %v4642 = vlaneseq
        %v4643 = vshrl.u32 %v4642, 7
        %v4644 = vsub.s32 %v4641, %v4643
        %v4645 = vrot.slane %v4631, %v4644
        %v4646 = vcombine.low %v4581, %v4597
        %v4647 = vcombine.high %v4581, %v4597
        %v4649 = vunpack.c.l.s4 1934713408
        %v4650 = vunpack.c.0.s8 %v4649
        %v4651 = vlaneseq
        %v4652 = vshrl.u32 %v4651, 7
        %v4653 = vsub.s32 %v4650, %v4652
        %v4654 = vrot.slane %v4646, %v4653
        %v4656 = vunpack.c.l.s4 1934713408
        %v4657 = vunpack.c.0.s8 %v4656
        %v4658 = vlaneseq
        %v4659 = vshrl.u32 %v4658, 7
        %v4660 = vsub.s32 %v4657, %v4659
        %v4661 = vrot.slane %v4647, %v4660
        %v4662 = vcombine.low %v4606, %v4638
        %v4663 = vcombine.high %v4606, %v4638
        %v4664 = vcombine.low %v4613, %v4645
        %v4665 = vcombine.high %v4613, %v4645
        %v4666 = vcombine.low %v4622, %v4654
        %v4667 = vcombine.high %v4622, %v4654
        %v4668 = vcombine.low %v4629, %v4661
        %v4669 = vcombine.high %v4629, %v4661
        %v4670 = vcombine.low %v4306, %v4321
        %v4671 = vcombine.high %v4306, %v4321
        %v4673 = vunpack.c.l.s4 1983009808
        %v4674 = vunpack.c.0.s8 %v4673
        %v4675 = vlaneseq
        %v4676 = vshrl.u32 %v4675, 7
        %v4677 = vsub.s32 %v4674, %v4676
        %v4678 = vrot.slane %v4670, %v4677
        %v4680 = vunpack.c.l.s4 1983009808
        %v4681 = vunpack.c.0.s8 %v4680
        %v4682 = vlaneseq
        %v4683 = vshrl.u32 %v4682, 7
        %v4684 = vsub.s32 %v4681, %v4683
        %v4685 = vrot.slane %v4671, %v4684
        %v4686 = vcombine.low %v4315, %v4327
        %v4687 = vcombine.high %v4315, %v4327
        %v4689 = vunpack.c.l.s4 1983009808
        %v4690 = vunpack.c.0.s8 %v4689
        %v4691 = vlaneseq
        %v4692 = vshrl.u32 %v4691, 7
        %v4693 = vsub.s32 %v4690, %v4692
        %v4694 = vrot.slane %v4686, %v4693
        %v4696 = vunpack.c.l.s4 1983009808
        %v4697 = vunpack.c.0.s8 %v4696
        %v4698 = vlaneseq
        %v4699 = vshrl.u32 %v4698, 7
        %v4700 = vsub.s32 %v4697, %v4699
        %v4701 = vrot.slane %v4687, %v4700
        %v4702 = vcombine.low %v4333, %v4345
        %v4703 = vcombine.high %v4333, %v4345
        %v4705 = vunpack.c.l.s4 1983009808
        %v4706 = vunpack.c.0.s8 %v4705
        %v4707 = vlaneseq
        %v4708 = vshrl.u32 %v4707, 7
        %v4709 = vsub.s32 %v4706, %v4708
        %v4710 = vrot.slane %v4702, %v4709
        %v4712 = vunpack.c.l.s4 1983009808
        %v4713 = vunpack.c.0.s8 %v4712
        %v4714 = vlaneseq
        %v4715 = vshrl.u32 %v4714, 7
        %v4716 = vsub.s32 %v4713, %v4715
        %v4717 = vrot.slane %v4703, %v4716
        %v4718 = vcombine.low %v4339, %v4351
        %v4719 = vcombine.high %v4339, %v4351
        %v4721 = vunpack.c.l.s4 1983009808
        %v4722 = vunpack.c.0.s8 %v4721
        %v4723 = vlaneseq
        %v4724 = vshrl.u32 %v4723, 7
        %v4725 = vsub.s32 %v4722, %v4724
        %v4726 = vrot.slane %v4718, %v4725
        %v4728 = vunpack.c.l.s4 1983009808
        %v4729 = vunpack.c.0.s8 %v4728
        %v4730 = vlaneseq
        %v4731 = vshrl.u32 %v4730, 7
        %v4732 = vsub.s32 %v4729, %v4731
        %v4733 = vrot.slane %v4719, %v4732
        %v4734 = vcombine.low %v4678, %v4694
        %v4735 = vcombine.high %v4678, %v4694
        %v4737 = vunpack.c.l.s4 1934713408
        %v4738 = vunpack.c.0.s8 %v4737
        %v4739 = vlaneseq
        %v4740 = vshrl.u32 %v4739, 7
        %v4741 = vsub.s32 %v4738, %v4740
        %v4742 = vrot.slane %v4734, %v4741
        %v4744 = vunpack.c.l.s4 1934713408
        %v4745 = vunpack.c.0.s8 %v4744
        %v4746 = vlaneseq
        %v4747 = vshrl.u32 %v4746, 7
        %v4748 = vsub.s32 %v4745, %v4747
        %v4749 = vrot.slane %v4735, %v4748
        %v4750 = vcombine.low %v4685, %v4701
        %v4751 = vcombine.high %v4685, %v4701
        %v4753 = vunpack.c.l.s4 1934713408
        %v4754 = vunpack.c.0.s8 %v4753
        %v4755 = vlaneseq
        %v4756 = vshrl.u32 %v4755, 7
        %v4757 = vsub.s32 %v4754, %v4756
        %v4758 = vrot.slane %v4750, %v4757
        %v4760 = vunpack.c.l.s4 1934713408
        %v4761 = vunpack.c.0.s8 %v4760
        %v4762 = vlaneseq
        %v4763 = vshrl.u32 %v4762, 7
        %v4764 = vsub.s32 %v4761, %v4763
        %v4765 = vrot.slane %v4751, %v4764
        %v4766 = vcombine.low %v4710, %v4726
        %v4767 = vcombine.high %v4710, %v4726
        %v4769 = vunpack.c.l.s4 1934713408
        %v4770 = vunpack.c.0.s8 %v4769
        %v4771 = vlaneseq
        %v4772 = vshrl.u32 %v4771, 7
        %v4773 = vsub.s32 %v4770, %v4772
        %v4774 = vrot.slane %v4766, %v4773
        %v4776 = vunpack.c.l.s4 1934713408
        %v4777 = vunpack.c.0.s8 %v4776
        %v4778 = vlaneseq
        %v4779 = vshrl.u32 %v4778, 7
        %v4780 = vsub.s32 %v4777, %v4779
        %v4781 = vrot.slane %v4767, %v4780
        %v4782 = vcombine.low %v4717, %v4733
        %v4783 = vcombine.high %v4717, %v4733
        %v4785 = vunpack.c.l.s4 1934713408
        %v4786 = vunpack.c.0.s8 %v4785
        %v4787 = vlaneseq
        %v4788 = vshrl.u32 %v4787, 7
        %v4789 = vsub.s32 %v4786, %v4788
        %v4790 = vrot.slane %v4782, %v4789
        %v4792 = vunpack.c.l.s4 1934713408
        %v4793 = vunpack.c.0.s8 %v4792
        %v4794 = vlaneseq
        %v4795 = vshrl.u32 %v4794, 7
        %v4796 = vsub.s32 %v4793, %v4795
        %v4797 = vrot.slane %v4783, %v4796
        %v4798 = vcombine.low %v4742, %v4774
        %v4799 = vcombine.high %v4742, %v4774
        %v4800 = vcombine.low %v4749, %v4781
        %v4801 = vcombine.high %v4749, %v4781
        %v4802 = vcombine.low %v4758, %v4790
        %v4803 = vcombine.high %v4758, %v4790
        %v4804 = vcombine.low %v4765, %v4797
        %v4805 = vcombine.high %v4765, %v4797
        %v4806 = vcombine.low %v4308, %v4365
        %v4807 = vcombine.high %v4308, %v4365
        %v4809 = vunpack.c.l.s4 1983009808
        %v4810 = vunpack.c.0.s8 %v4809
        %v4811 = vlaneseq
        %v4812 = vshrl.u32 %v4811, 7
        %v4813 = vsub.s32 %v4810, %v4812
        %v4814 = vrot.slane %v4806, %v4813
        %v4816 = vunpack.c.l.s4 1983009808
        %v4817 = vunpack.c.0.s8 %v4816
        %v4818 = vlaneseq
        %v4819 = vshrl.u32 %v4818, 7
        %v4820 = vsub.s32 %v4817, %v4819
        %v4821 = vrot.slane %v4807, %v4820
        %v4822 = vcombine.low %v4359, %v4371
        %v4823 = vcombine.high %v4359, %v4371
        %v4825 = vunpack.c.l.s4 1983009808
        %v4826 = vunpack.c.0.s8 %v4825
        %v4827 = vlaneseq
        %v4828 = vshrl.u32 %v4827, 7
        %v4829 = vsub.s32 %v4826, %v4828
        %v4830 = vrot.slane %v4822, %v4829
        %v4832 = vunpack.c.l.s4 1983009808
        %v4833 = vunpack.c.0.s8 %v4832
        %v4834 = vlaneseq
        %v4835 = vshrl.u32 %v4834, 7
        %v4836 = vsub.s32 %v4833, %v4835
        %v4837 = vrot.slane %v4823, %v4836
        %v4838 = vcombine.low %v4377, %v4389
        %v4839 = vcombine.high %v4377, %v4389
        %v4841 = vunpack.c.l.s4 1983009808
        %v4842 = vunpack.c.0.s8 %v4841
        %v4843 = vlaneseq
        %v4844 = vshrl.u32 %v4843, 7
        %v4845 = vsub.s32 %v4842, %v4844
        %v4846 = vrot.slane %v4838, %v4845
        %v4848 = vunpack.c.l.s4 1983009808
        %v4849 = vunpack.c.0.s8 %v4848
        %v4850 = vlaneseq
        %v4851 = vshrl.u32 %v4850, 7
        %v4852 = vsub.s32 %v4849, %v4851
        %v4853 = vrot.slane %v4839, %v4852
        %v4854 = vcombine.low %v4383, %v4395
        %v4855 = vcombine.high %v4383, %v4395
        %v4857 = vunpack.c.l.s4 1983009808
        %v4858 = vunpack.c.0.s8 %v4857
        %v4859 = vlaneseq
        %v4860 = vshrl.u32 %v4859, 7
        %v4861 = vsub.s32 %v4858, %v4860
        %v4862 = vrot.slane %v4854, %v4861
        %v4864 = vunpack.c.l.s4 1983009808
        %v4865 = vunpack.c.0.s8 %v4864
        %v4866 = vlaneseq
        %v4867 = vshrl.u32 %v4866, 7
        %v4868 = vsub.s32 %v4865, %v4867
        %v4869 = vrot.slane %v4855, %v4868
        %v4870 = vcombine.low %v4814, %v4830
        %v4871 = vcombine.high %v4814, %v4830
        %v4873 = vunpack.c.l.s4 1934713408
        %v4874 = vunpack.c.0.s8 %v4873
        %v4875 = vlaneseq
        %v4876 = vshrl.u32 %v4875, 7
        %v4877 = vsub.s32 %v4874, %v4876
        %v4878 = vrot.slane %v4870, %v4877
        %v4880 = vunpack.c.l.s4 1934713408
        %v4881 = vunpack.c.0.s8 %v4880
        %v4882 = vlaneseq
        %v4883 = vshrl.u32 %v4882, 7
        %v4884 = vsub.s32 %v4881, %v4883
        %v4885 = vrot.slane %v4871, %v4884
        %v4886 = vcombine.low %v4821, %v4837
        %v4887 = vcombine.high %v4821, %v4837
        %v4889 = vunpack.c.l.s4 1934713408
        %v4890 = vunpack.c.0.s8 %v4889
        %v4891 = vlaneseq
        %v4892 = vshrl.u32 %v4891, 7
        %v4893 = vsub.s32 %v4890, %v4892
        %v4894 = vrot.slane %v4886, %v4893
        %v4896 = vunpack.c.l.s4 1934713408
        %v4897 = vunpack.c.0.s8 %v4896
        %v4898 = vlaneseq
        %v4899 = vshrl.u32 %v4898, 7
        %v4900 = vsub.s32 %v4897, %v4899
        %v4901 = vrot.slane %v4887, %v4900
        %v4902 = vcombine.low %v4846, %v4862
        %v4903 = vcombine.high %v4846, %v4862
        %v4905 = vunpack.c.l.s4 1934713408
        %v4906 = vunpack.c.0.s8 %v4905
        %v4907 = vlaneseq
        %v4908 = vshrl.u32 %v4907, 7
        %v4909 = vsub.s32 %v4906, %v4908
        %v4910 = vrot.slane %v4902, %v4909
        %v4912 = vunpack.c.l.s4 1934713408
        %v4913 = vunpack.c.0.s8 %v4912
        %v4914 = vlaneseq
        %v4915 = vshrl.u32 %v4914, 7
        %v4916 = vsub.s32 %v4913, %v4915
        %v4917 = vrot.slane %v4903, %v4916
        %v4918 = vcombine.low %v4853, %v4869
        %v4919 = vcombine.high %v4853, %v4869
        %v4921 = vunpack.c.l.s4 1934713408
        %v4922 = vunpack.c.0.s8 %v4921
        %v4923 = vlaneseq
        %v4924 = vshrl.u32 %v4923, 7
        %v4925 = vsub.s32 %v4922, %v4924
        %v4926 = vrot.slane %v4918, %v4925
        %v4928 = vunpack.c.l.s4 1934713408
        %v4929 = vunpack.c.0.s8 %v4928
        %v4930 = vlaneseq
        %v4931 = vshrl.u32 %v4930, 7
        %v4932 = vsub.s32 %v4929, %v4931
        %v4933 = vrot.slane %v4919, %v4932
        %v4934 = vcombine.low %v4878, %v4910
        %v4935 = vcombine.high %v4878, %v4910
        %v4936 = vcombine.low %v4885, %v4917
        %v4937 = vcombine.high %v4885, %v4917
        %v4938 = vcombine.low %v4894, %v4926
        %v4939 = vcombine.high %v4894, %v4926
        %v4940 = vcombine.low %v4901, %v4933
        %v4941 = vcombine.high %v4901, %v4933
        %v4942 = vmax.f32 %v4526, 0.0
        %v4943 = vmax.f32 %v4662, 0.0
        %v4944 = vmax.f32 %v4527, 0.0
        %v4945 = vmax.f32 %v4663, 0.0
        %v4946 = vmax.f32 %v4528, 0.0
        %v4947 = vmax.f32 %v4664, 0.0
        %v4948 = vmax.f32 %v4529, 0.0
        %v4949 = vmax.f32 %v4665, 0.0
        %v4950 = vmax.f32 %v4530, 0.0
        %v4951 = vmax.f32 %v4666, 0.0
        %v4952 = vmax.f32 %v4531, 0.0
        %v4953 = vmax.f32 %v4667, 0.0
        %v4954 = vmax.f32 %v4532, 0.0
        %v4955 = vmax.f32 %v4668, 0.0
        %v4956 = vmax.f32 %v4533, 0.0
        %v4957 = vmax.f32 %v4669, 0.0
        %v4958 = vmax.f32 %v4798, 0.0
        %v4959 = vmax.f32 %v4934, 0.0
        %v4960 = vmax.f32 %v4799, 0.0
        %v4961 = vmax.f32 %v4935, 0.0
        %v4962 = vmax.f32 %v4800, 0.0
        %v4963 = vmax.f32 %v4936, 0.0
        %v4964 = vmax.f32 %v4801, 0.0
        %v4965 = vmax.f32 %v4937, 0.0
        %v4966 = vmax.f32 %v4802, 0.0
        %v4967 = vmax.f32 %v4938, 0.0
        %v4968 = vmax.f32 %v4803, 0.0
        %v4969 = vmax.f32 %v4939, 0.0
        %v4970 = vmax.f32 %v4804, 0.0
        %v4971 = vmax.f32 %v4940, 0.0
        %v4972 = vmax.f32 %v4805, 0.0
        %v4973 = vmax.f32 %v4941, 0.0
        %v4974 = vld [vmem:[%s435] sm:$0xf]
        %v4975 = vld [vmem:[%s435 + $0x4] sm:$0xf]
        %v4976 = vld [vmem:[%s435 + $0x8] sm:$0xf]
        %v4977 = vld [vmem:[%s435 + $0xc] sm:$0xf]
        %v4978 = vld [vmem:[%s435 + $0x10] sm:$0xf]
        %v4979 = vld [vmem:[%s435 + $0x14] sm:$0xf]
        %v4980 = vld [vmem:[%s435 + $0x18] sm:$0xf]
        %v4981 = vld [vmem:[%s435 + $0x1c] sm:$0xf]
        %v4983 = vshrl.u32 %v4974, 16
        %v4985 = vrot.slane %v4983, 7
        %v4986 = vshll.u32 %v4974, 16
        %v4988 = vor.u32 %v4985, %v4986
        %v4989 = vrot.slane %v4985, 4
        %v4991 = vshrl.u32 %v4975, 16
        %v4993 = vrot.slane %v4991, 7
        %v4994 = vshll.u32 %v4975, 16
        %v4996 = vor.u32 %v4993, %v4994
        %v4997 = vrot.slane %v4993, 4
        %v4999 = vshrl.u32 %v4976, 16
        %v5001 = vrot.slane %v4999, 7
        %v5002 = vshll.u32 %v4976, 16
        %v5004 = vor.u32 %v5001, %v5002
        %v5005 = vrot.slane %v5001, 4
        %v5007 = vshrl.u32 %v4977, 16
        %v5009 = vrot.slane %v5007, 7
        %v5010 = vshll.u32 %v4977, 16
        %v5012 = vor.u32 %v5009, %v5010
        %v5013 = vrot.slane %v5009, 4
        %v5015 = vshrl.u32 %v4978, 16
        %v5017 = vrot.slane %v5015, 7
        %v5018 = vshll.u32 %v4978, 16
        %v5020 = vor.u32 %v5017, %v5018
        %v5021 = vrot.slane %v5017, 4
        %v5023 = vshrl.u32 %v4979, 16
        %v5025 = vrot.slane %v5023, 7
        %v5026 = vshll.u32 %v4979, 16
        %v5028 = vor.u32 %v5025, %v5026
        %v5029 = vrot.slane %v5025, 4
        %v5031 = vshrl.u32 %v4980, 16
        %v5033 = vrot.slane %v5031, 7
        %v5034 = vshll.u32 %v4980, 16
        %v5036 = vor.u32 %v5033, %v5034
        %v5037 = vrot.slane %v5033, 4
        %v5039 = vshrl.u32 %v4981, 16
        %v5041 = vrot.slane %v5039, 7
        %v5042 = vshll.u32 %v4981, 16
        %v5044 = vor.u32 %v5041, %v5042
        %v5045 = vrot.slane %v5041, 4
        %5046 = vrot.lane.b32.xlu0 %v4988, 1
        %v5047 = vpop.permute.xlu0 %5046
        %5048 = vrot.lane.b32.xlu0 %v4989, 1
        %v5049 = vpop.permute.xlu0 %5048
        %5050 = vrot.lane.b32.xlu0 %v4996, 1
        %v5051 = vpop.permute.xlu0 %5050
        %5052 = vrot.lane.b32.xlu0 %v4997, 1
        %v5053 = vpop.permute.xlu0 %5052
        %5054 = vrot.lane.b32.xlu0 %v5004, 1
        %v5055 = vpop.permute.xlu0 %5054
        %5056 = vrot.lane.b32.xlu0 %v5005, 1
        %v5057 = vpop.permute.xlu0 %5056
        %5058 = vrot.lane.b32.xlu0 %v5012, 1
        %v5059 = vpop.permute.xlu0 %5058
        %5060 = vrot.lane.b32.xlu0 %v5013, 1
        %v5061 = vpop.permute.xlu0 %5060
        %5062 = vrot.lane.b32.xlu0 %v5020, 1
        %v5063 = vpop.permute.xlu0 %5062
        %5064 = vrot.lane.b32.xlu0 %v5021, 1
        %v5065 = vpop.permute.xlu0 %5064
        %5066 = vrot.lane.b32.xlu0 %v5028, 1
        %v5067 = vpop.permute.xlu0 %5066
        %5068 = vrot.lane.b32.xlu0 %v5029, 1
        %v5069 = vpop.permute.xlu0 %5068
        %5070 = vrot.lane.b32.xlu0 %v5036, 1
        %v5071 = vpop.permute.xlu0 %5070
        %5072 = vrot.lane.b32.xlu0 %v5037, 1
        %v5073 = vpop.permute.xlu0 %5072
        %5074 = vrot.lane.b32.xlu0 %v5044, 1
        %v5075 = vpop.permute.xlu0 %5074
        %5076 = vrot.lane.b32.xlu0 %v5045, 1
        %v5077 = vpop.permute.xlu0 %5076
        %vm5094 = vcmask 68616
        %vm5095 = vmand %vm5094, %vm720
        %v5096 = vld [vmem:[#allocation4] sm:$0xf]
        %v5097 = vsel %vm5095, %v5047, %v5096
        %5098 = vst [vmem:[#allocation4] sm:$0xf] %v5097
        %vm5099 = vcmask 65544
        %vm5100 = vmand %vm5099, %vm508
        %v5101 = vld [vmem:[#allocation4 + $0x4] sm:$0x1]
        %v5102 = vsel %vm5100, %v5049, %v5101
        %5103 = vst [vmem:[#allocation4 + $0x4] sm:$0x1] %v5102
        %v5104 = vld [vmem:[#allocation4 + $0x8] sm:$0xf]
        %v5105 = vsel %vm5095, %v5051, %v5104
        %5106 = vst [vmem:[#allocation4 + $0x8] sm:$0xf] %v5105
        %v5107 = vld [vmem:[#allocation4 + $0xc] sm:$0x1]
        %v5108 = vsel %vm5100, %v5053, %v5107
        %5109 = vst [vmem:[#allocation4 + $0xc] sm:$0x1] %v5108
        %v5110 = vld [vmem:[#allocation4 + $0x10] sm:$0xf]
        %v5111 = vsel %vm5095, %v5055, %v5110
        %5112 = vst [vmem:[#allocation4 + $0x10] sm:$0xf] %v5111
        %v5113 = vld [vmem:[#allocation4 + $0x14] sm:$0x1]
        %v5114 = vsel %vm5100, %v5057, %v5113
        %5115 = vst [vmem:[#allocation4 + $0x14] sm:$0x1] %v5114
        %v5116 = vld [vmem:[#allocation4 + $0x18] sm:$0xf]
        %v5117 = vsel %vm5095, %v5059, %v5116
        %5118 = vst [vmem:[#allocation4 + $0x18] sm:$0xf] %v5117
        %v5119 = vld [vmem:[#allocation4 + $0x1c] sm:$0x1]
        %v5120 = vsel %vm5100, %v5061, %v5119
        %5121 = vst [vmem:[#allocation4 + $0x1c] sm:$0x1] %v5120
        %v5122 = vld [vmem:[#allocation4 + $0x20] sm:$0xf]
        %v5123 = vsel %vm5095, %v5063, %v5122
        %5124 = vst [vmem:[#allocation4 + $0x20] sm:$0xf] %v5123
        %v5125 = vld [vmem:[#allocation4 + $0x24] sm:$0x1]
        %v5126 = vsel %vm5100, %v5065, %v5125
        %5127 = vst [vmem:[#allocation4 + $0x24] sm:$0x1] %v5126
        %v5128 = vld [vmem:[#allocation4 + $0x28] sm:$0xf]
        %v5129 = vsel %vm5095, %v5067, %v5128
        %5130 = vst [vmem:[#allocation4 + $0x28] sm:$0xf] %v5129
        %v5131 = vld [vmem:[#allocation4 + $0x2c] sm:$0x1]
        %v5132 = vsel %vm5100, %v5069, %v5131
        %5133 = vst [vmem:[#allocation4 + $0x2c] sm:$0x1] %v5132
        %v5134 = vld [vmem:[#allocation4 + $0x30] sm:$0xf]
        %v5135 = vsel %vm5095, %v5071, %v5134
        %5136 = vst [vmem:[#allocation4 + $0x30] sm:$0xf] %v5135
        %v5137 = vld [vmem:[#allocation4 + $0x34] sm:$0x1]
        %v5138 = vsel %vm5100, %v5073, %v5137
        %5139 = vst [vmem:[#allocation4 + $0x34] sm:$0x1] %v5138
        %v5140 = vld [vmem:[#allocation4 + $0x38] sm:$0xf]
        %v5141 = vsel %vm5095, %v5075, %v5140
        %5142 = vst [vmem:[#allocation4 + $0x38] sm:$0xf] %v5141
        %v5143 = vld [vmem:[#allocation4 + $0x3c] sm:$0x1]
        %v5144 = vsel %vm5100, %v5077, %v5143
        %5145 = vst [vmem:[#allocation4 + $0x3c] sm:$0x1] %v5144
        %v5146 = vld [vmem:[#allocation4] sm:$0xf]
        %v5147 = vld [vmem:[#allocation4 + $0x8] sm:$0xf]
        %v5148 = vld [vmem:[#allocation4 + $0x10] sm:$0xf]
        %v5149 = vld [vmem:[#allocation4 + $0x18] sm:$0xf]
        %v5150 = vld [vmem:[#allocation4 + $0x20] sm:$0xf]
        %v5151 = vld [vmem:[#allocation4 + $0x28] sm:$0xf]
        %v5152 = vld [vmem:[#allocation4 + $0x30] sm:$0xf]
        %v5153 = vld [vmem:[#allocation4 + $0x38] sm:$0xf]
        %vm5154 = vcmask 60416
        %5155 = vst.msk [vmem:[#allocation5] sm:$0xf] %vm5154, %v5146
        %5156 = vst.msk [vmem:[#allocation5 + $0x4] sm:$0xf] %vm5154, %v5147
        %5157 = vst.msk [vmem:[#allocation5 + $0x8] sm:$0xf] %vm5154, %v5148
        %5158 = vst.msk [vmem:[#allocation5 + $0xc] sm:$0xf] %vm5154, %v5149
        %5159 = vst.msk [vmem:[#allocation5 + $0x10] sm:$0xf] %vm5154, %v5150
        %5160 = vst.msk [vmem:[#allocation5 + $0x14] sm:$0xf] %vm5154, %v5151
        %5161 = vst.msk [vmem:[#allocation5 + $0x18] sm:$0xf] %vm5154, %v5152
        %5162 = vst.msk [vmem:[#allocation5 + $0x1c] sm:$0xf] %vm5154, %v5153
        %v5163 = vld [vmem:[#allocation4] sm:$0xf]
        %v5164 = vld [vmem:[#allocation4 + $0x8] sm:$0xf]
        %v5165 = vld [vmem:[#allocation4 + $0x10] sm:$0xf]
        %v5166 = vld [vmem:[#allocation4 + $0x18] sm:$0xf]
        %v5167 = vld [vmem:[#allocation4 + $0x20] sm:$0xf]
        %v5168 = vld [vmem:[#allocation4 + $0x28] sm:$0xf]
        %v5169 = vld [vmem:[#allocation4 + $0x30] sm:$0xf]
        %v5170 = vld [vmem:[#allocation4 + $0x38] sm:$0xf]
        %5179 = vrot.lane.b32.xlu0 %v5163, 127
        %v5180 = vpop.permute.xlu0 %5179
        %5181 = vrot.lane.b32.xlu0 %v5164, 127
        %v5182 = vpop.permute.xlu0 %5181
        %5183 = vrot.lane.b32.xlu0 %v5165, 127
        %v5184 = vpop.permute.xlu0 %5183
        %5185 = vrot.lane.b32.xlu0 %v5166, 127
        %v5186 = vpop.permute.xlu0 %5185
        %5187 = vrot.lane.b32.xlu0 %v5167, 127
        %v5188 = vpop.permute.xlu0 %5187
        %5189 = vrot.lane.b32.xlu0 %v5168, 127
        %v5190 = vpop.permute.xlu0 %5189
        %5191 = vrot.lane.b32.xlu0 %v5169, 127
        %v5192 = vpop.permute.xlu0 %5191
        %5193 = vrot.lane.b32.xlu0 %v5170, 127
        %v5194 = vpop.permute.xlu0 %5193
        %s5203 = scalar_lea.vmem [#allocation5], 32
        %5204 = vst.msk [vmem:[%s5203] sm:$0xf] %vm5154, %v5180
        %5205 = vst.msk [vmem:[%s5203 + $0x4] sm:$0xf] %vm5154, %v5182
        %5206 = vst.msk [vmem:[%s5203 + $0x8] sm:$0xf] %vm5154, %v5184
        %5207 = vst.msk [vmem:[%s5203 + $0xc] sm:$0xf] %vm5154, %v5186
        %5208 = vst.msk [vmem:[%s5203 + $0x10] sm:$0xf] %vm5154, %v5188
        %5209 = vst.msk [vmem:[%s5203 + $0x14] sm:$0xf] %vm5154, %v5190
        %5210 = vst.msk [vmem:[%s5203 + $0x18] sm:$0xf] %vm5154, %v5192
        %5211 = vst.msk [vmem:[%s5203 + $0x1c] sm:$0xf] %vm5154, %v5194
        %v5212 = vld [vmem:[#allocation4] sm:$0xf]
        %v5213 = vld [vmem:[#allocation4 + $0x8] sm:$0xf]
        %v5214 = vld [vmem:[#allocation4 + $0x10] sm:$0xf]
        %v5215 = vld [vmem:[#allocation4 + $0x18] sm:$0xf]
        %v5216 = vld [vmem:[#allocation4 + $0x20] sm:$0xf]
        %v5217 = vld [vmem:[#allocation4 + $0x28] sm:$0xf]
        %v5218 = vld [vmem:[#allocation4 + $0x30] sm:$0xf]
        %v5219 = vld [vmem:[#allocation4 + $0x38] sm:$0xf]
        %5228 = vrot.lane.b32.xlu0 %v5212, 126
        %v5229 = vpop.permute.xlu0 %5228
        %5230 = vrot.lane.b32.xlu0 %v5213, 126
        %v5231 = vpop.permute.xlu0 %5230
        %5232 = vrot.lane.b32.xlu0 %v5214, 126
        %v5233 = vpop.permute.xlu0 %5232
        %5234 = vrot.lane.b32.xlu0 %v5215, 126
        %v5235 = vpop.permute.xlu0 %5234
        %5236 = vrot.lane.b32.xlu0 %v5216, 126
        %v5237 = vpop.permute.xlu0 %5236
        %5238 = vrot.lane.b32.xlu0 %v5217, 126
        %v5239 = vpop.permute.xlu0 %5238
        %5240 = vrot.lane.b32.xlu0 %v5218, 126
        %v5241 = vpop.permute.xlu0 %5240
        %5242 = vrot.lane.b32.xlu0 %v5219, 126
        %v5243 = vpop.permute.xlu0 %5242
        %s5252 = scalar_lea.vmem [#allocation5], 64
        %5253 = vst.msk [vmem:[%s5252] sm:$0xf] %vm5154, %v5229
        %5254 = vst.msk [vmem:[%s5252 + $0x4] sm:$0xf] %vm5154, %v5231
        %5255 = vst.msk [vmem:[%s5252 + $0x8] sm:$0xf] %vm5154, %v5233
        %5256 = vst.msk [vmem:[%s5252 + $0xc] sm:$0xf] %vm5154, %v5235
        %5257 = vst.msk [vmem:[%s5252 + $0x10] sm:$0xf] %vm5154, %v5237
        %5258 = vst.msk [vmem:[%s5252 + $0x14] sm:$0xf] %vm5154, %v5239
        %5259 = vst.msk [vmem:[%s5252 + $0x18] sm:$0xf] %vm5154, %v5241
        %5260 = vst.msk [vmem:[%s5252 + $0x1c] sm:$0xf] %vm5154, %v5243
        %v5261 = vld [vmem:[#allocation4] sm:$0xf]
        %v5262 = vld [vmem:[#allocation4 + $0x4] sm:$0x1]
        %v5263 = vld [vmem:[#allocation4 + $0x8] sm:$0xf]
        %v5264 = vld [vmem:[#allocation4 + $0xc] sm:$0x1]
        %v5265 = vld [vmem:[#allocation4 + $0x10] sm:$0xf]
        %v5266 = vld [vmem:[#allocation4 + $0x14] sm:$0x1]
        %v5267 = vld [vmem:[#allocation4 + $0x18] sm:$0xf]
        %v5268 = vld [vmem:[#allocation4 + $0x1c] sm:$0x1]
        %v5269 = vld [vmem:[#allocation4 + $0x20] sm:$0xf]
        %v5270 = vld [vmem:[#allocation4 + $0x24] sm:$0x1]
        %v5271 = vld [vmem:[#allocation4 + $0x28] sm:$0xf]
        %v5272 = vld [vmem:[#allocation4 + $0x2c] sm:$0x1]
        %v5273 = vld [vmem:[#allocation4 + $0x30] sm:$0xf]
        %v5274 = vld [vmem:[#allocation4 + $0x34] sm:$0x1]
        %v5275 = vld [vmem:[#allocation4 + $0x38] sm:$0xf]
        %v5276 = vld [vmem:[#allocation4 + $0x3c] sm:$0x1]
        %vm5277 = vsmask.f32 3328
        %vm5278 = vsmask.f32 7440
        %vm5279 = vmor %vm5277, %vm5278
        %v5281 = vshrl.u32 %v5261, 16
        %v5283 = vrot.slane %v5281, 4
        %v5284 = vshll.u32 %v5261, 16
        %v5286 = vrot.slane %v5284, 5
        %v5287 = vor.u32 %v5283, %v5286
        %v5288 = vrot.slane %v5287, 4
        %v5290 = vshll.u32 %v5262, 16
        %v5292 = vrot.slane %v5290, 5
        %v5293 = vsel %vm5279, %v5288, %v5292
        %v5295 = vshrl.u32 %v5263, 16
        %v5297 = vrot.slane %v5295, 4
        %v5298 = vshll.u32 %v5263, 16
        %v5300 = vrot.slane %v5298, 5
        %v5301 = vor.u32 %v5297, %v5300
        %v5302 = vrot.slane %v5301, 4
        %v5304 = vshll.u32 %v5264, 16
        %v5306 = vrot.slane %v5304, 5
        %v5307 = vsel %vm5279, %v5302, %v5306
        %v5309 = vshrl.u32 %v5265, 16
        %v5311 = vrot.slane %v5309, 4
        %v5312 = vshll.u32 %v5265, 16
        %v5314 = vrot.slane %v5312, 5
        %v5315 = vor.u32 %v5311, %v5314
        %v5316 = vrot.slane %v5315, 4
        %v5318 = vshll.u32 %v5266, 16
        %v5320 = vrot.slane %v5318, 5
        %v5321 = vsel %vm5279, %v5316, %v5320
        %v5323 = vshrl.u32 %v5267, 16
        %v5325 = vrot.slane %v5323, 4
        %v5326 = vshll.u32 %v5267, 16
        %v5328 = vrot.slane %v5326, 5
        %v5329 = vor.u32 %v5325, %v5328
        %v5330 = vrot.slane %v5329, 4
        %v5332 = vshll.u32 %v5268, 16
        %v5334 = vrot.slane %v5332, 5
        %v5335 = vsel %vm5279, %v5330, %v5334
        %v5337 = vshrl.u32 %v5269, 16
        %v5339 = vrot.slane %v5337, 4
        %v5340 = vshll.u32 %v5269, 16
        %v5342 = vrot.slane %v5340, 5
        %v5343 = vor.u32 %v5339, %v5342
        %v5344 = vrot.slane %v5343, 4
        %v5346 = vshll.u32 %v5270, 16
        %v5348 = vrot.slane %v5346, 5
        %v5349 = vsel %vm5279, %v5344, %v5348
        %v5351 = vshrl.u32 %v5271, 16
        %v5353 = vrot.slane %v5351, 4
        %v5354 = vshll.u32 %v5271, 16
        %v5356 = vrot.slane %v5354, 5
        %v5357 = vor.u32 %v5353, %v5356
        %v5358 = vrot.slane %v5357, 4
        %v5360 = vshll.u32 %v5272, 16
        %v5362 = vrot.slane %v5360, 5
        %v5363 = vsel %vm5279, %v5358, %v5362
        %v5365 = vshrl.u32 %v5273, 16
        %v5367 = vrot.slane %v5365, 4
        %v5368 = vshll.u32 %v5273, 16
        %v5370 = vrot.slane %v5368, 5
        %v5371 = vor.u32 %v5367, %v5370
        %v5372 = vrot.slane %v5371, 4
        %v5374 = vshll.u32 %v5274, 16
        %v5376 = vrot.slane %v5374, 5
        %v5377 = vsel %vm5279, %v5372, %v5376
        %v5379 = vshrl.u32 %v5275, 16
        %v5381 = vrot.slane %v5379, 4
        %v5382 = vshll.u32 %v5275, 16
        %v5384 = vrot.slane %v5382, 5
        %v5385 = vor.u32 %v5381, %v5384
        %v5386 = vrot.slane %v5385, 4
        %v5388 = vshll.u32 %v5276, 16
        %v5390 = vrot.slane %v5388, 5
        %v5391 = vsel %vm5279, %v5386, %v5390
        %s5400 = scalar_lea.vmem [#allocation5], 96
        %5401 = vst.msk [vmem:[%s5400] sm:$0xf] %vm5154, %v5293
        %5402 = vst.msk [vmem:[%s5400 + $0x4] sm:$0xf] %vm5154, %v5307
        %5403 = vst.msk [vmem:[%s5400 + $0x8] sm:$0xf] %vm5154, %v5321
        %5404 = vst.msk [vmem:[%s5400 + $0xc] sm:$0xf] %vm5154, %v5335
        %5405 = vst.msk [vmem:[%s5400 + $0x10] sm:$0xf] %vm5154, %v5349
        %5406 = vst.msk [vmem:[%s5400 + $0x14] sm:$0xf] %vm5154, %v5363
        %5407 = vst.msk [vmem:[%s5400 + $0x18] sm:$0xf] %vm5154, %v5377
        %5408 = vst.msk [vmem:[%s5400 + $0x1c] sm:$0xf] %vm5154, %v5391
        %v5409 = vld [vmem:[#allocation4] sm:$0xf]
        %v5410 = vld [vmem:[#allocation4 + $0x4] sm:$0x1]
        %v5411 = vld [vmem:[#allocation4 + $0x8] sm:$0xf]
        %v5412 = vld [vmem:[#allocation4 + $0xc] sm:$0x1]
        %v5413 = vld [vmem:[#allocation4 + $0x10] sm:$0xf]
        %v5414 = vld [vmem:[#allocation4 + $0x14] sm:$0x1]
        %v5415 = vld [vmem:[#allocation4 + $0x18] sm:$0xf]
        %v5416 = vld [vmem:[#allocation4 + $0x1c] sm:$0x1]
        %v5417 = vld [vmem:[#allocation4 + $0x20] sm:$0xf]
        %v5418 = vld [vmem:[#allocation4 + $0x24] sm:$0x1]
        %v5419 = vld [vmem:[#allocation4 + $0x28] sm:$0xf]
        %v5420 = vld [vmem:[#allocation4 + $0x2c] sm:$0x1]
        %v5421 = vld [vmem:[#allocation4 + $0x30] sm:$0xf]
        %v5422 = vld [vmem:[#allocation4 + $0x34] sm:$0x1]
        %v5423 = vld [vmem:[#allocation4 + $0x38] sm:$0xf]
        %v5424 = vld [vmem:[#allocation4 + $0x3c] sm:$0x1]
        %v5426 = vshrl.u32 %v5409, 16
        %v5428 = vrot.slane %v5426, 4
        %v5429 = vshll.u32 %v5409, 16
        %v5431 = vrot.slane %v5429, 5
        %v5432 = vor.u32 %v5428, %v5431
        %v5433 = vrot.slane %v5432, 4
        %v5435 = vshll.u32 %v5410, 16
        %v5437 = vrot.slane %v5435, 5
        %v5438 = vsel %vm5279, %v5433, %v5437
        %v5440 = vshrl.u32 %v5411, 16
        %v5442 = vrot.slane %v5440, 4
        %v5443 = vshll.u32 %v5411, 16
        %v5445 = vrot.slane %v5443, 5
        %v5446 = vor.u32 %v5442, %v5445
        %v5447 = vrot.slane %v5446, 4
        %v5449 = vshll.u32 %v5412, 16
        %v5451 = vrot.slane %v5449, 5
        %v5452 = vsel %vm5279, %v5447, %v5451
        %v5454 = vshrl.u32 %v5413, 16
        %v5456 = vrot.slane %v5454, 4
        %v5457 = vshll.u32 %v5413, 16
        %v5459 = vrot.slane %v5457, 5
        %v5460 = vor.u32 %v5456, %v5459
        %v5461 = vrot.slane %v5460, 4
        %v5463 = vshll.u32 %v5414, 16
        %v5465 = vrot.slane %v5463, 5
        %v5466 = vsel %vm5279, %v5461, %v5465
        %v5468 = vshrl.u32 %v5415, 16
        %v5470 = vrot.slane %v5468, 4
        %v5471 = vshll.u32 %v5415, 16
        %v5473 = vrot.slane %v5471, 5
        %v5474 = vor.u32 %v5470, %v5473
        %v5475 = vrot.slane %v5474, 4
        %v5477 = vshll.u32 %v5416, 16
        %v5479 = vrot.slane %v5477, 5
        %v5480 = vsel %vm5279, %v5475, %v5479
        %v5482 = vshrl.u32 %v5417, 16
        %v5484 = vrot.slane %v5482, 4
        %v5485 = vshll.u32 %v5417, 16
        %v5487 = vrot.slane %v5485, 5
        %v5488 = vor.u32 %v5484, %v5487
        %v5489 = vrot.slane %v5488, 4
        %v5491 = vshll.u32 %v5418, 16
        %v5493 = vrot.slane %v5491, 5
        %v5494 = vsel %vm5279, %v5489, %v5493
        %v5496 = vshrl.u32 %v5419, 16
        %v5498 = vrot.slane %v5496, 4
        %v5499 = vshll.u32 %v5419, 16
        %v5501 = vrot.slane %v5499, 5
        %v5502 = vor.u32 %v5498, %v5501
        %v5503 = vrot.slane %v5502, 4
        %v5505 = vshll.u32 %v5420, 16
        %v5507 = vrot.slane %v5505, 5
        %v5508 = vsel %vm5279, %v5503, %v5507
        %v5510 = vshrl.u32 %v5421, 16
        %v5512 = vrot.slane %v5510, 4
        %v5513 = vshll.u32 %v5421, 16
        %v5515 = vrot.slane %v5513, 5
        %v5516 = vor.u32 %v5512, %v5515
        %v5517 = vrot.slane %v5516, 4
        %v5519 = vshll.u32 %v5422, 16
        %v5521 = vrot.slane %v5519, 5
        %v5522 = vsel %vm5279, %v5517, %v5521
        %v5524 = vshrl.u32 %v5423, 16
        %v5526 = vrot.slane %v5524, 4
        %v5527 = vshll.u32 %v5423, 16
        %v5529 = vrot.slane %v5527, 5
        %v5530 = vor.u32 %v5526, %v5529
        %v5531 = vrot.slane %v5530, 4
        %v5533 = vshll.u32 %v5424, 16
        %v5535 = vrot.slane %v5533, 5
        %v5536 = vsel %vm5279, %v5531, %v5535
        %5537 = vrot.lane.b32.xlu0 %v5438, 127
        %v5538 = vpop.permute.xlu0 %5537
        %5539 = vrot.lane.b32.xlu0 %v5452, 127
        %v5540 = vpop.permute.xlu0 %5539
        %5541 = vrot.lane.b32.xlu0 %v5466, 127
        %v5542 = vpop.permute.xlu0 %5541
        %5543 = vrot.lane.b32.xlu0 %v5480, 127
        %v5544 = vpop.permute.xlu0 %5543
        %5545 = vrot.lane.b32.xlu0 %v5494, 127
        %v5546 = vpop.permute.xlu0 %5545
        %5547 = vrot.lane.b32.xlu0 %v5508, 127
        %v5548 = vpop.permute.xlu0 %5547
        %5549 = vrot.lane.b32.xlu0 %v5522, 127
        %v5550 = vpop.permute.xlu0 %5549
        %5551 = vrot.lane.b32.xlu0 %v5536, 127
        %v5552 = vpop.permute.xlu0 %5551
        %s5561 = scalar_lea.vmem [#allocation5], 128
        %5562 = vst.msk [vmem:[%s5561] sm:$0xf] %vm5154, %v5538
        %5563 = vst.msk [vmem:[%s5561 + $0x4] sm:$0xf] %vm5154, %v5540
        %5564 = vst.msk [vmem:[%s5561 + $0x8] sm:$0xf] %vm5154, %v5542
        %5565 = vst.msk [vmem:[%s5561 + $0xc] sm:$0xf] %vm5154, %v5544
        %5566 = vst.msk [vmem:[%s5561 + $0x10] sm:$0xf] %vm5154, %v5546
        %5567 = vst.msk [vmem:[%s5561 + $0x14] sm:$0xf] %vm5154, %v5548
        %5568 = vst.msk [vmem:[%s5561 + $0x18] sm:$0xf] %vm5154, %v5550
        %5569 = vst.msk [vmem:[%s5561 + $0x1c] sm:$0xf] %vm5154, %v5552
        %v5570 = vld [vmem:[#allocation4] sm:$0xf]
        %v5571 = vld [vmem:[#allocation4 + $0x4] sm:$0x1]
        %v5572 = vld [vmem:[#allocation4 + $0x8] sm:$0xf]
        %v5573 = vld [vmem:[#allocation4 + $0xc] sm:$0x1]
        %v5574 = vld [vmem:[#allocation4 + $0x10] sm:$0xf]
        %v5575 = vld [vmem:[#allocation4 + $0x14] sm:$0x1]
        %v5576 = vld [vmem:[#allocation4 + $0x18] sm:$0xf]
        %v5577 = vld [vmem:[#allocation4 + $0x1c] sm:$0x1]
        %v5578 = vld [vmem:[#allocation4 + $0x20] sm:$0xf]
        %v5579 = vld [vmem:[#allocation4 + $0x24] sm:$0x1]
        %v5580 = vld [vmem:[#allocation4 + $0x28] sm:$0xf]
        %v5581 = vld [vmem:[#allocation4 + $0x2c] sm:$0x1]
        %v5582 = vld [vmem:[#allocation4 + $0x30] sm:$0xf]
        %v5583 = vld [vmem:[#allocation4 + $0x34] sm:$0x1]
        %v5584 = vld [vmem:[#allocation4 + $0x38] sm:$0xf]
        %v5585 = vld [vmem:[#allocation4 + $0x3c] sm:$0x1]
        %v5587 = vshrl.u32 %v5570, 16
        %v5589 = vrot.slane %v5587, 4
        %v5590 = vshll.u32 %v5570, 16
        %v5592 = vrot.slane %v5590, 5
        %v5593 = vor.u32 %v5589, %v5592
        %v5594 = vrot.slane %v5593, 4
        %v5596 = vshll.u32 %v5571, 16
        %v5598 = vrot.slane %v5596, 5
        %v5599 = vsel %vm5279, %v5594, %v5598
        %v5601 = vshrl.u32 %v5572, 16
        %v5603 = vrot.slane %v5601, 4
        %v5604 = vshll.u32 %v5572, 16
        %v5606 = vrot.slane %v5604, 5
        %v5607 = vor.u32 %v5603, %v5606
        %v5608 = vrot.slane %v5607, 4
        %v5610 = vshll.u32 %v5573, 16
        %v5612 = vrot.slane %v5610, 5
        %v5613 = vsel %vm5279, %v5608, %v5612
        %v5615 = vshrl.u32 %v5574, 16
        %v5617 = vrot.slane %v5615, 4
        %v5618 = vshll.u32 %v5574, 16
        %v5620 = vrot.slane %v5618, 5
        %v5621 = vor.u32 %v5617, %v5620
        %v5622 = vrot.slane %v5621, 4
        %v5624 = vshll.u32 %v5575, 16
        %v5626 = vrot.slane %v5624, 5
        %v5627 = vsel %vm5279, %v5622, %v5626
        %v5629 = vshrl.u32 %v5576, 16
        %v5631 = vrot.slane %v5629, 4
        %v5632 = vshll.u32 %v5576, 16
        %v5634 = vrot.slane %v5632, 5
        %v5635 = vor.u32 %v5631, %v5634
        %v5636 = vrot.slane %v5635, 4
        %v5638 = vshll.u32 %v5577, 16
        %v5640 = vrot.slane %v5638, 5
        %v5641 = vsel %vm5279, %v5636, %v5640
        %v5643 = vshrl.u32 %v5578, 16
        %v5645 = vrot.slane %v5643, 4
        %v5646 = vshll.u32 %v5578, 16
        %v5648 = vrot.slane %v5646, 5
        %v5649 = vor.u32 %v5645, %v5648
        %v5650 = vrot.slane %v5649, 4
        %v5652 = vshll.u32 %v5579, 16
        %v5654 = vrot.slane %v5652, 5
        %v5655 = vsel %vm5279, %v5650, %v5654
        %v5657 = vshrl.u32 %v5580, 16
        %v5659 = vrot.slane %v5657, 4
        %v5660 = vshll.u32 %v5580, 16
        %v5662 = vrot.slane %v5660, 5
        %v5663 = vor.u32 %v5659, %v5662
        %v5664 = vrot.slane %v5663, 4
        %v5666 = vshll.u32 %v5581, 16
        %v5668 = vrot.slane %v5666, 5
        %v5669 = vsel %vm5279, %v5664, %v5668
        %v5671 = vshrl.u32 %v5582, 16
        %v5673 = vrot.slane %v5671, 4
        %v5674 = vshll.u32 %v5582, 16
        %v5676 = vrot.slane %v5674, 5
        %v5677 = vor.u32 %v5673, %v5676
        %v5678 = vrot.slane %v5677, 4
        %v5680 = vshll.u32 %v5583, 16
        %v5682 = vrot.slane %v5680, 5
        %v5683 = vsel %vm5279, %v5678, %v5682
        %v5685 = vshrl.u32 %v5584, 16
        %v5687 = vrot.slane %v5685, 4
        %v5688 = vshll.u32 %v5584, 16
        %v5690 = vrot.slane %v5688, 5
        %v5691 = vor.u32 %v5687, %v5690
        %v5692 = vrot.slane %v5691, 4
        %v5694 = vshll.u32 %v5585, 16
        %v5696 = vrot.slane %v5694, 5
        %v5697 = vsel %vm5279, %v5692, %v5696
        %5698 = vrot.lane.b32.xlu0 %v5599, 126
        %v5699 = vpop.permute.xlu0 %5698
        %5700 = vrot.lane.b32.xlu0 %v5613, 126
        %v5701 = vpop.permute.xlu0 %5700
        %5702 = vrot.lane.b32.xlu0 %v5627, 126
        %v5703 = vpop.permute.xlu0 %5702
        %5704 = vrot.lane.b32.xlu0 %v5641, 126
        %v5705 = vpop.permute.xlu0 %5704
        %5706 = vrot.lane.b32.xlu0 %v5655, 126
        %v5707 = vpop.permute.xlu0 %5706
        %5708 = vrot.lane.b32.xlu0 %v5669, 126
        %v5709 = vpop.permute.xlu0 %5708
        %5710 = vrot.lane.b32.xlu0 %v5683, 126
        %v5711 = vpop.permute.xlu0 %5710
        %5712 = vrot.lane.b32.xlu0 %v5697, 126
        %v5713 = vpop.permute.xlu0 %5712
        %s5722 = scalar_lea.vmem [#allocation5], 160
        %5723 = vst.msk [vmem:[%s5722] sm:$0xf] %vm5154, %v5699
        %5724 = vst.msk [vmem:[%s5722 + $0x4] sm:$0xf] %vm5154, %v5701
        %5725 = vst.msk [vmem:[%s5722 + $0x8] sm:$0xf] %vm5154, %v5703
        %5726 = vst.msk [vmem:[%s5722 + $0xc] sm:$0xf] %vm5154, %v5705
        %5727 = vst.msk [vmem:[%s5722 + $0x10] sm:$0xf] %vm5154, %v5707
        %5728 = vst.msk [vmem:[%s5722 + $0x14] sm:$0xf] %vm5154, %v5709
        %5729 = vst.msk [vmem:[%s5722 + $0x18] sm:$0xf] %vm5154, %v5711
        %5730 = vst.msk [vmem:[%s5722 + $0x1c] sm:$0xf] %vm5154, %v5713
        %v5731 = vld [vmem:[#allocation4] sm:$0xe]
        %v5732 = vld [vmem:[#allocation4 + $0x4] sm:$0x1]
        %v5733 = vld [vmem:[#allocation4 + $0x8] sm:$0xe]
        %v5734 = vld [vmem:[#allocation4 + $0xc] sm:$0x1]
        %v5735 = vld [vmem:[#allocation4 + $0x10] sm:$0xe]
        %v5736 = vld [vmem:[#allocation4 + $0x14] sm:$0x1]
        %v5737 = vld [vmem:[#allocation4 + $0x18] sm:$0xe]
        %v5738 = vld [vmem:[#allocation4 + $0x1c] sm:$0x1]
        %v5739 = vld [vmem:[#allocation4 + $0x20] sm:$0xe]
        %v5740 = vld [vmem:[#allocation4 + $0x24] sm:$0x1]
        %v5741 = vld [vmem:[#allocation4 + $0x28] sm:$0xe]
        %v5742 = vld [vmem:[#allocation4 + $0x2c] sm:$0x1]
        %v5743 = vld [vmem:[#allocation4 + $0x30] sm:$0xe]
        %v5744 = vld [vmem:[#allocation4 + $0x34] sm:$0x1]
        %v5745 = vld [vmem:[#allocation4 + $0x38] sm:$0xe]
        %v5746 = vld [vmem:[#allocation4 + $0x3c] sm:$0x1]
        %vm5763 = vcmask 1042432
        %vm5764 = vcmask 1046532
        %vm5765 = vmor %vm5763, %vm5764
        %v5766 = vrot.slane %v5731, 5
        %v5767 = vrot.slane %v5766, 4
        %v5768 = vrot.slane %v5732, 5
        %v5769 = vsel %vm5765, %v5767, %v5768
        %v5770 = vrot.slane %v5733, 5
        %v5771 = vrot.slane %v5770, 4
        %v5772 = vrot.slane %v5734, 5
        %v5773 = vsel %vm5765, %v5771, %v5772
        %v5774 = vrot.slane %v5735, 5
        %v5775 = vrot.slane %v5774, 4
        %v5776 = vrot.slane %v5736, 5
        %v5777 = vsel %vm5765, %v5775, %v5776
        %v5778 = vrot.slane %v5737, 5
        %v5779 = vrot.slane %v5778, 4
        %v5780 = vrot.slane %v5738, 5
        %v5781 = vsel %vm5765, %v5779, %v5780
        %v5782 = vrot.slane %v5739, 5
        %v5783 = vrot.slane %v5782, 4
        %v5784 = vrot.slane %v5740, 5
        %v5785 = vsel %vm5765, %v5783, %v5784
        %v5786 = vrot.slane %v5741, 5
        %v5787 = vrot.slane %v5786, 4
        %v5788 = vrot.slane %v5742, 5
        %v5789 = vsel %vm5765, %v5787, %v5788
        %v5790 = vrot.slane %v5743, 5
        %v5791 = vrot.slane %v5790, 4
        %v5792 = vrot.slane %v5744, 5
        %v5793 = vsel %vm5765, %v5791, %v5792
        %v5794 = vrot.slane %v5745, 5
        %v5795 = vrot.slane %v5794, 4
        %v5796 = vrot.slane %v5746, 5
        %v5797 = vsel %vm5765, %v5795, %v5796
        %s5806 = scalar_lea.vmem [#allocation5], 192
        %5807 = vst.msk [vmem:[%s5806] sm:$0xf] %vm5154, %v5769
        %5808 = vst.msk [vmem:[%s5806 + $0x4] sm:$0xf] %vm5154, %v5773
        %5809 = vst.msk [vmem:[%s5806 + $0x8] sm:$0xf] %vm5154, %v5777
        %5810 = vst.msk [vmem:[%s5806 + $0xc] sm:$0xf] %vm5154, %v5781
        %5811 = vst.msk [vmem:[%s5806 + $0x10] sm:$0xf] %vm5154, %v5785
        %5812 = vst.msk [vmem:[%s5806 + $0x14] sm:$0xf] %vm5154, %v5789
        %5813 = vst.msk [vmem:[%s5806 + $0x18] sm:$0xf] %vm5154, %v5793
        %5814 = vst.msk [vmem:[%s5806 + $0x1c] sm:$0xf] %vm5154, %v5797
        %v5815 = vld [vmem:[#allocation4] sm:$0xe]
        %v5816 = vld [vmem:[#allocation4 + $0x4] sm:$0x1]
        %v5817 = vld [vmem:[#allocation4 + $0x8] sm:$0xe]
        %v5818 = vld [vmem:[#allocation4 + $0xc] sm:$0x1]
        %v5819 = vld [vmem:[#allocation4 + $0x10] sm:$0xe]
        %v5820 = vld [vmem:[#allocation4 + $0x14] sm:$0x1]
        %v5821 = vld [vmem:[#allocation4 + $0x18] sm:$0xe]
        %v5822 = vld [vmem:[#allocation4 + $0x1c] sm:$0x1]
        %v5823 = vld [vmem:[#allocation4 + $0x20] sm:$0xe]
        %v5824 = vld [vmem:[#allocation4 + $0x24] sm:$0x1]
        %v5825 = vld [vmem:[#allocation4 + $0x28] sm:$0xe]
        %v5826 = vld [vmem:[#allocation4 + $0x2c] sm:$0x1]
        %v5827 = vld [vmem:[#allocation4 + $0x30] sm:$0xe]
        %v5828 = vld [vmem:[#allocation4 + $0x34] sm:$0x1]
        %v5829 = vld [vmem:[#allocation4 + $0x38] sm:$0xe]
        %v5830 = vld [vmem:[#allocation4 + $0x3c] sm:$0x1]
        %v5847 = vrot.slane %v5815, 5
        %v5848 = vrot.slane %v5847, 4
        %v5849 = vrot.slane %v5816, 5
        %v5850 = vsel %vm5765, %v5848, %v5849
        %v5851 = vrot.slane %v5817, 5
        %v5852 = vrot.slane %v5851, 4
        %v5853 = vrot.slane %v5818, 5
        %v5854 = vsel %vm5765, %v5852, %v5853
        %v5855 = vrot.slane %v5819, 5
        %v5856 = vrot.slane %v5855, 4
        %v5857 = vrot.slane %v5820, 5
        %v5858 = vsel %vm5765, %v5856, %v5857
        %v5859 = vrot.slane %v5821, 5
        %v5860 = vrot.slane %v5859, 4
        %v5861 = vrot.slane %v5822, 5
        %v5862 = vsel %vm5765, %v5860, %v5861
        %v5863 = vrot.slane %v5823, 5
        %v5864 = vrot.slane %v5863, 4
        %v5865 = vrot.slane %v5824, 5
        %v5866 = vsel %vm5765, %v5864, %v5865
        %v5867 = vrot.slane %v5825, 5
        %v5868 = vrot.slane %v5867, 4
        %v5869 = vrot.slane %v5826, 5
        %v5870 = vsel %vm5765, %v5868, %v5869
        %v5871 = vrot.slane %v5827, 5
        %v5872 = vrot.slane %v5871, 4
        %v5873 = vrot.slane %v5828, 5
        %v5874 = vsel %vm5765, %v5872, %v5873
        %v5875 = vrot.slane %v5829, 5
        %v5876 = vrot.slane %v5875, 4
        %v5877 = vrot.slane %v5830, 5
        %v5878 = vsel %vm5765, %v5876, %v5877
        %5879 = vrot.lane.b32.xlu0 %v5850, 127
        %v5880 = vpop.permute.xlu0 %5879
        %5881 = vrot.lane.b32.xlu0 %v5854, 127
        %v5882 = vpop.permute.xlu0 %5881
        %5883 = vrot.lane.b32.xlu0 %v5858, 127
        %v5884 = vpop.permute.xlu0 %5883
        %5885 = vrot.lane.b32.xlu0 %v5862, 127
        %v5886 = vpop.permute.xlu0 %5885
        %5887 = vrot.lane.b32.xlu0 %v5866, 127
        %v5888 = vpop.permute.xlu0 %5887
        %5889 = vrot.lane.b32.xlu0 %v5870, 127
        %v5890 = vpop.permute.xlu0 %5889
        %5891 = vrot.lane.b32.xlu0 %v5874, 127
        %v5892 = vpop.permute.xlu0 %5891
        %5893 = vrot.lane.b32.xlu0 %v5878, 127
        %v5894 = vpop.permute.xlu0 %5893
        %s5903 = scalar_lea.vmem [#allocation5], 224
        %5904 = vst.msk [vmem:[%s5903] sm:$0xf] %vm5154, %v5880
        %5905 = vst.msk [vmem:[%s5903 + $0x4] sm:$0xf] %vm5154, %v5882
        %5906 = vst.msk [vmem:[%s5903 + $0x8] sm:$0xf] %vm5154, %v5884
        %5907 = vst.msk [vmem:[%s5903 + $0xc] sm:$0xf] %vm5154, %v5886
        %5908 = vst.msk [vmem:[%s5903 + $0x10] sm:$0xf] %vm5154, %v5888
        %5909 = vst.msk [vmem:[%s5903 + $0x14] sm:$0xf] %vm5154, %v5890
        %5910 = vst.msk [vmem:[%s5903 + $0x18] sm:$0xf] %vm5154, %v5892
        %5911 = vst.msk [vmem:[%s5903 + $0x1c] sm:$0xf] %vm5154, %v5894
        %v5912 = vld [vmem:[#allocation4] sm:$0xe]
        %v5913 = vld [vmem:[#allocation4 + $0x4] sm:$0x1]
        %v5914 = vld [vmem:[#allocation4 + $0x8] sm:$0xe]
        %v5915 = vld [vmem:[#allocation4 + $0xc] sm:$0x1]
        %v5916 = vld [vmem:[#allocation4 + $0x10] sm:$0xe]
        %v5917 = vld [vmem:[#allocation4 + $0x14] sm:$0x1]
        %v5918 = vld [vmem:[#allocation4 + $0x18] sm:$0xe]
        %v5919 = vld [vmem:[#allocation4 + $0x1c] sm:$0x1]
        %v5920 = vld [vmem:[#allocation4 + $0x20] sm:$0xe]
        %v5921 = vld [vmem:[#allocation4 + $0x24] sm:$0x1]
        %v5922 = vld [vmem:[#allocation4 + $0x28] sm:$0xe]
        %v5923 = vld [vmem:[#allocation4 + $0x2c] sm:$0x1]
        %v5924 = vld [vmem:[#allocation4 + $0x30] sm:$0xe]
        %v5925 = vld [vmem:[#allocation4 + $0x34] sm:$0x1]
        %v5926 = vld [vmem:[#allocation4 + $0x38] sm:$0xe]
        %v5927 = vld [vmem:[#allocation4 + $0x3c] sm:$0x1]
        %v5944 = vrot.slane %v5912, 5
        %v5945 = vrot.slane %v5944, 4
        %v5946 = vrot.slane %v5913, 5
        %v5947 = vsel %vm5765, %v5945, %v5946
        %v5948 = vrot.slane %v5914, 5
        %v5949 = vrot.slane %v5948, 4
        %v5950 = vrot.slane %v5915, 5
        %v5951 = vsel %vm5765, %v5949, %v5950
        %v5952 = vrot.slane %v5916, 5
        %v5953 = vrot.slane %v5952, 4
        %v5954 = vrot.slane %v5917, 5
        %v5955 = vsel %vm5765, %v5953, %v5954
        %v5956 = vrot.slane %v5918, 5
        %v5957 = vrot.slane %v5956, 4
        %v5958 = vrot.slane %v5919, 5
        %v5959 = vsel %vm5765, %v5957, %v5958
        %v5960 = vrot.slane %v5920, 5
        %v5961 = vrot.slane %v5960, 4
        %v5962 = vrot.slane %v5921, 5
        %v5963 = vsel %vm5765, %v5961, %v5962
        %v5964 = vrot.slane %v5922, 5
        %v5965 = vrot.slane %v5964, 4
        %v5966 = vrot.slane %v5923, 5
        %v5967 = vsel %vm5765, %v5965, %v5966
        %v5968 = vrot.slane %v5924, 5
        %v5969 = vrot.slane %v5968, 4
        %v5970 = vrot.slane %v5925, 5
        %v5971 = vsel %vm5765, %v5969, %v5970
        %v5972 = vrot.slane %v5926, 5
        %v5973 = vrot.slane %v5972, 4
        %v5974 = vrot.slane %v5927, 5
        %v5975 = vsel %vm5765, %v5973, %v5974
        %5976 = vrot.lane.b32.xlu0 %v5947, 126
        %v5977 = vpop.permute.xlu0 %5976
        %5978 = vrot.lane.b32.xlu0 %v5951, 126
        %v5979 = vpop.permute.xlu0 %5978
        %5980 = vrot.lane.b32.xlu0 %v5955, 126
        %v5981 = vpop.permute.xlu0 %5980
        %5982 = vrot.lane.b32.xlu0 %v5959, 126
        %v5983 = vpop.permute.xlu0 %5982
        %5984 = vrot.lane.b32.xlu0 %v5963, 126
        %v5985 = vpop.permute.xlu0 %5984
        %5986 = vrot.lane.b32.xlu0 %v5967, 126
        %v5987 = vpop.permute.xlu0 %5986
        %5988 = vrot.lane.b32.xlu0 %v5971, 126
        %v5989 = vpop.permute.xlu0 %5988
        %5990 = vrot.lane.b32.xlu0 %v5975, 126
        %v5991 = vpop.permute.xlu0 %5990
        %s6000 = scalar_lea.vmem [#allocation5], 256
        %6001 = vst.msk [vmem:[%s6000] sm:$0xf] %vm5154, %v5977
        %6002 = vst.msk [vmem:[%s6000 + $0x4] sm:$0xf] %vm5154, %v5979
        %6003 = vst.msk [vmem:[%s6000 + $0x8] sm:$0xf] %vm5154, %v5981
        %6004 = vst.msk [vmem:[%s6000 + $0xc] sm:$0xf] %vm5154, %v5983
        %6005 = vst.msk [vmem:[%s6000 + $0x10] sm:$0xf] %vm5154, %v5985
        %6006 = vst.msk [vmem:[%s6000 + $0x14] sm:$0xf] %vm5154, %v5987
        %6007 = vst.msk [vmem:[%s6000 + $0x18] sm:$0xf] %vm5154, %v5989
        %6008 = vst.msk [vmem:[%s6000 + $0x1c] sm:$0xf] %vm5154, %v5991
        %v6009 = vld [vmem:[%s3] sm:$0xf]
        %v6010 = vld [vmem:[%s3 + $0x4] sm:$0xf]
        %v6011 = vld [vmem:[#allocation5] sm:$0xf]
        %v6012 = vld [vmem:[#allocation5 + $0x4] sm:$0xf]
        %v6013 = vld [vmem:[#allocation5 + $0x8] sm:$0xf]
        %v6014 = vld [vmem:[#allocation5 + $0xc] sm:$0xf]
        %v6015 = vld [vmem:[#allocation5 + $0x10] sm:$0xf]
        %v6016 = vld [vmem:[#allocation5 + $0x14] sm:$0xf]
        %v6017 = vld [vmem:[#allocation5 + $0x18] sm:$0xf]
        %v6018 = vld [vmem:[#allocation5 + $0x1c] sm:$0xf]
        %v6019 = vld [vmem:[#allocation5 + $0x20] sm:$0xf]
        %v6020 = vld [vmem:[#allocation5 + $0x24] sm:$0xf]
        %v6021 = vld [vmem:[#allocation5 + $0x28] sm:$0xf]
        %v6022 = vld [vmem:[#allocation5 + $0x2c] sm:$0xf]
        %v6023 = vld [vmem:[#allocation5 + $0x30] sm:$0xf]
        %v6024 = vld [vmem:[#allocation5 + $0x34] sm:$0xf]
        %v6025 = vld [vmem:[#allocation5 + $0x38] sm:$0xf]
        %v6026 = vld [vmem:[#allocation5 + $0x3c] sm:$0xf]
        %v6027 = vld [vmem:[#allocation5 + $0x40] sm:$0xf]
        %v6028 = vld [vmem:[#allocation5 + $0x44] sm:$0xf]
        %v6029 = vld [vmem:[#allocation5 + $0x48] sm:$0xf]
        %v6030 = vld [vmem:[#allocation5 + $0x4c] sm:$0xf]
        %v6031 = vld [vmem:[#allocation5 + $0x50] sm:$0xf]
        %v6032 = vld [vmem:[#allocation5 + $0x54] sm:$0xf]
        %v6033 = vld [vmem:[#allocation5 + $0x58] sm:$0xf]
        %v6034 = vld [vmem:[#allocation5 + $0x5c] sm:$0xf]
        %v6035 = vld [vmem:[#allocation5 + $0x60] sm:$0xf]
        %v6036 = vld [vmem:[#allocation5 + $0x64] sm:$0xf]
        %v6037 = vld [vmem:[#allocation5 + $0x68] sm:$0xf]
        %v6038 = vld [vmem:[#allocation5 + $0x6c] sm:$0xf]
        %v6039 = vld [vmem:[#allocation5 + $0x70] sm:$0xf]
        %v6040 = vld [vmem:[#allocation5 + $0x74] sm:$0xf]
        %v6041 = vld [vmem:[#allocation5 + $0x78] sm:$0xf]
        %v6042 = vld [vmem:[#allocation5 + $0x7c] sm:$0xf]
        %v6043 = vld [vmem:[#allocation5 + $0x80] sm:$0xf]
        %v6044 = vld [vmem:[#allocation5 + $0x84] sm:$0xf]
        %v6045 = vld [vmem:[#allocation5 + $0x88] sm:$0xf]
        %v6046 = vld [vmem:[#allocation5 + $0x8c] sm:$0xf]
        %v6047 = vld [vmem:[#allocation5 + $0x90] sm:$0xf]
        %v6048 = vld [vmem:[#allocation5 + $0x94] sm:$0xf]
        %v6049 = vld [vmem:[#allocation5 + $0x98] sm:$0xf]
        %v6050 = vld [vmem:[#allocation5 + $0x9c] sm:$0xf]
        %v6051 = vld [vmem:[#allocation5 + $0xa0] sm:$0xf]
        %v6052 = vld [vmem:[#allocation5 + $0xa4] sm:$0xf]
        %v6053 = vld [vmem:[#allocation5 + $0xa8] sm:$0xf]
        %v6054 = vld [vmem:[#allocation5 + $0xac] sm:$0xf]
        %v6055 = vld [vmem:[#allocation5 + $0xb0] sm:$0xf]
        %v6056 = vld [vmem:[#allocation5 + $0xb4] sm:$0xf]
        %v6057 = vld [vmem:[#allocation5 + $0xb8] sm:$0xf]
        %v6058 = vld [vmem:[#allocation5 + $0xbc] sm:$0xf]
        %v6059 = vld [vmem:[#allocation5 + $0xc0] sm:$0xf]
        %v6060 = vld [vmem:[#allocation5 + $0xc4] sm:$0xf]
        %v6061 = vld [vmem:[#allocation5 + $0xc8] sm:$0xf]
        %v6062 = vld [vmem:[#allocation5 + $0xcc] sm:$0xf]
        %v6063 = vld [vmem:[#allocation5 + $0xd0] sm:$0xf]
        %v6064 = vld [vmem:[#allocation5 + $0xd4] sm:$0xf]
        %v6065 = vld [vmem:[#allocation5 + $0xd8] sm:$0xf]
        %v6066 = vld [vmem:[#allocation5 + $0xdc] sm:$0xf]
        %v6067 = vld [vmem:[#allocation5 + $0xe0] sm:$0xf]
        %v6068 = vld [vmem:[#allocation5 + $0xe4] sm:$0xf]
        %v6069 = vld [vmem:[#allocation5 + $0xe8] sm:$0xf]
        %v6070 = vld [vmem:[#allocation5 + $0xec] sm:$0xf]
        %v6071 = vld [vmem:[#allocation5 + $0xf0] sm:$0xf]
        %v6072 = vld [vmem:[#allocation5 + $0xf4] sm:$0xf]
        %v6073 = vld [vmem:[#allocation5 + $0xf8] sm:$0xf]
        %v6074 = vld [vmem:[#allocation5 + $0xfc] sm:$0xf]
        %v6075 = vld [vmem:[#allocation5 + $0x100] sm:$0xf]
        %v6076 = vld [vmem:[#allocation5 + $0x104] sm:$0xf]
        %v6077 = vld [vmem:[#allocation5 + $0x108] sm:$0xf]
        %v6078 = vld [vmem:[#allocation5 + $0x10c] sm:$0xf]
        %v6079 = vld [vmem:[#allocation5 + $0x110] sm:$0xf]
        %v6080 = vld [vmem:[#allocation5 + $0x114] sm:$0xf]
        %v6081 = vld [vmem:[#allocation5 + $0x118] sm:$0xf]
        %v6082 = vld [vmem:[#allocation5 + $0x11c] sm:$0xf]
        %v6083 = vld [vmem:[#allocation5 + $0x120] sm:$0xf]
        %v6086 = vpack.i.b16 %v6012, %v6011
        %v6088 = vshrl.u32 %v6011, 16
        %v6089 = vshrl.u32 %v6012, 16
        %v6090 = vpack.i.b16 %v6089, %v6088
        %v6094 = vpack.i.b16 %v6014, %v6013
        %v6096 = vshrl.u32 %v6013, 16
        %v6097 = vshrl.u32 %v6014, 16
        %v6098 = vpack.i.b16 %v6097, %v6096
        %v6102 = vpack.i.b16 %v6016, %v6015
        %v6104 = vshrl.u32 %v6015, 16
        %v6105 = vshrl.u32 %v6016, 16
        %v6106 = vpack.i.b16 %v6105, %v6104
        %v6110 = vpack.i.b16 %v6018, %v6017
        %v6112 = vshrl.u32 %v6017, 16
        %v6113 = vshrl.u32 %v6018, 16
        %v6114 = vpack.i.b16 %v6113, %v6112
        %v6118 = vpack.i.b16 %v6020, %v6019
        %v6120 = vshrl.u32 %v6019, 16
        %v6121 = vshrl.u32 %v6020, 16
        %v6122 = vpack.i.b16 %v6121, %v6120
        %v6126 = vpack.i.b16 %v6022, %v6021
        %v6128 = vshrl.u32 %v6021, 16
        %v6129 = vshrl.u32 %v6022, 16
        %v6130 = vpack.i.b16 %v6129, %v6128
        %v6134 = vpack.i.b16 %v6024, %v6023
        %v6136 = vshrl.u32 %v6023, 16
        %v6137 = vshrl.u32 %v6024, 16
        %v6138 = vpack.i.b16 %v6137, %v6136
        %v6142 = vpack.i.b16 %v6026, %v6025
        %v6144 = vshrl.u32 %v6025, 16
        %v6145 = vshrl.u32 %v6026, 16
        %v6146 = vpack.i.b16 %v6145, %v6144
        %v6150 = vpack.i.b16 %v6028, %v6027
        %v6152 = vshrl.u32 %v6027, 16
        %v6153 = vshrl.u32 %v6028, 16
        %v6154 = vpack.i.b16 %v6153, %v6152
        %v6158 = vpack.i.b16 %v6030, %v6029
        %v6160 = vshrl.u32 %v6029, 16
        %v6161 = vshrl.u32 %v6030, 16
        %v6162 = vpack.i.b16 %v6161, %v6160
        %v6166 = vpack.i.b16 %v6032, %v6031
        %v6168 = vshrl.u32 %v6031, 16
        %v6169 = vshrl.u32 %v6032, 16
        %v6170 = vpack.i.b16 %v6169, %v6168
        %v6174 = vpack.i.b16 %v6034, %v6033
        %v6176 = vshrl.u32 %v6033, 16
        %v6177 = vshrl.u32 %v6034, 16
        %v6178 = vpack.i.b16 %v6177, %v6176
        %v6182 = vpack.i.b16 %v6036, %v6035
        %v6184 = vshrl.u32 %v6035, 16
        %v6185 = vshrl.u32 %v6036, 16
        %v6186 = vpack.i.b16 %v6185, %v6184
        %v6190 = vpack.i.b16 %v6038, %v6037
        %v6192 = vshrl.u32 %v6037, 16
        %v6193 = vshrl.u32 %v6038, 16
        %v6194 = vpack.i.b16 %v6193, %v6192
        %v6198 = vpack.i.b16 %v6040, %v6039
        %v6200 = vshrl.u32 %v6039, 16
        %v6201 = vshrl.u32 %v6040, 16
        %v6202 = vpack.i.b16 %v6201, %v6200
        %v6206 = vpack.i.b16 %v6042, %v6041
        %v6208 = vshrl.u32 %v6041, 16
        %v6209 = vshrl.u32 %v6042, 16
        %v6210 = vpack.i.b16 %v6209, %v6208
        %v6214 = vpack.i.b16 %v6044, %v6043
        %v6216 = vshrl.u32 %v6043, 16
        %v6217 = vshrl.u32 %v6044, 16
        %v6218 = vpack.i.b16 %v6217, %v6216
        %v6222 = vpack.i.b16 %v6046, %v6045
        %v6224 = vshrl.u32 %v6045, 16
        %v6225 = vshrl.u32 %v6046, 16
        %v6226 = vpack.i.b16 %v6225, %v6224
        %v6230 = vpack.i.b16 %v6048, %v6047
        %v6232 = vshrl.u32 %v6047, 16
        %v6233 = vshrl.u32 %v6048, 16
        %v6234 = vpack.i.b16 %v6233, %v6232
        %v6238 = vpack.i.b16 %v6050, %v6049
        %v6240 = vshrl.u32 %v6049, 16
        %v6241 = vshrl.u32 %v6050, 16
        %v6242 = vpack.i.b16 %v6241, %v6240
        %v6246 = vpack.i.b16 %v6052, %v6051
        %v6248 = vshrl.u32 %v6051, 16
        %v6249 = vshrl.u32 %v6052, 16
        %v6250 = vpack.i.b16 %v6249, %v6248
        %v6254 = vpack.i.b16 %v6054, %v6053
        %v6256 = vshrl.u32 %v6053, 16
        %v6257 = vshrl.u32 %v6054, 16
        %v6258 = vpack.i.b16 %v6257, %v6256
        %v6262 = vpack.i.b16 %v6056, %v6055
        %v6264 = vshrl.u32 %v6055, 16
        %v6265 = vshrl.u32 %v6056, 16
        %v6266 = vpack.i.b16 %v6265, %v6264
        %v6270 = vpack.i.b16 %v6058, %v6057
        %v6272 = vshrl.u32 %v6057, 16
        %v6273 = vshrl.u32 %v6058, 16
        %v6274 = vpack.i.b16 %v6273, %v6272
        %v6278 = vpack.i.b16 %v6060, %v6059
        %v6280 = vshrl.u32 %v6059, 16
        %v6281 = vshrl.u32 %v6060, 16
        %v6282 = vpack.i.b16 %v6281, %v6280
        %v6286 = vpack.i.b16 %v6062, %v6061
        %v6288 = vshrl.u32 %v6061, 16
        %v6289 = vshrl.u32 %v6062, 16
        %v6290 = vpack.i.b16 %v6289, %v6288
        %v6294 = vpack.i.b16 %v6064, %v6063
        %v6296 = vshrl.u32 %v6063, 16
        %v6297 = vshrl.u32 %v6064, 16
        %v6298 = vpack.i.b16 %v6297, %v6296
        %v6302 = vpack.i.b16 %v6066, %v6065
        %v6304 = vshrl.u32 %v6065, 16
        %v6305 = vshrl.u32 %v6066, 16
        %v6306 = vpack.i.b16 %v6305, %v6304
        %v6310 = vpack.i.b16 %v6068, %v6067
        %v6312 = vshrl.u32 %v6067, 16
        %v6313 = vshrl.u32 %v6068, 16
        %v6314 = vpack.i.b16 %v6313, %v6312
        %v6318 = vpack.i.b16 %v6070, %v6069
        %v6320 = vshrl.u32 %v6069, 16
        %v6321 = vshrl.u32 %v6070, 16
        %v6322 = vpack.i.b16 %v6321, %v6320
        %v6326 = vpack.i.b16 %v6072, %v6071
        %v6328 = vshrl.u32 %v6071, 16
        %v6329 = vshrl.u32 %v6072, 16
        %v6330 = vpack.i.b16 %v6329, %v6328
        %v6334 = vpack.i.b16 %v6074, %v6073
        %v6336 = vshrl.u32 %v6073, 16
        %v6337 = vshrl.u32 %v6074, 16
        %v6338 = vpack.i.b16 %v6337, %v6336
        %v6342 = vpack.i.b16 %v6076, %v6075
        %v6344 = vshrl.u32 %v6075, 16
        %v6345 = vshrl.u32 %v6076, 16
        %v6346 = vpack.i.b16 %v6345, %v6344
        %v6350 = vpack.i.b16 %v6078, %v6077
        %v6352 = vshrl.u32 %v6077, 16
        %v6353 = vshrl.u32 %v6078, 16
        %v6354 = vpack.i.b16 %v6353, %v6352
        %v6358 = vpack.i.b16 %v6080, %v6079
        %v6360 = vshrl.u32 %v6079, 16
        %v6361 = vshrl.u32 %v6080, 16
        %v6362 = vpack.i.b16 %v6361, %v6360
        %v6366 = vpack.i.b16 %v6082, %v6081
        %v6368 = vshrl.u32 %v6081, 16
        %v6369 = vshrl.u32 %v6082, 16
        %v6370 = vpack.i.b16 %v6369, %v6368
        %v6373 = vpack.i.b16 0, %v6083
        %v6374 = vshrl.u32 %v6083, 16
        %v6375 = vpack.i.b16 %v2456, %v6374
        %v6376 = vcombine.low %v6086, %v6102
        %v6378 = vunpack.c.l.s4 1983009808
        %v6379 = vunpack.c.0.s8 %v6378
        %v6380 = vlaneseq
        %v6381 = vshrl.u32 %v6380, 7
        %v6382 = vsub.s32 %v6379, %v6381
        %v6383 = vrot.slane %v6376, %v6382
        %v6384 = vcombine.low %v6094, %v6110
        %v6386 = vunpack.c.l.s4 1983009808
        %v6387 = vunpack.c.0.s8 %v6386
        %v6388 = vlaneseq
        %v6389 = vshrl.u32 %v6388, 7
        %v6390 = vsub.s32 %v6387, %v6389
        %v6391 = vrot.slane %v6384, %v6390
        %v6392 = vcombine.low %v6383, %v6391
        %v6393 = vcombine.high %v6383, %v6391
        %v6395 = vunpack.c.l.s4 1934713408
        %v6396 = vunpack.c.0.s8 %v6395
        %v6397 = vlaneseq
        %v6398 = vshrl.u32 %v6397, 7
        %v6399 = vsub.s32 %v6396, %v6398
        %v6400 = vrot.slane %v6392, %v6399
        %v6402 = vunpack.c.l.s4 1934713408
        %v6403 = vunpack.c.0.s8 %v6402
        %v6404 = vlaneseq
        %v6405 = vshrl.u32 %v6404, 7
        %v6406 = vsub.s32 %v6403, %v6405
        %v6407 = vrot.slane %v6393, %v6406
        %v6408 = vcombine.high %v6400, 0
        %v6409 = vcombine.high %v6407, 0
        %v6410 = vcombine.low %v6090, %v6106
        %v6412 = vunpack.c.l.s4 1983009808
        %v6413 = vunpack.c.0.s8 %v6412
        %v6414 = vlaneseq
        %v6415 = vshrl.u32 %v6414, 7
        %v6416 = vsub.s32 %v6413, %v6415
        %v6417 = vrot.slane %v6410, %v6416
        %v6418 = vcombine.low %v6098, %v6114
        %v6420 = vunpack.c.l.s4 1983009808
        %v6421 = vunpack.c.0.s8 %v6420
        %v6422 = vlaneseq
        %v6423 = vshrl.u32 %v6422, 7
        %v6424 = vsub.s32 %v6421, %v6423
        %v6425 = vrot.slane %v6418, %v6424
        %v6426 = vcombine.low %v6417, %v6425
        %v6427 = vcombine.high %v6417, %v6425
        %v6429 = vunpack.c.l.s4 1934713408
        %v6430 = vunpack.c.0.s8 %v6429
        %v6431 = vlaneseq
        %v6432 = vshrl.u32 %v6431, 7
        %v6433 = vsub.s32 %v6430, %v6432
        %v6434 = vrot.slane %v6426, %v6433
        %v6436 = vunpack.c.l.s4 1934713408
        %v6437 = vunpack.c.0.s8 %v6436
        %v6438 = vlaneseq
        %v6439 = vshrl.u32 %v6438, 7
        %v6440 = vsub.s32 %v6437, %v6439
        %v6441 = vrot.slane %v6427, %v6440
        %v6442 = vcombine.high %v6434, 0
        %v6443 = vcombine.high %v6441, 0
        %v6444 = vcombine.low %v6118, %v6134
        %v6446 = vunpack.c.l.s4 1983009808
        %v6447 = vunpack.c.0.s8 %v6446
        %v6448 = vlaneseq
        %v6449 = vshrl.u32 %v6448, 7
        %v6450 = vsub.s32 %v6447, %v6449
        %v6451 = vrot.slane %v6444, %v6450
        %v6452 = vcombine.low %v6126, %v6142
        %v6454 = vunpack.c.l.s4 1983009808
        %v6455 = vunpack.c.0.s8 %v6454
        %v6456 = vlaneseq
        %v6457 = vshrl.u32 %v6456, 7
        %v6458 = vsub.s32 %v6455, %v6457
        %v6459 = vrot.slane %v6452, %v6458
        %v6460 = vcombine.low %v6451, %v6459
        %v6461 = vcombine.high %v6451, %v6459
        %v6463 = vunpack.c.l.s4 1934713408
        %v6464 = vunpack.c.0.s8 %v6463
        %v6465 = vlaneseq
        %v6466 = vshrl.u32 %v6465, 7
        %v6467 = vsub.s32 %v6464, %v6466
        %v6468 = vrot.slane %v6460, %v6467
        %v6470 = vunpack.c.l.s4 1934713408
        %v6471 = vunpack.c.0.s8 %v6470
        %v6472 = vlaneseq
        %v6473 = vshrl.u32 %v6472, 7
        %v6474 = vsub.s32 %v6471, %v6473
        %v6475 = vrot.slane %v6461, %v6474
        %v6476 = vcombine.high %v6468, 0
        %v6477 = vcombine.high %v6475, 0
        %v6478 = vcombine.low %v6122, %v6138
        %v6480 = vunpack.c.l.s4 1983009808
        %v6481 = vunpack.c.0.s8 %v6480
        %v6482 = vlaneseq
        %v6483 = vshrl.u32 %v6482, 7
        %v6484 = vsub.s32 %v6481, %v6483
        %v6485 = vrot.slane %v6478, %v6484
        %v6486 = vcombine.low %v6130, %v6146
        %v6488 = vunpack.c.l.s4 1983009808
        %v6489 = vunpack.c.0.s8 %v6488
        %v6490 = vlaneseq
        %v6491 = vshrl.u32 %v6490, 7
        %v6492 = vsub.s32 %v6489, %v6491
        %v6493 = vrot.slane %v6486, %v6492
        %v6494 = vcombine.low %v6485, %v6493
        %v6495 = vcombine.high %v6485, %v6493
        %v6497 = vunpack.c.l.s4 1934713408
        %v6498 = vunpack.c.0.s8 %v6497
        %v6499 = vlaneseq
        %v6500 = vshrl.u32 %v6499, 7
        %v6501 = vsub.s32 %v6498, %v6500
        %v6502 = vrot.slane %v6494, %v6501
        %v6504 = vunpack.c.l.s4 1934713408
        %v6505 = vunpack.c.0.s8 %v6504
        %v6506 = vlaneseq
        %v6507 = vshrl.u32 %v6506, 7
        %v6508 = vsub.s32 %v6505, %v6507
        %v6509 = vrot.slane %v6495, %v6508
        %v6510 = vcombine.high %v6502, 0
        %v6511 = vcombine.high %v6509, 0
        %v6512 = vcombine.low %v6150, %v6166
        %v6514 = vunpack.c.l.s4 1983009808
        %v6515 = vunpack.c.0.s8 %v6514
        %v6516 = vlaneseq
        %v6517 = vshrl.u32 %v6516, 7
        %v6518 = vsub.s32 %v6515, %v6517
        %v6519 = vrot.slane %v6512, %v6518
        %v6520 = vcombine.low %v6158, %v6174
        %v6522 = vunpack.c.l.s4 1983009808
        %v6523 = vunpack.c.0.s8 %v6522
        %v6524 = vlaneseq
        %v6525 = vshrl.u32 %v6524, 7
        %v6526 = vsub.s32 %v6523, %v6525
        %v6527 = vrot.slane %v6520, %v6526
        %v6528 = vcombine.low %v6519, %v6527
        %v6529 = vcombine.high %v6519, %v6527
        %v6531 = vunpack.c.l.s4 1934713408
        %v6532 = vunpack.c.0.s8 %v6531
        %v6533 = vlaneseq
        %v6534 = vshrl.u32 %v6533, 7
        %v6535 = vsub.s32 %v6532, %v6534
        %v6536 = vrot.slane %v6528, %v6535
        %v6538 = vunpack.c.l.s4 1934713408
        %v6539 = vunpack.c.0.s8 %v6538
        %v6540 = vlaneseq
        %v6541 = vshrl.u32 %v6540, 7
        %v6542 = vsub.s32 %v6539, %v6541
        %v6543 = vrot.slane %v6529, %v6542
        %v6544 = vcombine.high %v6536, 0
        %v6545 = vcombine.high %v6543, 0
        %v6546 = vcombine.low %v6154, %v6170
        %v6548 = vunpack.c.l.s4 1983009808
        %v6549 = vunpack.c.0.s8 %v6548
        %v6550 = vlaneseq
        %v6551 = vshrl.u32 %v6550, 7
        %v6552 = vsub.s32 %v6549, %v6551
        %v6553 = vrot.slane %v6546, %v6552
        %v6554 = vcombine.low %v6162, %v6178
        %v6556 = vunpack.c.l.s4 1983009808
        %v6557 = vunpack.c.0.s8 %v6556
        %v6558 = vlaneseq
        %v6559 = vshrl.u32 %v6558, 7
        %v6560 = vsub.s32 %v6557, %v6559
        %v6561 = vrot.slane %v6554, %v6560
        %v6562 = vcombine.low %v6553, %v6561
        %v6563 = vcombine.high %v6553, %v6561
        %v6565 = vunpack.c.l.s4 1934713408
        %v6566 = vunpack.c.0.s8 %v6565
        %v6567 = vlaneseq
        %v6568 = vshrl.u32 %v6567, 7
        %v6569 = vsub.s32 %v6566, %v6568
        %v6570 = vrot.slane %v6562, %v6569
        %v6572 = vunpack.c.l.s4 1934713408
        %v6573 = vunpack.c.0.s8 %v6572
        %v6574 = vlaneseq
        %v6575 = vshrl.u32 %v6574, 7
        %v6576 = vsub.s32 %v6573, %v6575
        %v6577 = vrot.slane %v6563, %v6576
        %v6578 = vcombine.high %v6570, 0
        %v6579 = vcombine.high %v6577, 0
        %v6580 = vcombine.low %v6182, %v6198
        %v6582 = vunpack.c.l.s4 1983009808
        %v6583 = vunpack.c.0.s8 %v6582
        %v6584 = vlaneseq
        %v6585 = vshrl.u32 %v6584, 7
        %v6586 = vsub.s32 %v6583, %v6585
        %v6587 = vrot.slane %v6580, %v6586
        %v6588 = vcombine.low %v6190, %v6206
        %v6590 = vunpack.c.l.s4 1983009808
        %v6591 = vunpack.c.0.s8 %v6590
        %v6592 = vlaneseq
        %v6593 = vshrl.u32 %v6592, 7
        %v6594 = vsub.s32 %v6591, %v6593
        %v6595 = vrot.slane %v6588, %v6594
        %v6596 = vcombine.low %v6587, %v6595
        %v6597 = vcombine.high %v6587, %v6595
        %v6599 = vunpack.c.l.s4 1934713408
        %v6600 = vunpack.c.0.s8 %v6599
        %v6601 = vlaneseq
        %v6602 = vshrl.u32 %v6601, 7
        %v6603 = vsub.s32 %v6600, %v6602
        %v6604 = vrot.slane %v6596, %v6603
        %v6606 = vunpack.c.l.s4 1934713408
        %v6607 = vunpack.c.0.s8 %v6606
        %v6608 = vlaneseq
        %v6609 = vshrl.u32 %v6608, 7
        %v6610 = vsub.s32 %v6607, %v6609
        %v6611 = vrot.slane %v6597, %v6610
        %v6612 = vcombine.high %v6604, 0
        %v6613 = vcombine.high %v6611, 0
        %v6614 = vcombine.low %v6186, %v6202
        %v6616 = vunpack.c.l.s4 1983009808
        %v6617 = vunpack.c.0.s8 %v6616
        %v6618 = vlaneseq
        %v6619 = vshrl.u32 %v6618, 7
        %v6620 = vsub.s32 %v6617, %v6619
        %v6621 = vrot.slane %v6614, %v6620
        %v6622 = vcombine.low %v6194, %v6210
        %v6624 = vunpack.c.l.s4 1983009808
        %v6625 = vunpack.c.0.s8 %v6624
        %v6626 = vlaneseq
        %v6627 = vshrl.u32 %v6626, 7
        %v6628 = vsub.s32 %v6625, %v6627
        %v6629 = vrot.slane %v6622, %v6628
        %v6630 = vcombine.low %v6621, %v6629
        %v6631 = vcombine.high %v6621, %v6629
        %v6633 = vunpack.c.l.s4 1934713408
        %v6634 = vunpack.c.0.s8 %v6633
        %v6635 = vlaneseq
        %v6636 = vshrl.u32 %v6635, 7
        %v6637 = vsub.s32 %v6634, %v6636
        %v6638 = vrot.slane %v6630, %v6637
        %v6640 = vunpack.c.l.s4 1934713408
        %v6641 = vunpack.c.0.s8 %v6640
        %v6642 = vlaneseq
        %v6643 = vshrl.u32 %v6642, 7
        %v6644 = vsub.s32 %v6641, %v6643
        %v6645 = vrot.slane %v6631, %v6644
        %v6646 = vcombine.high %v6638, 0
        %v6647 = vcombine.high %v6645, 0
        %v6648 = vcombine.low %v6214, %v6230
        %v6650 = vunpack.c.l.s4 1983009808
        %v6651 = vunpack.c.0.s8 %v6650
        %v6652 = vlaneseq
        %v6653 = vshrl.u32 %v6652, 7
        %v6654 = vsub.s32 %v6651, %v6653
        %v6655 = vrot.slane %v6648, %v6654
        %v6656 = vcombine.low %v6222, %v6238
        %v6658 = vunpack.c.l.s4 1983009808
        %v6659 = vunpack.c.0.s8 %v6658
        %v6660 = vlaneseq
        %v6661 = vshrl.u32 %v6660, 7
        %v6662 = vsub.s32 %v6659, %v6661
        %v6663 = vrot.slane %v6656, %v6662
        %v6664 = vcombine.low %v6655, %v6663
        %v6665 = vcombine.high %v6655, %v6663
        %v6667 = vunpack.c.l.s4 1934713408
        %v6668 = vunpack.c.0.s8 %v6667
        %v6669 = vlaneseq
        %v6670 = vshrl.u32 %v6669, 7
        %v6671 = vsub.s32 %v6668, %v6670
        %v6672 = vrot.slane %v6664, %v6671
        %v6674 = vunpack.c.l.s4 1934713408
        %v6675 = vunpack.c.0.s8 %v6674
        %v6676 = vlaneseq
        %v6677 = vshrl.u32 %v6676, 7
        %v6678 = vsub.s32 %v6675, %v6677
        %v6679 = vrot.slane %v6665, %v6678
        %v6680 = vcombine.high %v6672, 0
        %v6681 = vcombine.high %v6679, 0
        %v6682 = vcombine.low %v6218, %v6234
        %v6684 = vunpack.c.l.s4 1983009808
        %v6685 = vunpack.c.0.s8 %v6684
        %v6686 = vlaneseq
        %v6687 = vshrl.u32 %v6686, 7
        %v6688 = vsub.s32 %v6685, %v6687
        %v6689 = vrot.slane %v6682, %v6688
        %v6690 = vcombine.low %v6226, %v6242
        %v6692 = vunpack.c.l.s4 1983009808
        %v6693 = vunpack.c.0.s8 %v6692
        %v6694 = vlaneseq
        %v6695 = vshrl.u32 %v6694, 7
        %v6696 = vsub.s32 %v6693, %v6695
        %v6697 = vrot.slane %v6690, %v6696
        %v6698 = vcombine.low %v6689, %v6697
        %v6699 = vcombine.high %v6689, %v6697
        %v6701 = vunpack.c.l.s4 1934713408
        %v6702 = vunpack.c.0.s8 %v6701
        %v6703 = vlaneseq
        %v6704 = vshrl.u32 %v6703, 7
        %v6705 = vsub.s32 %v6702, %v6704
        %v6706 = vrot.slane %v6698, %v6705
        %v6708 = vunpack.c.l.s4 1934713408
        %v6709 = vunpack.c.0.s8 %v6708
        %v6710 = vlaneseq
        %v6711 = vshrl.u32 %v6710, 7
        %v6712 = vsub.s32 %v6709, %v6711
        %v6713 = vrot.slane %v6699, %v6712
        %v6714 = vcombine.high %v6706, 0
        %v6715 = vcombine.high %v6713, 0
        %v6716 = vcombine.low %v6246, %v6262
        %v6718 = vunpack.c.l.s4 1983009808
        %v6719 = vunpack.c.0.s8 %v6718
        %v6720 = vlaneseq
        %v6721 = vshrl.u32 %v6720, 7
        %v6722 = vsub.s32 %v6719, %v6721
        %v6723 = vrot.slane %v6716, %v6722
        %v6724 = vcombine.low %v6254, %v6270
        %v6726 = vunpack.c.l.s4 1983009808
        %v6727 = vunpack.c.0.s8 %v6726
        %v6728 = vlaneseq
        %v6729 = vshrl.u32 %v6728, 7
        %v6730 = vsub.s32 %v6727, %v6729
        %v6731 = vrot.slane %v6724, %v6730
        %v6732 = vcombine.low %v6723, %v6731
        %v6733 = vcombine.high %v6723, %v6731
        %v6735 = vunpack.c.l.s4 1934713408
        %v6736 = vunpack.c.0.s8 %v6735
        %v6737 = vlaneseq
        %v6738 = vshrl.u32 %v6737, 7
        %v6739 = vsub.s32 %v6736, %v6738
        %v6740 = vrot.slane %v6732, %v6739
        %v6742 = vunpack.c.l.s4 1934713408
        %v6743 = vunpack.c.0.s8 %v6742
        %v6744 = vlaneseq
        %v6745 = vshrl.u32 %v6744, 7
        %v6746 = vsub.s32 %v6743, %v6745
        %v6747 = vrot.slane %v6733, %v6746
        %v6748 = vcombine.high %v6740, 0
        %v6749 = vcombine.high %v6747, 0
        %v6750 = vcombine.low %v6250, %v6266
        %v6752 = vunpack.c.l.s4 1983009808
        %v6753 = vunpack.c.0.s8 %v6752
        %v6754 = vlaneseq
        %v6755 = vshrl.u32 %v6754, 7
        %v6756 = vsub.s32 %v6753, %v6755
        %v6757 = vrot.slane %v6750, %v6756
        %v6758 = vcombine.low %v6258, %v6274
        %v6760 = vunpack.c.l.s4 1983009808
        %v6761 = vunpack.c.0.s8 %v6760
        %v6762 = vlaneseq
        %v6763 = vshrl.u32 %v6762, 7
        %v6764 = vsub.s32 %v6761, %v6763
        %v6765 = vrot.slane %v6758, %v6764
        %v6766 = vcombine.low %v6757, %v6765
        %v6767 = vcombine.high %v6757, %v6765
        %v6769 = vunpack.c.l.s4 1934713408
        %v6770 = vunpack.c.0.s8 %v6769
        %v6771 = vlaneseq
        %v6772 = vshrl.u32 %v6771, 7
        %v6773 = vsub.s32 %v6770, %v6772
        %v6774 = vrot.slane %v6766, %v6773
        %v6776 = vunpack.c.l.s4 1934713408
        %v6777 = vunpack.c.0.s8 %v6776
        %v6778 = vlaneseq
        %v6779 = vshrl.u32 %v6778, 7
        %v6780 = vsub.s32 %v6777, %v6779
        %v6781 = vrot.slane %v6767, %v6780
        %v6782 = vcombine.high %v6774, 0
        %v6783 = vcombine.high %v6781, 0
        %v6784 = vcombine.low %v6278, %v6294
        %v6786 = vunpack.c.l.s4 1983009808
        %v6787 = vunpack.c.0.s8 %v6786
        %v6788 = vlaneseq
        %v6789 = vshrl.u32 %v6788, 7
        %v6790 = vsub.s32 %v6787, %v6789
        %v6791 = vrot.slane %v6784, %v6790
        %v6792 = vcombine.low %v6286, %v6302
        %v6794 = vunpack.c.l.s4 1983009808
        %v6795 = vunpack.c.0.s8 %v6794
        %v6796 = vlaneseq
        %v6797 = vshrl.u32 %v6796, 7
        %v6798 = vsub.s32 %v6795, %v6797
        %v6799 = vrot.slane %v6792, %v6798
        %v6800 = vcombine.low %v6791, %v6799
        %v6801 = vcombine.high %v6791, %v6799
        %v6803 = vunpack.c.l.s4 1934713408
        %v6804 = vunpack.c.0.s8 %v6803
        %v6805 = vlaneseq
        %v6806 = vshrl.u32 %v6805, 7
        %v6807 = vsub.s32 %v6804, %v6806
        %v6808 = vrot.slane %v6800, %v6807
        %v6810 = vunpack.c.l.s4 1934713408
        %v6811 = vunpack.c.0.s8 %v6810
        %v6812 = vlaneseq
        %v6813 = vshrl.u32 %v6812, 7
        %v6814 = vsub.s32 %v6811, %v6813
        %v6815 = vrot.slane %v6801, %v6814
        %v6816 = vcombine.high %v6808, 0
        %v6817 = vcombine.high %v6815, 0
        %v6818 = vcombine.low %v6282, %v6298
        %v6820 = vunpack.c.l.s4 1983009808
        %v6821 = vunpack.c.0.s8 %v6820
        %v6822 = vlaneseq
        %v6823 = vshrl.u32 %v6822, 7
        %v6824 = vsub.s32 %v6821, %v6823
        %v6825 = vrot.slane %v6818, %v6824
        %v6826 = vcombine.low %v6290, %v6306
        %v6828 = vunpack.c.l.s4 1983009808
        %v6829 = vunpack.c.0.s8 %v6828
        %v6830 = vlaneseq
        %v6831 = vshrl.u32 %v6830, 7
        %v6832 = vsub.s32 %v6829, %v6831
        %v6833 = vrot.slane %v6826, %v6832
        %v6834 = vcombine.low %v6825, %v6833
        %v6835 = vcombine.high %v6825, %v6833
        %v6837 = vunpack.c.l.s4 1934713408
        %v6838 = vunpack.c.0.s8 %v6837
        %v6839 = vlaneseq
        %v6840 = vshrl.u32 %v6839, 7
        %v6841 = vsub.s32 %v6838, %v6840
        %v6842 = vrot.slane %v6834, %v6841
        %v6844 = vunpack.c.l.s4 1934713408
        %v6845 = vunpack.c.0.s8 %v6844
        %v6846 = vlaneseq
        %v6847 = vshrl.u32 %v6846, 7
        %v6848 = vsub.s32 %v6845, %v6847
        %v6849 = vrot.slane %v6835, %v6848
        %v6850 = vcombine.high %v6842, 0
        %v6851 = vcombine.high %v6849, 0
        %v6852 = vcombine.low %v6310, %v6326
        %v6854 = vunpack.c.l.s4 1983009808
        %v6855 = vunpack.c.0.s8 %v6854
        %v6856 = vlaneseq
        %v6857 = vshrl.u32 %v6856, 7
        %v6858 = vsub.s32 %v6855, %v6857
        %v6859 = vrot.slane %v6852, %v6858
        %v6860 = vcombine.low %v6318, %v6334
        %v6862 = vunpack.c.l.s4 1983009808
        %v6863 = vunpack.c.0.s8 %v6862
        %v6864 = vlaneseq
        %v6865 = vshrl.u32 %v6864, 7
        %v6866 = vsub.s32 %v6863, %v6865
        %v6867 = vrot.slane %v6860, %v6866
        %v6868 = vcombine.low %v6859, %v6867
        %v6869 = vcombine.high %v6859, %v6867
        %v6871 = vunpack.c.l.s4 1934713408
        %v6872 = vunpack.c.0.s8 %v6871
        %v6873 = vlaneseq
        %v6874 = vshrl.u32 %v6873, 7
        %v6875 = vsub.s32 %v6872, %v6874
        %v6876 = vrot.slane %v6868, %v6875
        %v6878 = vunpack.c.l.s4 1934713408
        %v6879 = vunpack.c.0.s8 %v6878
        %v6880 = vlaneseq
        %v6881 = vshrl.u32 %v6880, 7
        %v6882 = vsub.s32 %v6879, %v6881
        %v6883 = vrot.slane %v6869, %v6882
        %v6884 = vcombine.high %v6876, 0
        %v6885 = vcombine.high %v6883, 0
        %v6886 = vcombine.low %v6314, %v6330
        %v6888 = vunpack.c.l.s4 1983009808
        %v6889 = vunpack.c.0.s8 %v6888
        %v6890 = vlaneseq
        %v6891 = vshrl.u32 %v6890, 7
        %v6892 = vsub.s32 %v6889, %v6891
        %v6893 = vrot.slane %v6886, %v6892
        %v6894 = vcombine.low %v6322, %v6338
        %v6896 = vunpack.c.l.s4 1983009808
        %v6897 = vunpack.c.0.s8 %v6896
        %v6898 = vlaneseq
        %v6899 = vshrl.u32 %v6898, 7
        %v6900 = vsub.s32 %v6897, %v6899
        %v6901 = vrot.slane %v6894, %v6900
        %v6902 = vcombine.low %v6893, %v6901
        %v6903 = vcombine.high %v6893, %v6901
        %v6905 = vunpack.c.l.s4 1934713408
        %v6906 = vunpack.c.0.s8 %v6905
        %v6907 = vlaneseq
        %v6908 = vshrl.u32 %v6907, 7
        %v6909 = vsub.s32 %v6906, %v6908
        %v6910 = vrot.slane %v6902, %v6909
        %v6912 = vunpack.c.l.s4 1934713408
        %v6913 = vunpack.c.0.s8 %v6912
        %v6914 = vlaneseq
        %v6915 = vshrl.u32 %v6914, 7
        %v6916 = vsub.s32 %v6913, %v6915
        %v6917 = vrot.slane %v6903, %v6916
        %v6918 = vcombine.high %v6910, 0
        %v6919 = vcombine.high %v6917, 0
        %v6920 = vcombine.low %v6342, %v6358
        %v6922 = vunpack.c.l.s4 1983009808
        %v6923 = vunpack.c.0.s8 %v6922
        %v6924 = vlaneseq
        %v6925 = vshrl.u32 %v6924, 7
        %v6926 = vsub.s32 %v6923, %v6925
        %v6927 = vrot.slane %v6920, %v6926
        %v6928 = vcombine.low %v6350, %v6366
        %v6930 = vunpack.c.l.s4 1983009808
        %v6931 = vunpack.c.0.s8 %v6930
        %v6932 = vlaneseq
        %v6933 = vshrl.u32 %v6932, 7
        %v6934 = vsub.s32 %v6931, %v6933
        %v6935 = vrot.slane %v6928, %v6934
        %v6936 = vcombine.low %v6927, %v6935
        %v6937 = vcombine.high %v6927, %v6935
        %v6939 = vunpack.c.l.s4 1934713408
        %v6940 = vunpack.c.0.s8 %v6939
        %v6941 = vlaneseq
        %v6942 = vshrl.u32 %v6941, 7
        %v6943 = vsub.s32 %v6940, %v6942
        %v6944 = vrot.slane %v6936, %v6943
        %v6946 = vunpack.c.l.s4 1934713408
        %v6947 = vunpack.c.0.s8 %v6946
        %v6948 = vlaneseq
        %v6949 = vshrl.u32 %v6948, 7
        %v6950 = vsub.s32 %v6947, %v6949
        %v6951 = vrot.slane %v6937, %v6950
        %v6952 = vcombine.high %v6944, 0
        %v6953 = vcombine.high %v6951, 0
        %v6954 = vcombine.low %v6346, %v6362
        %v6956 = vunpack.c.l.s4 1983009808
        %v6957 = vunpack.c.0.s8 %v6956
        %v6958 = vlaneseq
        %v6959 = vshrl.u32 %v6958, 7
        %v6960 = vsub.s32 %v6957, %v6959
        %v6961 = vrot.slane %v6954, %v6960
        %v6962 = vcombine.low %v6354, %v6370
        %v6964 = vunpack.c.l.s4 1983009808
        %v6965 = vunpack.c.0.s8 %v6964
        %v6966 = vlaneseq
        %v6967 = vshrl.u32 %v6966, 7
        %v6968 = vsub.s32 %v6965, %v6967
        %v6969 = vrot.slane %v6962, %v6968
        %v6970 = vcombine.low %v6961, %v6969
        %v6971 = vcombine.high %v6961, %v6969
        %v6973 = vunpack.c.l.s4 1934713408
        %v6974 = vunpack.c.0.s8 %v6973
        %v6975 = vlaneseq
        %v6976 = vshrl.u32 %v6975, 7
        %v6977 = vsub.s32 %v6974, %v6976
        %v6978 = vrot.slane %v6970, %v6977
        %v6980 = vunpack.c.l.s4 1934713408
        %v6981 = vunpack.c.0.s8 %v6980
        %v6982 = vlaneseq
        %v6983 = vshrl.u32 %v6982, 7
        %v6984 = vsub.s32 %v6981, %v6983
        %v6985 = vrot.slane %v6971, %v6984
        %v6986 = vcombine.high %v6978, 0
        %v6987 = vcombine.high %v6985, 0
        %v6990 = vunpack.c.l.s4 1983009808
        %v6991 = vunpack.c.0.s8 %v6990
        %v6992 = vlaneseq
        %v6993 = vshrl.u32 %v6992, 7
        %v6994 = vsub.s32 %v6991, %v6993
        %v6995 = vrot.slane %v6373, %v6994
        %v6996 = vcombine.high %v6995, 0
        %v6998 = vunpack.c.l.s4 1934713408
        %v6999 = vunpack.c.0.s8 %v6998
        %v7000 = vlaneseq
        %v7001 = vshrl.u32 %v7000, 7
        %v7002 = vsub.s32 %v6999, %v7001
        %v7003 = vrot.slane %v6995, %v7002
        %v7005 = vunpack.c.l.s4 1934713408
        %v7006 = vunpack.c.0.s8 %v7005
        %v7007 = vlaneseq
        %v7008 = vshrl.u32 %v7007, 7
        %v7009 = vsub.s32 %v7006, %v7008
        %v7010 = vrot.slane %v6996, %v7009
        %v7011 = vcombine.high %v7003, 0
        %v7012 = vcombine.high %v7010, 0
        %v7015 = vunpack.c.l.s4 1983009808
        %v7016 = vunpack.c.0.s8 %v7015
        %v7017 = vlaneseq
        %v7018 = vshrl.u32 %v7017, 7
        %v7019 = vsub.s32 %v7016, %v7018
        %v7020 = vrot.slane %v6375, %v7019
        %v7021 = vcombine.high %v7020, 0
        %v7023 = vunpack.c.l.s4 1934713408
        %v7024 = vunpack.c.0.s8 %v7023
        %v7025 = vlaneseq
        %v7026 = vshrl.u32 %v7025, 7
        %v7027 = vsub.s32 %v7024, %v7026
        %v7028 = vrot.slane %v7020, %v7027
        %v7030 = vunpack.c.l.s4 1934713408
        %v7031 = vunpack.c.0.s8 %v7030
        %v7032 = vlaneseq
        %v7033 = vshrl.u32 %v7032, 7
        %v7034 = vsub.s32 %v7031, %v7033
        %v7035 = vrot.slane %v7021, %v7034
        %v7036 = vcombine.high %v7028, 0
        %v7037 = vcombine.high %v7035, 0
        %v7048 = vunpack.c.l.b16 %v6400
        %v7049 = vunpack.c.l.b16 %v6468
        %v7050 = vunpack.c.l.b16 %v6536
        %v7051 = vunpack.c.l.b16 %v6604
        %v7052 = vunpack.c.l.b16 %v6672
        %v7053 = vunpack.c.l.b16 %v6740
        %v7054 = vunpack.c.l.b16 %v6808
        %v7055 = vunpack.c.l.b16 %v6876
        %v7056 = vunpack.c.l.b16 %v6944
        %v7057 = vunpack.c.l.b16 %v7003
        %v7058 = vpack.c.b16 %v7049, %v7048
        %v7059 = vpack.c.b16 %v7051, %v7050
        %v7060 = vpack.c.b16 %v7053, %v7052
        %v7061 = vpack.c.b16 %v7055, %v7054
        %v7062 = vpack.c.b16 %v7057, %v7056
        %v7073 = vunpack.c.l.b16 %v6434
        %v7074 = vunpack.c.l.b16 %v6502
        %v7075 = vunpack.c.l.b16 %v6570
        %v7076 = vunpack.c.l.b16 %v6638
        %v7077 = vunpack.c.l.b16 %v6706
        %v7078 = vunpack.c.l.b16 %v6774
        %v7079 = vunpack.c.l.b16 %v6842
        %v7080 = vunpack.c.l.b16 %v6910
        %v7081 = vunpack.c.l.b16 %v6978
        %v7082 = vunpack.c.l.b16 %v7028
        %v7083 = vpack.c.b16 %v7074, %v7073
        %v7084 = vpack.c.b16 %v7076, %v7075
        %v7085 = vpack.c.b16 %v7078, %v7077
        %v7086 = vpack.c.b16 %v7080, %v7079
        %v7087 = vpack.c.b16 %v7082, %v7081
        %7088 = vrot.lane.b32.xlu0 %v7083, 8
        %v7089 = vpop.permute.xlu0 %7088
        %7090 = vrot.lane.b32.xlu0 %v7084, 8
        %v7091 = vpop.permute.xlu0 %7090
        %7092 = vrot.lane.b32.xlu0 %v7085, 8
        %v7093 = vpop.permute.xlu0 %7092
        %7094 = vrot.lane.b32.xlu0 %v7086, 8
        %v7095 = vpop.permute.xlu0 %7094
        %7096 = vrot.lane.b32.xlu0 %v7087, 8
        %v7097 = vpop.permute.xlu0 %7096
        %v7108 = vunpack.c.l.b16 %v6408
        %v7109 = vunpack.c.l.b16 %v6476
        %v7110 = vunpack.c.l.b16 %v6544
        %v7111 = vunpack.c.l.b16 %v6612
        %v7112 = vunpack.c.l.b16 %v6680
        %v7113 = vunpack.c.l.b16 %v6748
        %v7114 = vunpack.c.l.b16 %v6816
        %v7115 = vunpack.c.l.b16 %v6884
        %v7116 = vunpack.c.l.b16 %v6952
        %v7117 = vunpack.c.l.b16 %v7011
        %v7118 = vpack.c.b16 %v7109, %v7108
        %v7119 = vpack.c.b16 %v7111, %v7110
        %v7120 = vpack.c.b16 %v7113, %v7112
        %v7121 = vpack.c.b16 %v7115, %v7114
        %v7122 = vpack.c.b16 %v7117, %v7116
        %7123 = vrot.lane.b32.xlu0 %v7118, 16
        %v7124 = vpop.permute.xlu0 %7123
        %7125 = vrot.lane.b32.xlu0 %v7119, 16
        %v7126 = vpop.permute.xlu0 %7125
        %7127 = vrot.lane.b32.xlu0 %v7120, 16
        %v7128 = vpop.permute.xlu0 %7127
        %7129 = vrot.lane.b32.xlu0 %v7121, 16
        %v7130 = vpop.permute.xlu0 %7129
        %7131 = vrot.lane.b32.xlu0 %v7122, 16
        %v7132 = vpop.permute.xlu0 %7131
        %v7143 = vunpack.c.l.b16 %v6442
        %v7144 = vunpack.c.l.b16 %v6510
        %v7145 = vunpack.c.l.b16 %v6578
        %v7146 = vunpack.c.l.b16 %v6646
        %v7147 = vunpack.c.l.b16 %v6714
        %v7148 = vunpack.c.l.b16 %v6782
        %v7149 = vunpack.c.l.b16 %v6850
        %v7150 = vunpack.c.l.b16 %v6918
        %v7151 = vunpack.c.l.b16 %v6986
        %v7152 = vunpack.c.l.b16 %v7036
        %v7153 = vpack.c.b16 %v7144, %v7143
        %v7154 = vpack.c.b16 %v7146, %v7145
        %v7155 = vpack.c.b16 %v7148, %v7147
        %v7156 = vpack.c.b16 %v7150, %v7149
        %v7157 = vpack.c.b16 %v7152, %v7151
        %7158 = vrot.lane.b32.xlu0 %v7153, 24
        %v7159 = vpop.permute.xlu0 %7158
        %7160 = vrot.lane.b32.xlu0 %v7154, 24
        %v7161 = vpop.permute.xlu0 %7160
        %7162 = vrot.lane.b32.xlu0 %v7155, 24
        %v7163 = vpop.permute.xlu0 %7162
        %7164 = vrot.lane.b32.xlu0 %v7156, 24
        %v7165 = vpop.permute.xlu0 %7164
        %7166 = vrot.lane.b32.xlu0 %v7157, 24
        %v7167 = vpop.permute.xlu0 %7166
        %v7178 = vunpack.c.l.b16 %v6407
        %v7179 = vunpack.c.l.b16 %v6475
        %v7180 = vunpack.c.l.b16 %v6543
        %v7181 = vunpack.c.l.b16 %v6611
        %v7182 = vunpack.c.l.b16 %v6679
        %v7183 = vunpack.c.l.b16 %v6747
        %v7184 = vunpack.c.l.b16 %v6815
        %v7185 = vunpack.c.l.b16 %v6883
        %v7186 = vunpack.c.l.b16 %v6951
        %v7187 = vunpack.c.l.b16 %v7010
        %v7188 = vpack.c.b16 %v7179, %v7178
        %v7189 = vpack.c.b16 %v7181, %v7180
        %v7190 = vpack.c.b16 %v7183, %v7182
        %v7191 = vpack.c.b16 %v7185, %v7184
        %v7192 = vpack.c.b16 %v7187, %v7186
        %7193 = vrot.lane.b32.xlu0 %v7188, 32
        %v7194 = vpop.permute.xlu0 %7193
        %7195 = vrot.lane.b32.xlu0 %v7189, 32
        %v7196 = vpop.permute.xlu0 %7195
        %7197 = vrot.lane.b32.xlu0 %v7190, 32
        %v7198 = vpop.permute.xlu0 %7197
        %7199 = vrot.lane.b32.xlu0 %v7191, 32
        %v7200 = vpop.permute.xlu0 %7199
        %7201 = vrot.lane.b32.xlu0 %v7192, 32
        %v7202 = vpop.permute.xlu0 %7201
        %v7213 = vunpack.c.l.b16 %v6441
        %v7214 = vunpack.c.l.b16 %v6509
        %v7215 = vunpack.c.l.b16 %v6577
        %v7216 = vunpack.c.l.b16 %v6645
        %v7217 = vunpack.c.l.b16 %v6713
        %v7218 = vunpack.c.l.b16 %v6781
        %v7219 = vunpack.c.l.b16 %v6849
        %v7220 = vunpack.c.l.b16 %v6917
        %v7221 = vunpack.c.l.b16 %v6985
        %v7222 = vunpack.c.l.b16 %v7035
        %v7223 = vpack.c.b16 %v7214, %v7213
        %v7224 = vpack.c.b16 %v7216, %v7215
        %v7225 = vpack.c.b16 %v7218, %v7217
        %v7226 = vpack.c.b16 %v7220, %v7219
        %v7227 = vpack.c.b16 %v7222, %v7221
        %7228 = vrot.lane.b32.xlu0 %v7223, 40
        %v7229 = vpop.permute.xlu0 %7228
        %7230 = vrot.lane.b32.xlu0 %v7224, 40
        %v7231 = vpop.permute.xlu0 %7230
        %7232 = vrot.lane.b32.xlu0 %v7225, 40
        %v7233 = vpop.permute.xlu0 %7232
        %7234 = vrot.lane.b32.xlu0 %v7226, 40
        %v7235 = vpop.permute.xlu0 %7234
        %7236 = vrot.lane.b32.xlu0 %v7227, 40
        %v7237 = vpop.permute.xlu0 %7236
        %v7248 = vunpack.c.l.b16 %v6409
        %v7249 = vunpack.c.l.b16 %v6477
        %v7250 = vunpack.c.l.b16 %v6545
        %v7251 = vunpack.c.l.b16 %v6613
        %v7252 = vunpack.c.l.b16 %v6681
        %v7253 = vunpack.c.l.b16 %v6749
        %v7254 = vunpack.c.l.b16 %v6817
        %v7255 = vunpack.c.l.b16 %v6885
        %v7256 = vunpack.c.l.b16 %v6953
        %v7257 = vunpack.c.l.b16 %v7012
        %v7258 = vpack.c.b16 %v7249, %v7248
        %v7259 = vpack.c.b16 %v7251, %v7250
        %v7260 = vpack.c.b16 %v7253, %v7252
        %v7261 = vpack.c.b16 %v7255, %v7254
        %v7262 = vpack.c.b16 %v7257, %v7256
        %7263 = vrot.lane.b32.xlu0 %v7258, 48
        %v7264 = vpop.permute.xlu0 %7263
        %7265 = vrot.lane.b32.xlu0 %v7259, 48
        %v7266 = vpop.permute.xlu0 %7265
        %7267 = vrot.lane.b32.xlu0 %v7260, 48
        %v7268 = vpop.permute.xlu0 %7267
        %7269 = vrot.lane.b32.xlu0 %v7261, 48
        %v7270 = vpop.permute.xlu0 %7269
        %7271 = vrot.lane.b32.xlu0 %v7262, 48
        %v7272 = vpop.permute.xlu0 %7271
        %v7283 = vunpack.c.l.b16 %v6443
        %v7284 = vunpack.c.l.b16 %v6511
        %v7285 = vunpack.c.l.b16 %v6579
        %v7286 = vunpack.c.l.b16 %v6647
        %v7287 = vunpack.c.l.b16 %v6715
        %v7288 = vunpack.c.l.b16 %v6783
        %v7289 = vunpack.c.l.b16 %v6851
        %v7290 = vunpack.c.l.b16 %v6919
        %v7291 = vunpack.c.l.b16 %v6987
        %v7292 = vunpack.c.l.b16 %v7037
        %v7293 = vpack.c.b16 %v7284, %v7283
        %v7294 = vpack.c.b16 %v7286, %v7285
        %v7295 = vpack.c.b16 %v7288, %v7287
        %v7296 = vpack.c.b16 %v7290, %v7289
        %v7297 = vpack.c.b16 %v7292, %v7291
        %7298 = vrot.lane.b32.xlu0 %v7293, 56
        %v7299 = vpop.permute.xlu0 %7298
        %7300 = vrot.lane.b32.xlu0 %v7294, 56
        %v7301 = vpop.permute.xlu0 %7300
        %7302 = vrot.lane.b32.xlu0 %v7295, 56
        %v7303 = vpop.permute.xlu0 %7302
        %7304 = vrot.lane.b32.xlu0 %v7296, 56
        %v7305 = vpop.permute.xlu0 %7304
        %7306 = vrot.lane.b32.xlu0 %v7297, 56
        %v7307 = vpop.permute.xlu0 %7306
        %vm7308 = vcmask 64512
        %v7311 = vsel %vm7308, %v7058, %v7089
        %v7314 = vsel %vm7308, %v7059, %v7091
        %v7317 = vsel %vm7308, %v7060, %v7093
        %v7320 = vsel %vm7308, %v7061, %v7095
        %v7323 = vsel %vm7308, %v7062, %v7097
        %v7325 = vsel %vm845, %v7311, %v7124
        %v7327 = vsel %vm845, %v7314, %v7126
        %v7329 = vsel %vm845, %v7317, %v7128
        %v7331 = vsel %vm845, %v7320, %v7130
        %v7333 = vsel %vm845, %v7323, %v7132
        %vm7334 = vcmask 195584
        %v7336 = vsel %vm7334, %v7325, %v7159
        %v7338 = vsel %vm7334, %v7327, %v7161
        %v7340 = vsel %vm7334, %v7329, %v7163
        %v7342 = vsel %vm7334, %v7331, %v7165
        %v7344 = vsel %vm7334, %v7333, %v7167
        %v7346 = vsel %vm4010, %v7336, %v7194
        %v7348 = vsel %vm4010, %v7338, %v7196
        %v7350 = vsel %vm4010, %v7340, %v7198
        %v7352 = vsel %vm4010, %v7342, %v7200
        %v7354 = vsel %vm4010, %v7344, %v7202
        %vm7355 = vcmask 326656
        %v7357 = vsel %vm7355, %v7346, %v7229
        %v7359 = vsel %vm7355, %v7348, %v7231
        %v7361 = vsel %vm7355, %v7350, %v7233
        %v7363 = vsel %vm7355, %v7352, %v7235
        %v7365 = vsel %vm7355, %v7354, %v7237
        %v7367 = vsel %vm4021, %v7357, %v7264
        %v7369 = vsel %vm4021, %v7359, %v7266
        %v7371 = vsel %vm4021, %v7361, %v7268
        %v7373 = vsel %vm4021, %v7363, %v7270
        %v7375 = vsel %vm4021, %v7365, %v7272
        %vm7376 = vcmask 457728
        %v7378 = vsel %vm7376, %v7367, %v7299
        %v7381 = vsel %vm7376, %v7369, %v7301
        %v7384 = vsel %vm7376, %v7371, %v7303
        %v7387 = vsel %vm7376, %v7373, %v7305
        %v7390 = vsel %vm7376, %v7375, %v7307
        %7391 = vrot.lane.b32.xlu0 %v4208, 8
        %v7392 = vpop.permute.xlu0 %7391
        %7394 = vrot.lane.b32.xlu0 %v4209, 16
        %v7395 = vpop.permute.xlu0 %7394
        %7397 = vrot.lane.b32.xlu0 %v4210, 24
        %v7398 = vpop.permute.xlu0 %7397
        %7400 = vrot.lane.b32.xlu0 %v4211, 32
        %v7401 = vpop.permute.xlu0 %7400
        %7403 = vrot.lane.b32.xlu0 %v4212, 40
        %v7404 = vpop.permute.xlu0 %7403
        %7406 = vrot.lane.b32.xlu0 %v4213, 48
        %v7407 = vpop.permute.xlu0 %7406
        %7409 = vrot.lane.b32.xlu0 %v4214, 56
        %v7410 = vpop.permute.xlu0 %7409
        %v7412 = vsel %vm7308, %v4207, %v7392
        %v7413 = vsel %vm845, %v7412, %v7395
        %v7414 = vsel %vm7334, %v7413, %v7398
        %v7415 = vsel %vm4010, %v7414, %v7401
        %v7416 = vsel %vm7355, %v7415, %v7404
        %v7417 = vsel %vm4021, %v7416, %v7407
        %v7418 = vsel %vm7376, %v7417, %v7410
        %v7421 = vunpack.c.l.b16 %v6009
        %v7422 = vunpack.c.l.b16 %v6010
        %v7423 = vpack.c.b16 %v7422, %v7421
        %v7425 = vsel %vm4255, %v7423, 0
        %v7427 = vand.u32 %v7390, %v4262
        %7429 = vmatprep.subr.bf16.mxu0 0
        %7430 = vmatpush1.bf16.msra.mxu0 %v7378
        %7431 = vmatprep.subr.bf16.mxu0 0
        %7432 = vmatpush1.bf16.msra.mxu0 %v7381
        %7433 = vmatprep.subr.bf16.mxu0 0
        %7434 = vmatpush1.bf16.msra.mxu0 %v7384
        %7435 = vmatprep.subr.bf16.mxu0 0
        %7436 = vmatpush1.bf16.msra.mxu0 %v7387
        %7437 = vmatprep.subr.bf16.mxu0 0
        %7438 = vmatpush1.bf16.msra.mxu0 %v7427
        %7439 = vmatprep.subr.bf16.mxu0 0
        %7440 = vmatpush1.bf16.msra.mxu0 0
        %7441 = vmatprep.subr.bf16.mxu0 0
        %7442 = vmatpush1.bf16.msra.mxu0 0
        %7443 = vmatprep.subr.bf16.mxu0 0
        %7444 = vmatpush1.bf16.msra.mxu0 0
        %7445 = vmatprep.subr.bf16.mxu0 0
        %7446 = vmatpush1.bf16.msra.mxu0 0
        %7447 = vmatprep.subr.bf16.mxu0 0
        %7448 = vmatpush1.bf16.msra.mxu0 0
        %7449 = vmatprep.subr.bf16.mxu0 0
        %7450 = vmatpush1.bf16.msra.mxu0 0
        %7451 = vmatprep.subr.bf16.mxu0 0
        %7452 = vmatpush1.bf16.msra.mxu0 0
        %7453 = vmatprep.subr.bf16.mxu0 0
        %7454 = vmatpush1.bf16.msra.mxu0 0
        %7455 = vmatprep.subr.bf16.mxu0 0
        %7456 = vmatpush1.bf16.msra.mxu0 0
        %7457 = vmatprep.subr.bf16.mxu0 0
        %7458 = vmatpush1.bf16.msra.mxu0 0
        %7459 = vmatprep.subr.bf16.mxu0 0
        %7460 = vmatpush1.bf16.msra.mxu0 0
        %7461 = vmatprep.mubr.bf16.mxu0 0
        %7462 = vmatmul.mubr.bf16.gmra.mrb[0].mxu0 %v7425
        %v7463 = vpop.f32.mrb[0].mxu0
        %v7464 = vadd.f32 %v7418, %v7463
        %v7465 = vpop.f32.mrb[0].mxu0
        %v7466 = vpop.f32.mrb[0].mxu0
        %v7467 = vadd.f32 %v7418, %v7466
        %v7468 = vpop.f32.mrb[0].mxu0
        %7469 = vdwg.mxu0
        %7472 = vrot.lane.b32.xlu0 %v7464, 120
        %v7473 = vpop.permute.xlu0 %7472
        %7474 = vrot.lane.b32.xlu0 %v7467, 120
        %v7475 = vpop.permute.xlu0 %7474
        %7478 = vrot.lane.b32.xlu0 %v7464, 112
        %v7479 = vpop.permute.xlu0 %7478
        %7480 = vrot.lane.b32.xlu0 %v7467, 112
        %v7481 = vpop.permute.xlu0 %7480
        %7484 = vrot.lane.b32.xlu0 %v7464, 104
        %v7485 = vpop.permute.xlu0 %7484
        %7486 = vrot.lane.b32.xlu0 %v7467, 104
        %v7487 = vpop.permute.xlu0 %7486
        %7490 = vrot.lane.b32.xlu0 %v7464, 96
        %v7491 = vpop.permute.xlu0 %7490
        %7492 = vrot.lane.b32.xlu0 %v7467, 96
        %v7493 = vpop.permute.xlu0 %7492
        %7496 = vrot.lane.b32.xlu0 %v7464, 88
        %v7497 = vpop.permute.xlu0 %7496
        %7498 = vrot.lane.b32.xlu0 %v7467, 88
        %v7499 = vpop.permute.xlu0 %7498
        %7502 = vrot.lane.b32.xlu0 %v7464, 80
        %v7503 = vpop.permute.xlu0 %7502
        %7504 = vrot.lane.b32.xlu0 %v7467, 80
        %v7505 = vpop.permute.xlu0 %7504
        %7508 = vrot.lane.b32.xlu0 %v7464, 72
        %v7509 = vpop.permute.xlu0 %7508
        %7510 = vrot.lane.b32.xlu0 %v7467, 72
        %v7511 = vpop.permute.xlu0 %7510
        %v7514 = vcombine.low %v7464, %v7479
        %v7515 = vcombine.high %v7464, %v7479
        %v7517 = vunpack.c.l.s4 1983009808
        %v7518 = vunpack.c.0.s8 %v7517
        %v7519 = vlaneseq
        %v7520 = vshrl.u32 %v7519, 7
        %v7521 = vsub.s32 %v7518, %v7520
        %v7522 = vrot.slane %v7514, %v7521
        %v7524 = vunpack.c.l.s4 1983009808
        %v7525 = vunpack.c.0.s8 %v7524
        %v7526 = vlaneseq
        %v7527 = vshrl.u32 %v7526, 7
        %v7528 = vsub.s32 %v7525, %v7527
        %v7529 = vrot.slane %v7515, %v7528
        %v7530 = vcombine.low %v7473, %v7485
        %v7531 = vcombine.high %v7473, %v7485
        %v7533 = vunpack.c.l.s4 1983009808
        %v7534 = vunpack.c.0.s8 %v7533
        %v7535 = vlaneseq
        %v7536 = vshrl.u32 %v7535, 7
        %v7537 = vsub.s32 %v7534, %v7536
        %v7538 = vrot.slane %v7530, %v7537
        %v7540 = vunpack.c.l.s4 1983009808
        %v7541 = vunpack.c.0.s8 %v7540
        %v7542 = vlaneseq
        %v7543 = vshrl.u32 %v7542, 7
        %v7544 = vsub.s32 %v7541, %v7543
        %v7545 = vrot.slane %v7531, %v7544
        %v7546 = vcombine.low %v7491, %v7503
        %v7547 = vcombine.high %v7491, %v7503
        %v7549 = vunpack.c.l.s4 1983009808
        %v7550 = vunpack.c.0.s8 %v7549
        %v7551 = vlaneseq
        %v7552 = vshrl.u32 %v7551, 7
        %v7553 = vsub.s32 %v7550, %v7552
        %v7554 = vrot.slane %v7546, %v7553
        %v7556 = vunpack.c.l.s4 1983009808
        %v7557 = vunpack.c.0.s8 %v7556
        %v7558 = vlaneseq
        %v7559 = vshrl.u32 %v7558, 7
        %v7560 = vsub.s32 %v7557, %v7559
        %v7561 = vrot.slane %v7547, %v7560
        %v7562 = vcombine.low %v7497, %v7509
        %v7563 = vcombine.high %v7497, %v7509
        %v7565 = vunpack.c.l.s4 1983009808
        %v7566 = vunpack.c.0.s8 %v7565
        %v7567 = vlaneseq
        %v7568 = vshrl.u32 %v7567, 7
        %v7569 = vsub.s32 %v7566, %v7568
        %v7570 = vrot.slane %v7562, %v7569
        %v7572 = vunpack.c.l.s4 1983009808
        %v7573 = vunpack.c.0.s8 %v7572
        %v7574 = vlaneseq
        %v7575 = vshrl.u32 %v7574, 7
        %v7576 = vsub.s32 %v7573, %v7575
        %v7577 = vrot.slane %v7563, %v7576
        %v7578 = vcombine.low %v7522, %v7538
        %v7579 = vcombine.high %v7522, %v7538
        %v7581 = vunpack.c.l.s4 1934713408
        %v7582 = vunpack.c.0.s8 %v7581
        %v7583 = vlaneseq
        %v7584 = vshrl.u32 %v7583, 7
        %v7585 = vsub.s32 %v7582, %v7584
        %v7586 = vrot.slane %v7578, %v7585
        %v7588 = vunpack.c.l.s4 1934713408
        %v7589 = vunpack.c.0.s8 %v7588
        %v7590 = vlaneseq
        %v7591 = vshrl.u32 %v7590, 7
        %v7592 = vsub.s32 %v7589, %v7591
        %v7593 = vrot.slane %v7579, %v7592
        %v7594 = vcombine.low %v7529, %v7545
        %v7595 = vcombine.high %v7529, %v7545
        %v7597 = vunpack.c.l.s4 1934713408
        %v7598 = vunpack.c.0.s8 %v7597
        %v7599 = vlaneseq
        %v7600 = vshrl.u32 %v7599, 7
        %v7601 = vsub.s32 %v7598, %v7600
        %v7602 = vrot.slane %v7594, %v7601
        %v7604 = vunpack.c.l.s4 1934713408
        %v7605 = vunpack.c.0.s8 %v7604
        %v7606 = vlaneseq
        %v7607 = vshrl.u32 %v7606, 7
        %v7608 = vsub.s32 %v7605, %v7607
        %v7609 = vrot.slane %v7595, %v7608
        %v7610 = vcombine.low %v7554, %v7570
        %v7611 = vcombine.high %v7554, %v7570
        %v7613 = vunpack.c.l.s4 1934713408
        %v7614 = vunpack.c.0.s8 %v7613
        %v7615 = vlaneseq
        %v7616 = vshrl.u32 %v7615, 7
        %v7617 = vsub.s32 %v7614, %v7616
        %v7618 = vrot.slane %v7610, %v7617
        %v7620 = vunpack.c.l.s4 1934713408
        %v7621 = vunpack.c.0.s8 %v7620
        %v7622 = vlaneseq
        %v7623 = vshrl.u32 %v7622, 7
        %v7624 = vsub.s32 %v7621, %v7623
        %v7625 = vrot.slane %v7611, %v7624
        %v7626 = vcombine.low %v7561, %v7577
        %v7627 = vcombine.high %v7561, %v7577
        %v7629 = vunpack.c.l.s4 1934713408
        %v7630 = vunpack.c.0.s8 %v7629
        %v7631 = vlaneseq
        %v7632 = vshrl.u32 %v7631, 7
        %v7633 = vsub.s32 %v7630, %v7632
        %v7634 = vrot.slane %v7626, %v7633
        %v7636 = vunpack.c.l.s4 1934713408
        %v7637 = vunpack.c.0.s8 %v7636
        %v7638 = vlaneseq
        %v7639 = vshrl.u32 %v7638, 7
        %v7640 = vsub.s32 %v7637, %v7639
        %v7641 = vrot.slane %v7627, %v7640
        %v7642 = vcombine.low %v7586, %v7618
        %v7643 = vcombine.high %v7586, %v7618
        %v7644 = vcombine.low %v7593, %v7625
        %v7645 = vcombine.high %v7593, %v7625
        %v7646 = vcombine.low %v7602, %v7634
        %v7647 = vcombine.high %v7602, %v7634
        %v7648 = vcombine.low %v7609, %v7641
        %v7649 = vcombine.high %v7609, %v7641
        %v7650 = vcombine.low %v7467, %v7481
        %v7651 = vcombine.high %v7467, %v7481
        %v7653 = vunpack.c.l.s4 1983009808
        %v7654 = vunpack.c.0.s8 %v7653
        %v7655 = vlaneseq
        %v7656 = vshrl.u32 %v7655, 7
        %v7657 = vsub.s32 %v7654, %v7656
        %v7658 = vrot.slane %v7650, %v7657
        %v7660 = vunpack.c.l.s4 1983009808
        %v7661 = vunpack.c.0.s8 %v7660
        %v7662 = vlaneseq
        %v7663 = vshrl.u32 %v7662, 7
        %v7664 = vsub.s32 %v7661, %v7663
        %v7665 = vrot.slane %v7651, %v7664
        %v7666 = vcombine.low %v7475, %v7487
        %v7667 = vcombine.high %v7475, %v7487
        %v7669 = vunpack.c.l.s4 1983009808
        %v7670 = vunpack.c.0.s8 %v7669
        %v7671 = vlaneseq
        %v7672 = vshrl.u32 %v7671, 7
        %v7673 = vsub.s32 %v7670, %v7672
        %v7674 = vrot.slane %v7666, %v7673
        %v7676 = vunpack.c.l.s4 1983009808
        %v7677 = vunpack.c.0.s8 %v7676
        %v7678 = vlaneseq
        %v7679 = vshrl.u32 %v7678, 7
        %v7680 = vsub.s32 %v7677, %v7679
        %v7681 = vrot.slane %v7667, %v7680
        %v7682 = vcombine.low %v7493, %v7505
        %v7683 = vcombine.high %v7493, %v7505
        %v7685 = vunpack.c.l.s4 1983009808
        %v7686 = vunpack.c.0.s8 %v7685
        %v7687 = vlaneseq
        %v7688 = vshrl.u32 %v7687, 7
        %v7689 = vsub.s32 %v7686, %v7688
        %v7690 = vrot.slane %v7682, %v7689
        %v7692 = vunpack.c.l.s4 1983009808
        %v7693 = vunpack.c.0.s8 %v7692
        %v7694 = vlaneseq
        %v7695 = vshrl.u32 %v7694, 7
        %v7696 = vsub.s32 %v7693, %v7695
        %v7697 = vrot.slane %v7683, %v7696
        %v7698 = vcombine.low %v7499, %v7511
        %v7699 = vcombine.high %v7499, %v7511
        %v7701 = vunpack.c.l.s4 1983009808
        %v7702 = vunpack.c.0.s8 %v7701
        %v7703 = vlaneseq
        %v7704 = vshrl.u32 %v7703, 7
        %v7705 = vsub.s32 %v7702, %v7704
        %v7706 = vrot.slane %v7698, %v7705
        %v7708 = vunpack.c.l.s4 1983009808
        %v7709 = vunpack.c.0.s8 %v7708
        %v7710 = vlaneseq
        %v7711 = vshrl.u32 %v7710, 7
        %v7712 = vsub.s32 %v7709, %v7711
        %v7713 = vrot.slane %v7699, %v7712
        %v7714 = vcombine.low %v7658, %v7674
        %v7715 = vcombine.high %v7658, %v7674
        %v7717 = vunpack.c.l.s4 1934713408
        %v7718 = vunpack.c.0.s8 %v7717
        %v7719 = vlaneseq
        %v7720 = vshrl.u32 %v7719, 7
        %v7721 = vsub.s32 %v7718, %v7720
        %v7722 = vrot.slane %v7714, %v7721
        %v7724 = vunpack.c.l.s4 1934713408
        %v7725 = vunpack.c.0.s8 %v7724
        %v7726 = vlaneseq
        %v7727 = vshrl.u32 %v7726, 7
        %v7728 = vsub.s32 %v7725, %v7727
        %v7729 = vrot.slane %v7715, %v7728
        %v7730 = vcombine.low %v7665, %v7681
        %v7731 = vcombine.high %v7665, %v7681
        %v7733 = vunpack.c.l.s4 1934713408
        %v7734 = vunpack.c.0.s8 %v7733
        %v7735 = vlaneseq
        %v7736 = vshrl.u32 %v7735, 7
        %v7737 = vsub.s32 %v7734, %v7736
        %v7738 = vrot.slane %v7730, %v7737
        %v7740 = vunpack.c.l.s4 1934713408
        %v7741 = vunpack.c.0.s8 %v7740
        %v7742 = vlaneseq
        %v7743 = vshrl.u32 %v7742, 7
        %v7744 = vsub.s32 %v7741, %v7743
        %v7745 = vrot.slane %v7731, %v7744
        %v7746 = vcombine.low %v7690, %v7706
        %v7747 = vcombine.high %v7690, %v7706
        %v7749 = vunpack.c.l.s4 1934713408
        %v7750 = vunpack.c.0.s8 %v7749
        %v7751 = vlaneseq
        %v7752 = vshrl.u32 %v7751, 7
        %v7753 = vsub.s32 %v7750, %v7752
        %v7754 = vrot.slane %v7746, %v7753
        %v7756 = vunpack.c.l.s4 1934713408
        %v7757 = vunpack.c.0.s8 %v7756
        %v7758 = vlaneseq
        %v7759 = vshrl.u32 %v7758, 7
        %v7760 = vsub.s32 %v7757, %v7759
        %v7761 = vrot.slane %v7747, %v7760
        %v7762 = vcombine.low %v7697, %v7713
        %v7763 = vcombine.high %v7697, %v7713
        %v7765 = vunpack.c.l.s4 1934713408
        %v7766 = vunpack.c.0.s8 %v7765
        %v7767 = vlaneseq
        %v7768 = vshrl.u32 %v7767, 7
        %v7769 = vsub.s32 %v7766, %v7768
        %v7770 = vrot.slane %v7762, %v7769
        %v7772 = vunpack.c.l.s4 1934713408
        %v7773 = vunpack.c.0.s8 %v7772
        %v7774 = vlaneseq
        %v7775 = vshrl.u32 %v7774, 7
        %v7776 = vsub.s32 %v7773, %v7775
        %v7777 = vrot.slane %v7763, %v7776
        %v7778 = vcombine.low %v7722, %v7754
        %v7779 = vcombine.high %v7722, %v7754
        %v7780 = vcombine.low %v7729, %v7761
        %v7781 = vcombine.high %v7729, %v7761
        %v7782 = vcombine.low %v7738, %v7770
        %v7783 = vcombine.high %v7738, %v7770
        %v7784 = vcombine.low %v7745, %v7777
        %v7785 = vcombine.high %v7745, %v7777
        %v7786 = vmax.f32 %v7642, 0.0
        %v7787 = vmax.f32 %v7643, 0.0
        %v7788 = vmax.f32 %v7644, 0.0
        %v7789 = vmax.f32 %v7645, 0.0
        %v7790 = vmax.f32 %v7646, 0.0
        %v7791 = vmax.f32 %v7647, 0.0
        %v7792 = vmax.f32 %v7648, 0.0
        %v7793 = vmax.f32 %v7649, 0.0
        %v7794 = vmax.f32 %v7778, 0.0
        %v7795 = vmax.f32 %v7779, 0.0
        %v7796 = vmax.f32 %v7780, 0.0
        %v7797 = vmax.f32 %v7781, 0.0
        %v7798 = vmax.f32 %v7782, 0.0
        %v7799 = vmax.f32 %v7783, 0.0
        %v7800 = vmax.f32 %v7784, 0.0
        %v7801 = vmax.f32 %v7785, 0.0
        %v7802 = vld [vmem:[%s5] sm:$0xf]
        %v7803 = vld [vmem:[%s4] sm:$0xf]
        %v7804 = vld [vmem:[%s4 + $0x4] sm:$0xf]
        %v7805 = vpack.c.bf16 %v7786, %v7786
        %v7806 = vpack.c.bf16 %v7787, %v7787
        %v7807 = vpack.c.bf16 %v7788, %v7788
        %v7808 = vpack.c.bf16 %v7789, %v7789
        %v7809 = vpack.c.bf16 %v7790, %v7790
        %v7810 = vpack.c.bf16 %v7791, %v7791
        %v7811 = vpack.c.bf16 %v7792, %v7792
        %v7812 = vpack.c.bf16 %v7793, %v7793
        %v7813 = vpack.c.bf16 %v7794, %v7794
        %v7814 = vpack.c.bf16 %v7795, %v7795
        %v7815 = vpack.c.bf16 %v7796, %v7796
        %v7816 = vpack.c.bf16 %v7797, %v7797
        %v7817 = vpack.c.bf16 %v7798, %v7798
        %v7818 = vpack.c.bf16 %v7799, %v7799
        %v7819 = vpack.c.bf16 %v7800, %v7800
        %v7820 = vpack.c.bf16 %v7801, %v7801
        %v7822 = vsel %vm7308, %v7805, 0
        %v7825 = vsel %vm4259, %v7802, 0
        %7827 = vmatprep.subr.bf16.mxu0 0
        %7828 = vmatpush1.bf16.msra.mxu0 %v7825
        %7829 = vmatprep.subr.bf16.mxu0 0
        %7830 = vmatpush1.bf16.msra.mxu0 0
        %7831 = vmatprep.subr.bf16.mxu0 0
        %7832 = vmatpush1.bf16.msra.mxu0 0
        %7833 = vmatprep.subr.bf16.mxu0 0
        %7834 = vmatpush1.bf16.msra.mxu0 0
        %7835 = vmatprep.subr.bf16.mxu0 0
        %7836 = vmatpush1.bf16.msra.mxu0 0
        %7837 = vmatprep.subr.bf16.mxu0 0
        %7838 = vmatpush1.bf16.msra.mxu0 0
        %7839 = vmatprep.subr.bf16.mxu0 0
        %7840 = vmatpush1.bf16.msra.mxu0 0
        %7841 = vmatprep.subr.bf16.mxu0 0
        %7842 = vmatpush1.bf16.msra.mxu0 0
        %7843 = vmatprep.subr.bf16.mxu0 0
        %7844 = vmatpush1.bf16.msra.mxu0 0
        %7845 = vmatprep.subr.bf16.mxu0 0
        %7846 = vmatpush1.bf16.msra.mxu0 0
        %7847 = vmatprep.subr.bf16.mxu0 0
        %7848 = vmatpush1.bf16.msra.mxu0 0
        %7849 = vmatprep.subr.bf16.mxu0 0
        %7850 = vmatpush1.bf16.msra.mxu0 0
        %7851 = vmatprep.subr.bf16.mxu0 0
        %7852 = vmatpush1.bf16.msra.mxu0 0
        %7853 = vmatprep.subr.bf16.mxu0 0
        %7854 = vmatpush1.bf16.msra.mxu0 0
        %7855 = vmatprep.subr.bf16.mxu0 0
        %7856 = vmatpush1.bf16.msra.mxu0 0
        %7857 = vmatprep.subr.bf16.mxu0 0
        %7858 = vmatpush1.bf16.msra.mxu0 0
        %7859 = vmatprep.mubr.bf16.mxu0 0
        %7860 = vmatmul.mubr.bf16.gmra.mrb[0].mxu0 %v7822
        %v7861 = vpop.f32.mrb[0].mxu0
        %v7862 = vadd.f32 0.0, %v7861
        %v7863 = vpop.f32.mrb[0].mxu0
        %v7864 = vpop.f32.mrb[0].mxu0
        %v7865 = vpop.f32.mrb[0].mxu0
        %7866 = vdwg.mxu0
        %v7868 = vsel %vm7308, %v7806, 0
        %7870 = vmatprep.subr.bf16.mxu0 0
        %7871 = vmatpush1.bf16.msra.mxu0 %v7825
        %7872 = vmatprep.subr.bf16.mxu0 0
        %7873 = vmatpush1.bf16.msra.mxu0 0
        %7874 = vmatprep.subr.bf16.mxu0 0
        %7875 = vmatpush1.bf16.msra.mxu0 0
        %7876 = vmatprep.subr.bf16.mxu0 0
        %7877 = vmatpush1.bf16.msra.mxu0 0
        %7878 = vmatprep.subr.bf16.mxu0 0
        %7879 = vmatpush1.bf16.msra.mxu0 0
        %7880 = vmatprep.subr.bf16.mxu0 0
        %7881 = vmatpush1.bf16.msra.mxu0 0
        %7882 = vmatprep.subr.bf16.mxu0 0
        %7883 = vmatpush1.bf16.msra.mxu0 0
        %7884 = vmatprep.subr.bf16.mxu0 0
        %7885 = vmatpush1.bf16.msra.mxu0 0
        %7886 = vmatprep.subr.bf16.mxu0 0
        %7887 = vmatpush1.bf16.msra.mxu0 0
        %7888 = vmatprep.subr.bf16.mxu0 0
        %7889 = vmatpush1.bf16.msra.mxu0 0
        %7890 = vmatprep.subr.bf16.mxu0 0
        %7891 = vmatpush1.bf16.msra.mxu0 0
        %7892 = vmatprep.subr.bf16.mxu0 0
        %7893 = vmatpush1.bf16.msra.mxu0 0
        %7894 = vmatprep.subr.bf16.mxu0 0
        %7895 = vmatpush1.bf16.msra.mxu0 0
        %7896 = vmatprep.subr.bf16.mxu0 0
        %7897 = vmatpush1.bf16.msra.mxu0 0
        %7898 = vmatprep.subr.bf16.mxu0 0
        %7899 = vmatpush1.bf16.msra.mxu0 0
        %7900 = vmatprep.subr.bf16.mxu0 0
        %7901 = vmatpush1.bf16.msra.mxu0 0
        %7902 = vmatprep.mubr.bf16.mxu0 0
        %7903 = vmatmul.mubr.bf16.gmra.mrb[0].mxu0 %v7868
        %v7904 = vpop.f32.mrb[0].mxu0
        %v7905 = vadd.f32 0.0, %v7904
        %v7906 = vpop.f32.mrb[0].mxu0
        %v7907 = vpop.f32.mrb[0].mxu0
        %v7908 = vpop.f32.mrb[0].mxu0
        %7909 = vdwg.mxu0
        %v7911 = vsel %vm7308, %v7807, 0
        %7913 = vmatprep.subr.bf16.mxu0 0
        %7914 = vmatpush1.bf16.msra.mxu0 %v7825
        %7915 = vmatprep.subr.bf16.mxu0 0
        %7916 = vmatpush1.bf16.msra.mxu0 0
        %7917 = vmatprep.subr.bf16.mxu0 0
        %7918 = vmatpush1.bf16.msra.mxu0 0
        %7919 = vmatprep.subr.bf16.mxu0 0
        %7920 = vmatpush1.bf16.msra.mxu0 0
        %7921 = vmatprep.subr.bf16.mxu0 0
        %7922 = vmatpush1.bf16.msra.mxu0 0
        %7923 = vmatprep.subr.bf16.mxu0 0
        %7924 = vmatpush1.bf16.msra.mxu0 0
        %7925 = vmatprep.subr.bf16.mxu0 0
        %7926 = vmatpush1.bf16.msra.mxu0 0
        %7927 = vmatprep.subr.bf16.mxu0 0
        %7928 = vmatpush1.bf16.msra.mxu0 0
        %7929 = vmatprep.subr.bf16.mxu0 0
        %7930 = vmatpush1.bf16.msra.mxu0 0
        %7931 = vmatprep.subr.bf16.mxu0 0
        %7932 = vmatpush1.bf16.msra.mxu0 0
        %7933 = vmatprep.subr.bf16.mxu0 0
        %7934 = vmatpush1.bf16.msra.mxu0 0
        %7935 = vmatprep.subr.bf16.mxu0 0
        %7936 = vmatpush1.bf16.msra.mxu0 0
        %7937 = vmatprep.subr.bf16.mxu0 0
        %7938 = vmatpush1.bf16.msra.mxu0 0
        %7939 = vmatprep.subr.bf16.mxu0 0
        %7940 = vmatpush1.bf16.msra.mxu0 0
        %7941 = vmatprep.subr.bf16.mxu0 0
        %7942 = vmatpush1.bf16.msra.mxu0 0
        %7943 = vmatprep.subr.bf16.mxu0 0
        %7944 = vmatpush1.bf16.msra.mxu0 0
        %7945 = vmatprep.mubr.bf16.mxu0 0
        %7946 = vmatmul.mubr.bf16.gmra.mrb[0].mxu0 %v7911
        %v7947 = vpop.f32.mrb[0].mxu0
        %v7948 = vadd.f32 0.0, %v7947
        %v7949 = vpop.f32.mrb[0].mxu0
        %v7950 = vpop.f32.mrb[0].mxu0
        %v7951 = vpop.f32.mrb[0].mxu0
        %7952 = vdwg.mxu0
        %v7954 = vsel %vm7308, %v7808, 0
        %7956 = vmatprep.subr.bf16.mxu0 0
        %7957 = vmatpush1.bf16.msra.mxu0 %v7825
        %7958 = vmatprep.subr.bf16.mxu0 0
        %7959 = vmatpush1.bf16.msra.mxu0 0
        %7960 = vmatprep.subr.bf16.mxu0 0
        %7961 = vmatpush1.bf16.msra.mxu0 0
        %7962 = vmatprep.subr.bf16.mxu0 0
        %7963 = vmatpush1.bf16.msra.mxu0 0
        %7964 = vmatprep.subr.bf16.mxu0 0
        %7965 = vmatpush1.bf16.msra.mxu0 0
        %7966 = vmatprep.subr.bf16.mxu0 0
        %7967 = vmatpush1.bf16.msra.mxu0 0
        %7968 = vmatprep.subr.bf16.mxu0 0
        %7969 = vmatpush1.bf16.msra.mxu0 0
        %7970 = vmatprep.subr.bf16.mxu0 0
        %7971 = vmatpush1.bf16.msra.mxu0 0
        %7972 = vmatprep.subr.bf16.mxu0 0
        %7973 = vmatpush1.bf16.msra.mxu0 0
        %7974 = vmatprep.subr.bf16.mxu0 0
        %7975 = vmatpush1.bf16.msra.mxu0 0
        %7976 = vmatprep.subr.bf16.mxu0 0
        %7977 = vmatpush1.bf16.msra.mxu0 0
        %7978 = vmatprep.subr.bf16.mxu0 0
        %7979 = vmatpush1.bf16.msra.mxu0 0
        %7980 = vmatprep.subr.bf16.mxu0 0
        %7981 = vmatpush1.bf16.msra.mxu0 0
        %7982 = vmatprep.subr.bf16.mxu0 0
        %7983 = vmatpush1.bf16.msra.mxu0 0
        %7984 = vmatprep.subr.bf16.mxu0 0
        %7985 = vmatpush1.bf16.msra.mxu0 0
        %7986 = vmatprep.subr.bf16.mxu0 0
        %7987 = vmatpush1.bf16.msra.mxu0 0
        %7988 = vmatprep.mubr.bf16.mxu0 0
        %7989 = vmatmul.mubr.bf16.gmra.mrb[0].mxu0 %v7954
        %v7990 = vpop.f32.mrb[0].mxu0
        %v7991 = vadd.f32 0.0, %v7990
        %v7992 = vpop.f32.mrb[0].mxu0
        %v7993 = vpop.f32.mrb[0].mxu0
        %v7994 = vpop.f32.mrb[0].mxu0
        %7995 = vdwg.mxu0
        %v7997 = vsel %vm7308, %v7809, 0
        %7999 = vmatprep.subr.bf16.mxu0 0
        %8000 = vmatpush1.bf16.msra.mxu0 %v7825
        %8001 = vmatprep.subr.bf16.mxu0 0
        %8002 = vmatpush1.bf16.msra.mxu0 0
        %8003 = vmatprep.subr.bf16.mxu0 0
        %8004 = vmatpush1.bf16.msra.mxu0 0
        %8005 = vmatprep.subr.bf16.mxu0 0
        %8006 = vmatpush1.bf16.msra.mxu0 0
        %8007 = vmatprep.subr.bf16.mxu0 0
        %8008 = vmatpush1.bf16.msra.mxu0 0
        %8009 = vmatprep.subr.bf16.mxu0 0
        %8010 = vmatpush1.bf16.msra.mxu0 0
        %8011 = vmatprep.subr.bf16.mxu0 0
        %8012 = vmatpush1.bf16.msra.mxu0 0
        %8013 = vmatprep.subr.bf16.mxu0 0
        %8014 = vmatpush1.bf16.msra.mxu0 0
        %8015 = vmatprep.subr.bf16.mxu0 0
        %8016 = vmatpush1.bf16.msra.mxu0 0
        %8017 = vmatprep.subr.bf16.mxu0 0
        %8018 = vmatpush1.bf16.msra.mxu0 0
        %8019 = vmatprep.subr.bf16.mxu0 0
        %8020 = vmatpush1.bf16.msra.mxu0 0
        %8021 = vmatprep.subr.bf16.mxu0 0
        %8022 = vmatpush1.bf16.msra.mxu0 0
        %8023 = vmatprep.subr.bf16.mxu0 0
        %8024 = vmatpush1.bf16.msra.mxu0 0
        %8025 = vmatprep.subr.bf16.mxu0 0
        %8026 = vmatpush1.bf16.msra.mxu0 0
        %8027 = vmatprep.subr.bf16.mxu0 0
        %8028 = vmatpush1.bf16.msra.mxu0 0
        %8029 = vmatprep.subr.bf16.mxu0 0
        %8030 = vmatpush1.bf16.msra.mxu0 0
        %8031 = vmatprep.mubr.bf16.mxu0 0
        %8032 = vmatmul.mubr.bf16.gmra.mrb[0].mxu0 %v7997
        %v8033 = vpop.f32.mrb[0].mxu0
        %v8034 = vadd.f32 0.0, %v8033
        %v8035 = vpop.f32.mrb[0].mxu0
        %v8036 = vpop.f32.mrb[0].mxu0
        %v8037 = vpop.f32.mrb[0].mxu0
        %8038 = vdwg.mxu0
        %v8040 = vsel %vm7308, %v7810, 0
        %8042 = vmatprep.subr.bf16.mxu0 0
        %8043 = vmatpush1.bf16.msra.mxu0 %v7825
        %8044 = vmatprep.subr.bf16.mxu0 0
        %8045 = vmatpush1.bf16.msra.mxu0 0
        %8046 = vmatprep.subr.bf16.mxu0 0
        %8047 = vmatpush1.bf16.msra.mxu0 0
        %8048 = vmatprep.subr.bf16.mxu0 0
        %8049 = vmatpush1.bf16.msra.mxu0 0
        %8050 = vmatprep.subr.bf16.mxu0 0
        %8051 = vmatpush1.bf16.msra.mxu0 0
        %8052 = vmatprep.subr.bf16.mxu0 0
        %8053 = vmatpush1.bf16.msra.mxu0 0
        %8054 = vmatprep.subr.bf16.mxu0 0
        %8055 = vmatpush1.bf16.msra.mxu0 0
        %8056 = vmatprep.subr.bf16.mxu0 0
        %8057 = vmatpush1.bf16.msra.mxu0 0
        %8058 = vmatprep.subr.bf16.mxu0 0
        %8059 = vmatpush1.bf16.msra.mxu0 0
        %8060 = vmatprep.subr.bf16.mxu0 0
        %8061 = vmatpush1.bf16.msra.mxu0 0
        %8062 = vmatprep.subr.bf16.mxu0 0
        %8063 = vmatpush1.bf16.msra.mxu0 0
        %8064 = vmatprep.subr.bf16.mxu0 0
        %8065 = vmatpush1.bf16.msra.mxu0 0
        %8066 = vmatprep.subr.bf16.mxu0 0
        %8067 = vmatpush1.bf16.msra.mxu0 0
        %8068 = vmatprep.subr.bf16.mxu0 0
        %8069 = vmatpush1.bf16.msra.mxu0 0
        %8070 = vmatprep.subr.bf16.mxu0 0
        %8071 = vmatpush1.bf16.msra.mxu0 0
        %8072 = vmatprep.subr.bf16.mxu0 0
        %8073 = vmatpush1.bf16.msra.mxu0 0
        %8074 = vmatprep.mubr.bf16.mxu0 0
        %8075 = vmatmul.mubr.bf16.gmra.mrb[0].mxu0 %v8040
        %v8076 = vpop.f32.mrb[0].mxu0
        %v8077 = vadd.f32 0.0, %v8076
        %v8078 = vpop.f32.mrb[0].mxu0
        %v8079 = vpop.f32.mrb[0].mxu0
        %v8080 = vpop.f32.mrb[0].mxu0
        %8081 = vdwg.mxu0
        %v8083 = vsel %vm7308, %v7811, 0
        %8085 = vmatprep.subr.bf16.mxu0 0
        %8086 = vmatpush1.bf16.msra.mxu0 %v7825
        %8087 = vmatprep.subr.bf16.mxu0 0
        %8088 = vmatpush1.bf16.msra.mxu0 0
        %8089 = vmatprep.subr.bf16.mxu0 0
        %8090 = vmatpush1.bf16.msra.mxu0 0
        %8091 = vmatprep.subr.bf16.mxu0 0
        %8092 = vmatpush1.bf16.msra.mxu0 0
        %8093 = vmatprep.subr.bf16.mxu0 0
        %8094 = vmatpush1.bf16.msra.mxu0 0
        %8095 = vmatprep.subr.bf16.mxu0 0
        %8096 = vmatpush1.bf16.msra.mxu0 0
        %8097 = vmatprep.subr.bf16.mxu0 0
        %8098 = vmatpush1.bf16.msra.mxu0 0
        %8099 = vmatprep.subr.bf16.mxu0 0
        %8100 = vmatpush1.bf16.msra.mxu0 0
        %8101 = vmatprep.subr.bf16.mxu0 0
        %8102 = vmatpush1.bf16.msra.mxu0 0
        %8103 = vmatprep.subr.bf16.mxu0 0
        %8104 = vmatpush1.bf16.msra.mxu0 0
        %8105 = vmatprep.subr.bf16.mxu0 0
        %8106 = vmatpush1.bf16.msra.mxu0 0
        %8107 = vmatprep.subr.bf16.mxu0 0
        %8108 = vmatpush1.bf16.msra.mxu0 0
        %8109 = vmatprep.subr.bf16.mxu0 0
        %8110 = vmatpush1.bf16.msra.mxu0 0
        %8111 = vmatprep.subr.bf16.mxu0 0
        %8112 = vmatpush1.bf16.msra.mxu0 0
        %8113 = vmatprep.subr.bf16.mxu0 0
        %8114 = vmatpush1.bf16.msra.mxu0 0
        %8115 = vmatprep.subr.bf16.mxu0 0
        %8116 = vmatpush1.bf16.msra.mxu0 0
        %8117 = vmatprep.mubr.bf16.mxu0 0
        %8118 = vmatmul.mubr.bf16.gmra.mrb[0].mxu0 %v8083
        %v8119 = vpop.f32.mrb[0].mxu0
        %v8120 = vadd.f32 0.0, %v8119
        %v8121 = vpop.f32.mrb[0].mxu0
        %v8122 = vpop.f32.mrb[0].mxu0
        %v8123 = vpop.f32.mrb[0].mxu0
        %8124 = vdwg.mxu0
        %v8126 = vsel %vm7308, %v7812, 0
        %8128 = vmatprep.subr.bf16.mxu0 0
        %8129 = vmatpush1.bf16.msra.mxu0 %v7825
        %8130 = vmatprep.subr.bf16.mxu0 0
        %8131 = vmatpush1.bf16.msra.mxu0 0
        %8132 = vmatprep.subr.bf16.mxu0 0
        %8133 = vmatpush1.bf16.msra.mxu0 0
        %8134 = vmatprep.subr.bf16.mxu0 0
        %8135 = vmatpush1.bf16.msra.mxu0 0
        %8136 = vmatprep.subr.bf16.mxu0 0
        %8137 = vmatpush1.bf16.msra.mxu0 0
        %8138 = vmatprep.subr.bf16.mxu0 0
        %8139 = vmatpush1.bf16.msra.mxu0 0
        %8140 = vmatprep.subr.bf16.mxu0 0
        %8141 = vmatpush1.bf16.msra.mxu0 0
        %8142 = vmatprep.subr.bf16.mxu0 0
        %8143 = vmatpush1.bf16.msra.mxu0 0
        %8144 = vmatprep.subr.bf16.mxu0 0
        %8145 = vmatpush1.bf16.msra.mxu0 0
        %8146 = vmatprep.subr.bf16.mxu0 0
        %8147 = vmatpush1.bf16.msra.mxu0 0
        %8148 = vmatprep.subr.bf16.mxu0 0
        %8149 = vmatpush1.bf16.msra.mxu0 0
        %8150 = vmatprep.subr.bf16.mxu0 0
        %8151 = vmatpush1.bf16.msra.mxu0 0
        %8152 = vmatprep.subr.bf16.mxu0 0
        %8153 = vmatpush1.bf16.msra.mxu0 0
        %8154 = vmatprep.subr.bf16.mxu0 0
        %8155 = vmatpush1.bf16.msra.mxu0 0
        %8156 = vmatprep.subr.bf16.mxu0 0
        %8157 = vmatpush1.bf16.msra.mxu0 0
        %8158 = vmatprep.subr.bf16.mxu0 0
        %8159 = vmatpush1.bf16.msra.mxu0 0
        %8160 = vmatprep.mubr.bf16.mxu0 0
        %8161 = vmatmul.mubr.bf16.gmra.mrb[0].mxu0 %v8126
        %v8162 = vpop.f32.mrb[0].mxu0
        %v8163 = vadd.f32 0.0, %v8162
        %v8164 = vpop.f32.mrb[0].mxu0
        %v8165 = vpop.f32.mrb[0].mxu0
        %v8166 = vpop.f32.mrb[0].mxu0
        %8167 = vdwg.mxu0
        %v8169 = vsel %vm7308, %v7813, 0
        %8171 = vmatprep.subr.bf16.mxu0 0
        %8172 = vmatpush1.bf16.msra.mxu0 %v7825
        %8173 = vmatprep.subr.bf16.mxu0 0
        %8174 = vmatpush1.bf16.msra.mxu0 0
        %8175 = vmatprep.subr.bf16.mxu0 0
        %8176 = vmatpush1.bf16.msra.mxu0 0
        %8177 = vmatprep.subr.bf16.mxu0 0
        %8178 = vmatpush1.bf16.msra.mxu0 0
        %8179 = vmatprep.subr.bf16.mxu0 0
        %8180 = vmatpush1.bf16.msra.mxu0 0
        %8181 = vmatprep.subr.bf16.mxu0 0
        %8182 = vmatpush1.bf16.msra.mxu0 0
        %8183 = vmatprep.subr.bf16.mxu0 0
        %8184 = vmatpush1.bf16.msra.mxu0 0
        %8185 = vmatprep.subr.bf16.mxu0 0
        %8186 = vmatpush1.bf16.msra.mxu0 0
        %8187 = vmatprep.subr.bf16.mxu0 0
        %8188 = vmatpush1.bf16.msra.mxu0 0
        %8189 = vmatprep.subr.bf16.mxu0 0
        %8190 = vmatpush1.bf16.msra.mxu0 0
        %8191 = vmatprep.subr.bf16.mxu0 0
        %8192 = vmatpush1.bf16.msra.mxu0 0
        %8193 = vmatprep.subr.bf16.mxu0 0
        %8194 = vmatpush1.bf16.msra.mxu0 0
        %8195 = vmatprep.subr.bf16.mxu0 0
        %8196 = vmatpush1.bf16.msra.mxu0 0
        %8197 = vmatprep.subr.bf16.mxu0 0
        %8198 = vmatpush1.bf16.msra.mxu0 0
        %8199 = vmatprep.subr.bf16.mxu0 0
        %8200 = vmatpush1.bf16.msra.mxu0 0
        %8201 = vmatprep.subr.bf16.mxu0 0
        %8202 = vmatpush1.bf16.msra.mxu0 0
        %8203 = vmatprep.mubr.bf16.mxu0 0
        %8204 = vmatmul.mubr.bf16.gmra.mrb[0].mxu0 %v8169
        %v8205 = vpop.f32.mrb[0].mxu0
        %v8206 = vadd.f32 0.0, %v8205
        %v8207 = vpop.f32.mrb[0].mxu0
        %v8208 = vpop.f32.mrb[0].mxu0
        %v8209 = vpop.f32.mrb[0].mxu0
        %8210 = vdwg.mxu0
        %v8212 = vsel %vm7308, %v7814, 0
        %8214 = vmatprep.subr.bf16.mxu0 0
        %8215 = vmatpush1.bf16.msra.mxu0 %v7825
        %8216 = vmatprep.subr.bf16.mxu0 0
        %8217 = vmatpush1.bf16.msra.mxu0 0
        %8218 = vmatprep.subr.bf16.mxu0 0
        %8219 = vmatpush1.bf16.msra.mxu0 0
        %8220 = vmatprep.subr.bf16.mxu0 0
        %8221 = vmatpush1.bf16.msra.mxu0 0
        %8222 = vmatprep.subr.bf16.mxu0 0
        %8223 = vmatpush1.bf16.msra.mxu0 0
        %8224 = vmatprep.subr.bf16.mxu0 0
        %8225 = vmatpush1.bf16.msra.mxu0 0
        %8226 = vmatprep.subr.bf16.mxu0 0
        %8227 = vmatpush1.bf16.msra.mxu0 0
        %8228 = vmatprep.subr.bf16.mxu0 0
        %8229 = vmatpush1.bf16.msra.mxu0 0
        %8230 = vmatprep.subr.bf16.mxu0 0
        %8231 = vmatpush1.bf16.msra.mxu0 0
        %8232 = vmatprep.subr.bf16.mxu0 0
        %8233 = vmatpush1.bf16.msra.mxu0 0
        %8234 = vmatprep.subr.bf16.mxu0 0
        %8235 = vmatpush1.bf16.msra.mxu0 0
        %8236 = vmatprep.subr.bf16.mxu0 0
        %8237 = vmatpush1.bf16.msra.mxu0 0
        %8238 = vmatprep.subr.bf16.mxu0 0
        %8239 = vmatpush1.bf16.msra.mxu0 0
        %8240 = vmatprep.subr.bf16.mxu0 0
        %8241 = vmatpush1.bf16.msra.mxu0 0
        %8242 = vmatprep.subr.bf16.mxu0 0
        %8243 = vmatpush1.bf16.msra.mxu0 0
        %8244 = vmatprep.subr.bf16.mxu0 0
        %8245 = vmatpush1.bf16.msra.mxu0 0
        %8246 = vmatprep.mubr.bf16.mxu0 0
        %8247 = vmatmul.mubr.bf16.gmra.mrb[0].mxu0 %v8212
        %v8248 = vpop.f32.mrb[0].mxu0
        %v8249 = vadd.f32 0.0, %v8248
        %v8250 = vpop.f32.mrb[0].mxu0
        %v8251 = vpop.f32.mrb[0].mxu0
        %v8252 = vpop.f32.mrb[0].mxu0
        %8253 = vdwg.mxu0
        %v8255 = vsel %vm7308, %v7815, 0
        %8257 = vmatprep.subr.bf16.mxu0 0
        %8258 = vmatpush1.bf16.msra.mxu0 %v7825
        %8259 = vmatprep.subr.bf16.mxu0 0
        %8260 = vmatpush1.bf16.msra.mxu0 0
        %8261 = vmatprep.subr.bf16.mxu0 0
        %8262 = vmatpush1.bf16.msra.mxu0 0
        %8263 = vmatprep.subr.bf16.mxu0 0
        %8264 = vmatpush1.bf16.msra.mxu0 0
        %8265 = vmatprep.subr.bf16.mxu0 0
        %8266 = vmatpush1.bf16.msra.mxu0 0
        %8267 = vmatprep.subr.bf16.mxu0 0
        %8268 = vmatpush1.bf16.msra.mxu0 0
        %8269 = vmatprep.subr.bf16.mxu0 0
        %8270 = vmatpush1.bf16.msra.mxu0 0
        %8271 = vmatprep.subr.bf16.mxu0 0
        %8272 = vmatpush1.bf16.msra.mxu0 0
        %8273 = vmatprep.subr.bf16.mxu0 0
        %8274 = vmatpush1.bf16.msra.mxu0 0
        %8275 = vmatprep.subr.bf16.mxu0 0
        %8276 = vmatpush1.bf16.msra.mxu0 0
        %8277 = vmatprep.subr.bf16.mxu0 0
        %8278 = vmatpush1.bf16.msra.mxu0 0
        %8279 = vmatprep.subr.bf16.mxu0 0
        %8280 = vmatpush1.bf16.msra.mxu0 0
        %8281 = vmatprep.subr.bf16.mxu0 0
        %8282 = vmatpush1.bf16.msra.mxu0 0
        %8283 = vmatprep.subr.bf16.mxu0 0
        %8284 = vmatpush1.bf16.msra.mxu0 0
        %8285 = vmatprep.subr.bf16.mxu0 0
        %8286 = vmatpush1.bf16.msra.mxu0 0
        %8287 = vmatprep.subr.bf16.mxu0 0
        %8288 = vmatpush1.bf16.msra.mxu0 0
        %8289 = vmatprep.mubr.bf16.mxu0 0
        %8290 = vmatmul.mubr.bf16.gmra.mrb[0].mxu0 %v8255
        %v8291 = vpop.f32.mrb[0].mxu0
        %v8292 = vadd.f32 0.0, %v8291
        %v8293 = vpop.f32.mrb[0].mxu0
        %v8294 = vpop.f32.mrb[0].mxu0
        %v8295 = vpop.f32.mrb[0].mxu0
        %8296 = vdwg.mxu0
        %v8298 = vsel %vm7308, %v7816, 0
        %8300 = vmatprep.subr.bf16.mxu0 0
        %8301 = vmatpush1.bf16.msra.mxu0 %v7825
        %8302 = vmatprep.subr.bf16.mxu0 0
        %8303 = vmatpush1.bf16.msra.mxu0 0
        %8304 = vmatprep.subr.bf16.mxu0 0
        %8305 = vmatpush1.bf16.msra.mxu0 0
        %8306 = vmatprep.subr.bf16.mxu0 0
        %8307 = vmatpush1.bf16.msra.mxu0 0
        %8308 = vmatprep.subr.bf16.mxu0 0
        %8309 = vmatpush1.bf16.msra.mxu0 0
        %8310 = vmatprep.subr.bf16.mxu0 0
        %8311 = vmatpush1.bf16.msra.mxu0 0
        %8312 = vmatprep.subr.bf16.mxu0 0
        %8313 = vmatpush1.bf16.msra.mxu0 0
        %8314 = vmatprep.subr.bf16.mxu0 0
        %8315 = vmatpush1.bf16.msra.mxu0 0
        %8316 = vmatprep.subr.bf16.mxu0 0
        %8317 = vmatpush1.bf16.msra.mxu0 0
        %8318 = vmatprep.subr.bf16.mxu0 0
        %8319 = vmatpush1.bf16.msra.mxu0 0
        %8320 = vmatprep.subr.bf16.mxu0 0
        %8321 = vmatpush1.bf16.msra.mxu0 0
        %8322 = vmatprep.subr.bf16.mxu0 0
        %8323 = vmatpush1.bf16.msra.mxu0 0
        %8324 = vmatprep.subr.bf16.mxu0 0
        %8325 = vmatpush1.bf16.msra.mxu0 0
        %8326 = vmatprep.subr.bf16.mxu0 0
        %8327 = vmatpush1.bf16.msra.mxu0 0
        %8328 = vmatprep.subr.bf16.mxu0 0
        %8329 = vmatpush1.bf16.msra.mxu0 0
        %8330 = vmatprep.subr.bf16.mxu0 0
        %8331 = vmatpush1.bf16.msra.mxu0 0
        %8332 = vmatprep.mubr.bf16.mxu0 0
        %8333 = vmatmul.mubr.bf16.gmra.mrb[0].mxu0 %v8298
        %v8334 = vpop.f32.mrb[0].mxu0
        %v8335 = vadd.f32 0.0, %v8334
        %v8336 = vpop.f32.mrb[0].mxu0
        %v8337 = vpop.f32.mrb[0].mxu0
        %v8338 = vpop.f32.mrb[0].mxu0
        %8339 = vdwg.mxu0
        %v8341 = vsel %vm7308, %v7817, 0
        %8343 = vmatprep.subr.bf16.mxu0 0
        %8344 = vmatpush1.bf16.msra.mxu0 %v7825
        %8345 = vmatprep.subr.bf16.mxu0 0
        %8346 = vmatpush1.bf16.msra.mxu0 0
        %8347 = vmatprep.subr.bf16.mxu0 0
        %8348 = vmatpush1.bf16.msra.mxu0 0
        %8349 = vmatprep.subr.bf16.mxu0 0
        %8350 = vmatpush1.bf16.msra.mxu0 0
        %8351 = vmatprep.subr.bf16.mxu0 0
        %8352 = vmatpush1.bf16.msra.mxu0 0
        %8353 = vmatprep.subr.bf16.mxu0 0
        %8354 = vmatpush1.bf16.msra.mxu0 0
        %8355 = vmatprep.subr.bf16.mxu0 0
        %8356 = vmatpush1.bf16.msra.mxu0 0
        %8357 = vmatprep.subr.bf16.mxu0 0
        %8358 = vmatpush1.bf16.msra.mxu0 0
        %8359 = vmatprep.subr.bf16.mxu0 0
        %8360 = vmatpush1.bf16.msra.mxu0 0
        %8361 = vmatprep.subr.bf16.mxu0 0
        %8362 = vmatpush1.bf16.msra.mxu0 0
        %8363 = vmatprep.subr.bf16.mxu0 0
        %8364 = vmatpush1.bf16.msra.mxu0 0
        %8365 = vmatprep.subr.bf16.mxu0 0
        %8366 = vmatpush1.bf16.msra.mxu0 0
        %8367 = vmatprep.subr.bf16.mxu0 0
        %8368 = vmatpush1.bf16.msra.mxu0 0
        %8369 = vmatprep.subr.bf16.mxu0 0
        %8370 = vmatpush1.bf16.msra.mxu0 0
        %8371 = vmatprep.subr.bf16.mxu0 0
        %8372 = vmatpush1.bf16.msra.mxu0 0
        %8373 = vmatprep.subr.bf16.mxu0 0
        %8374 = vmatpush1.bf16.msra.mxu0 0
        %8375 = vmatprep.mubr.bf16.mxu0 0
        %8376 = vmatmul.mubr.bf16.gmra.mrb[0].mxu0 %v8341
        %v8377 = vpop.f32.mrb[0].mxu0
        %v8378 = vadd.f32 0.0, %v8377
        %v8379 = vpop.f32.mrb[0].mxu0
        %v8380 = vpop.f32.mrb[0].mxu0
        %v8381 = vpop.f32.mrb[0].mxu0
        %8382 = vdwg.mxu0
        %v8384 = vsel %vm7308, %v7818, 0
        %8386 = vmatprep.subr.bf16.mxu0 0
        %8387 = vmatpush1.bf16.msra.mxu0 %v7825
        %8388 = vmatprep.subr.bf16.mxu0 0
        %8389 = vmatpush1.bf16.msra.mxu0 0
        %8390 = vmatprep.subr.bf16.mxu0 0
        %8391 = vmatpush1.bf16.msra.mxu0 0
        %8392 = vmatprep.subr.bf16.mxu0 0
        %8393 = vmatpush1.bf16.msra.mxu0 0
        %8394 = vmatprep.subr.bf16.mxu0 0
        %8395 = vmatpush1.bf16.msra.mxu0 0
        %8396 = vmatprep.subr.bf16.mxu0 0
        %8397 = vmatpush1.bf16.msra.mxu0 0
        %8398 = vmatprep.subr.bf16.mxu0 0
        %8399 = vmatpush1.bf16.msra.mxu0 0
        %8400 = vmatprep.subr.bf16.mxu0 0
        %8401 = vmatpush1.bf16.msra.mxu0 0
        %8402 = vmatprep.subr.bf16.mxu0 0
        %8403 = vmatpush1.bf16.msra.mxu0 0
        %8404 = vmatprep.subr.bf16.mxu0 0
        %8405 = vmatpush1.bf16.msra.mxu0 0
        %8406 = vmatprep.subr.bf16.mxu0 0
        %8407 = vmatpush1.bf16.msra.mxu0 0
        %8408 = vmatprep.subr.bf16.mxu0 0
        %8409 = vmatpush1.bf16.msra.mxu0 0
        %8410 = vmatprep.subr.bf16.mxu0 0
        %8411 = vmatpush1.bf16.msra.mxu0 0
        %8412 = vmatprep.subr.bf16.mxu0 0
        %8413 = vmatpush1.bf16.msra.mxu0 0
        %8414 = vmatprep.subr.bf16.mxu0 0
        %8415 = vmatpush1.bf16.msra.mxu0 0
        %8416 = vmatprep.subr.bf16.mxu0 0
        %8417 = vmatpush1.bf16.msra.mxu0 0
        %8418 = vmatprep.mubr.bf16.mxu0 0
        %8419 = vmatmul.mubr.bf16.gmra.mrb[0].mxu0 %v8384
        %v8420 = vpop.f32.mrb[0].mxu0
        %v8421 = vadd.f32 0.0, %v8420
        %v8422 = vpop.f32.mrb[0].mxu0
        %v8423 = vpop.f32.mrb[0].mxu0
        %v8424 = vpop.f32.mrb[0].mxu0
        %8425 = vdwg.mxu0
        %v8427 = vsel %vm7308, %v7819, 0
        %8429 = vmatprep.subr.bf16.mxu0 0
        %8430 = vmatpush1.bf16.msra.mxu0 %v7825
        %8431 = vmatprep.subr.bf16.mxu0 0
        %8432 = vmatpush1.bf16.msra.mxu0 0
        %8433 = vmatprep.subr.bf16.mxu0 0
        %8434 = vmatpush1.bf16.msra.mxu0 0
        %8435 = vmatprep.subr.bf16.mxu0 0
        %8436 = vmatpush1.bf16.msra.mxu0 0
        %8437 = vmatprep.subr.bf16.mxu0 0
        %8438 = vmatpush1.bf16.msra.mxu0 0
        %8439 = vmatprep.subr.bf16.mxu0 0
        %8440 = vmatpush1.bf16.msra.mxu0 0
        %8441 = vmatprep.subr.bf16.mxu0 0
        %8442 = vmatpush1.bf16.msra.mxu0 0
        %8443 = vmatprep.subr.bf16.mxu0 0
        %8444 = vmatpush1.bf16.msra.mxu0 0
        %8445 = vmatprep.subr.bf16.mxu0 0
        %8446 = vmatpush1.bf16.msra.mxu0 0
        %8447 = vmatprep.subr.bf16.mxu0 0
        %8448 = vmatpush1.bf16.msra.mxu0 0
        %8449 = vmatprep.subr.bf16.mxu0 0
        %8450 = vmatpush1.bf16.msra.mxu0 0
        %8451 = vmatprep.subr.bf16.mxu0 0
        %8452 = vmatpush1.bf16.msra.mxu0 0
        %8453 = vmatprep.subr.bf16.mxu0 0
        %8454 = vmatpush1.bf16.msra.mxu0 0
        %8455 = vmatprep.subr.bf16.mxu0 0
        %8456 = vmatpush1.bf16.msra.mxu0 0
        %8457 = vmatprep.subr.bf16.mxu0 0
        %8458 = vmatpush1.bf16.msra.mxu0 0
        %8459 = vmatprep.subr.bf16.mxu0 0
        %8460 = vmatpush1.bf16.msra.mxu0 0
        %8461 = vmatprep.mubr.bf16.mxu0 0
        %8462 = vmatmul.mubr.bf16.gmra.mrb[0].mxu0 %v8427
        %v8463 = vpop.f32.mrb[0].mxu0
        %v8464 = vadd.f32 0.0, %v8463
        %v8465 = vpop.f32.mrb[0].mxu0
        %v8466 = vpop.f32.mrb[0].mxu0
        %v8467 = vpop.f32.mrb[0].mxu0
        %8468 = vdwg.mxu0
        %v8470 = vsel %vm7308, %v7820, 0
        %8472 = vmatprep.subr.bf16.mxu0 0
        %8473 = vmatpush1.bf16.msra.mxu0 %v7825
        %8474 = vmatprep.subr.bf16.mxu0 0
        %8475 = vmatpush1.bf16.msra.mxu0 0
        %8476 = vmatprep.subr.bf16.mxu0 0
        %8477 = vmatpush1.bf16.msra.mxu0 0
        %8478 = vmatprep.subr.bf16.mxu0 0
        %8479 = vmatpush1.bf16.msra.mxu0 0
        %8480 = vmatprep.subr.bf16.mxu0 0
        %8481 = vmatpush1.bf16.msra.mxu0 0
        %8482 = vmatprep.subr.bf16.mxu0 0
        %8483 = vmatpush1.bf16.msra.mxu0 0
        %8484 = vmatprep.subr.bf16.mxu0 0
        %8485 = vmatpush1.bf16.msra.mxu0 0
        %8486 = vmatprep.subr.bf16.mxu0 0
        %8487 = vmatpush1.bf16.msra.mxu0 0
        %8488 = vmatprep.subr.bf16.mxu0 0
        %8489 = vmatpush1.bf16.msra.mxu0 0
        %8490 = vmatprep.subr.bf16.mxu0 0
        %8491 = vmatpush1.bf16.msra.mxu0 0
        %8492 = vmatprep.subr.bf16.mxu0 0
        %8493 = vmatpush1.bf16.msra.mxu0 0
        %8494 = vmatprep.subr.bf16.mxu0 0
        %8495 = vmatpush1.bf16.msra.mxu0 0
        %8496 = vmatprep.subr.bf16.mxu0 0
        %8497 = vmatpush1.bf16.msra.mxu0 0
        %8498 = vmatprep.subr.bf16.mxu0 0
        %8499 = vmatpush1.bf16.msra.mxu0 0
        %8500 = vmatprep.subr.bf16.mxu0 0
        %8501 = vmatpush1.bf16.msra.mxu0 0
        %8502 = vmatprep.subr.bf16.mxu0 0
        %8503 = vmatpush1.bf16.msra.mxu0 0
        %8504 = vmatprep.mubr.bf16.mxu0 0
        %8505 = vmatmul.mubr.bf16.gmra.mrb[0].mxu0 %v8470
        %v8506 = vpop.f32.mrb[0].mxu0
        %v8507 = vadd.f32 0.0, %v8506
        %v8508 = vpop.f32.mrb[0].mxu0
        %v8509 = vpop.f32.mrb[0].mxu0
        %v8510 = vpop.f32.mrb[0].mxu0
        %8511 = vdwg.mxu0
        %v8512 = vpack.c.bf16 %v7862, %v7862
        %v8513 = vpack.c.bf16 %v7905, %v7905
        %v8514 = vpack.c.bf16 %v7948, %v7948
        %v8515 = vpack.c.bf16 %v7991, %v7991
        %v8516 = vpack.c.bf16 %v8034, %v8034
        %v8517 = vpack.c.bf16 %v8077, %v8077
        %v8518 = vpack.c.bf16 %v8120, %v8120
        %v8519 = vpack.c.bf16 %v8163, %v8163
        %v8520 = vpack.c.bf16 %v8206, %v8206
        %v8521 = vpack.c.bf16 %v8249, %v8249
        %v8522 = vpack.c.bf16 %v8292, %v8292
        %v8523 = vpack.c.bf16 %v8335, %v8335
        %v8524 = vpack.c.bf16 %v8378, %v8378
        %v8525 = vpack.c.bf16 %v8421, %v8421
        %v8526 = vpack.c.bf16 %v8464, %v8464
        %v8527 = vpack.c.bf16 %v8507, %v8507
        %v8530 = vunpack.c.l.b16 %v7803
        %v8531 = vunpack.c.l.b16 %v7804
        %v8532 = vpack.c.b16 %v8531, %v8530
        %v8534 = vsel %vm7308, %v8532, 0
        %v8537 = vsel %vm4259, %v8512, 0
        %8539 = vmatprep.subr.bf16.mxu0 0
        %8540 = vmatpush1.bf16.msra.mxu0 %v8537
        %8541 = vmatprep.subr.bf16.mxu0 0
        %8542 = vmatpush1.bf16.msra.mxu0 0
        %8543 = vmatprep.subr.bf16.mxu0 0
        %8544 = vmatpush1.bf16.msra.mxu0 0
        %8545 = vmatprep.subr.bf16.mxu0 0
        %8546 = vmatpush1.bf16.msra.mxu0 0
        %8547 = vmatprep.subr.bf16.mxu0 0
        %8548 = vmatpush1.bf16.msra.mxu0 0
        %8549 = vmatprep.subr.bf16.mxu0 0
        %8550 = vmatpush1.bf16.msra.mxu0 0
        %8551 = vmatprep.subr.bf16.mxu0 0
        %8552 = vmatpush1.bf16.msra.mxu0 0
        %8553 = vmatprep.subr.bf16.mxu0 0
        %8554 = vmatpush1.bf16.msra.mxu0 0
        %8555 = vmatprep.subr.bf16.mxu0 0
        %8556 = vmatpush1.bf16.msra.mxu0 0
        %8557 = vmatprep.subr.bf16.mxu0 0
        %8558 = vmatpush1.bf16.msra.mxu0 0
        %8559 = vmatprep.subr.bf16.mxu0 0
        %8560 = vmatpush1.bf16.msra.mxu0 0
        %8561 = vmatprep.subr.bf16.mxu0 0
        %8562 = vmatpush1.bf16.msra.mxu0 0
        %8563 = vmatprep.subr.bf16.mxu0 0
        %8564 = vmatpush1.bf16.msra.mxu0 0
        %8565 = vmatprep.subr.bf16.mxu0 0
        %8566 = vmatpush1.bf16.msra.mxu0 0
        %8567 = vmatprep.subr.bf16.mxu0 0
        %8568 = vmatpush1.bf16.msra.mxu0 0
        %8569 = vmatprep.subr.bf16.mxu0 0
        %8570 = vmatpush1.bf16.msra.mxu0 0
        %8571 = vmatprep.mubr.bf16.mxu0 0
        %8572 = vmatmul.mubr.bf16.gmra.mrb[0].mxu0 %v8534
        %v8573 = vpop.f32.mrb[0].mxu0
        %v8574 = vadd.f32 0.0, %v8573
        %v8575 = vpop.f32.mrb[0].mxu0
        %v8576 = vpop.f32.mrb[0].mxu0
        %v8577 = vadd.f32 0.0, %v8576
        %v8578 = vpop.f32.mrb[0].mxu0
        %8579 = vdwg.mxu0
        %v8581 = vsel %vm4259, %v8513, 0
        %8583 = vmatprep.subr.bf16.mxu0 0
        %8584 = vmatpush1.bf16.msra.mxu0 %v8581
        %8585 = vmatprep.subr.bf16.mxu0 0
        %8586 = vmatpush1.bf16.msra.mxu0 0
        %8587 = vmatprep.subr.bf16.mxu0 0
        %8588 = vmatpush1.bf16.msra.mxu0 0
        %8589 = vmatprep.subr.bf16.mxu0 0
        %8590 = vmatpush1.bf16.msra.mxu0 0
        %8591 = vmatprep.subr.bf16.mxu0 0
        %8592 = vmatpush1.bf16.msra.mxu0 0
        %8593 = vmatprep.subr.bf16.mxu0 0
        %8594 = vmatpush1.bf16.msra.mxu0 0
        %8595 = vmatprep.subr.bf16.mxu0 0
        %8596 = vmatpush1.bf16.msra.mxu0 0
        %8597 = vmatprep.subr.bf16.mxu0 0
        %8598 = vmatpush1.bf16.msra.mxu0 0
        %8599 = vmatprep.subr.bf16.mxu0 0
        %8600 = vmatpush1.bf16.msra.mxu0 0
        %8601 = vmatprep.subr.bf16.mxu0 0
        %8602 = vmatpush1.bf16.msra.mxu0 0
        %8603 = vmatprep.subr.bf16.mxu0 0
        %8604 = vmatpush1.bf16.msra.mxu0 0
        %8605 = vmatprep.subr.bf16.mxu0 0
        %8606 = vmatpush1.bf16.msra.mxu0 0
        %8607 = vmatprep.subr.bf16.mxu0 0
        %8608 = vmatpush1.bf16.msra.mxu0 0
        %8609 = vmatprep.subr.bf16.mxu0 0
        %8610 = vmatpush1.bf16.msra.mxu0 0
        %8611 = vmatprep.subr.bf16.mxu0 0
        %8612 = vmatpush1.bf16.msra.mxu0 0
        %8613 = vmatprep.subr.bf16.mxu0 0
        %8614 = vmatpush1.bf16.msra.mxu0 0
        %8615 = vmatprep.mubr.bf16.mxu0 0
        %8616 = vmatmul.mubr.bf16.gmra.mrb[0].mxu0 %v8534
        %v8617 = vpop.f32.mrb[0].mxu0
        %v8618 = vadd.f32 0.0, %v8617
        %v8619 = vpop.f32.mrb[0].mxu0
        %v8620 = vpop.f32.mrb[0].mxu0
        %v8621 = vadd.f32 0.0, %v8620
        %v8622 = vpop.f32.mrb[0].mxu0
        %8623 = vdwg.mxu0
        %v8625 = vsel %vm4259, %v8514, 0
        %8627 = vmatprep.subr.bf16.mxu0 0
        %8628 = vmatpush1.bf16.msra.mxu0 %v8625
        %8629 = vmatprep.subr.bf16.mxu0 0
        %8630 = vmatpush1.bf16.msra.mxu0 0
        %8631 = vmatprep.subr.bf16.mxu0 0
        %8632 = vmatpush1.bf16.msra.mxu0 0
        %8633 = vmatprep.subr.bf16.mxu0 0
        %8634 = vmatpush1.bf16.msra.mxu0 0
        %8635 = vmatprep.subr.bf16.mxu0 0
        %8636 = vmatpush1.bf16.msra.mxu0 0
        %8637 = vmatprep.subr.bf16.mxu0 0
        %8638 = vmatpush1.bf16.msra.mxu0 0
        %8639 = vmatprep.subr.bf16.mxu0 0
        %8640 = vmatpush1.bf16.msra.mxu0 0
        %8641 = vmatprep.subr.bf16.mxu0 0
        %8642 = vmatpush1.bf16.msra.mxu0 0
        %8643 = vmatprep.subr.bf16.mxu0 0
        %8644 = vmatpush1.bf16.msra.mxu0 0
        %8645 = vmatprep.subr.bf16.mxu0 0
        %8646 = vmatpush1.bf16.msra.mxu0 0
        %8647 = vmatprep.subr.bf16.mxu0 0
        %8648 = vmatpush1.bf16.msra.mxu0 0
        %8649 = vmatprep.subr.bf16.mxu0 0
        %8650 = vmatpush1.bf16.msra.mxu0 0
        %8651 = vmatprep.subr.bf16.mxu0 0
        %8652 = vmatpush1.bf16.msra.mxu0 0
        %8653 = vmatprep.subr.bf16.mxu0 0
        %8654 = vmatpush1.bf16.msra.mxu0 0
        %8655 = vmatprep.subr.bf16.mxu0 0
        %8656 = vmatpush1.bf16.msra.mxu0 0
        %8657 = vmatprep.subr.bf16.mxu0 0
        %8658 = vmatpush1.bf16.msra.mxu0 0
        %8659 = vmatprep.mubr.bf16.mxu0 0
        %8660 = vmatmul.mubr.bf16.gmra.mrb[0].mxu0 %v8534
        %v8661 = vpop.f32.mrb[0].mxu0
        %v8662 = vadd.f32 0.0, %v8661
        %v8663 = vpop.f32.mrb[0].mxu0
        %v8664 = vpop.f32.mrb[0].mxu0
        %v8665 = vadd.f32 0.0, %v8664
        %v8666 = vpop.f32.mrb[0].mxu0
        %8667 = vdwg.mxu0
        %v8669 = vsel %vm4259, %v8515, 0
        %8671 = vmatprep.subr.bf16.mxu0 0
        %8672 = vmatpush1.bf16.msra.mxu0 %v8669
        %8673 = vmatprep.subr.bf16.mxu0 0
        %8674 = vmatpush1.bf16.msra.mxu0 0
        %8675 = vmatprep.subr.bf16.mxu0 0
        %8676 = vmatpush1.bf16.msra.mxu0 0
        %8677 = vmatprep.subr.bf16.mxu0 0
        %8678 = vmatpush1.bf16.msra.mxu0 0
        %8679 = vmatprep.subr.bf16.mxu0 0
        %8680 = vmatpush1.bf16.msra.mxu0 0
        %8681 = vmatprep.subr.bf16.mxu0 0
        %8682 = vmatpush1.bf16.msra.mxu0 0
        %8683 = vmatprep.subr.bf16.mxu0 0
        %8684 = vmatpush1.bf16.msra.mxu0 0
        %8685 = vmatprep.subr.bf16.mxu0 0
        %8686 = vmatpush1.bf16.msra.mxu0 0
        %8687 = vmatprep.subr.bf16.mxu0 0
        %8688 = vmatpush1.bf16.msra.mxu0 0
        %8689 = vmatprep.subr.bf16.mxu0 0
        %8690 = vmatpush1.bf16.msra.mxu0 0
        %8691 = vmatprep.subr.bf16.mxu0 0
        %8692 = vmatpush1.bf16.msra.mxu0 0
        %8693 = vmatprep.subr.bf16.mxu0 0
        %8694 = vmatpush1.bf16.msra.mxu0 0
        %8695 = vmatprep.subr.bf16.mxu0 0
        %8696 = vmatpush1.bf16.msra.mxu0 0
        %8697 = vmatprep.subr.bf16.mxu0 0
        %8698 = vmatpush1.bf16.msra.mxu0 0
        %8699 = vmatprep.subr.bf16.mxu0 0
        %8700 = vmatpush1.bf16.msra.mxu0 0
        %8701 = vmatprep.subr.bf16.mxu0 0
        %8702 = vmatpush1.bf16.msra.mxu0 0
        %8703 = vmatprep.mubr.bf16.mxu0 0
        %8704 = vmatmul.mubr.bf16.gmra.mrb[0].mxu0 %v8534
        %v8705 = vpop.f32.mrb[0].mxu0
        %v8706 = vadd.f32 0.0, %v8705
        %v8707 = vpop.f32.mrb[0].mxu0
        %v8708 = vpop.f32.mrb[0].mxu0
        %v8709 = vadd.f32 0.0, %v8708
        %v8710 = vpop.f32.mrb[0].mxu0
        %8711 = vdwg.mxu0
        %v8713 = vsel %vm4259, %v8516, 0
        %8715 = vmatprep.subr.bf16.mxu0 0
        %8716 = vmatpush1.bf16.msra.mxu0 %v8713
        %8717 = vmatprep.subr.bf16.mxu0 0
        %8718 = vmatpush1.bf16.msra.mxu0 0
        %8719 = vmatprep.subr.bf16.mxu0 0
        %8720 = vmatpush1.bf16.msra.mxu0 0
        %8721 = vmatprep.subr.bf16.mxu0 0
        %8722 = vmatpush1.bf16.msra.mxu0 0
        %8723 = vmatprep.subr.bf16.mxu0 0
        %8724 = vmatpush1.bf16.msra.mxu0 0
        %8725 = vmatprep.subr.bf16.mxu0 0
        %8726 = vmatpush1.bf16.msra.mxu0 0
        %8727 = vmatprep.subr.bf16.mxu0 0
        %8728 = vmatpush1.bf16.msra.mxu0 0
        %8729 = vmatprep.subr.bf16.mxu0 0
        %8730 = vmatpush1.bf16.msra.mxu0 0
        %8731 = vmatprep.subr.bf16.mxu0 0
        %8732 = vmatpush1.bf16.msra.mxu0 0
        %8733 = vmatprep.subr.bf16.mxu0 0
        %8734 = vmatpush1.bf16.msra.mxu0 0
        %8735 = vmatprep.subr.bf16.mxu0 0
        %8736 = vmatpush1.bf16.msra.mxu0 0
        %8737 = vmatprep.subr.bf16.mxu0 0
        %8738 = vmatpush1.bf16.msra.mxu0 0
        %8739 = vmatprep.subr.bf16.mxu0 0
        %8740 = vmatpush1.bf16.msra.mxu0 0
        %8741 = vmatprep.subr.bf16.mxu0 0
        %8742 = vmatpush1.bf16.msra.mxu0 0
        %8743 = vmatprep.subr.bf16.mxu0 0
        %8744 = vmatpush1.bf16.msra.mxu0 0
        %8745 = vmatprep.subr.bf16.mxu0 0
        %8746 = vmatpush1.bf16.msra.mxu0 0
        %8747 = vmatprep.mubr.bf16.mxu0 0
        %8748 = vmatmul.mubr.bf16.gmra.mrb[0].mxu0 %v8534
        %v8749 = vpop.f32.mrb[0].mxu0
        %v8750 = vadd.f32 0.0, %v8749
        %v8751 = vpop.f32.mrb[0].mxu0
        %v8752 = vpop.f32.mrb[0].mxu0
        %v8753 = vadd.f32 0.0, %v8752
        %v8754 = vpop.f32.mrb[0].mxu0
        %8755 = vdwg.mxu0
        %v8757 = vsel %vm4259, %v8517, 0
        %8759 = vmatprep.subr.bf16.mxu0 0
        %8760 = vmatpush1.bf16.msra.mxu0 %v8757
        %8761 = vmatprep.subr.bf16.mxu0 0
        %8762 = vmatpush1.bf16.msra.mxu0 0
        %8763 = vmatprep.subr.bf16.mxu0 0
        %8764 = vmatpush1.bf16.msra.mxu0 0
        %8765 = vmatprep.subr.bf16.mxu0 0
        %8766 = vmatpush1.bf16.msra.mxu0 0
        %8767 = vmatprep.subr.bf16.mxu0 0
        %8768 = vmatpush1.bf16.msra.mxu0 0
        %8769 = vmatprep.subr.bf16.mxu0 0
        %8770 = vmatpush1.bf16.msra.mxu0 0
        %8771 = vmatprep.subr.bf16.mxu0 0
        %8772 = vmatpush1.bf16.msra.mxu0 0
        %8773 = vmatprep.subr.bf16.mxu0 0
        %8774 = vmatpush1.bf16.msra.mxu0 0
        %8775 = vmatprep.subr.bf16.mxu0 0
        %8776 = vmatpush1.bf16.msra.mxu0 0
        %8777 = vmatprep.subr.bf16.mxu0 0
        %8778 = vmatpush1.bf16.msra.mxu0 0
        %8779 = vmatprep.subr.bf16.mxu0 0
        %8780 = vmatpush1.bf16.msra.mxu0 0
        %8781 = vmatprep.subr.bf16.mxu0 0
        %8782 = vmatpush1.bf16.msra.mxu0 0
        %8783 = vmatprep.subr.bf16.mxu0 0
        %8784 = vmatpush1.bf16.msra.mxu0 0
        %8785 = vmatprep.subr.bf16.mxu0 0
        %8786 = vmatpush1.bf16.msra.mxu0 0
        %8787 = vmatprep.subr.bf16.mxu0 0
        %8788 = vmatpush1.bf16.msra.mxu0 0
        %8789 = vmatprep.subr.bf16.mxu0 0
        %8790 = vmatpush1.bf16.msra.mxu0 0
        %8791 = vmatprep.mubr.bf16.mxu0 0
        %8792 = vmatmul.mubr.bf16.gmra.mrb[0].mxu0 %v8534
        %v8793 = vpop.f32.mrb[0].mxu0
        %v8794 = vadd.f32 0.0, %v8793
        %v8795 = vpop.f32.mrb[0].mxu0
        %v8796 = vpop.f32.mrb[0].mxu0
        %v8797 = vadd.f32 0.0, %v8796
        %v8798 = vpop.f32.mrb[0].mxu0
        %8799 = vdwg.mxu0
        %v8801 = vsel %vm4259, %v8518, 0
        %8803 = vmatprep.subr.bf16.mxu0 0
        %8804 = vmatpush1.bf16.msra.mxu0 %v8801
        %8805 = vmatprep.subr.bf16.mxu0 0
        %8806 = vmatpush1.bf16.msra.mxu0 0
        %8807 = vmatprep.subr.bf16.mxu0 0
        %8808 = vmatpush1.bf16.msra.mxu0 0
        %8809 = vmatprep.subr.bf16.mxu0 0
        %8810 = vmatpush1.bf16.msra.mxu0 0
        %8811 = vmatprep.subr.bf16.mxu0 0
        %8812 = vmatpush1.bf16.msra.mxu0 0
        %8813 = vmatprep.subr.bf16.mxu0 0
        %8814 = vmatpush1.bf16.msra.mxu0 0
        %8815 = vmatprep.subr.bf16.mxu0 0
        %8816 = vmatpush1.bf16.msra.mxu0 0
        %8817 = vmatprep.subr.bf16.mxu0 0
        %8818 = vmatpush1.bf16.msra.mxu0 0
        %8819 = vmatprep.subr.bf16.mxu0 0
        %8820 = vmatpush1.bf16.msra.mxu0 0
        %8821 = vmatprep.subr.bf16.mxu0 0
        %8822 = vmatpush1.bf16.msra.mxu0 0
        %8823 = vmatprep.subr.bf16.mxu0 0
        %8824 = vmatpush1.bf16.msra.mxu0 0
        %8825 = vmatprep.subr.bf16.mxu0 0
        %8826 = vmatpush1.bf16.msra.mxu0 0
        %8827 = vmatprep.subr.bf16.mxu0 0
        %8828 = vmatpush1.bf16.msra.mxu0 0
        %8829 = vmatprep.subr.bf16.mxu0 0
        %8830 = vmatpush1.bf16.msra.mxu0 0
        %8831 = vmatprep.subr.bf16.mxu0 0
        %8832 = vmatpush1.bf16.msra.mxu0 0
        %8833 = vmatprep.subr.bf16.mxu0 0
        %8834 = vmatpush1.bf16.msra.mxu0 0
        %8835 = vmatprep.mubr.bf16.mxu0 0
        %8836 = vmatmul.mubr.bf16.gmra.mrb[0].mxu0 %v8534
        %v8837 = vpop.f32.mrb[0].mxu0
        %v8838 = vadd.f32 0.0, %v8837
        %v8839 = vpop.f32.mrb[0].mxu0
        %v8840 = vpop.f32.mrb[0].mxu0
        %v8841 = vadd.f32 0.0, %v8840
        %v8842 = vpop.f32.mrb[0].mxu0
        %8843 = vdwg.mxu0
        %v8845 = vsel %vm4259, %v8519, 0
        %8847 = vmatprep.subr.bf16.mxu0 0
        %8848 = vmatpush1.bf16.msra.mxu0 %v8845
        %8849 = vmatprep.subr.bf16.mxu0 0
        %8850 = vmatpush1.bf16.msra.mxu0 0
        %8851 = vmatprep.subr.bf16.mxu0 0
        %8852 = vmatpush1.bf16.msra.mxu0 0
        %8853 = vmatprep.subr.bf16.mxu0 0
        %8854 = vmatpush1.bf16.msra.mxu0 0
        %8855 = vmatprep.subr.bf16.mxu0 0
        %8856 = vmatpush1.bf16.msra.mxu0 0
        %8857 = vmatprep.subr.bf16.mxu0 0
        %8858 = vmatpush1.bf16.msra.mxu0 0
        %8859 = vmatprep.subr.bf16.mxu0 0
        %8860 = vmatpush1.bf16.msra.mxu0 0
        %8861 = vmatprep.subr.bf16.mxu0 0
        %8862 = vmatpush1.bf16.msra.mxu0 0
        %8863 = vmatprep.subr.bf16.mxu0 0
        %8864 = vmatpush1.bf16.msra.mxu0 0
        %8865 = vmatprep.subr.bf16.mxu0 0
        %8866 = vmatpush1.bf16.msra.mxu0 0
        %8867 = vmatprep.subr.bf16.mxu0 0
        %8868 = vmatpush1.bf16.msra.mxu0 0
        %8869 = vmatprep.subr.bf16.mxu0 0
        %8870 = vmatpush1.bf16.msra.mxu0 0
        %8871 = vmatprep.subr.bf16.mxu0 0
        %8872 = vmatpush1.bf16.msra.mxu0 0
        %8873 = vmatprep.subr.bf16.mxu0 0
        %8874 = vmatpush1.bf16.msra.mxu0 0
        %8875 = vmatprep.subr.bf16.mxu0 0
        %8876 = vmatpush1.bf16.msra.mxu0 0
        %8877 = vmatprep.subr.bf16.mxu0 0
        %8878 = vmatpush1.bf16.msra.mxu0 0
        %8879 = vmatprep.mubr.bf16.mxu0 0
        %8880 = vmatmul.mubr.bf16.gmra.mrb[0].mxu0 %v8534
        %v8881 = vpop.f32.mrb[0].mxu0
        %v8882 = vadd.f32 0.0, %v8881
        %v8883 = vpop.f32.mrb[0].mxu0
        %v8884 = vpop.f32.mrb[0].mxu0
        %v8885 = vadd.f32 0.0, %v8884
        %v8886 = vpop.f32.mrb[0].mxu0
        %8887 = vdwg.mxu0
        %v8889 = vsel %vm4259, %v8520, 0
        %8891 = vmatprep.subr.bf16.mxu0 0
        %8892 = vmatpush1.bf16.msra.mxu0 %v8889
        %8893 = vmatprep.subr.bf16.mxu0 0
        %8894 = vmatpush1.bf16.msra.mxu0 0
        %8895 = vmatprep.subr.bf16.mxu0 0
        %8896 = vmatpush1.bf16.msra.mxu0 0
        %8897 = vmatprep.subr.bf16.mxu0 0
        %8898 = vmatpush1.bf16.msra.mxu0 0
        %8899 = vmatprep.subr.bf16.mxu0 0
        %8900 = vmatpush1.bf16.msra.mxu0 0
        %8901 = vmatprep.subr.bf16.mxu0 0
        %8902 = vmatpush1.bf16.msra.mxu0 0
        %8903 = vmatprep.subr.bf16.mxu0 0
        %8904 = vmatpush1.bf16.msra.mxu0 0
        %8905 = vmatprep.subr.bf16.mxu0 0
        %8906 = vmatpush1.bf16.msra.mxu0 0
        %8907 = vmatprep.subr.bf16.mxu0 0
        %8908 = vmatpush1.bf16.msra.mxu0 0
        %8909 = vmatprep.subr.bf16.mxu0 0
        %8910 = vmatpush1.bf16.msra.mxu0 0
        %8911 = vmatprep.subr.bf16.mxu0 0
        %8912 = vmatpush1.bf16.msra.mxu0 0
        %8913 = vmatprep.subr.bf16.mxu0 0
        %8914 = vmatpush1.bf16.msra.mxu0 0
        %8915 = vmatprep.subr.bf16.mxu0 0
        %8916 = vmatpush1.bf16.msra.mxu0 0
        %8917 = vmatprep.subr.bf16.mxu0 0
        %8918 = vmatpush1.bf16.msra.mxu0 0
        %8919 = vmatprep.subr.bf16.mxu0 0
        %8920 = vmatpush1.bf16.msra.mxu0 0
        %8921 = vmatprep.subr.bf16.mxu0 0
        %8922 = vmatpush1.bf16.msra.mxu0 0
        %8923 = vmatprep.mubr.bf16.mxu0 0
        %8924 = vmatmul.mubr.bf16.gmra.mrb[0].mxu0 %v8534
        %v8925 = vpop.f32.mrb[0].mxu0
        %v8926 = vadd.f32 0.0, %v8925
        %v8927 = vpop.f32.mrb[0].mxu0
        %v8928 = vpop.f32.mrb[0].mxu0
        %v8929 = vadd.f32 0.0, %v8928
        %v8930 = vpop.f32.mrb[0].mxu0
        %8931 = vdwg.mxu0
        %v8933 = vsel %vm4259, %v8521, 0
        %8935 = vmatprep.subr.bf16.mxu0 0
        %8936 = vmatpush1.bf16.msra.mxu0 %v8933
        %8937 = vmatprep.subr.bf16.mxu0 0
        %8938 = vmatpush1.bf16.msra.mxu0 0
        %8939 = vmatprep.subr.bf16.mxu0 0
        %8940 = vmatpush1.bf16.msra.mxu0 0
        %8941 = vmatprep.subr.bf16.mxu0 0
        %8942 = vmatpush1.bf16.msra.mxu0 0
        %8943 = vmatprep.subr.bf16.mxu0 0
        %8944 = vmatpush1.bf16.msra.mxu0 0
        %8945 = vmatprep.subr.bf16.mxu0 0
        %8946 = vmatpush1.bf16.msra.mxu0 0
        %8947 = vmatprep.subr.bf16.mxu0 0
        %8948 = vmatpush1.bf16.msra.mxu0 0
        %8949 = vmatprep.subr.bf16.mxu0 0
        %8950 = vmatpush1.bf16.msra.mxu0 0
        %8951 = vmatprep.subr.bf16.mxu0 0
        %8952 = vmatpush1.bf16.msra.mxu0 0
        %8953 = vmatprep.subr.bf16.mxu0 0
        %8954 = vmatpush1.bf16.msra.mxu0 0
        %8955 = vmatprep.subr.bf16.mxu0 0
        %8956 = vmatpush1.bf16.msra.mxu0 0
        %8957 = vmatprep.subr.bf16.mxu0 0
        %8958 = vmatpush1.bf16.msra.mxu0 0
        %8959 = vmatprep.subr.bf16.mxu0 0
        %8960 = vmatpush1.bf16.msra.mxu0 0
        %8961 = vmatprep.subr.bf16.mxu0 0
        %8962 = vmatpush1.bf16.msra.mxu0 0
        %8963 = vmatprep.subr.bf16.mxu0 0
        %8964 = vmatpush1.bf16.msra.mxu0 0
        %8965 = vmatprep.subr.bf16.mxu0 0
        %8966 = vmatpush1.bf16.msra.mxu0 0
        %8967 = vmatprep.mubr.bf16.mxu0 0
        %8968 = vmatmul.mubr.bf16.gmra.mrb[0].mxu0 %v8534
        %v8969 = vpop.f32.mrb[0].mxu0
        %v8970 = vadd.f32 0.0, %v8969
        %v8971 = vpop.f32.mrb[0].mxu0
        %v8972 = vpop.f32.mrb[0].mxu0
        %v8973 = vadd.f32 0.0, %v8972
        %v8974 = vpop.f32.mrb[0].mxu0
        %8975 = vdwg.mxu0
        %v8977 = vsel %vm4259, %v8522, 0
        %8979 = vmatprep.subr.bf16.mxu0 0
        %8980 = vmatpush1.bf16.msra.mxu0 %v8977
        %8981 = vmatprep.subr.bf16.mxu0 0
        %8982 = vmatpush1.bf16.msra.mxu0 0
        %8983 = vmatprep.subr.bf16.mxu0 0
        %8984 = vmatpush1.bf16.msra.mxu0 0
        %8985 = vmatprep.subr.bf16.mxu0 0
        %8986 = vmatpush1.bf16.msra.mxu0 0
        %8987 = vmatprep.subr.bf16.mxu0 0
        %8988 = vmatpush1.bf16.msra.mxu0 0
        %8989 = vmatprep.subr.bf16.mxu0 0
        %8990 = vmatpush1.bf16.msra.mxu0 0
        %8991 = vmatprep.subr.bf16.mxu0 0
        %8992 = vmatpush1.bf16.msra.mxu0 0
        %8993 = vmatprep.subr.bf16.mxu0 0
        %8994 = vmatpush1.bf16.msra.mxu0 0
        %8995 = vmatprep.subr.bf16.mxu0 0
        %8996 = vmatpush1.bf16.msra.mxu0 0
        %8997 = vmatprep.subr.bf16.mxu0 0
        %8998 = vmatpush1.bf16.msra.mxu0 0
        %8999 = vmatprep.subr.bf16.mxu0 0
        %9000 = vmatpush1.bf16.msra.mxu0 0
        %9001 = vmatprep.subr.bf16.mxu0 0
        %9002 = vmatpush1.bf16.msra.mxu0 0
        %9003 = vmatprep.subr.bf16.mxu0 0
        %9004 = vmatpush1.bf16.msra.mxu0 0
        %9005 = vmatprep.subr.bf16.mxu0 0
        %9006 = vmatpush1.bf16.msra.mxu0 0
        %9007 = vmatprep.subr.bf16.mxu0 0
        %9008 = vmatpush1.bf16.msra.mxu0 0
        %9009 = vmatprep.subr.bf16.mxu0 0
        %9010 = vmatpush1.bf16.msra.mxu0 0
        %9011 = vmatprep.mubr.bf16.mxu0 0
        %9012 = vmatmul.mubr.bf16.gmra.mrb[0].mxu0 %v8534
        %v9013 = vpop.f32.mrb[0].mxu0
        %v9014 = vadd.f32 0.0, %v9013
        %v9015 = vpop.f32.mrb[0].mxu0
        %v9016 = vpop.f32.mrb[0].mxu0
        %v9017 = vadd.f32 0.0, %v9016
        %v9018 = vpop.f32.mrb[0].mxu0
        %9019 = vdwg.mxu0
        %v9021 = vsel %vm4259, %v8523, 0
        %9023 = vmatprep.subr.bf16.mxu0 0
        %9024 = vmatpush1.bf16.msra.mxu0 %v9021
        %9025 = vmatprep.subr.bf16.mxu0 0
        %9026 = vmatpush1.bf16.msra.mxu0 0
        %9027 = vmatprep.subr.bf16.mxu0 0
        %9028 = vmatpush1.bf16.msra.mxu0 0
        %9029 = vmatprep.subr.bf16.mxu0 0
        %9030 = vmatpush1.bf16.msra.mxu0 0
        %9031 = vmatprep.subr.bf16.mxu0 0
        %9032 = vmatpush1.bf16.msra.mxu0 0
        %9033 = vmatprep.subr.bf16.mxu0 0
        %9034 = vmatpush1.bf16.msra.mxu0 0
        %9035 = vmatprep.subr.bf16.mxu0 0
        %9036 = vmatpush1.bf16.msra.mxu0 0
        %9037 = vmatprep.subr.bf16.mxu0 0
        %9038 = vmatpush1.bf16.msra.mxu0 0
        %9039 = vmatprep.subr.bf16.mxu0 0
        %9040 = vmatpush1.bf16.msra.mxu0 0
        %9041 = vmatprep.subr.bf16.mxu0 0
        %9042 = vmatpush1.bf16.msra.mxu0 0
        %9043 = vmatprep.subr.bf16.mxu0 0
        %9044 = vmatpush1.bf16.msra.mxu0 0
        %9045 = vmatprep.subr.bf16.mxu0 0
        %9046 = vmatpush1.bf16.msra.mxu0 0
        %9047 = vmatprep.subr.bf16.mxu0 0
        %9048 = vmatpush1.bf16.msra.mxu0 0
        %9049 = vmatprep.subr.bf16.mxu0 0
        %9050 = vmatpush1.bf16.msra.mxu0 0
        %9051 = vmatprep.subr.bf16.mxu0 0
        %9052 = vmatpush1.bf16.msra.mxu0 0
        %9053 = vmatprep.subr.bf16.mxu0 0
        %9054 = vmatpush1.bf16.msra.mxu0 0
        %9055 = vmatprep.mubr.bf16.mxu0 0
        %9056 = vmatmul.mubr.bf16.gmra.mrb[0].mxu0 %v8534
        %v9057 = vpop.f32.mrb[0].mxu0
        %v9058 = vadd.f32 0.0, %v9057
        %v9059 = vpop.f32.mrb[0].mxu0
        %v9060 = vpop.f32.mrb[0].mxu0
        %v9061 = vadd.f32 0.0, %v9060
        %v9062 = vpop.f32.mrb[0].mxu0
        %9063 = vdwg.mxu0
        %v9065 = vsel %vm4259, %v8524, 0
        %9067 = vmatprep.subr.bf16.mxu0 0
        %9068 = vmatpush1.bf16.msra.mxu0 %v9065
        %9069 = vmatprep.subr.bf16.mxu0 0
        %9070 = vmatpush1.bf16.msra.mxu0 0
        %9071 = vmatprep.subr.bf16.mxu0 0
        %9072 = vmatpush1.bf16.msra.mxu0 0
        %9073 = vmatprep.subr.bf16.mxu0 0
        %9074 = vmatpush1.bf16.msra.mxu0 0
        %9075 = vmatprep.subr.bf16.mxu0 0
        %9076 = vmatpush1.bf16.msra.mxu0 0
        %9077 = vmatprep.subr.bf16.mxu0 0
        %9078 = vmatpush1.bf16.msra.mxu0 0
        %9079 = vmatprep.subr.bf16.mxu0 0
        %9080 = vmatpush1.bf16.msra.mxu0 0
        %9081 = vmatprep.subr.bf16.mxu0 0
        %9082 = vmatpush1.bf16.msra.mxu0 0
        %9083 = vmatprep.subr.bf16.mxu0 0
        %9084 = vmatpush1.bf16.msra.mxu0 0
        %9085 = vmatprep.subr.bf16.mxu0 0
        %9086 = vmatpush1.bf16.msra.mxu0 0
        %9087 = vmatprep.subr.bf16.mxu0 0
        %9088 = vmatpush1.bf16.msra.mxu0 0
        %9089 = vmatprep.subr.bf16.mxu0 0
        %9090 = vmatpush1.bf16.msra.mxu0 0
        %9091 = vmatprep.subr.bf16.mxu0 0
        %9092 = vmatpush1.bf16.msra.mxu0 0
        %9093 = vmatprep.subr.bf16.mxu0 0
        %9094 = vmatpush1.bf16.msra.mxu0 0
        %9095 = vmatprep.subr.bf16.mxu0 0
        %9096 = vmatpush1.bf16.msra.mxu0 0
        %9097 = vmatprep.subr.bf16.mxu0 0
        %9098 = vmatpush1.bf16.msra.mxu0 0
        %9099 = vmatprep.mubr.bf16.mxu0 0
        %9100 = vmatmul.mubr.bf16.gmra.mrb[0].mxu0 %v8534
        %v9101 = vpop.f32.mrb[0].mxu0
        %v9102 = vadd.f32 0.0, %v9101
        %v9103 = vpop.f32.mrb[0].mxu0
        %v9104 = vpop.f32.mrb[0].mxu0
        %v9105 = vadd.f32 0.0, %v9104
        %v9106 = vpop.f32.mrb[0].mxu0
        %9107 = vdwg.mxu0
        %v9109 = vsel %vm4259, %v8525, 0
        %9111 = vmatprep.subr.bf16.mxu0 0
        %9112 = vmatpush1.bf16.msra.mxu0 %v9109
        %9113 = vmatprep.subr.bf16.mxu0 0
        %9114 = vmatpush1.bf16.msra.mxu0 0
        %9115 = vmatprep.subr.bf16.mxu0 0
        %9116 = vmatpush1.bf16.msra.mxu0 0
        %9117 = vmatprep.subr.bf16.mxu0 0
        %9118 = vmatpush1.bf16.msra.mxu0 0
        %9119 = vmatprep.subr.bf16.mxu0 0
        %9120 = vmatpush1.bf16.msra.mxu0 0
        %9121 = vmatprep.subr.bf16.mxu0 0
        %9122 = vmatpush1.bf16.msra.mxu0 0
        %9123 = vmatprep.subr.bf16.mxu0 0
        %9124 = vmatpush1.bf16.msra.mxu0 0
        %9125 = vmatprep.subr.bf16.mxu0 0
        %9126 = vmatpush1.bf16.msra.mxu0 0
        %9127 = vmatprep.subr.bf16.mxu0 0
        %9128 = vmatpush1.bf16.msra.mxu0 0
        %9129 = vmatprep.subr.bf16.mxu0 0
        %9130 = vmatpush1.bf16.msra.mxu0 0
        %9131 = vmatprep.subr.bf16.mxu0 0
        %9132 = vmatpush1.bf16.msra.mxu0 0
        %9133 = vmatprep.subr.bf16.mxu0 0
        %9134 = vmatpush1.bf16.msra.mxu0 0
        %9135 = vmatprep.subr.bf16.mxu0 0
        %9136 = vmatpush1.bf16.msra.mxu0 0
        %9137 = vmatprep.subr.bf16.mxu0 0
        %9138 = vmatpush1.bf16.msra.mxu0 0
        %9139 = vmatprep.subr.bf16.mxu0 0
        %9140 = vmatpush1.bf16.msra.mxu0 0
        %9141 = vmatprep.subr.bf16.mxu0 0
        %9142 = vmatpush1.bf16.msra.mxu0 0
        %9143 = vmatprep.mubr.bf16.mxu0 0
        %9144 = vmatmul.mubr.bf16.gmra.mrb[0].mxu0 %v8534
        %v9145 = vpop.f32.mrb[0].mxu0
        %v9146 = vadd.f32 0.0, %v9145
        %v9147 = vpop.f32.mrb[0].mxu0
        %v9148 = vpop.f32.mrb[0].mxu0
        %v9149 = vadd.f32 0.0, %v9148
        %v9150 = vpop.f32.mrb[0].mxu0
        %9151 = vdwg.mxu0
        %v9153 = vsel %vm4259, %v8526, 0
        %9155 = vmatprep.subr.bf16.mxu0 0
        %9156 = vmatpush1.bf16.msra.mxu0 %v9153
        %9157 = vmatprep.subr.bf16.mxu0 0
        %9158 = vmatpush1.bf16.msra.mxu0 0
        %9159 = vmatprep.subr.bf16.mxu0 0
        %9160 = vmatpush1.bf16.msra.mxu0 0
        %9161 = vmatprep.subr.bf16.mxu0 0
        %9162 = vmatpush1.bf16.msra.mxu0 0
        %9163 = vmatprep.subr.bf16.mxu0 0
        %9164 = vmatpush1.bf16.msra.mxu0 0
        %9165 = vmatprep.subr.bf16.mxu0 0
        %9166 = vmatpush1.bf16.msra.mxu0 0
        %9167 = vmatprep.subr.bf16.mxu0 0
        %9168 = vmatpush1.bf16.msra.mxu0 0
        %9169 = vmatprep.subr.bf16.mxu0 0
        %9170 = vmatpush1.bf16.msra.mxu0 0
        %9171 = vmatprep.subr.bf16.mxu0 0
        %9172 = vmatpush1.bf16.msra.mxu0 0
        %9173 = vmatprep.subr.bf16.mxu0 0
        %9174 = vmatpush1.bf16.msra.mxu0 0
        %9175 = vmatprep.subr.bf16.mxu0 0
        %9176 = vmatpush1.bf16.msra.mxu0 0
        %9177 = vmatprep.subr.bf16.mxu0 0
        %9178 = vmatpush1.bf16.msra.mxu0 0
        %9179 = vmatprep.subr.bf16.mxu0 0
        %9180 = vmatpush1.bf16.msra.mxu0 0
        %9181 = vmatprep.subr.bf16.mxu0 0
        %9182 = vmatpush1.bf16.msra.mxu0 0
        %9183 = vmatprep.subr.bf16.mxu0 0
        %9184 = vmatpush1.bf16.msra.mxu0 0
        %9185 = vmatprep.subr.bf16.mxu0 0
        %9186 = vmatpush1.bf16.msra.mxu0 0
        %9187 = vmatprep.mubr.bf16.mxu0 0
        %9188 = vmatmul.mubr.bf16.gmra.mrb[0].mxu0 %v8534
        %v9189 = vpop.f32.mrb[0].mxu0
        %v9190 = vadd.f32 0.0, %v9189
        %v9191 = vpop.f32.mrb[0].mxu0
        %v9192 = vpop.f32.mrb[0].mxu0
        %v9193 = vadd.f32 0.0, %v9192
        %v9194 = vpop.f32.mrb[0].mxu0
        %9195 = vdwg.mxu0
        %v9197 = vsel %vm4259, %v8527, 0
        %9199 = vmatprep.subr.bf16.mxu0 0
        %9200 = vmatpush1.bf16.msra.mxu0 %v9197
        %9201 = vmatprep.subr.bf16.mxu0 0
        %9202 = vmatpush1.bf16.msra.mxu0 0
        %9203 = vmatprep.subr.bf16.mxu0 0
        %9204 = vmatpush1.bf16.msra.mxu0 0
        %9205 = vmatprep.subr.bf16.mxu0 0
        %9206 = vmatpush1.bf16.msra.mxu0 0
        %9207 = vmatprep.subr.bf16.mxu0 0
        %9208 = vmatpush1.bf16.msra.mxu0 0
        %9209 = vmatprep.subr.bf16.mxu0 0
        %9210 = vmatpush1.bf16.msra.mxu0 0
        %9211 = vmatprep.subr.bf16.mxu0 0
        %9212 = vmatpush1.bf16.msra.mxu0 0
        %9213 = vmatprep.subr.bf16.mxu0 0
        %9214 = vmatpush1.bf16.msra.mxu0 0
        %9215 = vmatprep.subr.bf16.mxu0 0
        %9216 = vmatpush1.bf16.msra.mxu0 0
        %9217 = vmatprep.subr.bf16.mxu0 0
        %9218 = vmatpush1.bf16.msra.mxu0 0
        %9219 = vmatprep.subr.bf16.mxu0 0
        %9220 = vmatpush1.bf16.msra.mxu0 0
        %9221 = vmatprep.subr.bf16.mxu0 0
        %9222 = vmatpush1.bf16.msra.mxu0 0
        %9223 = vmatprep.subr.bf16.mxu0 0
        %9224 = vmatpush1.bf16.msra.mxu0 0
        %9225 = vmatprep.subr.bf16.mxu0 0
        %9226 = vmatpush1.bf16.msra.mxu0 0
        %9227 = vmatprep.subr.bf16.mxu0 0
        %9228 = vmatpush1.bf16.msra.mxu0 0
        %9229 = vmatprep.subr.bf16.mxu0 0
        %9230 = vmatpush1.bf16.msra.mxu0 0
        %9231 = vmatprep.mubr.bf16.mxu0 0
        %9232 = vmatmul.mubr.bf16.gmra.mrb[0].mxu0 %v8534
        %v9233 = vpop.f32.mrb[0].mxu0
        %v9234 = vadd.f32 0.0, %v9233
        %v9235 = vpop.f32.mrb[0].mxu0
        %v9236 = vpop.f32.mrb[0].mxu0
        %v9237 = vadd.f32 0.0, %v9236
        %v9238 = vpop.f32.mrb[0].mxu0
        %9239 = vdwg.mxu0
        %v9240 = vadd.f32 %v4942, %v8574
        %v9241 = vadd.f32 %v4943, %v8577
        %v9242 = vadd.f32 %v4944, %v8618
        %v9243 = vadd.f32 %v4945, %v8621
        %v9244 = vadd.f32 %v4946, %v8662
        %v9245 = vadd.f32 %v4947, %v8665
        %v9246 = vadd.f32 %v4948, %v8706
        %v9247 = vadd.f32 %v4949, %v8709
        %v9248 = vadd.f32 %v4950, %v8750
        %v9249 = vadd.f32 %v4951, %v8753
        %v9250 = vadd.f32 %v4952, %v8794
        %v9251 = vadd.f32 %v4953, %v8797
        %v9252 = vadd.f32 %v4954, %v8838
        %v9253 = vadd.f32 %v4955, %v8841
        %v9254 = vadd.f32 %v4956, %v8882
        %v9255 = vadd.f32 %v4957, %v8885
        %v9256 = vadd.f32 %v4958, %v8926
        %v9257 = vadd.f32 %v4959, %v8929
        %v9258 = vadd.f32 %v4960, %v8970
        %v9259 = vadd.f32 %v4961, %v8973
        %v9260 = vadd.f32 %v4962, %v9014
        %v9261 = vadd.f32 %v4963, %v9017
        %v9262 = vadd.f32 %v4964, %v9058
        %v9263 = vadd.f32 %v4965, %v9061
        %v9264 = vadd.f32 %v4966, %v9102
        %v9265 = vadd.f32 %v4967, %v9105
        %v9266 = vadd.f32 %v4968, %v9146
        %v9267 = vadd.f32 %v4969, %v9149
        %v9268 = vadd.f32 %v4970, %v9190
        %v9269 = vadd.f32 %v4971, %v9193
        %v9270 = vadd.f32 %v4972, %v9234
        %v9271 = vadd.f32 %v4973, %v9237
        %v9272 = vld [vmem:[%s6] sm:$0xf]
        %v9273 = vld [vmem:[%s6 + $0x4] sm:$0xf]
        %v9274 = vld [vmem:[%s6 + $0x8] sm:$0x3]
        %v9275 = vpack.c.bf16 %v9241, %v9240
        %v9276 = vpack.c.bf16 %v9243, %v9242
        %v9277 = vpack.c.bf16 %v9245, %v9244
        %v9278 = vpack.c.bf16 %v9247, %v9246
        %v9279 = vpack.c.bf16 %v9249, %v9248
        %v9280 = vpack.c.bf16 %v9251, %v9250
        %v9281 = vpack.c.bf16 %v9253, %v9252
        %v9282 = vpack.c.bf16 %v9255, %v9254
        %v9283 = vpack.c.bf16 %v9257, %v9256
        %v9284 = vpack.c.bf16 %v9259, %v9258
        %v9285 = vpack.c.bf16 %v9261, %v9260
        %v9286 = vpack.c.bf16 %v9263, %v9262
        %v9287 = vpack.c.bf16 %v9265, %v9264
        %v9288 = vpack.c.bf16 %v9267, %v9266
        %v9289 = vpack.c.bf16 %v9269, %v9268
        %v9290 = vpack.c.bf16 %v9271, %v9270
        %v9291 = vld [vmem:[%s7] sm:$0x1]
        %v9292 = vld [vmem:[%s7 + $0x1] sm:$0x1]
        %v9293 = vld [vmem:[%s7 + $0x2] sm:$0x1]
        %v9294 = vld [vmem:[%s7 + $0x3] sm:$0x1]
        %v9295 = vld [vmem:[%s7 + $0x4] sm:$0x1]
        %v9296 = vld [vmem:[%s7 + $0x5] sm:$0x1]
        %v9297 = vld [vmem:[%s7 + $0x6] sm:$0x1]
        %v9298 = vld [vmem:[%s7 + $0x7] sm:$0x1]
        %v9299 = vld [vmem:[%s7 + $0x8] sm:$0x1]
        %v9300 = vld [vmem:[%s7 + $0x9] sm:$0x1]
        %v9301 = vld [vmem:[%s7 + $0xa] sm:$0x1]
        %v9302 = vld [vmem:[%s7 + $0xb] sm:$0x1]
        %v9303 = vld [vmem:[%s7 + $0xc] sm:$0x1]
        %v9304 = vld [vmem:[%s7 + $0xd] sm:$0x1]
        %v9305 = vld [vmem:[%s7 + $0xe] sm:$0x1]
        %v9306 = vld [vmem:[%s7 + $0xf] sm:$0x1]
        %v9307 = vld [vmem:[%s7 + $0x10] sm:$0x1]
        %v9308 = vld [vmem:[%s7 + $0x11] sm:$0x1]
        %v9309 = vld [vmem:[%s7 + $0x12] sm:$0x1]
        %v9310 = vld [vmem:[%s7 + $0x13] sm:$0x1]
        %v9331 = vlaneseq
        %v9332 = vshrl.u32 %v9331, 7
        %v9333 = vsub.s32 0, %v9332
        %v9334 = vrot.slane %v9291, %v9333
        %v9335 = vlaneseq
        %v9336 = vshrl.u32 %v9335, 7
        %v9337 = vsub.s32 0, %v9336
        %v9338 = vrot.slane %v9292, %v9337
        %v9339 = vlaneseq
        %v9340 = vshrl.u32 %v9339, 7
        %v9341 = vsub.s32 0, %v9340
        %v9342 = vrot.slane %v9293, %v9341
        %v9343 = vlaneseq
        %v9344 = vshrl.u32 %v9343, 7
        %v9345 = vsub.s32 0, %v9344
        %v9346 = vrot.slane %v9294, %v9345
        %v9347 = vlaneseq
        %v9348 = vshrl.u32 %v9347, 7
        %v9349 = vsub.s32 0, %v9348
        %v9350 = vrot.slane %v9295, %v9349
        %v9351 = vlaneseq
        %v9352 = vshrl.u32 %v9351, 7
        %v9353 = vsub.s32 0, %v9352
        %v9354 = vrot.slane %v9296, %v9353
        %v9355 = vlaneseq
        %v9356 = vshrl.u32 %v9355, 7
        %v9357 = vsub.s32 0, %v9356
        %v9358 = vrot.slane %v9297, %v9357
        %v9359 = vlaneseq
        %v9360 = vshrl.u32 %v9359, 7
        %v9361 = vsub.s32 0, %v9360
        %v9362 = vrot.slane %v9298, %v9361
        %v9363 = vlaneseq
        %v9364 = vshrl.u32 %v9363, 7
        %v9365 = vsub.s32 0, %v9364
        %v9366 = vrot.slane %v9299, %v9365
        %v9367 = vlaneseq
        %v9368 = vshrl.u32 %v9367, 7
        %v9369 = vsub.s32 0, %v9368
        %v9370 = vrot.slane %v9300, %v9369
        %v9371 = vlaneseq
        %v9372 = vshrl.u32 %v9371, 7
        %v9373 = vsub.s32 0, %v9372
        %v9374 = vrot.slane %v9301, %v9373
        %v9375 = vlaneseq
        %v9376 = vshrl.u32 %v9375, 7
        %v9377 = vsub.s32 0, %v9376
        %v9378 = vrot.slane %v9302, %v9377
        %v9379 = vlaneseq
        %v9380 = vshrl.u32 %v9379, 7
        %v9381 = vsub.s32 0, %v9380
        %v9382 = vrot.slane %v9303, %v9381
        %v9383 = vlaneseq
        %v9384 = vshrl.u32 %v9383, 7
        %v9385 = vsub.s32 0, %v9384
        %v9386 = vrot.slane %v9304, %v9385
        %v9387 = vlaneseq
        %v9388 = vshrl.u32 %v9387, 7
        %v9389 = vsub.s32 0, %v9388
        %v9390 = vrot.slane %v9305, %v9389
        %v9391 = vlaneseq
        %v9392 = vshrl.u32 %v9391, 7
        %v9393 = vsub.s32 0, %v9392
        %v9394 = vrot.slane %v9306, %v9393
        %v9395 = vlaneseq
        %v9396 = vshrl.u32 %v9395, 7
        %v9397 = vsub.s32 0, %v9396
        %v9398 = vrot.slane %v9307, %v9397
        %v9399 = vlaneseq
        %v9400 = vshrl.u32 %v9399, 7
        %v9401 = vsub.s32 0, %v9400
        %v9402 = vrot.slane %v9308, %v9401
        %v9403 = vlaneseq
        %v9404 = vshrl.u32 %v9403, 7
        %v9405 = vsub.s32 0, %v9404
        %v9406 = vrot.slane %v9309, %v9405
        %v9407 = vlaneseq
        %v9408 = vshrl.u32 %v9407, 7
        %v9409 = vsub.s32 0, %v9408
        %v9410 = vrot.slane %v9310, %v9409
        %9411 = vset.pattern.permute.xlu0 0
        %9412 = vperm.xlu0 %9411, %v9334
        %v9413 = vpop.permute.xlu0 %9412
        %9415 = vset.pattern.permute.xlu0 0
        %9416 = vperm.xlu0 %9415, %v9338
        %v9417 = vpop.permute.xlu0 %9416
        %9419 = vset.pattern.permute.xlu0 0
        %9420 = vperm.xlu0 %9419, %v9342
        %v9421 = vpop.permute.xlu0 %9420
        %9423 = vset.pattern.permute.xlu0 0
        %9424 = vperm.xlu0 %9423, %v9346
        %v9425 = vpop.permute.xlu0 %9424
        %9427 = vset.pattern.permute.xlu0 0
        %9428 = vperm.xlu0 %9427, %v9350
        %v9429 = vpop.permute.xlu0 %9428
        %9431 = vset.pattern.permute.xlu0 0
        %9432 = vperm.xlu0 %9431, %v9354
        %v9433 = vpop.permute.xlu0 %9432
        %9435 = vset.pattern.permute.xlu0 0
        %9436 = vperm.xlu0 %9435, %v9358
        %v9437 = vpop.permute.xlu0 %9436
        %9439 = vset.pattern.permute.xlu0 0
        %9440 = vperm.xlu0 %9439, %v9362
        %v9441 = vpop.permute.xlu0 %9440
        %9443 = vset.pattern.permute.xlu0 0
        %9444 = vperm.xlu0 %9443, %v9366
        %v9445 = vpop.permute.xlu0 %9444
        %9447 = vset.pattern.permute.xlu0 0
        %9448 = vperm.xlu0 %9447, %v9370
        %v9449 = vpop.permute.xlu0 %9448
        %9451 = vset.pattern.permute.xlu0 0
        %9452 = vperm.xlu0 %9451, %v9374
        %v9453 = vpop.permute.xlu0 %9452
        %9455 = vset.pattern.permute.xlu0 0
        %9456 = vperm.xlu0 %9455, %v9378
        %v9457 = vpop.permute.xlu0 %9456
        %9459 = vset.pattern.permute.xlu0 0
        %9460 = vperm.xlu0 %9459, %v9382
        %v9461 = vpop.permute.xlu0 %9460
        %9463 = vset.pattern.permute.xlu0 0
        %9464 = vperm.xlu0 %9463, %v9386
        %v9465 = vpop.permute.xlu0 %9464
        %9467 = vset.pattern.permute.xlu0 0
        %9468 = vperm.xlu0 %9467, %v9390
        %v9469 = vpop.permute.xlu0 %9468
        %9471 = vset.pattern.permute.xlu0 0
        %9472 = vperm.xlu0 %9471, %v9394
        %v9473 = vpop.permute.xlu0 %9472
        %9475 = vset.pattern.permute.xlu0 0
        %9476 = vperm.xlu0 %9475, %v9398
        %v9477 = vpop.permute.xlu0 %9476
        %9479 = vset.pattern.permute.xlu0 0
        %9480 = vperm.xlu0 %9479, %v9402
        %v9481 = vpop.permute.xlu0 %9480
        %9483 = vset.pattern.permute.xlu0 0
        %9484 = vperm.xlu0 %9483, %v9406
        %v9485 = vpop.permute.xlu0 %9484
        %9487 = vset.pattern.permute.xlu0 0
        %9488 = vperm.xlu0 %9487, %v9410
        %v9489 = vpop.permute.xlu0 %9488
        %v9491 = vcombine.low %v9275, %v9279
        %v9492 = vcombine.high %v9275, %v9279
        %v9494 = vunpack.c.l.s4 1983009808
        %v9495 = vunpack.c.0.s8 %v9494
        %v9496 = vlaneseq
        %v9497 = vshrl.u32 %v9496, 7
        %v9498 = vsub.s32 %v9495, %v9497
        %v9499 = vrot.slane %v9491, %v9498
        %v9501 = vunpack.c.l.s4 1983009808
        %v9502 = vunpack.c.0.s8 %v9501
        %v9503 = vlaneseq
        %v9504 = vshrl.u32 %v9503, 7
        %v9505 = vsub.s32 %v9502, %v9504
        %v9506 = vrot.slane %v9492, %v9505
        %v9507 = vcombine.low %v9277, %v9281
        %v9508 = vcombine.high %v9277, %v9281
        %v9510 = vunpack.c.l.s4 1983009808
        %v9511 = vunpack.c.0.s8 %v9510
        %v9512 = vlaneseq
        %v9513 = vshrl.u32 %v9512, 7
        %v9514 = vsub.s32 %v9511, %v9513
        %v9515 = vrot.slane %v9507, %v9514
        %v9517 = vunpack.c.l.s4 1983009808
        %v9518 = vunpack.c.0.s8 %v9517
        %v9519 = vlaneseq
        %v9520 = vshrl.u32 %v9519, 7
        %v9521 = vsub.s32 %v9518, %v9520
        %v9522 = vrot.slane %v9508, %v9521
        %v9523 = vcombine.low %v9283, %v9287
        %v9524 = vcombine.high %v9283, %v9287
        %v9526 = vunpack.c.l.s4 1983009808
        %v9527 = vunpack.c.0.s8 %v9526
        %v9528 = vlaneseq
        %v9529 = vshrl.u32 %v9528, 7
        %v9530 = vsub.s32 %v9527, %v9529
        %v9531 = vrot.slane %v9523, %v9530
        %v9533 = vunpack.c.l.s4 1983009808
        %v9534 = vunpack.c.0.s8 %v9533
        %v9535 = vlaneseq
        %v9536 = vshrl.u32 %v9535, 7
        %v9537 = vsub.s32 %v9534, %v9536
        %v9538 = vrot.slane %v9524, %v9537
        %v9539 = vcombine.low %v9285, %v9289
        %v9540 = vcombine.high %v9285, %v9289
        %v9542 = vunpack.c.l.s4 1983009808
        %v9543 = vunpack.c.0.s8 %v9542
        %v9544 = vlaneseq
        %v9545 = vshrl.u32 %v9544, 7
        %v9546 = vsub.s32 %v9543, %v9545
        %v9547 = vrot.slane %v9539, %v9546
        %v9549 = vunpack.c.l.s4 1983009808
        %v9550 = vunpack.c.0.s8 %v9549
        %v9551 = vlaneseq
        %v9552 = vshrl.u32 %v9551, 7
        %v9553 = vsub.s32 %v9550, %v9552
        %v9554 = vrot.slane %v9540, %v9553
        %v9555 = vcombine.low %v9499, %v9515
        %v9556 = vcombine.high %v9499, %v9515
        %v9558 = vunpack.c.l.s4 1934713408
        %v9559 = vunpack.c.0.s8 %v9558
        %v9560 = vlaneseq
        %v9561 = vshrl.u32 %v9560, 7
        %v9562 = vsub.s32 %v9559, %v9561
        %v9563 = vrot.slane %v9555, %v9562
        %v9565 = vunpack.c.l.s4 1934713408
        %v9566 = vunpack.c.0.s8 %v9565
        %v9567 = vlaneseq
        %v9568 = vshrl.u32 %v9567, 7
        %v9569 = vsub.s32 %v9566, %v9568
        %v9570 = vrot.slane %v9556, %v9569
        %v9571 = vcombine.low %v9506, %v9522
        %v9572 = vcombine.high %v9506, %v9522
        %v9574 = vunpack.c.l.s4 1934713408
        %v9575 = vunpack.c.0.s8 %v9574
        %v9576 = vlaneseq
        %v9577 = vshrl.u32 %v9576, 7
        %v9578 = vsub.s32 %v9575, %v9577
        %v9579 = vrot.slane %v9571, %v9578
        %v9581 = vunpack.c.l.s4 1934713408
        %v9582 = vunpack.c.0.s8 %v9581
        %v9583 = vlaneseq
        %v9584 = vshrl.u32 %v9583, 7
        %v9585 = vsub.s32 %v9582, %v9584
        %v9586 = vrot.slane %v9572, %v9585
        %v9587 = vcombine.low %v9531, %v9547
        %v9588 = vcombine.high %v9531, %v9547
        %v9590 = vunpack.c.l.s4 1934713408
        %v9591 = vunpack.c.0.s8 %v9590
        %v9592 = vlaneseq
        %v9593 = vshrl.u32 %v9592, 7
        %v9594 = vsub.s32 %v9591, %v9593
        %v9595 = vrot.slane %v9587, %v9594
        %v9597 = vunpack.c.l.s4 1934713408
        %v9598 = vunpack.c.0.s8 %v9597
        %v9599 = vlaneseq
        %v9600 = vshrl.u32 %v9599, 7
        %v9601 = vsub.s32 %v9598, %v9600
        %v9602 = vrot.slane %v9588, %v9601
        %v9603 = vcombine.low %v9538, %v9554
        %v9604 = vcombine.high %v9538, %v9554
        %v9606 = vunpack.c.l.s4 1934713408
        %v9607 = vunpack.c.0.s8 %v9606
        %v9608 = vlaneseq
        %v9609 = vshrl.u32 %v9608, 7
        %v9610 = vsub.s32 %v9607, %v9609
        %v9611 = vrot.slane %v9603, %v9610
        %v9613 = vunpack.c.l.s4 1934713408
        %v9614 = vunpack.c.0.s8 %v9613
        %v9615 = vlaneseq
        %v9616 = vshrl.u32 %v9615, 7
        %v9617 = vsub.s32 %v9614, %v9616
        %v9618 = vrot.slane %v9604, %v9617
        %v9619 = vcombine.low %v9563, %v9595
        %v9620 = vcombine.high %v9563, %v9595
        %v9621 = vcombine.low %v9570, %v9602
        %v9622 = vcombine.high %v9570, %v9602
        %v9623 = vcombine.low %v9579, %v9611
        %v9624 = vcombine.high %v9579, %v9611
        %v9625 = vcombine.low %v9586, %v9618
        %v9626 = vcombine.high %v9586, %v9618
        %v9627 = vcombine.low %v9276, %v9280
        %v9628 = vcombine.high %v9276, %v9280
        %v9630 = vunpack.c.l.s4 1983009808
        %v9631 = vunpack.c.0.s8 %v9630
        %v9632 = vlaneseq
        %v9633 = vshrl.u32 %v9632, 7
        %v9634 = vsub.s32 %v9631, %v9633
        %v9635 = vrot.slane %v9627, %v9634
        %v9637 = vunpack.c.l.s4 1983009808
        %v9638 = vunpack.c.0.s8 %v9637
        %v9639 = vlaneseq
        %v9640 = vshrl.u32 %v9639, 7
        %v9641 = vsub.s32 %v9638, %v9640
        %v9642 = vrot.slane %v9628, %v9641
        %v9643 = vcombine.low %v9278, %v9282
        %v9644 = vcombine.high %v9278, %v9282
        %v9646 = vunpack.c.l.s4 1983009808
        %v9647 = vunpack.c.0.s8 %v9646
        %v9648 = vlaneseq
        %v9649 = vshrl.u32 %v9648, 7
        %v9650 = vsub.s32 %v9647, %v9649
        %v9651 = vrot.slane %v9643, %v9650
        %v9653 = vunpack.c.l.s4 1983009808
        %v9654 = vunpack.c.0.s8 %v9653
        %v9655 = vlaneseq
        %v9656 = vshrl.u32 %v9655, 7
        %v9657 = vsub.s32 %v9654, %v9656
        %v9658 = vrot.slane %v9644, %v9657
        %v9659 = vcombine.low %v9284, %v9288
        %v9660 = vcombine.high %v9284, %v9288
        %v9662 = vunpack.c.l.s4 1983009808
        %v9663 = vunpack.c.0.s8 %v9662
        %v9664 = vlaneseq
        %v9665 = vshrl.u32 %v9664, 7
        %v9666 = vsub.s32 %v9663, %v9665
        %v9667 = vrot.slane %v9659, %v9666
        %v9669 = vunpack.c.l.s4 1983009808
        %v9670 = vunpack.c.0.s8 %v9669
        %v9671 = vlaneseq
        %v9672 = vshrl.u32 %v9671, 7
        %v9673 = vsub.s32 %v9670, %v9672
        %v9674 = vrot.slane %v9660, %v9673
        %v9675 = vcombine.low %v9286, %v9290
        %v9676 = vcombine.high %v9286, %v9290
        %v9678 = vunpack.c.l.s4 1983009808
        %v9679 = vunpack.c.0.s8 %v9678
        %v9680 = vlaneseq
        %v9681 = vshrl.u32 %v9680, 7
        %v9682 = vsub.s32 %v9679, %v9681
        %v9683 = vrot.slane %v9675, %v9682
        %v9685 = vunpack.c.l.s4 1983009808
        %v9686 = vunpack.c.0.s8 %v9685
        %v9687 = vlaneseq
        %v9688 = vshrl.u32 %v9687, 7
        %v9689 = vsub.s32 %v9686, %v9688
        %v9690 = vrot.slane %v9676, %v9689
        %v9691 = vcombine.low %v9635, %v9651
        %v9692 = vcombine.high %v9635, %v9651
        %v9694 = vunpack.c.l.s4 1934713408
        %v9695 = vunpack.c.0.s8 %v9694
        %v9696 = vlaneseq
        %v9697 = vshrl.u32 %v9696, 7
        %v9698 = vsub.s32 %v9695, %v9697
        %v9699 = vrot.slane %v9691, %v9698
        %v9701 = vunpack.c.l.s4 1934713408
        %v9702 = vunpack.c.0.s8 %v9701
        %v9703 = vlaneseq
        %v9704 = vshrl.u32 %v9703, 7
        %v9705 = vsub.s32 %v9702, %v9704
        %v9706 = vrot.slane %v9692, %v9705
        %v9707 = vcombine.low %v9642, %v9658
        %v9708 = vcombine.high %v9642, %v9658
        %v9710 = vunpack.c.l.s4 1934713408
        %v9711 = vunpack.c.0.s8 %v9710
        %v9712 = vlaneseq
        %v9713 = vshrl.u32 %v9712, 7
        %v9714 = vsub.s32 %v9711, %v9713
        %v9715 = vrot.slane %v9707, %v9714
        %v9717 = vunpack.c.l.s4 1934713408
        %v9718 = vunpack.c.0.s8 %v9717
        %v9719 = vlaneseq
        %v9720 = vshrl.u32 %v9719, 7
        %v9721 = vsub.s32 %v9718, %v9720
        %v9722 = vrot.slane %v9708, %v9721
        %v9723 = vcombine.low %v9667, %v9683
        %v9724 = vcombine.high %v9667, %v9683
        %v9726 = vunpack.c.l.s4 1934713408
        %v9727 = vunpack.c.0.s8 %v9726
        %v9728 = vlaneseq
        %v9729 = vshrl.u32 %v9728, 7
        %v9730 = vsub.s32 %v9727, %v9729
        %v9731 = vrot.slane %v9723, %v9730
        %v9733 = vunpack.c.l.s4 1934713408
        %v9734 = vunpack.c.0.s8 %v9733
        %v9735 = vlaneseq
        %v9736 = vshrl.u32 %v9735, 7
        %v9737 = vsub.s32 %v9734, %v9736
        %v9738 = vrot.slane %v9724, %v9737
        %v9739 = vcombine.low %v9674, %v9690
        %v9740 = vcombine.high %v9674, %v9690
        %v9742 = vunpack.c.l.s4 1934713408
        %v9743 = vunpack.c.0.s8 %v9742
        %v9744 = vlaneseq
        %v9745 = vshrl.u32 %v9744, 7
        %v9746 = vsub.s32 %v9743, %v9745
        %v9747 = vrot.slane %v9739, %v9746
        %v9749 = vunpack.c.l.s4 1934713408
        %v9750 = vunpack.c.0.s8 %v9749
        %v9751 = vlaneseq
        %v9752 = vshrl.u32 %v9751, 7
        %v9753 = vsub.s32 %v9750, %v9752
        %v9754 = vrot.slane %v9740, %v9753
        %v9755 = vcombine.low %v9699, %v9731
        %v9756 = vcombine.high %v9699, %v9731
        %v9757 = vcombine.low %v9706, %v9738
        %v9758 = vcombine.high %v9706, %v9738
        %v9759 = vcombine.low %v9715, %v9747
        %v9760 = vcombine.high %v9715, %v9747
        %v9761 = vcombine.low %v9722, %v9754
        %v9762 = vcombine.high %v9722, %v9754
        %v9765 = vpack.i.b16 %v9755, %v9619
        %v9766 = vshrl.u32 %v9619, 16
        %v9767 = vshrl.u32 %v9755, 16
        %v9768 = vpack.i.b16 %v9767, %v9766
        %v9771 = vpack.i.b16 %v9756, %v9620
        %v9772 = vshrl.u32 %v9620, 16
        %v9773 = vshrl.u32 %v9756, 16
        %v9774 = vpack.i.b16 %v9773, %v9772
        %v9777 = vpack.i.b16 %v9757, %v9621
        %v9778 = vshrl.u32 %v9621, 16
        %v9779 = vshrl.u32 %v9757, 16
        %v9780 = vpack.i.b16 %v9779, %v9778
        %v9783 = vpack.i.b16 %v9758, %v9622
        %v9784 = vshrl.u32 %v9622, 16
        %v9785 = vshrl.u32 %v9758, 16
        %v9786 = vpack.i.b16 %v9785, %v9784
        %v9789 = vpack.i.b16 %v9759, %v9623
        %v9790 = vshrl.u32 %v9623, 16
        %v9791 = vshrl.u32 %v9759, 16
        %v9792 = vpack.i.b16 %v9791, %v9790
        %v9795 = vpack.i.b16 %v9760, %v9624
        %v9796 = vshrl.u32 %v9624, 16
        %v9797 = vshrl.u32 %v9760, 16
        %v9798 = vpack.i.b16 %v9797, %v9796
        %v9801 = vpack.i.b16 %v9761, %v9625
        %v9802 = vshrl.u32 %v9625, 16
        %v9803 = vshrl.u32 %v9761, 16
        %v9804 = vpack.i.b16 %v9803, %v9802
        %v9807 = vpack.i.b16 %v9762, %v9626
        %v9808 = vshrl.u32 %v9626, 16
        %v9809 = vshrl.u32 %v9762, 16
        %v9810 = vpack.i.b16 %v9809, %v9808
        %9811 = vrot.lane.b32.xlu0 %v9768, 16
        %v9812 = vpop.permute.xlu0 %9811
        %9813 = vrot.lane.b32.xlu0 %v9771, 32
        %v9814 = vpop.permute.xlu0 %9813
        %9815 = vrot.lane.b32.xlu0 %v9774, 48
        %v9816 = vpop.permute.xlu0 %9815
        %9817 = vrot.lane.b32.xlu0 %v9777, 64
        %v9818 = vpop.permute.xlu0 %9817
        %9819 = vrot.lane.b32.xlu0 %v9780, 80
        %v9820 = vpop.permute.xlu0 %9819
        %9821 = vrot.lane.b32.xlu0 %v9783, 96
        %v9822 = vpop.permute.xlu0 %9821
        %9823 = vrot.lane.b32.xlu0 %v9786, 112
        %v9824 = vpop.permute.xlu0 %9823
        %9825 = vrot.lane.b32.xlu0 %v9792, 16
        %v9826 = vpop.permute.xlu0 %9825
        %9827 = vrot.lane.b32.xlu0 %v9795, 32
        %v9828 = vpop.permute.xlu0 %9827
        %9829 = vrot.lane.b32.xlu0 %v9798, 48
        %v9830 = vpop.permute.xlu0 %9829
        %9831 = vrot.lane.b32.xlu0 %v9801, 64
        %v9832 = vpop.permute.xlu0 %9831
        %9833 = vrot.lane.b32.xlu0 %v9804, 80
        %v9834 = vpop.permute.xlu0 %9833
        %9835 = vrot.lane.b32.xlu0 %v9807, 96
        %v9836 = vpop.permute.xlu0 %9835
        %9837 = vrot.lane.b32.xlu0 %v9810, 112
        %v9838 = vpop.permute.xlu0 %9837
        %v9841 = vsel %vm845, %v9765, %v9812
        %v9843 = vsel %vm4010, %v9841, %v9814
        %v9845 = vsel %vm4021, %v9843, %v9816
        %v9847 = vsel %vm4032, %v9845, %v9818
        %v9849 = vsel %vm4043, %v9847, %v9820
        %v9851 = vsel %vm4054, %v9849, %v9822
        %v9853 = vsel %vm4065, %v9851, %v9824
        %v9857 = vsel %vm845, %v9789, %v9826
        %v9859 = vsel %vm4010, %v9857, %v9828
        %v9861 = vsel %vm4021, %v9859, %v9830
        %v9863 = vsel %vm4032, %v9861, %v9832
        %v9865 = vsel %vm4043, %v9863, %v9834
        %v9867 = vsel %vm4054, %v9865, %v9836
        %v9869 = vsel %vm4065, %v9867, %v9838
        %v9871 = vcombine.low %v9413, %v9421
        %v9872 = vcombine.high %v9413, %v9421
        %v9874 = vunpack.c.l.s4 1983009808
        %v9875 = vunpack.c.0.s8 %v9874
        %v9876 = vlaneseq
        %v9877 = vshrl.u32 %v9876, 7
        %v9878 = vsub.s32 %v9875, %v9877
        %v9879 = vrot.slane %v9871, %v9878
        %v9881 = vunpack.c.l.s4 1983009808
        %v9882 = vunpack.c.0.s8 %v9881
        %v9883 = vlaneseq
        %v9884 = vshrl.u32 %v9883, 7
        %v9885 = vsub.s32 %v9882, %v9884
        %v9886 = vrot.slane %v9872, %v9885
        %v9887 = vcombine.low %v9417, %v9425
        %v9888 = vcombine.high %v9417, %v9425
        %v9890 = vunpack.c.l.s4 1983009808
        %v9891 = vunpack.c.0.s8 %v9890
        %v9892 = vlaneseq
        %v9893 = vshrl.u32 %v9892, 7
        %v9894 = vsub.s32 %v9891, %v9893
        %v9895 = vrot.slane %v9887, %v9894
        %v9897 = vunpack.c.l.s4 1983009808
        %v9898 = vunpack.c.0.s8 %v9897
        %v9899 = vlaneseq
        %v9900 = vshrl.u32 %v9899, 7
        %v9901 = vsub.s32 %v9898, %v9900
        %v9902 = vrot.slane %v9888, %v9901
        %v9903 = vcombine.low %v9429, %v9437
        %v9904 = vcombine.high %v9429, %v9437
        %v9906 = vunpack.c.l.s4 1983009808
        %v9907 = vunpack.c.0.s8 %v9906
        %v9908 = vlaneseq
        %v9909 = vshrl.u32 %v9908, 7
        %v9910 = vsub.s32 %v9907, %v9909
        %v9911 = vrot.slane %v9903, %v9910
        %v9913 = vunpack.c.l.s4 1983009808
        %v9914 = vunpack.c.0.s8 %v9913
        %v9915 = vlaneseq
        %v9916 = vshrl.u32 %v9915, 7
        %v9917 = vsub.s32 %v9914, %v9916
        %v9918 = vrot.slane %v9904, %v9917
        %v9919 = vcombine.low %v9433, %v9441
        %v9920 = vcombine.high %v9433, %v9441
        %v9922 = vunpack.c.l.s4 1983009808
        %v9923 = vunpack.c.0.s8 %v9922
        %v9924 = vlaneseq
        %v9925 = vshrl.u32 %v9924, 7
        %v9926 = vsub.s32 %v9923, %v9925
        %v9927 = vrot.slane %v9919, %v9926
        %v9929 = vunpack.c.l.s4 1983009808
        %v9930 = vunpack.c.0.s8 %v9929
        %v9931 = vlaneseq
        %v9932 = vshrl.u32 %v9931, 7
        %v9933 = vsub.s32 %v9930, %v9932
        %v9934 = vrot.slane %v9920, %v9933
        %v9935 = vcombine.low %v9879, %v9895
        %v9936 = vcombine.high %v9879, %v9895
        %v9938 = vunpack.c.l.s4 1934713408
        %v9939 = vunpack.c.0.s8 %v9938
        %v9940 = vlaneseq
        %v9941 = vshrl.u32 %v9940, 7
        %v9942 = vsub.s32 %v9939, %v9941
        %v9943 = vrot.slane %v9935, %v9942
        %v9945 = vunpack.c.l.s4 1934713408
        %v9946 = vunpack.c.0.s8 %v9945
        %v9947 = vlaneseq
        %v9948 = vshrl.u32 %v9947, 7
        %v9949 = vsub.s32 %v9946, %v9948
        %v9950 = vrot.slane %v9936, %v9949
        %v9951 = vcombine.low %v9886, %v9902
        %v9952 = vcombine.high %v9886, %v9902
        %v9954 = vunpack.c.l.s4 1934713408
        %v9955 = vunpack.c.0.s8 %v9954
        %v9956 = vlaneseq
        %v9957 = vshrl.u32 %v9956, 7
        %v9958 = vsub.s32 %v9955, %v9957
        %v9959 = vrot.slane %v9951, %v9958
        %v9961 = vunpack.c.l.s4 1934713408
        %v9962 = vunpack.c.0.s8 %v9961
        %v9963 = vlaneseq
        %v9964 = vshrl.u32 %v9963, 7
        %v9965 = vsub.s32 %v9962, %v9964
        %v9966 = vrot.slane %v9952, %v9965
        %v9967 = vcombine.low %v9911, %v9927
        %v9968 = vcombine.high %v9911, %v9927
        %v9970 = vunpack.c.l.s4 1934713408
        %v9971 = vunpack.c.0.s8 %v9970
        %v9972 = vlaneseq
        %v9973 = vshrl.u32 %v9972, 7
        %v9974 = vsub.s32 %v9971, %v9973
        %v9975 = vrot.slane %v9967, %v9974
        %v9977 = vunpack.c.l.s4 1934713408
        %v9978 = vunpack.c.0.s8 %v9977
        %v9979 = vlaneseq
        %v9980 = vshrl.u32 %v9979, 7
        %v9981 = vsub.s32 %v9978, %v9980
        %v9982 = vrot.slane %v9968, %v9981
        %v9983 = vcombine.low %v9918, %v9934
        %v9984 = vcombine.high %v9918, %v9934
        %v9986 = vunpack.c.l.s4 1934713408
        %v9987 = vunpack.c.0.s8 %v9986
        %v9988 = vlaneseq
        %v9989 = vshrl.u32 %v9988, 7
        %v9990 = vsub.s32 %v9987, %v9989
        %v9991 = vrot.slane %v9983, %v9990
        %v9993 = vunpack.c.l.s4 1934713408
        %v9994 = vunpack.c.0.s8 %v9993
        %v9995 = vlaneseq
        %v9996 = vshrl.u32 %v9995, 7
        %v9997 = vsub.s32 %v9994, %v9996
        %v9998 = vrot.slane %v9984, %v9997
        %v9999 = vcombine.low %v9943, %v9975
        %v10000 = vcombine.high %v9943, %v9975
        %v10001 = vcombine.low %v9950, %v9982
        %v10002 = vcombine.high %v9950, %v9982
        %v10003 = vcombine.low %v9959, %v9991
        %v10004 = vcombine.high %v9959, %v9991
        %v10005 = vcombine.low %v9966, %v9998
        %v10006 = vcombine.high %v9966, %v9998
        %v10007 = vcombine.low %v9445, %v9453
        %v10008 = vcombine.high %v9445, %v9453
        %v10010 = vunpack.c.l.s4 1983009808
        %v10011 = vunpack.c.0.s8 %v10010
        %v10012 = vlaneseq
        %v10013 = vshrl.u32 %v10012, 7
        %v10014 = vsub.s32 %v10011, %v10013
        %v10015 = vrot.slane %v10007, %v10014
        %v10017 = vunpack.c.l.s4 1983009808
        %v10018 = vunpack.c.0.s8 %v10017
        %v10019 = vlaneseq
        %v10020 = vshrl.u32 %v10019, 7
        %v10021 = vsub.s32 %v10018, %v10020
        %v10022 = vrot.slane %v10008, %v10021
        %v10023 = vcombine.low %v9449, %v9457
        %v10024 = vcombine.high %v9449, %v9457
        %v10026 = vunpack.c.l.s4 1983009808
        %v10027 = vunpack.c.0.s8 %v10026
        %v10028 = vlaneseq
        %v10029 = vshrl.u32 %v10028, 7
        %v10030 = vsub.s32 %v10027, %v10029
        %v10031 = vrot.slane %v10023, %v10030
        %v10033 = vunpack.c.l.s4 1983009808
        %v10034 = vunpack.c.0.s8 %v10033
        %v10035 = vlaneseq
        %v10036 = vshrl.u32 %v10035, 7
        %v10037 = vsub.s32 %v10034, %v10036
        %v10038 = vrot.slane %v10024, %v10037
        %v10039 = vcombine.low %v9461, %v9469
        %v10040 = vcombine.high %v9461, %v9469
        %v10042 = vunpack.c.l.s4 1983009808
        %v10043 = vunpack.c.0.s8 %v10042
        %v10044 = vlaneseq
        %v10045 = vshrl.u32 %v10044, 7
        %v10046 = vsub.s32 %v10043, %v10045
        %v10047 = vrot.slane %v10039, %v10046
        %v10049 = vunpack.c.l.s4 1983009808
        %v10050 = vunpack.c.0.s8 %v10049
        %v10051 = vlaneseq
        %v10052 = vshrl.u32 %v10051, 7
        %v10053 = vsub.s32 %v10050, %v10052
        %v10054 = vrot.slane %v10040, %v10053
        %v10055 = vcombine.low %v9465, %v9473
        %v10056 = vcombine.high %v9465, %v9473
        %v10058 = vunpack.c.l.s4 1983009808
        %v10059 = vunpack.c.0.s8 %v10058
        %v10060 = vlaneseq
        %v10061 = vshrl.u32 %v10060, 7
        %v10062 = vsub.s32 %v10059, %v10061
        %v10063 = vrot.slane %v10055, %v10062
        %v10065 = vunpack.c.l.s4 1983009808
        %v10066 = vunpack.c.0.s8 %v10065
        %v10067 = vlaneseq
        %v10068 = vshrl.u32 %v10067, 7
        %v10069 = vsub.s32 %v10066, %v10068
        %v10070 = vrot.slane %v10056, %v10069
        %v10071 = vcombine.low %v10015, %v10031
        %v10072 = vcombine.high %v10015, %v10031
        %v10074 = vunpack.c.l.s4 1934713408
        %v10075 = vunpack.c.0.s8 %v10074
        %v10076 = vlaneseq
        %v10077 = vshrl.u32 %v10076, 7
        %v10078 = vsub.s32 %v10075, %v10077
        %v10079 = vrot.slane %v10071, %v10078
        %v10081 = vunpack.c.l.s4 1934713408
        %v10082 = vunpack.c.0.s8 %v10081
        %v10083 = vlaneseq
        %v10084 = vshrl.u32 %v10083, 7
        %v10085 = vsub.s32 %v10082, %v10084
        %v10086 = vrot.slane %v10072, %v10085
        %v10087 = vcombine.low %v10022, %v10038
        %v10088 = vcombine.high %v10022, %v10038
        %v10090 = vunpack.c.l.s4 1934713408
        %v10091 = vunpack.c.0.s8 %v10090
        %v10092 = vlaneseq
        %v10093 = vshrl.u32 %v10092, 7
        %v10094 = vsub.s32 %v10091, %v10093
        %v10095 = vrot.slane %v10087, %v10094
        %v10097 = vunpack.c.l.s4 1934713408
        %v10098 = vunpack.c.0.s8 %v10097
        %v10099 = vlaneseq
        %v10100 = vshrl.u32 %v10099, 7
        %v10101 = vsub.s32 %v10098, %v10100
        %v10102 = vrot.slane %v10088, %v10101
        %v10103 = vcombine.low %v10047, %v10063
        %v10104 = vcombine.high %v10047, %v10063
        %v10106 = vunpack.c.l.s4 1934713408
        %v10107 = vunpack.c.0.s8 %v10106
        %v10108 = vlaneseq
        %v10109 = vshrl.u32 %v10108, 7
        %v10110 = vsub.s32 %v10107, %v10109
        %v10111 = vrot.slane %v10103, %v10110
        %v10113 = vunpack.c.l.s4 1934713408
        %v10114 = vunpack.c.0.s8 %v10113
        %v10115 = vlaneseq
        %v10116 = vshrl.u32 %v10115, 7
        %v10117 = vsub.s32 %v10114, %v10116
        %v10118 = vrot.slane %v10104, %v10117
        %v10119 = vcombine.low %v10054, %v10070
        %v10120 = vcombine.high %v10054, %v10070
        %v10122 = vunpack.c.l.s4 1934713408
        %v10123 = vunpack.c.0.s8 %v10122
        %v10124 = vlaneseq
        %v10125 = vshrl.u32 %v10124, 7
        %v10126 = vsub.s32 %v10123, %v10125
        %v10127 = vrot.slane %v10119, %v10126
        %v10129 = vunpack.c.l.s4 1934713408
        %v10130 = vunpack.c.0.s8 %v10129
        %v10131 = vlaneseq
        %v10132 = vshrl.u32 %v10131, 7
        %v10133 = vsub.s32 %v10130, %v10132
        %v10134 = vrot.slane %v10120, %v10133
        %v10135 = vcombine.low %v10079, %v10111
        %v10136 = vcombine.high %v10079, %v10111
        %v10137 = vcombine.low %v10086, %v10118
        %v10138 = vcombine.high %v10086, %v10118
        %v10139 = vcombine.low %v10095, %v10127
        %v10140 = vcombine.high %v10095, %v10127
        %v10141 = vcombine.low %v10102, %v10134
        %v10142 = vcombine.high %v10102, %v10134
        %v10143 = vcombine.low %v9477, %v9485
        %v10144 = vcombine.high %v9477, %v9485
        %v10146 = vunpack.c.l.s4 1983009808
        %v10147 = vunpack.c.0.s8 %v10146
        %v10148 = vlaneseq
        %v10149 = vshrl.u32 %v10148, 7
        %v10150 = vsub.s32 %v10147, %v10149
        %v10151 = vrot.slane %v10143, %v10150
        %v10153 = vunpack.c.l.s4 1983009808
        %v10154 = vunpack.c.0.s8 %v10153
        %v10155 = vlaneseq
        %v10156 = vshrl.u32 %v10155, 7
        %v10157 = vsub.s32 %v10154, %v10156
        %v10158 = vrot.slane %v10144, %v10157
        %v10159 = vcombine.low %v9481, %v9489
        %v10160 = vcombine.high %v9481, %v9489
        %v10162 = vunpack.c.l.s4 1983009808
        %v10163 = vunpack.c.0.s8 %v10162
        %v10164 = vlaneseq
        %v10165 = vshrl.u32 %v10164, 7
        %v10166 = vsub.s32 %v10163, %v10165
        %v10167 = vrot.slane %v10159, %v10166
        %v10169 = vunpack.c.l.s4 1983009808
        %v10170 = vunpack.c.0.s8 %v10169
        %v10171 = vlaneseq
        %v10172 = vshrl.u32 %v10171, 7
        %v10173 = vsub.s32 %v10170, %v10172
        %v10174 = vrot.slane %v10160, %v10173
        %v10175 = vcombine.low %v10151, %v10167
        %v10176 = vcombine.high %v10151, %v10167
        %v10178 = vunpack.c.l.s4 1934713408
        %v10179 = vunpack.c.0.s8 %v10178
        %v10180 = vlaneseq
        %v10181 = vshrl.u32 %v10180, 7
        %v10182 = vsub.s32 %v10179, %v10181
        %v10183 = vrot.slane %v10175, %v10182
        %v10185 = vunpack.c.l.s4 1934713408
        %v10186 = vunpack.c.0.s8 %v10185
        %v10187 = vlaneseq
        %v10188 = vshrl.u32 %v10187, 7
        %v10189 = vsub.s32 %v10186, %v10188
        %v10190 = vrot.slane %v10176, %v10189
        %v10191 = vcombine.low %v10158, %v10174
        %v10192 = vcombine.high %v10158, %v10174
        %v10194 = vunpack.c.l.s4 1934713408
        %v10195 = vunpack.c.0.s8 %v10194
        %v10196 = vlaneseq
        %v10197 = vshrl.u32 %v10196, 7
        %v10198 = vsub.s32 %v10195, %v10197
        %v10199 = vrot.slane %v10191, %v10198
        %v10201 = vunpack.c.l.s4 1934713408
        %v10202 = vunpack.c.0.s8 %v10201
        %v10203 = vlaneseq
        %v10204 = vshrl.u32 %v10203, 7
        %v10205 = vsub.s32 %v10202, %v10204
        %v10206 = vrot.slane %v10192, %v10205
        %v10207 = vcombine.high %v10183, 0.0
        %v10208 = vcombine.high %v10190, 0.0
        %v10209 = vcombine.high %v10199, 0.0
        %v10210 = vcombine.high %v10206, 0.0
        %10214 = vrot.lane.b32.xlu0 %v10000, 16
        %v10215 = vpop.permute.xlu0 %10214
        %10216 = vrot.lane.b32.xlu0 %v10136, 16
        %v10217 = vpop.permute.xlu0 %10216
        %10218 = vrot.lane.b32.xlu0 %v10207, 16
        %v10219 = vpop.permute.xlu0 %10218
        %10226 = vrot.lane.b32.xlu0 %v10001, 32
        %v10227 = vpop.permute.xlu0 %10226
        %10228 = vrot.lane.b32.xlu0 %v10137, 32
        %v10229 = vpop.permute.xlu0 %10228
        %10230 = vrot.lane.b32.xlu0 %v10190, 32
        %v10231 = vpop.permute.xlu0 %10230
        %10238 = vrot.lane.b32.xlu0 %v10002, 48
        %v10239 = vpop.permute.xlu0 %10238
        %10240 = vrot.lane.b32.xlu0 %v10138, 48
        %v10241 = vpop.permute.xlu0 %10240
        %10242 = vrot.lane.b32.xlu0 %v10208, 48
        %v10243 = vpop.permute.xlu0 %10242
        %10250 = vrot.lane.b32.xlu0 %v10003, 64
        %v10251 = vpop.permute.xlu0 %10250
        %10252 = vrot.lane.b32.xlu0 %v10139, 64
        %v10253 = vpop.permute.xlu0 %10252
        %10254 = vrot.lane.b32.xlu0 %v10199, 64
        %v10255 = vpop.permute.xlu0 %10254
        %10262 = vrot.lane.b32.xlu0 %v10004, 80
        %v10263 = vpop.permute.xlu0 %10262
        %10264 = vrot.lane.b32.xlu0 %v10140, 80
        %v10265 = vpop.permute.xlu0 %10264
        %10266 = vrot.lane.b32.xlu0 %v10209, 80
        %v10267 = vpop.permute.xlu0 %10266
        %10274 = vrot.lane.b32.xlu0 %v10005, 96
        %v10275 = vpop.permute.xlu0 %10274
        %10276 = vrot.lane.b32.xlu0 %v10141, 96
        %v10277 = vpop.permute.xlu0 %10276
        %10278 = vrot.lane.b32.xlu0 %v10206, 96
        %v10279 = vpop.permute.xlu0 %10278
        %10286 = vrot.lane.b32.xlu0 %v10006, 112
        %v10287 = vpop.permute.xlu0 %10286
        %10288 = vrot.lane.b32.xlu0 %v10142, 112
        %v10289 = vpop.permute.xlu0 %10288
        %10290 = vrot.lane.b32.xlu0 %v10210, 112
        %v10291 = vpop.permute.xlu0 %10290
        %v10295 = vsel %vm845, %v9999, %v10215
        %v10296 = vsel %vm845, %v10135, %v10217
        %v10297 = vsel %vm845, %v10183, %v10219
        %v10298 = vsel %vm4010, %v10295, %v10227
        %v10299 = vsel %vm4010, %v10296, %v10229
        %v10300 = vsel %vm4010, %v10297, %v10231
        %v10301 = vsel %vm4021, %v10298, %v10239
        %v10302 = vsel %vm4021, %v10299, %v10241
        %v10303 = vsel %vm4021, %v10300, %v10243
        %v10304 = vsel %vm4032, %v10301, %v10251
        %v10305 = vsel %vm4032, %v10302, %v10253
        %v10306 = vsel %vm4032, %v10303, %v10255
        %v10307 = vsel %vm4043, %v10304, %v10263
        %v10308 = vsel %vm4043, %v10305, %v10265
        %v10309 = vsel %vm4043, %v10306, %v10267
        %v10310 = vsel %vm4054, %v10307, %v10275
        %v10311 = vsel %vm4054, %v10308, %v10277
        %v10312 = vsel %vm4054, %v10309, %v10279
        %v10313 = vsel %vm4065, %v10310, %v10287
        %v10314 = vsel %vm4065, %v10311, %v10289
        %v10315 = vsel %vm4065, %v10312, %v10291
        %v10319 = vunpack.c.l.b16 %v9272
        %v10320 = vunpack.c.l.b16 %v9273
        %v10321 = vunpack.c.l.b16 %v9274
        %v10322 = vpack.c.b16 %v10320, %v10319
        %v10323 = vpack.c.b16 %v10321, %v10321
        %v10325 = vsel %vm845, %v10322, 0
        %v10328 = vsel %vm845, %v10323, 0
        %10330 = vmatprep.subr.bf16.mxu0 %v9869
        %10331 = vmatpush1.bf16.msra.mxu0 %v9853
        %10332 = vmatprep.subr.bf16.mxu0 0
        %10333 = vmatpush1.bf16.msra.mxu0 0
        %10334 = vmatprep.subr.bf16.mxu0 0
        %10335 = vmatpush1.bf16.msra.mxu0 0
        %10336 = vmatprep.subr.bf16.mxu0 0
        %10337 = vmatpush1.bf16.msra.mxu0 0
        %10338 = vmatprep.subr.bf16.mxu0 0
        %10339 = vmatpush1.bf16.msra.mxu0 0
        %10340 = vmatprep.subr.bf16.mxu0 0
        %10341 = vmatpush1.bf16.msra.mxu0 0
        %10342 = vmatprep.subr.bf16.mxu0 0
        %10343 = vmatpush1.bf16.msra.mxu0 0
        %10344 = vmatprep.subr.bf16.mxu0 0
        %10345 = vmatpush1.bf16.msra.mxu0 0
        %10346 = vmatprep.subr.bf16.mxu0 0
        %10347 = vmatpush1.bf16.msra.mxu0 0
        %10348 = vmatprep.subr.bf16.mxu0 0
        %10349 = vmatpush1.bf16.msra.mxu0 0
        %10350 = vmatprep.subr.bf16.mxu0 0
        %10351 = vmatpush1.bf16.msra.mxu0 0
        %10352 = vmatprep.subr.bf16.mxu0 0
        %10353 = vmatpush1.bf16.msra.mxu0 0
        %10354 = vmatprep.subr.bf16.mxu0 0
        %10355 = vmatpush1.bf16.msra.mxu0 0
        %10356 = vmatprep.subr.bf16.mxu0 0
        %10357 = vmatpush1.bf16.msra.mxu0 0
        %10358 = vmatprep.subr.bf16.mxu0 0
        %10359 = vmatpush1.bf16.msra.mxu0 0
        %10360 = vmatprep.subr.bf16.mxu0 0
        %10361 = vmatpush1.bf16.msra.mxu0 0
        %10362 = vmatprep.mubr.bf16.mxu0 0
        %10363 = vmatmul.mubr.bf16.gmra.mrb[0].mxu0 %v10325
        %v10364 = vpop.f32.mrb[0].mxu0
        %v10365 = vadd.f32 %v10313, %v10364
        %v10366 = vpop.f32.mrb[0].mxu0
        %v10367 = vadd.f32 %v10313, %v10366
        %v10368 = vpop.f32.mrb[0].mxu0
        %v10369 = vadd.f32 %v10314, %v10368
        %v10370 = vpop.f32.mrb[0].mxu0
        %v10371 = vadd.f32 %v10314, %v10370
        %10372 = vmatprep.mubr.bf16.mxu0 0
        %10373 = vmatmul.mubr.bf16.gmra.mrb[0].mxu0 %v10328
        %v10374 = vpop.f32.mrb[0].mxu0
        %v10375 = vadd.f32 %v10315, %v10374
        %v10376 = vpop.f32.mrb[0].mxu0
        %v10377 = vadd.f32 %v10315, %v10376
        %v10378 = vpop.f32.mrb[0].mxu0
        %v10379 = vpop.f32.mrb[0].mxu0
        %10380 = vdwg.mxu0
        %10384 = vrot.lane.b32.xlu0 %v10365, 112
        %v10385 = vpop.permute.xlu0 %10384
        %10386 = vrot.lane.b32.xlu0 %v10369, 112
        %v10387 = vpop.permute.xlu0 %10386
        %10388 = vrot.lane.b32.xlu0 %v10375, 112
        %v10389 = vpop.permute.xlu0 %10388
        %10393 = vrot.lane.b32.xlu0 %v10365, 96
        %v10394 = vpop.permute.xlu0 %10393
        %10395 = vrot.lane.b32.xlu0 %v10369, 96
        %v10396 = vpop.permute.xlu0 %10395
        %10397 = vrot.lane.b32.xlu0 %v10375, 96
        %v10398 = vpop.permute.xlu0 %10397
        %10402 = vrot.lane.b32.xlu0 %v10365, 80
        %v10403 = vpop.permute.xlu0 %10402
        %10404 = vrot.lane.b32.xlu0 %v10369, 80
        %v10405 = vpop.permute.xlu0 %10404
        %10406 = vrot.lane.b32.xlu0 %v10375, 80
        %v10407 = vpop.permute.xlu0 %10406
        %10411 = vrot.lane.b32.xlu0 %v10365, 64
        %v10412 = vpop.permute.xlu0 %10411
        %10413 = vrot.lane.b32.xlu0 %v10369, 64
        %v10414 = vpop.permute.xlu0 %10413
        %10415 = vrot.lane.b32.xlu0 %v10375, 64
        %v10416 = vpop.permute.xlu0 %10415
        %10420 = vrot.lane.b32.xlu0 %v10365, 48
        %v10421 = vpop.permute.xlu0 %10420
        %10422 = vrot.lane.b32.xlu0 %v10369, 48
        %v10423 = vpop.permute.xlu0 %10422
        %10424 = vrot.lane.b32.xlu0 %v10375, 48
        %v10425 = vpop.permute.xlu0 %10424
        %10429 = vrot.lane.b32.xlu0 %v10365, 32
        %v10430 = vpop.permute.xlu0 %10429
        %10431 = vrot.lane.b32.xlu0 %v10369, 32
        %v10432 = vpop.permute.xlu0 %10431
        %10433 = vrot.lane.b32.xlu0 %v10375, 32
        %v10434 = vpop.permute.xlu0 %10433
        %10438 = vrot.lane.b32.xlu0 %v10365, 16
        %v10439 = vpop.permute.xlu0 %10438
        %10440 = vrot.lane.b32.xlu0 %v10369, 16
        %v10441 = vpop.permute.xlu0 %10440
        %10442 = vrot.lane.b32.xlu0 %v10375, 16
        %v10443 = vpop.permute.xlu0 %10442
        %10450 = vrot.lane.b32.xlu0 %v10367, 112
        %v10451 = vpop.permute.xlu0 %10450
        %10452 = vrot.lane.b32.xlu0 %v10371, 112
        %v10453 = vpop.permute.xlu0 %10452
        %10454 = vrot.lane.b32.xlu0 %v10377, 112
        %v10455 = vpop.permute.xlu0 %10454
        %10459 = vrot.lane.b32.xlu0 %v10367, 96
        %v10460 = vpop.permute.xlu0 %10459
        %10461 = vrot.lane.b32.xlu0 %v10371, 96
        %v10462 = vpop.permute.xlu0 %10461
        %10463 = vrot.lane.b32.xlu0 %v10377, 96
        %v10464 = vpop.permute.xlu0 %10463
        %10468 = vrot.lane.b32.xlu0 %v10367, 80
        %v10469 = vpop.permute.xlu0 %10468
        %10470 = vrot.lane.b32.xlu0 %v10371, 80
        %v10471 = vpop.permute.xlu0 %10470
        %10472 = vrot.lane.b32.xlu0 %v10377, 80
        %v10473 = vpop.permute.xlu0 %10472
        %10477 = vrot.lane.b32.xlu0 %v10367, 64
        %v10478 = vpop.permute.xlu0 %10477
        %10479 = vrot.lane.b32.xlu0 %v10371, 64
        %v10480 = vpop.permute.xlu0 %10479
        %10481 = vrot.lane.b32.xlu0 %v10377, 64
        %v10482 = vpop.permute.xlu0 %10481
        %10486 = vrot.lane.b32.xlu0 %v10367, 48
        %v10487 = vpop.permute.xlu0 %10486
        %10488 = vrot.lane.b32.xlu0 %v10371, 48
        %v10489 = vpop.permute.xlu0 %10488
        %10490 = vrot.lane.b32.xlu0 %v10377, 48
        %v10491 = vpop.permute.xlu0 %10490
        %10495 = vrot.lane.b32.xlu0 %v10367, 32
        %v10496 = vpop.permute.xlu0 %10495
        %10497 = vrot.lane.b32.xlu0 %v10371, 32
        %v10498 = vpop.permute.xlu0 %10497
        %10499 = vrot.lane.b32.xlu0 %v10377, 32
        %v10500 = vpop.permute.xlu0 %10499
        %10504 = vrot.lane.b32.xlu0 %v10367, 16
        %v10505 = vpop.permute.xlu0 %10504
        %10506 = vrot.lane.b32.xlu0 %v10371, 16
        %v10507 = vpop.permute.xlu0 %10506
        %10508 = vrot.lane.b32.xlu0 %v10377, 16
        %v10509 = vpop.permute.xlu0 %10508
        %v10513 = vcombine.low %v10365, %v10394
        %v10514 = vcombine.high %v10365, %v10394
        %v10516 = vunpack.c.l.s4 1983009808
        %v10517 = vunpack.c.0.s8 %v10516
        %v10518 = vlaneseq
        %v10519 = vshrl.u32 %v10518, 7
        %v10520 = vsub.s32 %v10517, %v10519
        %v10521 = vrot.slane %v10513, %v10520
        %v10523 = vunpack.c.l.s4 1983009808
        %v10524 = vunpack.c.0.s8 %v10523
        %v10525 = vlaneseq
        %v10526 = vshrl.u32 %v10525, 7
        %v10527 = vsub.s32 %v10524, %v10526
        %v10528 = vrot.slane %v10514, %v10527
        %v10529 = vcombine.low %v10385, %v10403
        %v10530 = vcombine.high %v10385, %v10403
        %v10532 = vunpack.c.l.s4 1983009808
        %v10533 = vunpack.c.0.s8 %v10532
        %v10534 = vlaneseq
        %v10535 = vshrl.u32 %v10534, 7
        %v10536 = vsub.s32 %v10533, %v10535
        %v10537 = vrot.slane %v10529, %v10536
        %v10539 = vunpack.c.l.s4 1983009808
        %v10540 = vunpack.c.0.s8 %v10539
        %v10541 = vlaneseq
        %v10542 = vshrl.u32 %v10541, 7
        %v10543 = vsub.s32 %v10540, %v10542
        %v10544 = vrot.slane %v10530, %v10543
        %v10545 = vcombine.low %v10412, %v10430
        %v10546 = vcombine.high %v10412, %v10430
        %v10548 = vunpack.c.l.s4 1983009808
        %v10549 = vunpack.c.0.s8 %v10548
        %v10550 = vlaneseq
        %v10551 = vshrl.u32 %v10550, 7
        %v10552 = vsub.s32 %v10549, %v10551
        %v10553 = vrot.slane %v10545, %v10552
        %v10555 = vunpack.c.l.s4 1983009808
        %v10556 = vunpack.c.0.s8 %v10555
        %v10557 = vlaneseq
        %v10558 = vshrl.u32 %v10557, 7
        %v10559 = vsub.s32 %v10556, %v10558
        %v10560 = vrot.slane %v10546, %v10559
        %v10561 = vcombine.low %v10421, %v10439
        %v10562 = vcombine.high %v10421, %v10439
        %v10564 = vunpack.c.l.s4 1983009808
        %v10565 = vunpack.c.0.s8 %v10564
        %v10566 = vlaneseq
        %v10567 = vshrl.u32 %v10566, 7
        %v10568 = vsub.s32 %v10565, %v10567
        %v10569 = vrot.slane %v10561, %v10568
        %v10571 = vunpack.c.l.s4 1983009808
        %v10572 = vunpack.c.0.s8 %v10571
        %v10573 = vlaneseq
        %v10574 = vshrl.u32 %v10573, 7
        %v10575 = vsub.s32 %v10572, %v10574
        %v10576 = vrot.slane %v10562, %v10575
        %v10577 = vcombine.low %v10521, %v10537
        %v10578 = vcombine.high %v10521, %v10537
        %v10580 = vunpack.c.l.s4 1934713408
        %v10581 = vunpack.c.0.s8 %v10580
        %v10582 = vlaneseq
        %v10583 = vshrl.u32 %v10582, 7
        %v10584 = vsub.s32 %v10581, %v10583
        %v10585 = vrot.slane %v10577, %v10584
        %v10587 = vunpack.c.l.s4 1934713408
        %v10588 = vunpack.c.0.s8 %v10587
        %v10589 = vlaneseq
        %v10590 = vshrl.u32 %v10589, 7
        %v10591 = vsub.s32 %v10588, %v10590
        %v10592 = vrot.slane %v10578, %v10591
        %v10593 = vcombine.low %v10528, %v10544
        %v10594 = vcombine.high %v10528, %v10544
        %v10596 = vunpack.c.l.s4 1934713408
        %v10597 = vunpack.c.0.s8 %v10596
        %v10598 = vlaneseq
        %v10599 = vshrl.u32 %v10598, 7
        %v10600 = vsub.s32 %v10597, %v10599
        %v10601 = vrot.slane %v10593, %v10600
        %v10603 = vunpack.c.l.s4 1934713408
        %v10604 = vunpack.c.0.s8 %v10603
        %v10605 = vlaneseq
        %v10606 = vshrl.u32 %v10605, 7
        %v10607 = vsub.s32 %v10604, %v10606
        %v10608 = vrot.slane %v10594, %v10607
        %v10609 = vcombine.low %v10553, %v10569
        %v10610 = vcombine.high %v10553, %v10569
        %v10612 = vunpack.c.l.s4 1934713408
        %v10613 = vunpack.c.0.s8 %v10612
        %v10614 = vlaneseq
        %v10615 = vshrl.u32 %v10614, 7
        %v10616 = vsub.s32 %v10613, %v10615
        %v10617 = vrot.slane %v10609, %v10616
        %v10619 = vunpack.c.l.s4 1934713408
        %v10620 = vunpack.c.0.s8 %v10619
        %v10621 = vlaneseq
        %v10622 = vshrl.u32 %v10621, 7
        %v10623 = vsub.s32 %v10620, %v10622
        %v10624 = vrot.slane %v10610, %v10623
        %v10625 = vcombine.low %v10560, %v10576
        %v10626 = vcombine.high %v10560, %v10576
        %v10628 = vunpack.c.l.s4 1934713408
        %v10629 = vunpack.c.0.s8 %v10628
        %v10630 = vlaneseq
        %v10631 = vshrl.u32 %v10630, 7
        %v10632 = vsub.s32 %v10629, %v10631
        %v10633 = vrot.slane %v10625, %v10632
        %v10635 = vunpack.c.l.s4 1934713408
        %v10636 = vunpack.c.0.s8 %v10635
        %v10637 = vlaneseq
        %v10638 = vshrl.u32 %v10637, 7
        %v10639 = vsub.s32 %v10636, %v10638
        %v10640 = vrot.slane %v10626, %v10639
        %v10641 = vcombine.low %v10585, %v10617
        %v10642 = vcombine.high %v10585, %v10617
        %v10643 = vcombine.low %v10592, %v10624
        %v10644 = vcombine.high %v10592, %v10624
        %v10645 = vcombine.low %v10601, %v10633
        %v10646 = vcombine.high %v10601, %v10633
        %v10647 = vcombine.low %v10608, %v10640
        %v10648 = vcombine.high %v10608, %v10640
        %v10649 = vcombine.low %v10367, %v10460
        %v10650 = vcombine.high %v10367, %v10460
        %v10652 = vunpack.c.l.s4 1983009808
        %v10653 = vunpack.c.0.s8 %v10652
        %v10654 = vlaneseq
        %v10655 = vshrl.u32 %v10654, 7
        %v10656 = vsub.s32 %v10653, %v10655
        %v10657 = vrot.slane %v10649, %v10656
        %v10659 = vunpack.c.l.s4 1983009808
        %v10660 = vunpack.c.0.s8 %v10659
        %v10661 = vlaneseq
        %v10662 = vshrl.u32 %v10661, 7
        %v10663 = vsub.s32 %v10660, %v10662
        %v10664 = vrot.slane %v10650, %v10663
        %v10665 = vcombine.low %v10451, %v10469
        %v10666 = vcombine.high %v10451, %v10469
        %v10668 = vunpack.c.l.s4 1983009808
        %v10669 = vunpack.c.0.s8 %v10668
        %v10670 = vlaneseq
        %v10671 = vshrl.u32 %v10670, 7
        %v10672 = vsub.s32 %v10669, %v10671
        %v10673 = vrot.slane %v10665, %v10672
        %v10675 = vunpack.c.l.s4 1983009808
        %v10676 = vunpack.c.0.s8 %v10675
        %v10677 = vlaneseq
        %v10678 = vshrl.u32 %v10677, 7
        %v10679 = vsub.s32 %v10676, %v10678
        %v10680 = vrot.slane %v10666, %v10679
        %v10681 = vcombine.low %v10478, %v10496
        %v10682 = vcombine.high %v10478, %v10496
        %v10684 = vunpack.c.l.s4 1983009808
        %v10685 = vunpack.c.0.s8 %v10684
        %v10686 = vlaneseq
        %v10687 = vshrl.u32 %v10686, 7
        %v10688 = vsub.s32 %v10685, %v10687
        %v10689 = vrot.slane %v10681, %v10688
        %v10691 = vunpack.c.l.s4 1983009808
        %v10692 = vunpack.c.0.s8 %v10691
        %v10693 = vlaneseq
        %v10694 = vshrl.u32 %v10693, 7
        %v10695 = vsub.s32 %v10692, %v10694
        %v10696 = vrot.slane %v10682, %v10695
        %v10697 = vcombine.low %v10487, %v10505
        %v10698 = vcombine.high %v10487, %v10505
        %v10700 = vunpack.c.l.s4 1983009808
        %v10701 = vunpack.c.0.s8 %v10700
        %v10702 = vlaneseq
        %v10703 = vshrl.u32 %v10702, 7
        %v10704 = vsub.s32 %v10701, %v10703
        %v10705 = vrot.slane %v10697, %v10704
        %v10707 = vunpack.c.l.s4 1983009808
        %v10708 = vunpack.c.0.s8 %v10707
        %v10709 = vlaneseq
        %v10710 = vshrl.u32 %v10709, 7
        %v10711 = vsub.s32 %v10708, %v10710
        %v10712 = vrot.slane %v10698, %v10711
        %v10713 = vcombine.low %v10657, %v10673
        %v10714 = vcombine.high %v10657, %v10673
        %v10716 = vunpack.c.l.s4 1934713408
        %v10717 = vunpack.c.0.s8 %v10716
        %v10718 = vlaneseq
        %v10719 = vshrl.u32 %v10718, 7
        %v10720 = vsub.s32 %v10717, %v10719
        %v10721 = vrot.slane %v10713, %v10720
        %v10723 = vunpack.c.l.s4 1934713408
        %v10724 = vunpack.c.0.s8 %v10723
        %v10725 = vlaneseq
        %v10726 = vshrl.u32 %v10725, 7
        %v10727 = vsub.s32 %v10724, %v10726
        %v10728 = vrot.slane %v10714, %v10727
        %v10729 = vcombine.low %v10664, %v10680
        %v10730 = vcombine.high %v10664, %v10680
        %v10732 = vunpack.c.l.s4 1934713408
        %v10733 = vunpack.c.0.s8 %v10732
        %v10734 = vlaneseq
        %v10735 = vshrl.u32 %v10734, 7
        %v10736 = vsub.s32 %v10733, %v10735
        %v10737 = vrot.slane %v10729, %v10736
        %v10739 = vunpack.c.l.s4 1934713408
        %v10740 = vunpack.c.0.s8 %v10739
        %v10741 = vlaneseq
        %v10742 = vshrl.u32 %v10741, 7
        %v10743 = vsub.s32 %v10740, %v10742
        %v10744 = vrot.slane %v10730, %v10743
        %v10745 = vcombine.low %v10689, %v10705
        %v10746 = vcombine.high %v10689, %v10705
        %v10748 = vunpack.c.l.s4 1934713408
        %v10749 = vunpack.c.0.s8 %v10748
        %v10750 = vlaneseq
        %v10751 = vshrl.u32 %v10750, 7
        %v10752 = vsub.s32 %v10749, %v10751
        %v10753 = vrot.slane %v10745, %v10752
        %v10755 = vunpack.c.l.s4 1934713408
        %v10756 = vunpack.c.0.s8 %v10755
        %v10757 = vlaneseq
        %v10758 = vshrl.u32 %v10757, 7
        %v10759 = vsub.s32 %v10756, %v10758
        %v10760 = vrot.slane %v10746, %v10759
        %v10761 = vcombine.low %v10696, %v10712
        %v10762 = vcombine.high %v10696, %v10712
        %v10764 = vunpack.c.l.s4 1934713408
        %v10765 = vunpack.c.0.s8 %v10764
        %v10766 = vlaneseq
        %v10767 = vshrl.u32 %v10766, 7
        %v10768 = vsub.s32 %v10765, %v10767
        %v10769 = vrot.slane %v10761, %v10768
        %v10771 = vunpack.c.l.s4 1934713408
        %v10772 = vunpack.c.0.s8 %v10771
        %v10773 = vlaneseq
        %v10774 = vshrl.u32 %v10773, 7
        %v10775 = vsub.s32 %v10772, %v10774
        %v10776 = vrot.slane %v10762, %v10775
        %v10777 = vcombine.low %v10721, %v10753
        %v10778 = vcombine.high %v10721, %v10753
        %v10779 = vcombine.low %v10728, %v10760
        %v10780 = vcombine.high %v10728, %v10760
        %v10781 = vcombine.low %v10737, %v10769
        %v10782 = vcombine.high %v10737, %v10769
        %v10783 = vcombine.low %v10744, %v10776
        %v10784 = vcombine.high %v10744, %v10776
        %v10785 = vcombine.low %v10369, %v10396
        %v10786 = vcombine.high %v10369, %v10396
        %v10788 = vunpack.c.l.s4 1983009808
        %v10789 = vunpack.c.0.s8 %v10788
        %v10790 = vlaneseq
        %v10791 = vshrl.u32 %v10790, 7
        %v10792 = vsub.s32 %v10789, %v10791
        %v10793 = vrot.slane %v10785, %v10792
        %v10795 = vunpack.c.l.s4 1983009808
        %v10796 = vunpack.c.0.s8 %v10795
        %v10797 = vlaneseq
        %v10798 = vshrl.u32 %v10797, 7
        %v10799 = vsub.s32 %v10796, %v10798
        %v10800 = vrot.slane %v10786, %v10799
        %v10801 = vcombine.low %v10387, %v10405
        %v10802 = vcombine.high %v10387, %v10405
        %v10804 = vunpack.c.l.s4 1983009808
        %v10805 = vunpack.c.0.s8 %v10804
        %v10806 = vlaneseq
        %v10807 = vshrl.u32 %v10806, 7
        %v10808 = vsub.s32 %v10805, %v10807
        %v10809 = vrot.slane %v10801, %v10808
        %v10811 = vunpack.c.l.s4 1983009808
        %v10812 = vunpack.c.0.s8 %v10811
        %v10813 = vlaneseq
        %v10814 = vshrl.u32 %v10813, 7
        %v10815 = vsub.s32 %v10812, %v10814
        %v10816 = vrot.slane %v10802, %v10815
        %v10817 = vcombine.low %v10414, %v10432
        %v10818 = vcombine.high %v10414, %v10432
        %v10820 = vunpack.c.l.s4 1983009808
        %v10821 = vunpack.c.0.s8 %v10820
        %v10822 = vlaneseq
        %v10823 = vshrl.u32 %v10822, 7
        %v10824 = vsub.s32 %v10821, %v10823
        %v10825 = vrot.slane %v10817, %v10824
        %v10827 = vunpack.c.l.s4 1983009808
        %v10828 = vunpack.c.0.s8 %v10827
        %v10829 = vlaneseq
        %v10830 = vshrl.u32 %v10829, 7
        %v10831 = vsub.s32 %v10828, %v10830
        %v10832 = vrot.slane %v10818, %v10831
        %v10833 = vcombine.low %v10423, %v10441
        %v10834 = vcombine.high %v10423, %v10441
        %v10836 = vunpack.c.l.s4 1983009808
        %v10837 = vunpack.c.0.s8 %v10836
        %v10838 = vlaneseq
        %v10839 = vshrl.u32 %v10838, 7
        %v10840 = vsub.s32 %v10837, %v10839
        %v10841 = vrot.slane %v10833, %v10840
        %v10843 = vunpack.c.l.s4 1983009808
        %v10844 = vunpack.c.0.s8 %v10843
        %v10845 = vlaneseq
        %v10846 = vshrl.u32 %v10845, 7
        %v10847 = vsub.s32 %v10844, %v10846
        %v10848 = vrot.slane %v10834, %v10847
        %v10849 = vcombine.low %v10793, %v10809
        %v10850 = vcombine.high %v10793, %v10809
        %v10852 = vunpack.c.l.s4 1934713408
        %v10853 = vunpack.c.0.s8 %v10852
        %v10854 = vlaneseq
        %v10855 = vshrl.u32 %v10854, 7
        %v10856 = vsub.s32 %v10853, %v10855
        %v10857 = vrot.slane %v10849, %v10856
        %v10859 = vunpack.c.l.s4 1934713408
        %v10860 = vunpack.c.0.s8 %v10859
        %v10861 = vlaneseq
        %v10862 = vshrl.u32 %v10861, 7
        %v10863 = vsub.s32 %v10860, %v10862
        %v10864 = vrot.slane %v10850, %v10863
        %v10865 = vcombine.low %v10800, %v10816
        %v10866 = vcombine.high %v10800, %v10816
        %v10868 = vunpack.c.l.s4 1934713408
        %v10869 = vunpack.c.0.s8 %v10868
        %v10870 = vlaneseq
        %v10871 = vshrl.u32 %v10870, 7
        %v10872 = vsub.s32 %v10869, %v10871
        %v10873 = vrot.slane %v10865, %v10872
        %v10875 = vunpack.c.l.s4 1934713408
        %v10876 = vunpack.c.0.s8 %v10875
        %v10877 = vlaneseq
        %v10878 = vshrl.u32 %v10877, 7
        %v10879 = vsub.s32 %v10876, %v10878
        %v10880 = vrot.slane %v10866, %v10879
        %v10881 = vcombine.low %v10825, %v10841
        %v10882 = vcombine.high %v10825, %v10841
        %v10884 = vunpack.c.l.s4 1934713408
        %v10885 = vunpack.c.0.s8 %v10884
        %v10886 = vlaneseq
        %v10887 = vshrl.u32 %v10886, 7
        %v10888 = vsub.s32 %v10885, %v10887
        %v10889 = vrot.slane %v10881, %v10888
        %v10891 = vunpack.c.l.s4 1934713408
        %v10892 = vunpack.c.0.s8 %v10891
        %v10893 = vlaneseq
        %v10894 = vshrl.u32 %v10893, 7
        %v10895 = vsub.s32 %v10892, %v10894
        %v10896 = vrot.slane %v10882, %v10895
        %v10897 = vcombine.low %v10832, %v10848
        %v10898 = vcombine.high %v10832, %v10848
        %v10900 = vunpack.c.l.s4 1934713408
        %v10901 = vunpack.c.0.s8 %v10900
        %v10902 = vlaneseq
        %v10903 = vshrl.u32 %v10902, 7
        %v10904 = vsub.s32 %v10901, %v10903
        %v10905 = vrot.slane %v10897, %v10904
        %v10907 = vunpack.c.l.s4 1934713408
        %v10908 = vunpack.c.0.s8 %v10907
        %v10909 = vlaneseq
        %v10910 = vshrl.u32 %v10909, 7
        %v10911 = vsub.s32 %v10908, %v10910
        %v10912 = vrot.slane %v10898, %v10911
        %v10913 = vcombine.low %v10857, %v10889
        %v10914 = vcombine.high %v10857, %v10889
        %v10915 = vcombine.low %v10864, %v10896
        %v10916 = vcombine.high %v10864, %v10896
        %v10917 = vcombine.low %v10873, %v10905
        %v10918 = vcombine.high %v10873, %v10905
        %v10919 = vcombine.low %v10880, %v10912
        %v10920 = vcombine.high %v10880, %v10912
        %v10921 = vcombine.low %v10371, %v10462
        %v10922 = vcombine.high %v10371, %v10462
        %v10924 = vunpack.c.l.s4 1983009808
        %v10925 = vunpack.c.0.s8 %v10924
        %v10926 = vlaneseq
        %v10927 = vshrl.u32 %v10926, 7
        %v10928 = vsub.s32 %v10925, %v10927
        %v10929 = vrot.slane %v10921, %v10928
        %v10931 = vunpack.c.l.s4 1983009808
        %v10932 = vunpack.c.0.s8 %v10931
        %v10933 = vlaneseq
        %v10934 = vshrl.u32 %v10933, 7
        %v10935 = vsub.s32 %v10932, %v10934
        %v10936 = vrot.slane %v10922, %v10935
        %v10937 = vcombine.low %v10453, %v10471
        %v10938 = vcombine.high %v10453, %v10471
        %v10940 = vunpack.c.l.s4 1983009808
        %v10941 = vunpack.c.0.s8 %v10940
        %v10942 = vlaneseq
        %v10943 = vshrl.u32 %v10942, 7
        %v10944 = vsub.s32 %v10941, %v10943
        %v10945 = vrot.slane %v10937, %v10944
        %v10947 = vunpack.c.l.s4 1983009808
        %v10948 = vunpack.c.0.s8 %v10947
        %v10949 = vlaneseq
        %v10950 = vshrl.u32 %v10949, 7
        %v10951 = vsub.s32 %v10948, %v10950
        %v10952 = vrot.slane %v10938, %v10951
        %v10953 = vcombine.low %v10480, %v10498
        %v10954 = vcombine.high %v10480, %v10498
        %v10956 = vunpack.c.l.s4 1983009808
        %v10957 = vunpack.c.0.s8 %v10956
        %v10958 = vlaneseq
        %v10959 = vshrl.u32 %v10958, 7
        %v10960 = vsub.s32 %v10957, %v10959
        %v10961 = vrot.slane %v10953, %v10960
        %v10963 = vunpack.c.l.s4 1983009808
        %v10964 = vunpack.c.0.s8 %v10963
        %v10965 = vlaneseq
        %v10966 = vshrl.u32 %v10965, 7
        %v10967 = vsub.s32 %v10964, %v10966
        %v10968 = vrot.slane %v10954, %v10967
        %v10969 = vcombine.low %v10489, %v10507
        %v10970 = vcombine.high %v10489, %v10507
        %v10972 = vunpack.c.l.s4 1983009808
        %v10973 = vunpack.c.0.s8 %v10972
        %v10974 = vlaneseq
        %v10975 = vshrl.u32 %v10974, 7
        %v10976 = vsub.s32 %v10973, %v10975
        %v10977 = vrot.slane %v10969, %v10976
        %v10979 = vunpack.c.l.s4 1983009808
        %v10980 = vunpack.c.0.s8 %v10979
        %v10981 = vlaneseq
        %v10982 = vshrl.u32 %v10981, 7
        %v10983 = vsub.s32 %v10980, %v10982
        %v10984 = vrot.slane %v10970, %v10983
        %v10985 = vcombine.low %v10929, %v10945
        %v10986 = vcombine.high %v10929, %v10945
        %v10988 = vunpack.c.l.s4 1934713408
        %v10989 = vunpack.c.0.s8 %v10988
        %v10990 = vlaneseq
        %v10991 = vshrl.u32 %v10990, 7
        %v10992 = vsub.s32 %v10989, %v10991
        %v10993 = vrot.slane %v10985, %v10992
        %v10995 = vunpack.c.l.s4 1934713408
        %v10996 = vunpack.c.0.s8 %v10995
        %v10997 = vlaneseq
        %v10998 = vshrl.u32 %v10997, 7
        %v10999 = vsub.s32 %v10996, %v10998
        %v11000 = vrot.slane %v10986, %v10999
        %v11001 = vcombine.low %v10936, %v10952
        %v11002 = vcombine.high %v10936, %v10952
        %v11004 = vunpack.c.l.s4 1934713408
        %v11005 = vunpack.c.0.s8 %v11004
        %v11006 = vlaneseq
        %v11007 = vshrl.u32 %v11006, 7
        %v11008 = vsub.s32 %v11005, %v11007
        %v11009 = vrot.slane %v11001, %v11008
        %v11011 = vunpack.c.l.s4 1934713408
        %v11012 = vunpack.c.0.s8 %v11011
        %v11013 = vlaneseq
        %v11014 = vshrl.u32 %v11013, 7
        %v11015 = vsub.s32 %v11012, %v11014
        %v11016 = vrot.slane %v11002, %v11015
        %v11017 = vcombine.low %v10961, %v10977
        %v11018 = vcombine.high %v10961, %v10977
        %v11020 = vunpack.c.l.s4 1934713408
        %v11021 = vunpack.c.0.s8 %v11020
        %v11022 = vlaneseq
        %v11023 = vshrl.u32 %v11022, 7
        %v11024 = vsub.s32 %v11021, %v11023
        %v11025 = vrot.slane %v11017, %v11024
        %v11027 = vunpack.c.l.s4 1934713408
        %v11028 = vunpack.c.0.s8 %v11027
        %v11029 = vlaneseq
        %v11030 = vshrl.u32 %v11029, 7
        %v11031 = vsub.s32 %v11028, %v11030
        %v11032 = vrot.slane %v11018, %v11031
        %v11033 = vcombine.low %v10968, %v10984
        %v11034 = vcombine.high %v10968, %v10984
        %v11036 = vunpack.c.l.s4 1934713408
        %v11037 = vunpack.c.0.s8 %v11036
        %v11038 = vlaneseq
        %v11039 = vshrl.u32 %v11038, 7
        %v11040 = vsub.s32 %v11037, %v11039
        %v11041 = vrot.slane %v11033, %v11040
        %v11043 = vunpack.c.l.s4 1934713408
        %v11044 = vunpack.c.0.s8 %v11043
        %v11045 = vlaneseq
        %v11046 = vshrl.u32 %v11045, 7
        %v11047 = vsub.s32 %v11044, %v11046
        %v11048 = vrot.slane %v11034, %v11047
        %v11049 = vcombine.low %v10993, %v11025
        %v11050 = vcombine.high %v10993, %v11025
        %v11051 = vcombine.low %v11000, %v11032
        %v11052 = vcombine.high %v11000, %v11032
        %v11053 = vcombine.low %v11009, %v11041
        %v11054 = vcombine.high %v11009, %v11041
        %v11055 = vcombine.low %v11016, %v11048
        %v11056 = vcombine.high %v11016, %v11048
        %v11057 = vcombine.low %v10375, %v10398
        %v11059 = vunpack.c.l.s4 1983009808
        %v11060 = vunpack.c.0.s8 %v11059
        %v11061 = vlaneseq
        %v11062 = vshrl.u32 %v11061, 7
        %v11063 = vsub.s32 %v11060, %v11062
        %v11064 = vrot.slane %v11057, %v11063
        %v11065 = vcombine.low %v10389, %v10407
        %v11067 = vunpack.c.l.s4 1983009808
        %v11068 = vunpack.c.0.s8 %v11067
        %v11069 = vlaneseq
        %v11070 = vshrl.u32 %v11069, 7
        %v11071 = vsub.s32 %v11068, %v11070
        %v11072 = vrot.slane %v11065, %v11071
        %v11073 = vcombine.low %v10416, %v10434
        %v11075 = vunpack.c.l.s4 1983009808
        %v11076 = vunpack.c.0.s8 %v11075
        %v11077 = vlaneseq
        %v11078 = vshrl.u32 %v11077, 7
        %v11079 = vsub.s32 %v11076, %v11078
        %v11080 = vrot.slane %v11073, %v11079
        %v11081 = vcombine.low %v10425, %v10443
        %v11083 = vunpack.c.l.s4 1983009808
        %v11084 = vunpack.c.0.s8 %v11083
        %v11085 = vlaneseq
        %v11086 = vshrl.u32 %v11085, 7
        %v11087 = vsub.s32 %v11084, %v11086
        %v11088 = vrot.slane %v11081, %v11087
        %v11089 = vcombine.low %v11064, %v11072
        %v11090 = vcombine.high %v11064, %v11072
        %v11092 = vunpack.c.l.s4 1934713408
        %v11093 = vunpack.c.0.s8 %v11092
        %v11094 = vlaneseq
        %v11095 = vshrl.u32 %v11094, 7
        %v11096 = vsub.s32 %v11093, %v11095
        %v11097 = vrot.slane %v11089, %v11096
        %v11099 = vunpack.c.l.s4 1934713408
        %v11100 = vunpack.c.0.s8 %v11099
        %v11101 = vlaneseq
        %v11102 = vshrl.u32 %v11101, 7
        %v11103 = vsub.s32 %v11100, %v11102
        %v11104 = vrot.slane %v11090, %v11103
        %v11105 = vcombine.low %v11080, %v11088
        %v11106 = vcombine.high %v11080, %v11088
        %v11108 = vunpack.c.l.s4 1934713408
        %v11109 = vunpack.c.0.s8 %v11108
        %v11110 = vlaneseq
        %v11111 = vshrl.u32 %v11110, 7
        %v11112 = vsub.s32 %v11109, %v11111
        %v11113 = vrot.slane %v11105, %v11112
        %v11115 = vunpack.c.l.s4 1934713408
        %v11116 = vunpack.c.0.s8 %v11115
        %v11117 = vlaneseq
        %v11118 = vshrl.u32 %v11117, 7
        %v11119 = vsub.s32 %v11116, %v11118
        %v11120 = vrot.slane %v11106, %v11119
        %v11121 = vcombine.low %v11097, %v11113
        %v11122 = vcombine.high %v11097, %v11113
        %v11123 = vcombine.low %v11104, %v11120
        %v11124 = vcombine.high %v11104, %v11120
        %v11125 = vcombine.low %v10377, %v10464
        %v11127 = vunpack.c.l.s4 1983009808
        %v11128 = vunpack.c.0.s8 %v11127
        %v11129 = vlaneseq
        %v11130 = vshrl.u32 %v11129, 7
        %v11131 = vsub.s32 %v11128, %v11130
        %v11132 = vrot.slane %v11125, %v11131
        %v11133 = vcombine.low %v10455, %v10473
        %v11135 = vunpack.c.l.s4 1983009808
        %v11136 = vunpack.c.0.s8 %v11135
        %v11137 = vlaneseq
        %v11138 = vshrl.u32 %v11137, 7
        %v11139 = vsub.s32 %v11136, %v11138
        %v11140 = vrot.slane %v11133, %v11139
        %v11141 = vcombine.low %v10482, %v10500
        %v11143 = vunpack.c.l.s4 1983009808
        %v11144 = vunpack.c.0.s8 %v11143
        %v11145 = vlaneseq
        %v11146 = vshrl.u32 %v11145, 7
        %v11147 = vsub.s32 %v11144, %v11146
        %v11148 = vrot.slane %v11141, %v11147
        %v11149 = vcombine.low %v10491, %v10509
        %v11151 = vunpack.c.l.s4 1983009808
        %v11152 = vunpack.c.0.s8 %v11151
        %v11153 = vlaneseq
        %v11154 = vshrl.u32 %v11153, 7
        %v11155 = vsub.s32 %v11152, %v11154
        %v11156 = vrot.slane %v11149, %v11155
        %v11157 = vcombine.low %v11132, %v11140
        %v11158 = vcombine.high %v11132, %v11140
        %v11160 = vunpack.c.l.s4 1934713408
        %v11161 = vunpack.c.0.s8 %v11160
        %v11162 = vlaneseq
        %v11163 = vshrl.u32 %v11162, 7
        %v11164 = vsub.s32 %v11161, %v11163
        %v11165 = vrot.slane %v11157, %v11164
        %v11167 = vunpack.c.l.s4 1934713408
        %v11168 = vunpack.c.0.s8 %v11167
        %v11169 = vlaneseq
        %v11170 = vshrl.u32 %v11169, 7
        %v11171 = vsub.s32 %v11168, %v11170
        %v11172 = vrot.slane %v11158, %v11171
        %v11173 = vcombine.low %v11148, %v11156
        %v11174 = vcombine.high %v11148, %v11156
        %v11176 = vunpack.c.l.s4 1934713408
        %v11177 = vunpack.c.0.s8 %v11176
        %v11178 = vlaneseq
        %v11179 = vshrl.u32 %v11178, 7
        %v11180 = vsub.s32 %v11177, %v11179
        %v11181 = vrot.slane %v11173, %v11180
        %v11183 = vunpack.c.l.s4 1934713408
        %v11184 = vunpack.c.0.s8 %v11183
        %v11185 = vlaneseq
        %v11186 = vshrl.u32 %v11185, 7
        %v11187 = vsub.s32 %v11184, %v11186
        %v11188 = vrot.slane %v11174, %v11187
        %v11189 = vcombine.low %v11165, %v11181
        %v11190 = vcombine.high %v11165, %v11181
        %v11191 = vcombine.low %v11172, %v11188
        %v11192 = vcombine.high %v11172, %v11188
        %v11193 = vmax.f32 %v10645, 0.0
        %v11194 = vmax.f32 %v10781, 0.0
        %v11195 = vmax.f32 %v10646, 0.0
        %v11196 = vmax.f32 %v10782, 0.0
        %v11197 = vmax.f32 %v10647, 0.0
        %v11198 = vmax.f32 %v10783, 0.0
        %v11199 = vmax.f32 %v10648, 0.0
        %v11200 = vmax.f32 %v10784, 0.0
        %v11201 = vmax.f32 %v10913, 0.0
        %v11202 = vmax.f32 %v11049, 0.0
        %v11203 = vmax.f32 %v10914, 0.0
        %v11204 = vmax.f32 %v11050, 0.0
        %v11205 = vmax.f32 %v10915, 0.0
        %v11206 = vmax.f32 %v11051, 0.0
        %v11207 = vmax.f32 %v10916, 0.0
        %v11208 = vmax.f32 %v11052, 0.0
        %v11209 = vmax.f32 %v10917, 0.0
        %v11210 = vmax.f32 %v11053, 0.0
        %v11211 = vmax.f32 %v10918, 0.0
        %v11212 = vmax.f32 %v11054, 0.0
        %v11213 = vmax.f32 %v10919, 0.0
        %v11214 = vmax.f32 %v11055, 0.0
        %v11215 = vmax.f32 %v10920, 0.0
        %v11216 = vmax.f32 %v11056, 0.0
        %v11217 = vmax.f32 %v11121, 0.0
        %v11218 = vmax.f32 %v11189, 0.0
        %v11219 = vmax.f32 %v11122, 0.0
        %v11220 = vmax.f32 %v11190, 0.0
        %v11221 = vmax.f32 %v11123, 0.0
        %v11222 = vmax.f32 %v11191, 0.0
        %v11223 = vmax.f32 %v11124, 0.0
        %v11224 = vmax.f32 %v11192, 0.0
        %11225 = vst.msk [vmem:[%s430] sm:$0xff] %vm845, %v11193
        %11226 = vst.msk [vmem:[%s430 + $0x8] sm:$0xff] %vm845, %v11194
        %11227 = vst.msk [vmem:[%s430 + $0x10] sm:$0xff] %vm845, %v11195
        %11228 = vst.msk [vmem:[%s430 + $0x18] sm:$0xff] %vm845, %v11196
        %11229 = vst.msk [vmem:[%s430 + $0x20] sm:$0xff] %vm845, %v11197
        %11230 = vst.msk [vmem:[%s430 + $0x28] sm:$0xff] %vm845, %v11198
        %11231 = vst.msk [vmem:[%s430 + $0x30] sm:$0xff] %vm845, %v11199
        %11232 = vst.msk [vmem:[%s430 + $0x38] sm:$0xff] %vm845, %v11200
        %11233 = vst.msk [vmem:[%s430 + $0x40] sm:$0xff] %vm845, %v11201
        %11234 = vst.msk [vmem:[%s430 + $0x48] sm:$0xff] %vm845, %v11202
        %11235 = vst.msk [vmem:[%s430 + $0x50] sm:$0xff] %vm845, %v11203
        %11236 = vst.msk [vmem:[%s430 + $0x58] sm:$0xff] %vm845, %v11204
        %11237 = vst.msk [vmem:[%s430 + $0x60] sm:$0xff] %vm845, %v11205
        %11238 = vst.msk [vmem:[%s430 + $0x68] sm:$0xff] %vm845, %v11206
        %11239 = vst.msk [vmem:[%s430 + $0x70] sm:$0xff] %vm845, %v11207
        %11240 = vst.msk [vmem:[%s430 + $0x78] sm:$0xff] %vm845, %v11208
        %11241 = vst.msk [vmem:[%s430 + $0x80] sm:$0xff] %vm845, %v11209
        %11242 = vst.msk [vmem:[%s430 + $0x88] sm:$0xff] %vm845, %v11210
        %11243 = vst.msk [vmem:[%s430 + $0x90] sm:$0xff] %vm845, %v11211
        %11244 = vst.msk [vmem:[%s430 + $0x98] sm:$0xff] %vm845, %v11212
        %11245 = vst.msk [vmem:[%s430 + $0xa0] sm:$0xff] %vm845, %v11213
        %11246 = vst.msk [vmem:[%s430 + $0xa8] sm:$0xff] %vm845, %v11214
        %11247 = vst.msk [vmem:[%s430 + $0xb0] sm:$0xff] %vm845, %v11215
        %11248 = vst.msk [vmem:[%s430 + $0xb8] sm:$0xff] %vm845, %v11216
        %11249 = vst.msk [vmem:[%s430 + $0xc0] sm:$0xff] %vm845, %v11217
        %11250 = vst.msk [vmem:[%s430 + $0xc8] sm:$0xff] %vm845, %v11218
        %11251 = vst.msk [vmem:[%s430 + $0xd0] sm:$0xff] %vm845, %v11219
        %11252 = vst.msk [vmem:[%s430 + $0xd8] sm:$0xff] %vm845, %v11220
        %11253 = vst.msk [vmem:[%s430 + $0xe0] sm:$0xff] %vm845, %v11221
        %11254 = vst.msk [vmem:[%s430 + $0xe8] sm:$0xff] %vm845, %v11222
        %11255 = vst.msk [vmem:[%s430 + $0xf0] sm:$0xff] %vm845, %v11223
        %11256 = vst.msk [vmem:[%s430 + $0xf8] sm:$0xff] %vm845, %v11224
        %v11257 = vld [vmem:[%s9] sm:$0xf]
        %v11258 = vld [vmem:[%s9 + $0x4] sm:$0xf]
        %v11259 = vld [vmem:[%s8] sm:$0xf]
        %v11260 = vld [vmem:[%s8 + $0x4] sm:$0xf]
        %v11261 = vld [vmem:[%s8 + $0x8] sm:$0xf]
        %v11262 = vld [vmem:[%s8 + $0xc] sm:$0xf]
        %v11263 = vld [vmem:[%s8 + $0x10] sm:$0xf]
        %v11264 = vld [vmem:[%s8 + $0x14] sm:$0xf]
        %v11265 = vld [vmem:[%s8 + $0x18] sm:$0xf]
        %v11266 = vld [vmem:[%s8 + $0x1c] sm:$0xf]
        %v11267 = vpack.c.bf16 %v10777, %v10641
        %v11268 = vpack.c.bf16 %v10778, %v10642
        %v11269 = vpack.c.bf16 %v10779, %v10643
        %v11270 = vpack.c.bf16 %v10780, %v10644
        %v11273 = vunpack.c.l.b16 %v11257
        %v11274 = vunpack.c.l.b16 %v11258
        %v11275 = vpack.c.b16 %v11274, %v11273
        %v11278 = vsel %vm845, %v11267, 0
        %11280 = vmatprep.subr.bf16.mxu0 0
        %11281 = vmatpush1.bf16.msra.mxu0 %v11275
        %11282 = vmatprep.subr.bf16.mxu0 0
        %11283 = vmatpush1.bf16.msra.mxu0 0
        %11284 = vmatprep.subr.bf16.mxu0 0
        %11285 = vmatpush1.bf16.msra.mxu0 0
        %11286 = vmatprep.subr.bf16.mxu0 0
        %11287 = vmatpush1.bf16.msra.mxu0 0
        %11288 = vmatprep.subr.bf16.mxu0 0
        %11289 = vmatpush1.bf16.msra.mxu0 0
        %11290 = vmatprep.subr.bf16.mxu0 0
        %11291 = vmatpush1.bf16.msra.mxu0 0
        %11292 = vmatprep.subr.bf16.mxu0 0
        %11293 = vmatpush1.bf16.msra.mxu0 0
        %11294 = vmatprep.subr.bf16.mxu0 0
        %11295 = vmatpush1.bf16.msra.mxu0 0
        %11296 = vmatprep.subr.bf16.mxu0 0
        %11297 = vmatpush1.bf16.msra.mxu0 0
        %11298 = vmatprep.subr.bf16.mxu0 0
        %11299 = vmatpush1.bf16.msra.mxu0 0
        %11300 = vmatprep.subr.bf16.mxu0 0
        %11301 = vmatpush1.bf16.msra.mxu0 0
        %11302 = vmatprep.subr.bf16.mxu0 0
        %11303 = vmatpush1.bf16.msra.mxu0 0
        %11304 = vmatprep.subr.bf16.mxu0 0
        %11305 = vmatpush1.bf16.msra.mxu0 0
        %11306 = vmatprep.subr.bf16.mxu0 0
        %11307 = vmatpush1.bf16.msra.mxu0 0
        %11308 = vmatprep.subr.bf16.mxu0 0
        %11309 = vmatpush1.bf16.msra.mxu0 0
        %11310 = vmatprep.subr.bf16.mxu0 0
        %11311 = vmatpush1.bf16.msra.mxu0 0
        %11312 = vmatprep.mubr.bf16.mxu0 0
        %11313 = vmatmul.mubr.bf16.gmra.mrb[0].mxu0 %v11278
        %v11314 = vpop.f32.mrb[0].mxu0
        %v11315 = vadd.f32 0.0, %v11314
        %v11316 = vpop.f32.mrb[0].mxu0
        %v11317 = vpop.f32.mrb[0].mxu0
        %v11318 = vadd.f32 0.0, %v11317
        %v11319 = vpop.f32.mrb[0].mxu0
        %11320 = vdwg.mxu0
        %v11322 = vsel %vm845, %v11268, 0
        %11324 = vmatprep.subr.bf16.mxu0 0
        %11325 = vmatpush1.bf16.msra.mxu0 %v11275
        %11326 = vmatprep.subr.bf16.mxu0 0
        %11327 = vmatpush1.bf16.msra.mxu0 0
        %11328 = vmatprep.subr.bf16.mxu0 0
        %11329 = vmatpush1.bf16.msra.mxu0 0
        %11330 = vmatprep.subr.bf16.mxu0 0
        %11331 = vmatpush1.bf16.msra.mxu0 0
        %11332 = vmatprep.subr.bf16.mxu0 0
        %11333 = vmatpush1.bf16.msra.mxu0 0
        %11334 = vmatprep.subr.bf16.mxu0 0
        %11335 = vmatpush1.bf16.msra.mxu0 0
        %11336 = vmatprep.subr.bf16.mxu0 0
        %11337 = vmatpush1.bf16.msra.mxu0 0
        %11338 = vmatprep.subr.bf16.mxu0 0
        %11339 = vmatpush1.bf16.msra.mxu0 0
        %11340 = vmatprep.subr.bf16.mxu0 0
        %11341 = vmatpush1.bf16.msra.mxu0 0
        %11342 = vmatprep.subr.bf16.mxu0 0
        %11343 = vmatpush1.bf16.msra.mxu0 0
        %11344 = vmatprep.subr.bf16.mxu0 0
        %11345 = vmatpush1.bf16.msra.mxu0 0
        %11346 = vmatprep.subr.bf16.mxu0 0
        %11347 = vmatpush1.bf16.msra.mxu0 0
        %11348 = vmatprep.subr.bf16.mxu0 0
        %11349 = vmatpush1.bf16.msra.mxu0 0
        %11350 = vmatprep.subr.bf16.mxu0 0
        %11351 = vmatpush1.bf16.msra.mxu0 0
        %11352 = vmatprep.subr.bf16.mxu0 0
        %11353 = vmatpush1.bf16.msra.mxu0 0
        %11354 = vmatprep.subr.bf16.mxu0 0
        %11355 = vmatpush1.bf16.msra.mxu0 0
        %11356 = vmatprep.mubr.bf16.mxu0 0
        %11357 = vmatmul.mubr.bf16.gmra.mrb[0].mxu0 %v11322
        %v11358 = vpop.f32.mrb[0].mxu0
        %v11359 = vadd.f32 0.0, %v11358
        %v11360 = vpop.f32.mrb[0].mxu0
        %v11361 = vpop.f32.mrb[0].mxu0
        %v11362 = vadd.f32 0.0, %v11361
        %v11363 = vpop.f32.mrb[0].mxu0
        %11364 = vdwg.mxu0
        %v11366 = vsel %vm845, %v11269, 0
        %11368 = vmatprep.subr.bf16.mxu0 0
        %11369 = vmatpush1.bf16.msra.mxu0 %v11275
        %11370 = vmatprep.subr.bf16.mxu0 0
        %11371 = vmatpush1.bf16.msra.mxu0 0
        %11372 = vmatprep.subr.bf16.mxu0 0
        %11373 = vmatpush1.bf16.msra.mxu0 0
        %11374 = vmatprep.subr.bf16.mxu0 0
        %11375 = vmatpush1.bf16.msra.mxu0 0
        %11376 = vmatprep.subr.bf16.mxu0 0
        %11377 = vmatpush1.bf16.msra.mxu0 0
        %11378 = vmatprep.subr.bf16.mxu0 0
        %11379 = vmatpush1.bf16.msra.mxu0 0
        %11380 = vmatprep.subr.bf16.mxu0 0
        %11381 = vmatpush1.bf16.msra.mxu0 0
        %11382 = vmatprep.subr.bf16.mxu0 0
        %11383 = vmatpush1.bf16.msra.mxu0 0
        %11384 = vmatprep.subr.bf16.mxu0 0
        %11385 = vmatpush1.bf16.msra.mxu0 0
        %11386 = vmatprep.subr.bf16.mxu0 0
        %11387 = vmatpush1.bf16.msra.mxu0 0
        %11388 = vmatprep.subr.bf16.mxu0 0
        %11389 = vmatpush1.bf16.msra.mxu0 0
        %11390 = vmatprep.subr.bf16.mxu0 0
        %11391 = vmatpush1.bf16.msra.mxu0 0
        %11392 = vmatprep.subr.bf16.mxu0 0
        %11393 = vmatpush1.bf16.msra.mxu0 0
        %11394 = vmatprep.subr.bf16.mxu0 0
        %11395 = vmatpush1.bf16.msra.mxu0 0
        %11396 = vmatprep.subr.bf16.mxu0 0
        %11397 = vmatpush1.bf16.msra.mxu0 0
        %11398 = vmatprep.subr.bf16.mxu0 0
        %11399 = vmatpush1.bf16.msra.mxu0 0
        %11400 = vmatprep.mubr.bf16.mxu0 0
        %11401 = vmatmul.mubr.bf16.gmra.mrb[0].mxu0 %v11366
        %v11402 = vpop.f32.mrb[0].mxu0
        %v11403 = vadd.f32 0.0, %v11402
        %v11404 = vpop.f32.mrb[0].mxu0
        %v11405 = vpop.f32.mrb[0].mxu0
        %v11406 = vadd.f32 0.0, %v11405
        %v11407 = vpop.f32.mrb[0].mxu0
        %11408 = vdwg.mxu0
        %v11410 = vsel %vm845, %v11270, 0
        %11412 = vmatprep.subr.bf16.mxu0 0
        %11413 = vmatpush1.bf16.msra.mxu0 %v11275
        %11414 = vmatprep.subr.bf16.mxu0 0
        %11415 = vmatpush1.bf16.msra.mxu0 0
        %11416 = vmatprep.subr.bf16.mxu0 0
        %11417 = vmatpush1.bf16.msra.mxu0 0
        %11418 = vmatprep.subr.bf16.mxu0 0
        %11419 = vmatpush1.bf16.msra.mxu0 0
        %11420 = vmatprep.subr.bf16.mxu0 0
        %11421 = vmatpush1.bf16.msra.mxu0 0
        %11422 = vmatprep.subr.bf16.mxu0 0
        %11423 = vmatpush1.bf16.msra.mxu0 0
        %11424 = vmatprep.subr.bf16.mxu0 0
        %11425 = vmatpush1.bf16.msra.mxu0 0
        %11426 = vmatprep.subr.bf16.mxu0 0
        %11427 = vmatpush1.bf16.msra.mxu0 0
        %11428 = vmatprep.subr.bf16.mxu0 0
        %11429 = vmatpush1.bf16.msra.mxu0 0
        %11430 = vmatprep.subr.bf16.mxu0 0
        %11431 = vmatpush1.bf16.msra.mxu0 0
        %11432 = vmatprep.subr.bf16.mxu0 0
        %11433 = vmatpush1.bf16.msra.mxu0 0
        %11434 = vmatprep.subr.bf16.mxu0 0
        %11435 = vmatpush1.bf16.msra.mxu0 0
        %11436 = vmatprep.subr.bf16.mxu0 0
        %11437 = vmatpush1.bf16.msra.mxu0 0
        %11438 = vmatprep.subr.bf16.mxu0 0
        %11439 = vmatpush1.bf16.msra.mxu0 0
        %11440 = vmatprep.subr.bf16.mxu0 0
        %11441 = vmatpush1.bf16.msra.mxu0 0
        %11442 = vmatprep.subr.bf16.mxu0 0
        %11443 = vmatpush1.bf16.msra.mxu0 0
        %11444 = vmatprep.mubr.bf16.mxu0 0
        %11445 = vmatmul.mubr.bf16.gmra.mrb[0].mxu0 %v11410
        %v11446 = vpop.f32.mrb[0].mxu0
        %v11447 = vadd.f32 0.0, %v11446
        %v11448 = vpop.f32.mrb[0].mxu0
        %v11449 = vpop.f32.mrb[0].mxu0
        %v11450 = vadd.f32 0.0, %v11449
        %v11451 = vpop.f32.mrb[0].mxu0
        %11452 = vdwg.mxu0
        %v11453 = vpack.c.bf16 %v11318, %v11315
        %v11454 = vpack.c.bf16 %v11362, %v11359
        %v11455 = vpack.c.bf16 %v11406, %v11403
        %v11456 = vpack.c.bf16 %v11450, %v11447
        %v11465 = vunpack.c.l.b16 %v11259
        %v11466 = vunpack.c.l.b16 %v11260
        %v11467 = vunpack.c.l.b16 %v11261
        %v11468 = vunpack.c.l.b16 %v11262
        %v11469 = vunpack.c.l.b16 %v11263
        %v11470 = vunpack.c.l.b16 %v11264
        %v11471 = vunpack.c.l.b16 %v11265
        %v11472 = vunpack.c.l.b16 %v11266
        %v11473 = vpack.c.b16 %v11466, %v11465
        %v11474 = vpack.c.b16 %v11468, %v11467
        %v11475 = vpack.c.b16 %v11470, %v11469
        %v11476 = vpack.c.b16 %v11472, %v11471
        %v11478 = vsel %vm845, %v11473, 0
        %v11481 = vsel %vm845, %v11474, 0
        %v11484 = vsel %vm845, %v11475, 0
        %v11487 = vsel %vm845, %v11476, 0
        %11489 = vmatprep.subr.bf16.mxu0 0
        %11490 = vmatpush1.bf16.msra.mxu0 %v11453
        %11491 = vmatprep.subr.bf16.mxu0 0
        %11492 = vmatpush1.bf16.msra.mxu0 0
        %11493 = vmatprep.subr.bf16.mxu0 0
        %11494 = vmatpush1.bf16.msra.mxu0 0
        %11495 = vmatprep.subr.bf16.mxu0 0
        %11496 = vmatpush1.bf16.msra.mxu0 0
        %11497 = vmatprep.subr.bf16.mxu0 0
        %11498 = vmatpush1.bf16.msra.mxu0 0
        %11499 = vmatprep.subr.bf16.mxu0 0
        %11500 = vmatpush1.bf16.msra.mxu0 0
        %11501 = vmatprep.subr.bf16.mxu0 0
        %11502 = vmatpush1.bf16.msra.mxu0 0
        %11503 = vmatprep.subr.bf16.mxu0 0
        %11504 = vmatpush1.bf16.msra.mxu0 0
        %11505 = vmatprep.subr.bf16.mxu0 0
        %11506 = vmatpush1.bf16.msra.mxu0 0
        %11507 = vmatprep.subr.bf16.mxu0 0
        %11508 = vmatpush1.bf16.msra.mxu0 0
        %11509 = vmatprep.subr.bf16.mxu0 0
        %11510 = vmatpush1.bf16.msra.mxu0 0
        %11511 = vmatprep.subr.bf16.mxu0 0
        %11512 = vmatpush1.bf16.msra.mxu0 0
        %11513 = vmatprep.subr.bf16.mxu0 0
        %11514 = vmatpush1.bf16.msra.mxu0 0
        %11515 = vmatprep.subr.bf16.mxu0 0
        %11516 = vmatpush1.bf16.msra.mxu0 0
        %11517 = vmatprep.subr.bf16.mxu0 0
        %11518 = vmatpush1.bf16.msra.mxu0 0
        %11519 = vmatprep.subr.bf16.mxu0 0
        %11520 = vmatpush1.bf16.msra.mxu0 0
        %11521 = vmatprep.mubr.bf16.mxu0 0
        %11522 = vmatmul.mubr.bf16.gmra.mrb[0].mxu0 %v11478
        %v11523 = vpop.f32.mrb[0].mxu0
        %v11524 = vadd.f32 0.0, %v11523
        %v11525 = vpop.f32.mrb[0].mxu0
        %v11526 = vpop.f32.mrb[0].mxu0
        %v11527 = vadd.f32 0.0, %v11526
        %v11528 = vpop.f32.mrb[0].mxu0
        %11529 = vmatprep.mubr.bf16.mxu0 0
        %11530 = vmatmul.mubr.bf16.gmra.mrb[0].mxu0 %v11481
        %v11531 = vpop.f32.mrb[0].mxu0
        %v11532 = vadd.f32 0.0, %v11531
        %v11533 = vpop.f32.mrb[0].mxu0
        %v11534 = vpop.f32.mrb[0].mxu0
        %v11535 = vadd.f32 0.0, %v11534
        %v11536 = vpop.f32.mrb[0].mxu0
        %11537 = vmatprep.mubr.bf16.mxu0 0
        %11538 = vmatmul.mubr.bf16.gmra.mrb[0].mxu0 %v11484
        %v11539 = vpop.f32.mrb[0].mxu0
        %v11540 = vadd.f32 0.0, %v11539
        %v11541 = vpop.f32.mrb[0].mxu0
        %v11542 = vpop.f32.mrb[0].mxu0
        %v11543 = vadd.f32 0.0, %v11542
        %v11544 = vpop.f32.mrb[0].mxu0
        %11545 = vmatprep.mubr.bf16.mxu0 0
        %11546 = vmatmul.mubr.bf16.gmra.mrb[0].mxu0 %v11487
        %v11547 = vpop.f32.mrb[0].mxu0
        %v11548 = vadd.f32 0.0, %v11547
        %v11549 = vpop.f32.mrb[0].mxu0
        %v11550 = vpop.f32.mrb[0].mxu0
        %v11551 = vadd.f32 0.0, %v11550
        %v11552 = vpop.f32.mrb[0].mxu0
        %11553 = vdwg.mxu0
        %11554 = vmatprep.subr.bf16.mxu0 0
        %11555 = vmatpush1.bf16.msra.mxu0 %v11454
        %11556 = vmatprep.subr.bf16.mxu0 0
        %11557 = vmatpush1.bf16.msra.mxu0 0
        %11558 = vmatprep.subr.bf16.mxu0 0
        %11559 = vmatpush1.bf16.msra.mxu0 0
        %11560 = vmatprep.subr.bf16.mxu0 0
        %11561 = vmatpush1.bf16.msra.mxu0 0
        %11562 = vmatprep.subr.bf16.mxu0 0
        %11563 = vmatpush1.bf16.msra.mxu0 0
        %11564 = vmatprep.subr.bf16.mxu0 0
        %11565 = vmatpush1.bf16.msra.mxu0 0
        %11566 = vmatprep.subr.bf16.mxu0 0
        %11567 = vmatpush1.bf16.msra.mxu0 0
        %11568 = vmatprep.subr.bf16.mxu0 0
        %11569 = vmatpush1.bf16.msra.mxu0 0
        %11570 = vmatprep.subr.bf16.mxu0 0
        %11571 = vmatpush1.bf16.msra.mxu0 0
        %11572 = vmatprep.subr.bf16.mxu0 0
        %11573 = vmatpush1.bf16.msra.mxu0 0
        %11574 = vmatprep.subr.bf16.mxu0 0
        %11575 = vmatpush1.bf16.msra.mxu0 0
        %11576 = vmatprep.subr.bf16.mxu0 0
        %11577 = vmatpush1.bf16.msra.mxu0 0
        %11578 = vmatprep.subr.bf16.mxu0 0
        %11579 = vmatpush1.bf16.msra.mxu0 0
        %11580 = vmatprep.subr.bf16.mxu0 0
        %11581 = vmatpush1.bf16.msra.mxu0 0
        %11582 = vmatprep.subr.bf16.mxu0 0
        %11583 = vmatpush1.bf16.msra.mxu0 0
        %11584 = vmatprep.subr.bf16.mxu0 0
        %11585 = vmatpush1.bf16.msra.mxu0 0
        %11586 = vmatprep.mubr.bf16.mxu0 0
        %11587 = vmatmul.mubr.bf16.gmra.mrb[0].mxu0 %v11478
        %v11588 = vpop.f32.mrb[0].mxu0
        %v11589 = vadd.f32 0.0, %v11588
        %v11590 = vpop.f32.mrb[0].mxu0
        %v11591 = vpop.f32.mrb[0].mxu0
        %v11592 = vadd.f32 0.0, %v11591
        %v11593 = vpop.f32.mrb[0].mxu0
        %11594 = vmatprep.mubr.bf16.mxu0 0
        %11595 = vmatmul.mubr.bf16.gmra.mrb[0].mxu0 %v11481
        %v11596 = vpop.f32.mrb[0].mxu0
        %v11597 = vadd.f32 0.0, %v11596
        %v11598 = vpop.f32.mrb[0].mxu0
        %v11599 = vpop.f32.mrb[0].mxu0
        %v11600 = vadd.f32 0.0, %v11599
        %v11601 = vpop.f32.mrb[0].mxu0
        %11602 = vmatprep.mubr.bf16.mxu0 0
        %11603 = vmatmul.mubr.bf16.gmra.mrb[0].mxu0 %v11484
        %v11604 = vpop.f32.mrb[0].mxu0
        %v11605 = vadd.f32 0.0, %v11604
        %v11606 = vpop.f32.mrb[0].mxu0
        %v11607 = vpop.f32.mrb[0].mxu0
        %v11608 = vadd.f32 0.0, %v11607
        %v11609 = vpop.f32.mrb[0].mxu0
        %11610 = vmatprep.mubr.bf16.mxu0 0
        %11611 = vmatmul.mubr.bf16.gmra.mrb[0].mxu0 %v11487
        %v11612 = vpop.f32.mrb[0].mxu0
        %v11613 = vadd.f32 0.0, %v11612
        %v11614 = vpop.f32.mrb[0].mxu0
        %v11615 = vpop.f32.mrb[0].mxu0
        %v11616 = vadd.f32 0.0, %v11615
        %v11617 = vpop.f32.mrb[0].mxu0
        %11618 = vdwg.mxu0
        %11619 = vmatprep.subr.bf16.mxu0 0
        %11620 = vmatpush1.bf16.msra.mxu0 %v11455
        %11621 = vmatprep.subr.bf16.mxu0 0
        %11622 = vmatpush1.bf16.msra.mxu0 0
        %11623 = vmatprep.subr.bf16.mxu0 0
        %11624 = vmatpush1.bf16.msra.mxu0 0
        %11625 = vmatprep.subr.bf16.mxu0 0
        %11626 = vmatpush1.bf16.msra.mxu0 0
        %11627 = vmatprep.subr.bf16.mxu0 0
        %11628 = vmatpush1.bf16.msra.mxu0 0
        %11629 = vmatprep.subr.bf16.mxu0 0
        %11630 = vmatpush1.bf16.msra.mxu0 0
        %11631 = vmatprep.subr.bf16.mxu0 0
        %11632 = vmatpush1.bf16.msra.mxu0 0
        %11633 = vmatprep.subr.bf16.mxu0 0
        %11634 = vmatpush1.bf16.msra.mxu0 0
        %11635 = vmatprep.subr.bf16.mxu0 0
        %11636 = vmatpush1.bf16.msra.mxu0 0
        %11637 = vmatprep.subr.bf16.mxu0 0
        %11638 = vmatpush1.bf16.msra.mxu0 0
        %11639 = vmatprep.subr.bf16.mxu0 0
        %11640 = vmatpush1.bf16.msra.mxu0 0
        %11641 = vmatprep.subr.bf16.mxu0 0
        %11642 = vmatpush1.bf16.msra.mxu0 0
        %11643 = vmatprep.subr.bf16.mxu0 0
        %11644 = vmatpush1.bf16.msra.mxu0 0
        %11645 = vmatprep.subr.bf16.mxu0 0
        %11646 = vmatpush1.bf16.msra.mxu0 0
        %11647 = vmatprep.subr.bf16.mxu0 0
        %11648 = vmatpush1.bf16.msra.mxu0 0
        %11649 = vmatprep.subr.bf16.mxu0 0
        %11650 = vmatpush1.bf16.msra.mxu0 0
        %11651 = vmatprep.mubr.bf16.mxu0 0
        %11652 = vmatmul.mubr.bf16.gmra.mrb[0].mxu0 %v11478
        %v11653 = vpop.f32.mrb[0].mxu0
        %v11654 = vadd.f32 0.0, %v11653
        %v11655 = vpop.f32.mrb[0].mxu0
        %v11656 = vpop.f32.mrb[0].mxu0
        %v11657 = vadd.f32 0.0, %v11656
        %v11658 = vpop.f32.mrb[0].mxu0
        %11659 = vmatprep.mubr.bf16.mxu0 0
        %11660 = vmatmul.mubr.bf16.gmra.mrb[0].mxu0 %v11481
        %v11661 = vpop.f32.mrb[0].mxu0
        %v11662 = vadd.f32 0.0, %v11661
        %v11663 = vpop.f32.mrb[0].mxu0
        %v11664 = vpop.f32.mrb[0].mxu0
        %v11665 = vadd.f32 0.0, %v11664
        %v11666 = vpop.f32.mrb[0].mxu0
        %11667 = vmatprep.mubr.bf16.mxu0 0
        %11668 = vmatmul.mubr.bf16.gmra.mrb[0].mxu0 %v11484
        %v11669 = vpop.f32.mrb[0].mxu0
        %v11670 = vadd.f32 0.0, %v11669
        %v11671 = vpop.f32.mrb[0].mxu0
        %v11672 = vpop.f32.mrb[0].mxu0
        %v11673 = vadd.f32 0.0, %v11672
        %v11674 = vpop.f32.mrb[0].mxu0
        %11675 = vmatprep.mubr.bf16.mxu0 0
        %11676 = vmatmul.mubr.bf16.gmra.mrb[0].mxu0 %v11487
        %v11677 = vpop.f32.mrb[0].mxu0
        %v11678 = vadd.f32 0.0, %v11677
        %v11679 = vpop.f32.mrb[0].mxu0
        %v11680 = vpop.f32.mrb[0].mxu0
        %v11681 = vadd.f32 0.0, %v11680
        %v11682 = vpop.f32.mrb[0].mxu0
        %11683 = vdwg.mxu0
        %11684 = vmatprep.subr.bf16.mxu0 0
        %11685 = vmatpush1.bf16.msra.mxu0 %v11456
        %11686 = vmatprep.subr.bf16.mxu0 0
        %11687 = vmatpush1.bf16.msra.mxu0 0
        %11688 = vmatprep.subr.bf16.mxu0 0
        %11689 = vmatpush1.bf16.msra.mxu0 0
        %11690 = vmatprep.subr.bf16.mxu0 0
        %11691 = vmatpush1.bf16.msra.mxu0 0
        %11692 = vmatprep.subr.bf16.mxu0 0
        %11693 = vmatpush1.bf16.msra.mxu0 0
        %11694 = vmatprep.subr.bf16.mxu0 0
        %11695 = vmatpush1.bf16.msra.mxu0 0
        %11696 = vmatprep.subr.bf16.mxu0 0
        %11697 = vmatpush1.bf16.msra.mxu0 0
        %11698 = vmatprep.subr.bf16.mxu0 0
        %11699 = vmatpush1.bf16.msra.mxu0 0
        %11700 = vmatprep.subr.bf16.mxu0 0
        %11701 = vmatpush1.bf16.msra.mxu0 0
        %11702 = vmatprep.subr.bf16.mxu0 0
        %11703 = vmatpush1.bf16.msra.mxu0 0
        %11704 = vmatprep.subr.bf16.mxu0 0
        %11705 = vmatpush1.bf16.msra.mxu0 0
        %11706 = vmatprep.subr.bf16.mxu0 0
        %11707 = vmatpush1.bf16.msra.mxu0 0
        %11708 = vmatprep.subr.bf16.mxu0 0
        %11709 = vmatpush1.bf16.msra.mxu0 0
        %11710 = vmatprep.subr.bf16.mxu0 0
        %11711 = vmatpush1.bf16.msra.mxu0 0
        %11712 = vmatprep.subr.bf16.mxu0 0
        %11713 = vmatpush1.bf16.msra.mxu0 0
        %11714 = vmatprep.subr.bf16.mxu0 0
        %11715 = vmatpush1.bf16.msra.mxu0 0
        %11716 = vmatprep.mubr.bf16.mxu0 0
        %11717 = vmatmul.mubr.bf16.gmra.mrb[0].mxu0 %v11478
        %v11718 = vpop.f32.mrb[0].mxu0
        %v11719 = vadd.f32 0.0, %v11718
        %v11720 = vpop.f32.mrb[0].mxu0
        %v11721 = vpop.f32.mrb[0].mxu0
        %v11722 = vadd.f32 0.0, %v11721
        %v11723 = vpop.f32.mrb[0].mxu0
        %11724 = vmatprep.mubr.bf16.mxu0 0
        %11725 = vmatmul.mubr.bf16.gmra.mrb[0].mxu0 %v11481
        %v11726 = vpop.f32.mrb[0].mxu0
        %v11727 = vadd.f32 0.0, %v11726
        %v11728 = vpop.f32.mrb[0].mxu0
        %v11729 = vpop.f32.mrb[0].mxu0
        %v11730 = vadd.f32 0.0, %v11729
        %v11731 = vpop.f32.mrb[0].mxu0
        %11732 = vmatprep.mubr.bf16.mxu0 0
        %11733 = vmatmul.mubr.bf16.gmra.mrb[0].mxu0 %v11484
        %v11734 = vpop.f32.mrb[0].mxu0
        %v11735 = vadd.f32 0.0, %v11734
        %v11736 = vpop.f32.mrb[0].mxu0
        %v11737 = vpop.f32.mrb[0].mxu0
        %v11738 = vadd.f32 0.0, %v11737
        %v11739 = vpop.f32.mrb[0].mxu0
        %11740 = vmatprep.mubr.bf16.mxu0 0
        %11741 = vmatmul.mubr.bf16.gmra.mrb[0].mxu0 %v11487
        %v11742 = vpop.f32.mrb[0].mxu0
        %v11743 = vadd.f32 0.0, %v11742
        %v11744 = vpop.f32.mrb[0].mxu0
        %v11745 = vpop.f32.mrb[0].mxu0
        %v11746 = vadd.f32 0.0, %v11745
        %v11747 = vpop.f32.mrb[0].mxu0
        %11748 = vdwg.mxu0
        %v11749 = vpack.c.bf16 %v11527, %v11524
        %v11750 = vpack.c.bf16 %v11535, %v11532
        %v11751 = vpack.c.bf16 %v11543, %v11540
        %v11752 = vpack.c.bf16 %v11551, %v11548
        %v11753 = vpack.c.bf16 %v11592, %v11589
        %v11754 = vpack.c.bf16 %v11600, %v11597
        %v11755 = vpack.c.bf16 %v11608, %v11605
        %v11756 = vpack.c.bf16 %v11616, %v11613
        %v11757 = vpack.c.bf16 %v11657, %v11654
        %v11758 = vpack.c.bf16 %v11665, %v11662
        %v11759 = vpack.c.bf16 %v11673, %v11670
        %v11760 = vpack.c.bf16 %v11681, %v11678
        %v11761 = vpack.c.bf16 %v11722, %v11719
        %v11762 = vpack.c.bf16 %v11730, %v11727
        %v11763 = vpack.c.bf16 %v11738, %v11735
        %v11764 = vpack.c.bf16 %v11746, %v11743
        %v11781 = vunpack.c.l.b16 %v11749
        %v11782 = vunpack.c.h.b16 %v11749
        %v11783 = vunpack.c.l.b16 %v11750
        %v11784 = vunpack.c.h.b16 %v11750
        %v11785 = vunpack.c.l.b16 %v11751
        %v11786 = vunpack.c.h.b16 %v11751
        %v11787 = vunpack.c.l.b16 %v11752
        %v11788 = vunpack.c.h.b16 %v11752
        %v11789 = vunpack.c.l.b16 %v11753
        %v11790 = vunpack.c.h.b16 %v11753
        %v11791 = vunpack.c.l.b16 %v11754
        %v11792 = vunpack.c.h.b16 %v11754
        %v11793 = vunpack.c.l.b16 %v11755
        %v11794 = vunpack.c.h.b16 %v11755
        %v11795 = vunpack.c.l.b16 %v11756
        %v11796 = vunpack.c.h.b16 %v11756
        %v11797 = vunpack.c.l.b16 %v11757
        %v11798 = vunpack.c.h.b16 %v11757
        %v11799 = vunpack.c.l.b16 %v11758
        %v11800 = vunpack.c.h.b16 %v11758
        %v11801 = vunpack.c.l.b16 %v11759
        %v11802 = vunpack.c.h.b16 %v11759
        %v11803 = vunpack.c.l.b16 %v11760
        %v11804 = vunpack.c.h.b16 %v11760
        %v11805 = vunpack.c.l.b16 %v11761
        %v11806 = vunpack.c.h.b16 %v11761
        %v11807 = vunpack.c.l.b16 %v11762
        %v11808 = vunpack.c.h.b16 %v11762
        %v11809 = vunpack.c.l.b16 %v11763
        %v11810 = vunpack.c.h.b16 %v11763
        %v11811 = vunpack.c.l.b16 %v11764
        %v11812 = vunpack.c.h.b16 %v11764
        %v11813 = vpack.c.b16 %v11781, %v11781
        %v11814 = vpack.c.b16 %v11782, %v11782
        %v11815 = vpack.c.b16 %v11783, %v11783
        %v11816 = vpack.c.b16 %v11784, %v11784
        %v11817 = vpack.c.b16 %v11785, %v11785
        %v11818 = vpack.c.b16 %v11786, %v11786
        %v11819 = vpack.c.b16 %v11787, %v11787
        %v11820 = vpack.c.b16 %v11788, %v11788
        %v11821 = vpack.c.b16 %v11789, %v11789
        %v11822 = vpack.c.b16 %v11790, %v11790
        %v11823 = vpack.c.b16 %v11791, %v11791
        %v11824 = vpack.c.b16 %v11792, %v11792
        %v11825 = vpack.c.b16 %v11793, %v11793
        %v11826 = vpack.c.b16 %v11794, %v11794
        %v11827 = vpack.c.b16 %v11795, %v11795
        %v11828 = vpack.c.b16 %v11796, %v11796
        %v11829 = vpack.c.b16 %v11797, %v11797
        %v11830 = vpack.c.b16 %v11798, %v11798
        %v11831 = vpack.c.b16 %v11799, %v11799
        %v11832 = vpack.c.b16 %v11800, %v11800
        %v11833 = vpack.c.b16 %v11801, %v11801
        %v11834 = vpack.c.b16 %v11802, %v11802
        %v11835 = vpack.c.b16 %v11803, %v11803
        %v11836 = vpack.c.b16 %v11804, %v11804
        %v11837 = vpack.c.b16 %v11805, %v11805
        %v11838 = vpack.c.b16 %v11806, %v11806
        %v11839 = vpack.c.b16 %v11807, %v11807
        %v11840 = vpack.c.b16 %v11808, %v11808
        %v11841 = vpack.c.b16 %v11809, %v11809
        %v11842 = vpack.c.b16 %v11810, %v11810
        %v11843 = vpack.c.b16 %v11811, %v11811
        %v11844 = vpack.c.b16 %v11812, %v11812
        %vm11877 = vcmask 519168
        %11878 = vst.msk [vmem:[%s423] sm:$0xf] %vm11877, %v11813
        %11879 = vst.msk [vmem:[%s423 + $0x4] sm:$0xf] %vm11877, %v11814
        %11880 = vst.msk [vmem:[%s423 + $0x8] sm:$0xf] %vm11877, %v11815
        %11881 = vst.msk [vmem:[%s423 + $0xc] sm:$0xf] %vm11877, %v11816
        %11882 = vst.msk [vmem:[%s423 + $0x10] sm:$0xf] %vm11877, %v11817
        %11883 = vst.msk [vmem:[%s423 + $0x14] sm:$0xf] %vm11877, %v11818
        %11884 = vst.msk [vmem:[%s423 + $0x18] sm:$0xf] %vm11877, %v11819
        %11885 = vst.msk [vmem:[%s423 + $0x1c] sm:$0xf] %vm11877, %v11820
        %11886 = vst.msk [vmem:[%s423 + $0x20] sm:$0xf] %vm11877, %v11821
        %11887 = vst.msk [vmem:[%s423 + $0x24] sm:$0xf] %vm11877, %v11822
        %11888 = vst.msk [vmem:[%s423 + $0x28] sm:$0xf] %vm11877, %v11823
        %11889 = vst.msk [vmem:[%s423 + $0x2c] sm:$0xf] %vm11877, %v11824
        %11890 = vst.msk [vmem:[%s423 + $0x30] sm:$0xf] %vm11877, %v11825
        %11891 = vst.msk [vmem:[%s423 + $0x34] sm:$0xf] %vm11877, %v11826
        %11892 = vst.msk [vmem:[%s423 + $0x38] sm:$0xf] %vm11877, %v11827
        %11893 = vst.msk [vmem:[%s423 + $0x3c] sm:$0xf] %vm11877, %v11828
        %11894 = vst.msk [vmem:[%s423 + $0x40] sm:$0xf] %vm11877, %v11829
        %11895 = vst.msk [vmem:[%s423 + $0x44] sm:$0xf] %vm11877, %v11830
        %11896 = vst.msk [vmem:[%s423 + $0x48] sm:$0xf] %vm11877, %v11831
        %11897 = vst.msk [vmem:[%s423 + $0x4c] sm:$0xf] %vm11877, %v11832
        %11898 = vst.msk [vmem:[%s423 + $0x50] sm:$0xf] %vm11877, %v11833
        %11899 = vst.msk [vmem:[%s423 + $0x54] sm:$0xf] %vm11877, %v11834
        %11900 = vst.msk [vmem:[%s423 + $0x58] sm:$0xf] %vm11877, %v11835
        %11901 = vst.msk [vmem:[%s423 + $0x5c] sm:$0xf] %vm11877, %v11836
        %11902 = vst.msk [vmem:[%s423 + $0x60] sm:$0xf] %vm11877, %v11837
        %11903 = vst.msk [vmem:[%s423 + $0x64] sm:$0xf] %vm11877, %v11838
        %11904 = vst.msk [vmem:[%s423 + $0x68] sm:$0xf] %vm11877, %v11839
        %11905 = vst.msk [vmem:[%s423 + $0x6c] sm:$0xf] %vm11877, %v11840
        %11906 = vst.msk [vmem:[%s423 + $0x70] sm:$0xf] %vm11877, %v11841
        %11907 = vst.msk [vmem:[%s423 + $0x74] sm:$0xf] %vm11877, %v11842
        %11908 = vst.msk [vmem:[%s423 + $0x78] sm:$0xf] %vm11877, %v11843
        %11909 = vst.msk [vmem:[%s423 + $0x7c] sm:$0xf] %vm11877, %v11844
        %s11910 = sand.u32 %s260, 1
        %s11911 = scalar_lea.sflag [#allocation8], %s11910
        %s11912 = sand.u32 %s260, 1
        %s11913 = smul.addr %s11912, 128
        %s11914 = scalar_lea.vmem [#allocation9], %s11913
        %s11915 = sand.u32 %s286, 1
        %s11916 = scalar_lea.sflag [#allocation11], %s11915
        %s11917 = sand.u32 %s286, 1
        %s11918 = smul.addr %s11917, 256
        %s11919 = scalar_lea.vmem [#allocation10], %s11918
        // Predicated region
        $region69: #{tpu_custom_call.1} parent=59 // pred_check
          %p11920 = pneg %p270
        $region70: #{tpu_custom_call.1} parent=59 // pred_check_branch
          %11922 = sbr.rel (%p11920) target = $region72
        $region71: #{tpu_custom_call.1} parent=59 // pred_region
          %s11924 = ssub.s32 2048, 2048
          %11925 = vsyncadd %s11911, %s11924
          %s11926 = smul.addr %s32, 32
          %s11927 = smul.addr %s11926, 64
          %s11928 = scalar_lea.hbm %s10, %s11927
          %s11929 = sshll.u32 %s11914, 4
          %s11930 = int_to_ptr.vmem [resolvable:$true] %s11929
          %11935 = dma.vmem_to_hbm [thread:$0]  %s11930, 2048, %s11928, %s11911, 64, 64, 4
        $region72: #{tpu_custom_call.1} parent=59 // pred_fallthru
          _
        // Predicated region
        $region73: #{tpu_custom_call.1} parent=59 // pred_check
          %p11936 = pneg %p296
        $region74: #{tpu_custom_call.1} parent=59 // pred_check_branch
          %11938 = sbr.rel (%p11936) target = $region76
        $region75: #{tpu_custom_call.1} parent=59 // pred_region
          %s11940 = ssub.s32 4096, 4096
          %11941 = vsyncadd %s11916, %s11940
          %s11942 = smul.addr %s32, 32
          %s11943 = smul.addr %s11942, 128
          %s11944 = scalar_lea.hbm %s11, %s11943
          %s11945 = sshll.u32 %s11919, 4
          %s11946 = int_to_ptr.vmem [resolvable:$true] %s11945
          %11951 = dma.vmem_to_hbm [thread:$0]  %s11946, 4096, %s11944, %s11916, 128, 128, 8
        $region76: #{tpu_custom_call.1} parent=59 // pred_fallthru
          _
      $region60: #{tpu_custom_call.1} parent=5 // pred_fallthru
        _
      %p11952 = scmp.le.s32.totalorder 2, %s27
      // Predicated region
      $region77: #{tpu_custom_call.1} parent=5 // pred_check
        %p11953 = pneg %p11952
      $region78: #{tpu_custom_call.1} parent=5 // pred_check_branch
        %11955 = sbr.rel (%p11953) target = $region80
      $region79: #{tpu_custom_call.1} parent=5 // pred_region
        %s11956 = ssub.s32 %s27, 2
        // Predicated region
        $region81: #{tpu_custom_call.1} parent=79 // pred_check
          %p11957 = pneg %p276
        $region82: #{tpu_custom_call.1} parent=79 // pred_check_branch
          %11959 = sbr.rel (%p11957) target = $region84
        $region83: #{tpu_custom_call.1} parent=79 // pred_region
          %s11960 = sand.u32 %s261, 1
          %s11961 = scalar_lea.sflag [#allocation8], %s11960
          %s11962 = sand.u32 %s261, 1
          %s11963 = smul.addr %s11962, 128
          %s11964 = scalar_lea.vmem [#allocation9], %s11963
          %11965 = dma.done %s11961, 2048
        $region84: #{tpu_custom_call.1} parent=79 // pred_fallthru
          _
        // Predicated region
        $region85: #{tpu_custom_call.1} parent=79 // pred_check
          %p11966 = pneg %p302
        $region86: #{tpu_custom_call.1} parent=79 // pred_check_branch
          %11968 = sbr.rel (%p11966) target = $region88
        $region87: #{tpu_custom_call.1} parent=79 // pred_region
          %s11969 = sand.u32 %s287, 1
          %s11970 = scalar_lea.sflag [#allocation11], %s11969
          %s11971 = sand.u32 %s287, 1
          %s11972 = smul.addr %s11971, 256
          %s11973 = scalar_lea.vmem [#allocation10], %s11972
          %11974 = dma.done %s11970, 4096
        $region88: #{tpu_custom_call.1} parent=79 // pred_fallthru
          _
      $region80: #{tpu_custom_call.1} parent=5 // pred_fallthru
        _
    $region6: #{tpu_custom_call.1} parent=1 // loop_footer
      %s31 = sadd.s32 1, %s27
    $region7: #{tpu_custom_call.1} parent=1 // loop_footer_branch
      %26 = sbr.rel target = $region3
    $region8: #{tpu_custom_call.1} parent=1 // loop_exit
      _
    %11975 = vsyncpa [#allocation7], 1
    %s11976 = scalar_lea.sflag [#allocation7], 1
    %11977 = vsyncpa %s11976, 1
    %11978 = vsyncpa [#allocation8], 1
    %s11979 = scalar_lea.sflag [#allocation8], 1
    %11980 = vsyncpa %s11979, 1
    %11981 = vsyncpa [#allocation11], 1
    %s11982 = scalar_lea.sflag [#allocation11], 1
    %11983 = vsyncpa %s11982, 1

</llo_original>
